<compile_context>
chip_gen: v5e
topology: v5e:2x2
jax: 0.10.0
libtpu: 0.0.40
codegen_flags: <defaults>
</compile_context>

<pallas_src>
import functools

import jax
import jax.numpy as jnp
from jax import lax
from jax.experimental import pallas as pl
from jax.experimental.pallas import tpu as pltpu

LANE = 128          # output channel padding target (vreg lane width)
TILE_M_MAX = 1024   # single grid step up to this many patch rows
TILE_M = 512        # row-tile size for larger layers


def _round_up(v, m):
    return (v + m - 1) // m * m


# ----------------------------- Pallas kernel ------------------------------ #
def _matmul_act_kernel(p_ref, w_ref, o_ref, *, act):
    # bf16 x bf16 -> f32 accumulate, single MXU pass
    acc = jnp.dot(p_ref[...], w_ref[...], preferred_element_type=jnp.float32)
    if act == "tanh":
        acc = jnp.tanh(acc)
    elif act == "sigmoid":
        acc = pl.reciprocal(1.0 + jnp.exp(-acc), approx=True)
    o_ref[...] = acc.astype(o_ref.dtype)


def _matmul_act(patches_p, wmat_p, act):
    # patches_p: (Mp, Kp) bf16 (bias ones-column folded in, K/M padded)
    # wmat_p:    (Kp, Cp) bf16 (bias row folded in, Cout padded to 128)
    Mp, Kp = patches_p.shape
    Kw, Cp = wmat_p.shape
    assert Kp == Kw and Kp % LANE == 0 and Cp % LANE == 0 and Mp % 8 == 0
    tile_m = Mp if Mp <= TILE_M_MAX else TILE_M
    assert Mp % tile_m == 0
    grid = (Mp // tile_m,)
    return pl.pallas_call(
        functools.partial(_matmul_act_kernel, act=act),
        out_shape=jax.ShapeDtypeStruct((Mp, Cp), jnp.float32),
        grid=grid,
        in_specs=[
            pl.BlockSpec((tile_m, Kp), lambda i: (i, 0)),
            pl.BlockSpec((Kp, Cp), lambda i: (0, 0)),
        ],
        out_specs=pl.BlockSpec((tile_m, Cp), lambda i: (i, 0)),
        compiler_params=pltpu.CompilerParams(dimension_semantics=("parallel",)),
    )(patches_p, wmat_p)


# ------------------------------ conv wrappers ------------------------------ #
def _im2col_nhwc(x, kh, kw, sh, sw):
    # x: already padded, NHWC.  Patch ordering along K is (i, j, c), c fastest.
    N, H, W, C = x.shape
    Ho = (H - kh) // sh + 1
    Wo = (W - kw) // sw + 1
    cols = []
    for i in range(kh):
        for j in range(kw):
            cols.append(
                x[:, i : i + sh * (Ho - 1) + 1 : sh, j : j + sw * (Wo - 1) + 1 : sw, :]
            )
    p = jnp.concatenate(cols, axis=-1)  # (N, Ho, Wo, kh*kw*C)
    return p.reshape(N * Ho * Wo, kh * kw * C), Ho, Wo


def conv2d_nhwc(x, w, b, stride, padding, act):
    # x: (N, H, W, Cin) NHWC; w: (Cout, Cin, kh, kw) OIHW; b: (Cout,)
    Cout, Cin, kh, kw = w.shape
    sh, sw = stride
    ph, pw = padding
    N = x.shape[0]

    xp = jnp.pad(x, ((0, 0), (ph, ph), (pw, pw), (0, 0)))
    patches, Ho, Wo = _im2col_nhwc(xp, kh, kw, sh, sw)  # (M, K)
    M, K = patches.shape

    Kp = _round_up(K + 1, LANE)  # +1: ones column carries the bias
    Cp = _round_up(Cout, LANE)
    Mp = _round_up(M, 8) if M <= TILE_M_MAX else _round_up(M, TILE_M)

    ones = jnp.ones((M, 1), patches.dtype)
    patches_p = jnp.concatenate([patches, ones], axis=1)
    patches_p = jnp.pad(patches_p, ((0, Mp - M), (0, Kp - (K + 1))))

    wmat = w.transpose(2, 3, 1, 0).reshape(K, Cout)  # (kh*kw*Cin, Cout), c fastest
    wmat_p = jnp.concatenate([wmat, b.reshape(1, Cout)], axis=0)
    wmat_p = jnp.pad(wmat_p, ((0, Kp - (K + 1)), (0, Cp - Cout)))

    out = _matmul_act(
        patches_p.astype(jnp.bfloat16), wmat_p.astype(jnp.bfloat16), act
    )  # (Mp, Cp) f32
    return out[:M, :Cout].reshape(N, Ho, Wo, Cout)


def conv_transpose2d_nhwc(x, w, b, stride, padding, output_padding, act):
    # x: (N, H, W, Cin) NHWC; w: (Cin, Cout, kh, kw)  (PyTorch ConvTranspose2d layout)
    Cin, Cout, kh, kw = w.shape
    sh, sw = stride
    ph, pw = padding
    oph, opw = output_padding
    N, H, W, _ = x.shape
    # zero-insert (lhs dilation)
    Hd, Wd = (H - 1) * sh + 1, (W - 1) * sw + 1
    xd = jnp.zeros((N, Hd, Wd, Cin), x.dtype).at[:, ::sh, ::sw, :].set(x)
    # equivalent stride-1 conv padding; may be negative -> crop
    lh, rh = kh - 1 - ph, kh - 1 - ph + oph
    lw, rw = kw - 1 - pw, kw - 1 - pw + opw
    xp = jnp.pad(
        xd,
        ((0, 0), (max(lh, 0), max(rh, 0)), (max(lw, 0), max(rw, 0)), (0, 0)),
    )
    xp = xp[
        :,
        max(-lh, 0) : xp.shape[1] - max(-rh, 0),
        max(-lw, 0) : xp.shape[2] - max(-rw, 0),
        :,
    ]
    wflip = jnp.flip(w, axis=(2, 3)).transpose(1, 0, 2, 3)  # (Cout, Cin, kh, kw)
    return conv2d_nhwc(xp, wflip, b, stride=(1, 1), padding=(0, 0), act=act)


# ---------------------------- parameters / model --------------------------- #
def _init_conv(key, cout, cin, kh, kw):
    bound = 1.0 / (cin * kh * kw) ** 0.5
    k1, k2 = jax.random.split(key)
    w = jax.random.uniform(k1, (cout, cin, kh, kw), jnp.float32, -bound, bound)
    b = jax.random.uniform(k2, (cout,), jnp.float32, -bound, bound)
    return w, b


def _init_convT(key, cin, cout, kh, kw):
    bound = 1.0 / (cout * kh * kw) ** 0.5
    k1, k2 = jax.random.split(key)
    w = jax.random.uniform(k1, (cin, cout, kh, kw), jnp.float32, -bound, bound)
    b = jax.random.uniform(k2, (cout,), jnp.float32, -bound, bound)
    return w, b


def init_params(key):
    ks = jax.random.split(key, 8)
    return {
        "enc_conv1": _init_conv(ks[0], 16, 3, 3, 3),
        "enc_conv2": _init_conv(ks[1], 32, 16, 3, 3),
        "enc_conv3": _init_conv(ks[2], 64, 32, 3, 3),
        "z": _init_convT(ks[3], 64, 3, 3, 3),
        "dec_conv1": _init_conv(ks[4], 64, 3, 3, 3),
        "dec_conv2": _init_convT(ks[5], 64, 32, 3, 3),
        "dec_conv3": _init_convT(ks[6], 32, 16, 3, 3),
        "dec_conv4": _init_convT(ks[7], 16, 3, 3, 3),
    }


def conv_autoencoder_forward(params, x_nchw):
    x = x_nchw.transpose(0, 2, 3, 1)  # -> NHWC once at the boundary
    # encode
    w, b = params["enc_conv1"]; x = conv2d_nhwc(x, w, b, (1, 2), (1, 17), "tanh")
    w, b = params["enc_conv2"]; x = conv2d_nhwc(x, w, b, (1, 2), (1, 17), "tanh")
    w, b = params["enc_conv3"]; x = conv2d_nhwc(x, w, b, (1, 2), (1, 15), "tanh")
    w, b = params["z"];         x = conv_transpose2d_nhwc(x, w, b, (3, 3), (0, 0), (0, 0), "sigmoid")
    # decode
    w, b = params["dec_conv1"]; x = conv2d_nhwc(x, w, b, (3, 3), (0, 0), "tanh")
    w, b = params["dec_conv2"]; x = conv_transpose2d_nhwc(x, w, b, (1, 2), (1, 15), (0, 0), "tanh")
    w, b = params["dec_conv3"]; x = conv_transpose2d_nhwc(x, w, b, (1, 2), (1, 17), (0, 1), "tanh")
    w, b = params["dec_conv4"]; x = conv_transpose2d_nhwc(x, w, b, (1, 2), (1, 17), (0, 1), "tanh")
    return x.transpose(0, 3, 1, 2)  # back to NCHW
# TODO(synk): return_image_tensor (F.pad of the latent) is not part of forward() and is not implemented.


# ----------------------------- pure-JAX reference -------------------------- #
def _ref_conv(x, w, b, stride, padding, act):
    out = lax.conv_general_dilated(
        x, w, window_strides=stride,
        padding=[(padding[0], padding[0]), (padding[1], padding[1])],
        dimension_numbers=("NCHW", "OIHW", "NCHW"),
        precision=lax.Precision.HIGHEST,
    ) + b.reshape(1, -1, 1, 1)
    return jnp.tanh(out) if act == "tanh" else 1.0 / (1.0 + jnp.exp(-out))


def _ref_convT(x, w, b, stride, padding, output_padding, act):
    kh, kw = w.shape[2], w.shape[3]
    wflip = jnp.flip(w, axis=(2, 3)).transpose(1, 0, 2, 3)
    pad = [
        (kh - 1 - padding[0], kh - 1 - padding[0] + output_padding[0]),
        (kw - 1 - padding[1], kw - 1 - padding[1] + output_padding[1]),
    ]
    out = lax.conv_general_dilated(
        x, wflip, window_strides=(1, 1), padding=pad, lhs_dilation=stride,
        dimension_numbers=("NCHW", "OIHW", "NCHW"),
        precision=lax.Precision.HIGHEST,
    ) + b.reshape(1, -1, 1, 1)
    return jnp.tanh(out) if act == "tanh" else 1.0 / (1.0 + jnp.exp(-out))


def conv_autoencoder_ref(params, x):
    w, b = params["enc_conv1"]; x = _ref_conv(x, w, b, (1, 2), (1, 17), "tanh")
    w, b = params["enc_conv2"]; x = _ref_conv(x, w, b, (1, 2), (1, 17), "tanh")
    w, b = params["enc_conv3"]; x = _ref_conv(x, w, b, (1, 2), (1, 15), "tanh")
    w, b = params["z"];         x = _ref_convT(x, w, b, (3, 3), (0, 0), (0, 0), "sigmoid")
    w, b = params["dec_conv1"]; x = _ref_conv(x, w, b, (3, 3), (0, 0), "tanh")
    w, b = params["dec_conv2"]; x = _ref_convT(x, w, b, (1, 2), (1, 15), (0, 0), "tanh")
    w, b = params["dec_conv3"]; x = _ref_convT(x, w, b, (1, 2), (1, 17), (0, 1), "tanh")
    w, b = params["dec_conv4"]; x = _ref_convT(x, w, b, (1, 2), (1, 17), (0, 1), "tanh")
    return x


# ----------------------------------- main ---------------------------------- #
if __name__ == "__main__":
    key = jax.random.PRNGKey(0)
    kp, kx = jax.random.split(key)
    params = init_params(kp)
    x = jax.random.normal(kx, (2, 3, 8, 16), jnp.float32)  # NCHW, like PyTorch

    out = jax.jit(conv_autoencoder_forward)(params, x)
    out = jax.block_until_ready(out)

    ref = conv_autoencoder_ref(params, x)
    assert out.shape == ref.shape == (2, 3, 8, 12), (out.shape, ref.shape)
    max_err = float(jnp.max(jnp.abs(out - ref)))
    # bf16 operands / f32 accumulation vs. HIGHEST-precision reference
    assert max_err < 2e-2, f"max abs error too large: {max_err}"
    print("KERNEL_OK")
</pallas_src>

<mosaic_0001>
module attributes {stable_mosaic.version = 11 : i64} {
  func.func @_matmul_act_kernel(%arg0: i32, %arg1: memref<384x128xbf16, #tpu.memory_space<vmem>>, %arg2: memref<128x128xbf16, #tpu.memory_space<vmem>>, %arg3: memref<384x128xf32, #tpu.memory_space<vmem>>) attributes {dimension_semantics = [#tpu.dimension_semantics<parallel>], iteration_bounds = array<i64: 1>, scalar_prefetch = 0 : i64, scratch_operands = 0 : i64, tpu.core_type = #tpu.core_type<tc>, window_params = [{transform_indices = @transform_0, window_bounds = array<i64: 384, 128>}, {pipeline_mode = #tpu.pipeline_mode<synchronous>, transform_indices = @transform_1, window_bounds = array<i64: 128, 128>}, {transform_indices = @transform_2, window_bounds = array<i64: 384, 128>}]} {
    %c0 = arith.constant 0 : index
    %c0_0 = arith.constant 0 : index
    %0 = vector.load %arg1[%c0, %c0_0] : memref<384x128xbf16, #tpu.memory_space<vmem>>, vector<384x128xbf16>
    %c0_1 = arith.constant 0 : index
    %c0_2 = arith.constant 0 : index
    %1 = vector.load %arg2[%c0_1, %c0_2] : memref<128x128xbf16, #tpu.memory_space<vmem>>, vector<128x128xbf16>
    %cst = arith.constant dense<0.000000e+00> : vector<384x128xf32>
    %2 = tpu.matmul %0, %1, %cst {dimension_numbers = #tpu.dot_dimension_numbers<[1], [0], [0], [1], [0, 0, 1, 1], [], []>} : vector<384x128xbf16>, vector<128x128xbf16>, vector<384x128xf32> -> vector<384x128xf32>
    %3 = math.tanh %2 : vector<384x128xf32>
    %c0_3 = arith.constant 0 : index
    %c0_4 = arith.constant 0 : index
    %4 = vector.load %arg3[%c0_3, %c0_4] : memref<384x128xf32, #tpu.memory_space<vmem>>, vector<384x128xf32>
    tpu.vector_store %arg3[%c0_3, %c0_4], %3 {strides = array<i32>} : memref<384x128xf32, #tpu.memory_space<vmem>>, vector<384x128xf32>,
    return
  }
  func.func @transform_0(%arg0: i32) -> (i32, i32) {
    %c0_i32 = arith.constant 0 : i32
    %c0_i32_0 = arith.constant 0 : i32
    return %arg0, %c0_i32 : i32, i32
  }
  func.func @transform_1(%arg0: i32) -> (i32, i32) {
    %c0_i32 = arith.constant 0 : i32
    %c0_i32_0 = arith.constant 0 : i32
    %c0_i32_1 = arith.constant 0 : i32
    return %c0_i32, %c0_i32_0 : i32, i32
  }
  func.func @transform_2(%arg0: i32) -> (i32, i32) {
    %c0_i32 = arith.constant 0 : i32
    %c0_i32_0 = arith.constant 0 : i32
    return %arg0, %c0_i32 : i32, i32
  }
}

module attributes {stable_mosaic.version = 11 : i64} {
  func.func @_matmul_act_kernel(%arg0: i32, %arg1: memref<448x256xbf16, #tpu.memory_space<vmem>>, %arg2: memref<256x128xbf16, #tpu.memory_space<vmem>>, %arg3: memref<448x128xf32, #tpu.memory_space<vmem>>) attributes {dimension_semantics = [#tpu.dimension_semantics<parallel>], iteration_bounds = array<i64: 1>, scalar_prefetch = 0 : i64, scratch_operands = 0 : i64, tpu.core_type = #tpu.core_type<tc>, window_params = [{transform_indices = @transform_0, window_bounds = array<i64: 448, 256>}, {pipeline_mode = #tpu.pipeline_mode<synchronous>, transform_indices = @transform_1, window_bounds = array<i64: 256, 128>}, {transform_indices = @transform_2, window_bounds = array<i64: 448, 128>}]} {
    %c0 = arith.constant 0 : index
    %c0_0 = arith.constant 0 : index
    %0 = vector.load %arg1[%c0, %c0_0] : memref<448x256xbf16, #tpu.memory_space<vmem>>, vector<448x256xbf16>
    %c0_1 = arith.constant 0 : index
    %c0_2 = arith.constant 0 : index
    %1 = vector.load %arg2[%c0_1, %c0_2] : memref<256x128xbf16, #tpu.memory_space<vmem>>, vector<256x128xbf16>
    %cst = arith.constant dense<0.000000e+00> : vector<448x128xf32>
    %2 = tpu.matmul %0, %1, %cst {dimension_numbers = #tpu.dot_dimension_numbers<[1], [0], [0], [1], [0, 0, 1, 1], [], []>} : vector<448x256xbf16>, vector<256x128xbf16>, vector<448x128xf32> -> vector<448x128xf32>
    %3 = math.tanh %2 : vector<448x128xf32>
    %c0_3 = arith.constant 0 : index
    %c0_4 = arith.constant 0 : index
    %4 = vector.load %arg3[%c0_3, %c0_4] : memref<448x128xf32, #tpu.memory_space<vmem>>, vector<448x128xf32>
    tpu.vector_store %arg3[%c0_3, %c0_4], %3 {strides = array<i32>} : memref<448x128xf32, #tpu.memory_space<vmem>>, vector<448x128xf32>,
    return
  }
  func.func @transform_0(%arg0: i32) -> (i32, i32) {
    %c0_i32 = arith.constant 0 : i32
    %c0_i32_0 = arith.constant 0 : i32
    return %arg0, %c0_i32 : i32, i32
  }
  func.func @transform_1(%arg0: i32) -> (i32, i32) {
    %c0_i32 = arith.constant 0 : i32
    %c0_i32_0 = arith.constant 0 : i32
    %c0_i32_1 = arith.constant 0 : i32
    return %c0_i32, %c0_i32_0 : i32, i32
  }
  func.func @transform_2(%arg0: i32) -> (i32, i32) {
    %c0_i32 = arith.constant 0 : i32
    %c0_i32_0 = arith.constant 0 : i32
    return %arg0, %c0_i32 : i32, i32
  }
}

module attributes {stable_mosaic.version = 11 : i64} {
  func.func @_matmul_act_kernel(%arg0: i32, %arg1: memref<448x384xbf16, #tpu.memory_space<vmem>>, %arg2: memref<384x128xbf16, #tpu.memory_space<vmem>>, %arg3: memref<448x128xf32, #tpu.memory_space<vmem>>) attributes {dimension_semantics = [#tpu.dimension_semantics<parallel>], iteration_bounds = array<i64: 1>, scalar_prefetch = 0 : i64, scratch_operands = 0 : i64, tpu.core_type = #tpu.core_type<tc>, window_params = [{transform_indices = @transform_0, window_bounds = array<i64: 448, 384>}, {pipeline_mode = #tpu.pipeline_mode<synchronous>, transform_indices = @transform_1, window_bounds = array<i64: 384, 128>}, {transform_indices = @transform_2, window_bounds = array<i64: 448, 128>}]} {
    %c0 = arith.constant 0 : index
    %c0_0 = arith.constant 0 : index
    %0 = vector.load %arg1[%c0, %c0_0] : memref<448x384xbf16, #tpu.memory_space<vmem>>, vector<448x384xbf16>
    %c0_1 = arith.constant 0 : index
    %c0_2 = arith.constant 0 : index
    %1 = vector.load %arg2[%c0_1, %c0_2] : memref<384x128xbf16, #tpu.memory_space<vmem>>, vector<384x128xbf16>
    %cst = arith.constant dense<0.000000e+00> : vector<448x128xf32>
    %2 = tpu.matmul %0, %1, %cst {dimension_numbers = #tpu.dot_dimension_numbers<[1], [0], [0], [1], [0, 0, 1, 1], [], []>} : vector<448x384xbf16>, vector<384x128xbf16>, vector<448x128xf32> -> vector<448x128xf32>
    %3 = math.tanh %2 : vector<448x128xf32>
    %c0_3 = arith.constant 0 : index
    %c0_4 = arith.constant 0 : index
    %4 = vector.load %arg3[%c0_3, %c0_4] : memref<448x128xf32, #tpu.memory_space<vmem>>, vector<448x128xf32>
    tpu.vector_store %arg3[%c0_3, %c0_4], %3 {strides = array<i32>} : memref<448x128xf32, #tpu.memory_space<vmem>>, vector<448x128xf32>,
    return
  }
  func.func @transform_0(%arg0: i32) -> (i32, i32) {
    %c0_i32 = arith.constant 0 : i32
    %c0_i32_0 = arith.constant 0 : i32
    return %arg0, %c0_i32 : i32, i32
  }
  func.func @transform_1(%arg0: i32) -> (i32, i32) {
    %c0_i32 = arith.constant 0 : i32
    %c0_i32_0 = arith.constant 0 : i32
    %c0_i32_1 = arith.constant 0 : i32
    return %c0_i32, %c0_i32_0 : i32, i32
  }
  func.func @transform_2(%arg0: i32) -> (i32, i32) {
    %c0_i32 = arith.constant 0 : i32
    %c0_i32_0 = arith.constant 0 : i32
    return %arg0, %c0_i32 : i32, i32
  }
}

module attributes {stable_mosaic.version = 11 : i64} {
  func.func @_matmul_act_kernel(%arg0: i32, %arg1: memref<512x640xbf16, #tpu.memory_space<vmem>>, %arg2: memref<640x128xbf16, #tpu.memory_space<vmem>>, %arg3: memref<512x128xf32, #tpu.memory_space<vmem>>) attributes {dimension_semantics = [#tpu.dimension_semantics<parallel>], iteration_bounds = array<i64: 8>, scalar_prefetch = 0 : i64, scratch_operands = 0 : i64, tpu.core_type = #tpu.core_type<tc>, window_params = [{transform_indices = @transform_0, window_bounds = array<i64: 512, 640>}, {pipeline_mode = #tpu.pipeline_mode<synchronous>, transform_indices = @transform_1, window_bounds = array<i64: 640, 128>}, {transform_indices = @transform_2, window_bounds = array<i64: 512, 128>}]} {
    %c0 = arith.constant 0 : index
    %c0_0 = arith.constant 0 : index
    %0 = vector.load %arg1[%c0, %c0_0] : memref<512x640xbf16, #tpu.memory_space<vmem>>, vector<512x640xbf16>
    %c0_1 = arith.constant 0 : index
    %c0_2 = arith.constant 0 : index
    %1 = vector.load %arg2[%c0_1, %c0_2] : memref<640x128xbf16, #tpu.memory_space<vmem>>, vector<640x128xbf16>
    %cst = arith.constant dense<0.000000e+00> : vector<512x128xf32>
    %2 = tpu.matmul %0, %1, %cst {dimension_numbers = #tpu.dot_dimension_numbers<[1], [0], [0], [1], [0, 0, 1, 1], [], []>} : vector<512x640xbf16>, vector<640x128xbf16>, vector<512x128xf32> -> vector<512x128xf32>
    %cst_3 = arith.constant 0.000000e+00 : f32
    %3 = vector.broadcast %cst_3 : f32 to vector<512x128xf32>
    %4 = arith.subf %3, %2 : vector<512x128xf32>
    %5 = math.exp %4 : vector<512x128xf32>
    %cst_4 = arith.constant 1.000000e+00 : f32
    %6 = vector.broadcast %cst_4 : f32 to vector<512x128xf32>
    %7 = arith.addf %6, %5 : vector<512x128xf32>
    %8 = tpu.reciprocal %7 {approx = true} : vector<512x128xf32> -> vector<512x128xf32>
    %c0_5 = arith.constant 0 : index
    %c0_6 = arith.constant 0 : index
    %9 = vector.load %arg3[%c0_5, %c0_6] : memref<512x128xf32, #tpu.memory_space<vmem>>, vector<512x128xf32>
    tpu.vector_store %arg3[%c0_5, %c0_6], %8 {strides = array<i32>} : memref<512x128xf32, #tpu.memory_space<vmem>>, vector<512x128xf32>,
    return
  }
  func.func @transform_0(%arg0: i32) -> (i32, i32) {
    %c0_i32 = arith.constant 0 : i32
    %c0_i32_0 = arith.constant 0 : i32
    return %arg0, %c0_i32 : i32, i32
  }
  func.func @transform_1(%arg0: i32) -> (i32, i32) {
    %c0_i32 = arith.constant 0 : i32
    %c0_i32_0 = arith.constant 0 : i32
    %c0_i32_1 = arith.constant 0 : i32
    return %c0_i32, %c0_i32_0 : i32, i32
  }
  func.func @transform_2(%arg0: i32) -> (i32, i32) {
    %c0_i32 = arith.constant 0 : i32
    %c0_i32_0 = arith.constant 0 : i32
    return %arg0, %c0_i32 : i32, i32
  }
}

module attributes {stable_mosaic.version = 11 : i64} {
  func.func @_matmul_act_kernel(%arg0: i32, %arg1: memref<448x128xbf16, #tpu.memory_space<vmem>>, %arg2: memref<128x128xbf16, #tpu.memory_space<vmem>>, %arg3: memref<448x128xf32, #tpu.memory_space<vmem>>) attributes {dimension_semantics = [#tpu.dimension_semantics<parallel>], iteration_bounds = array<i64: 1>, scalar_prefetch = 0 : i64, scratch_operands = 0 : i64, tpu.core_type = #tpu.core_type<tc>, window_params = [{transform_indices = @transform_0, window_bounds = array<i64: 448, 128>}, {pipeline_mode = #tpu.pipeline_mode<synchronous>, transform_indices = @transform_1, window_bounds = array<i64: 128, 128>}, {transform_indices = @transform_2, window_bounds = array<i64: 448, 128>}]} {
    %c0 = arith.constant 0 : index
    %c0_0 = arith.constant 0 : index
    %0 = vector.load %arg1[%c0, %c0_0] : memref<448x128xbf16, #tpu.memory_space<vmem>>, vector<448x128xbf16>
    %c0_1 = arith.constant 0 : index
    %c0_2 = arith.constant 0 : index
    %1 = vector.load %arg2[%c0_1, %c0_2] : memref<128x128xbf16, #tpu.memory_space<vmem>>, vector<128x128xbf16>
    %cst = arith.constant dense<0.000000e+00> : vector<448x128xf32>
    %2 = tpu.matmul %0, %1, %cst {dimension_numbers = #tpu.dot_dimension_numbers<[1], [0], [0], [1], [0, 0, 1, 1], [], []>} : vector<448x128xbf16>, vector<128x128xbf16>, vector<448x128xf32> -> vector<448x128xf32>
    %3 = math.tanh %2 : vector<448x128xf32>
    %c0_3 = arith.constant 0 : index
    %c0_4 = arith.constant 0 : index
    %4 = vector.load %arg3[%c0_3, %c0_4] : memref<448x128xf32, #tpu.memory_space<vmem>>, vector<448x128xf32>
    tpu.vector_store %arg3[%c0_3, %c0_4], %3 {strides = array<i32>} : memref<448x128xf32, #tpu.memory_space<vmem>>, vector<448x128xf32>,
    return
  }
  func.func @transform_0(%arg0: i32) -> (i32, i32) {
    %c0_i32 = arith.constant 0 : i32
    %c0_i32_0 = arith.constant 0 : i32
    return %arg0, %c0_i32 : i32, i32
  }
  func.func @transform_1(%arg0: i32) -> (i32, i32) {
    %c0_i32 = arith.constant 0 : i32
    %c0_i32_0 = arith.constant 0 : i32
    %c0_i32_1 = arith.constant 0 : i32
    return %c0_i32, %c0_i32_0 : i32, i32
  }
  func.func @transform_2(%arg0: i32) -> (i32, i32) {
    %c0_i32 = arith.constant 0 : i32
    %c0_i32_0 = arith.constant 0 : i32
    return %arg0, %c0_i32 : i32, i32
  }
}

module attributes {stable_mosaic.version = 11 : i64} {
  func.func @_matmul_act_kernel(%arg0: i32, %arg1: memref<432x640xbf16, #tpu.memory_space<vmem>>, %arg2: memref<640x128xbf16, #tpu.memory_space<vmem>>, %arg3: memref<432x128xf32, #tpu.memory_space<vmem>>) attributes {dimension_semantics = [#tpu.dimension_semantics<parallel>], iteration_bounds = array<i64: 1>, scalar_prefetch = 0 : i64, scratch_operands = 0 : i64, tpu.core_type = #tpu.core_type<tc>, window_params = [{transform_indices = @transform_0, window_bounds = array<i64: 432, 640>}, {pipeline_mode = #tpu.pipeline_mode<synchronous>, transform_indices = @transform_1, window_bounds = array<i64: 640, 128>}, {transform_indices = @transform_2, window_bounds = array<i64: 432, 128>}]} {
    %c0 = arith.constant 0 : index
    %c0_0 = arith.constant 0 : index
    %0 = vector.load %arg1[%c0, %c0_0] : memref<432x640xbf16, #tpu.memory_space<vmem>>, vector<432x640xbf16>
    %c0_1 = arith.constant 0 : index
    %c0_2 = arith.constant 0 : index
    %1 = vector.load %arg2[%c0_1, %c0_2] : memref<640x128xbf16, #tpu.memory_space<vmem>>, vector<640x128xbf16>
    %cst = arith.constant dense<0.000000e+00> : vector<432x128xf32>
    %2 = tpu.matmul %0, %1, %cst {dimension_numbers = #tpu.dot_dimension_numbers<[1], [0], [0], [1], [0, 0, 1, 1], [], []>} : vector<432x640xbf16>, vector<640x128xbf16>, vector<432x128xf32> -> vector<432x128xf32>
    %3 = math.tanh %2 : vector<432x128xf32>
    %c0_3 = arith.constant 0 : index
    %c0_4 = arith.constant 0 : index
    %4 = vector.load %arg3[%c0_3, %c0_4] : memref<432x128xf32, #tpu.memory_space<vmem>>, vector<432x128xf32>
    tpu.vector_store %arg3[%c0_3, %c0_4], %3 {strides = array<i32>} : memref<432x128xf32, #tpu.memory_space<vmem>>, vector<432x128xf32>,
    return
  }
  func.func @transform_0(%arg0: i32) -> (i32, i32) {
    %c0_i32 = arith.constant 0 : i32
    %c0_i32_0 = arith.constant 0 : i32
    return %arg0, %c0_i32 : i32, i32
  }
  func.func @transform_1(%arg0: i32) -> (i32, i32) {
    %c0_i32 = arith.constant 0 : i32
    %c0_i32_0 = arith.constant 0 : i32
    %c0_i32_1 = arith.constant 0 : i32
    return %c0_i32, %c0_i32_0 : i32, i32
  }
  func.func @transform_2(%arg0: i32) -> (i32, i32) {
    %c0_i32 = arith.constant 0 : i32
    %c0_i32_0 = arith.constant 0 : i32
    return %arg0, %c0_i32 : i32, i32
  }
}

module attributes {stable_mosaic.version = 11 : i64} {
  func.func @_matmul_act_kernel(%arg0: i32, %arg1: memref<352x384xbf16, #tpu.memory_space<vmem>>, %arg2: memref<384x128xbf16, #tpu.memory_space<vmem>>, %arg3: memref<352x128xf32, #tpu.memory_space<vmem>>) attributes {dimension_semantics = [#tpu.dimension_semantics<parallel>], iteration_bounds = array<i64: 1>, scalar_prefetch = 0 : i64, scratch_operands = 0 : i64, tpu.core_type = #tpu.core_type<tc>, window_params = [{transform_indices = @transform_0, window_bounds = array<i64: 352, 384>}, {pipeline_mode = #tpu.pipeline_mode<synchronous>, transform_indices = @transform_1, window_bounds = array<i64: 384, 128>}, {transform_indices = @transform_2, window_bounds = array<i64: 352, 128>}]} {
    %c0 = arith.constant 0 : index
    %c0_0 = arith.constant 0 : index
    %0 = vector.load %arg1[%c0, %c0_0] : memref<352x384xbf16, #tpu.memory_space<vmem>>, vector<352x384xbf16>
    %c0_1 = arith.constant 0 : index
    %c0_2 = arith.constant 0 : index
    %1 = vector.load %arg2[%c0_1, %c0_2] : memref<384x128xbf16, #tpu.memory_space<vmem>>, vector<384x128xbf16>
    %cst = arith.constant dense<0.000000e+00> : vector<352x128xf32>
    %2 = tpu.matmul %0, %1, %cst {dimension_numbers = #tpu.dot_dimension_numbers<[1], [0], [0], [1], [0, 0, 1, 1], [], []>} : vector<352x384xbf16>, vector<384x128xbf16>, vector<352x128xf32> -> vector<352x128xf32>
    %3 = math.tanh %2 : vector<352x128xf32>
    %c0_3 = arith.constant 0 : index
    %c0_4 = arith.constant 0 : index
    %4 = vector.load %arg3[%c0_3, %c0_4] : memref<352x128xf32, #tpu.memory_space<vmem>>, vector<352x128xf32>
    tpu.vector_store %arg3[%c0_3, %c0_4], %3 {strides = array<i32>} : memref<352x128xf32, #tpu.memory_space<vmem>>, vector<352x128xf32>,
    return
  }
  func.func @transform_0(%arg0: i32) -> (i32, i32) {
    %c0_i32 = arith.constant 0 : i32
    %c0_i32_0 = arith.constant 0 : i32
    return %arg0, %c0_i32 : i32, i32
  }
  func.func @transform_1(%arg0: i32) -> (i32, i32) {
    %c0_i32 = arith.constant 0 : i32
    %c0_i32_0 = arith.constant 0 : i32
    %c0_i32_1 = arith.constant 0 : i32
    return %c0_i32, %c0_i32_0 : i32, i32
  }
  func.func @transform_2(%arg0: i32) -> (i32, i32) {
    %c0_i32 = arith.constant 0 : i32
    %c0_i32_0 = arith.constant 0 : i32
    return %arg0, %c0_i32 : i32, i32
  }
}

module attributes {stable_mosaic.version = 11 : i64} {
  func.func @_matmul_act_kernel(%arg0: i32, %arg1: memref<192x256xbf16, #tpu.memory_space<vmem>>, %arg2: memref<256x128xbf16, #tpu.memory_space<vmem>>, %arg3: memref<192x128xf32, #tpu.memory_space<vmem>>) attributes {dimension_semantics = [#tpu.dimension_semantics<parallel>], iteration_bounds = array<i64: 1>, scalar_prefetch = 0 : i64, scratch_operands = 0 : i64, tpu.core_type = #tpu.core_type<tc>, window_params = [{transform_indices = @transform_0, window_bounds = array<i64: 192, 256>}, {pipeline_mode = #tpu.pipeline_mode<synchronous>, transform_indices = @transform_1, window_bounds = array<i64: 256, 128>}, {transform_indices = @transform_2, window_bounds = array<i64: 192, 128>}]} {
    %c0 = arith.constant 0 : index
    %c0_0 = arith.constant 0 : index
    %0 = vector.load %arg1[%c0, %c0_0] : memref<192x256xbf16, #tpu.memory_space<vmem>>, vector<192x256xbf16>
    %c0_1 = arith.constant 0 : index
    %c0_2 = arith.constant 0 : index
    %1 = vector.load %arg2[%c0_1, %c0_2] : memref<256x128xbf16, #tpu.memory_space<vmem>>, vector<256x128xbf16>
    %cst = arith.constant dense<0.000000e+00> : vector<192x128xf32>
    %2 = tpu.matmul %0, %1, %cst {dimension_numbers = #tpu.dot_dimension_numbers<[1], [0], [0], [1], [0, 0, 1, 1], [], []>} : vector<192x256xbf16>, vector<256x128xbf16>, vector<192x128xf32> -> vector<192x128xf32>
    %3 = math.tanh %2 : vector<192x128xf32>
    %c0_3 = arith.constant 0 : index
    %c0_4 = arith.constant 0 : index
    %4 = vector.load %arg3[%c0_3, %c0_4] : memref<192x128xf32, #tpu.memory_space<vmem>>, vector<192x128xf32>
    tpu.vector_store %arg3[%c0_3, %c0_4], %3 {strides = array<i32>} : memref<192x128xf32, #tpu.memory_space<vmem>>, vector<192x128xf32>,
    return
  }
  func.func @transform_0(%arg0: i32) -> (i32, i32) {
    %c0_i32 = arith.constant 0 : i32
    %c0_i32_0 = arith.constant 0 : i32
    return %arg0, %c0_i32 : i32, i32
  }
  func.func @transform_1(%arg0: i32) -> (i32, i32) {
    %c0_i32 = arith.constant 0 : i32
    %c0_i32_0 = arith.constant 0 : i32
    %c0_i32_1 = arith.constant 0 : i32
    return %c0_i32, %c0_i32_0 : i32, i32
  }
  func.func @transform_2(%arg0: i32) -> (i32, i32) {
    %c0_i32 = arith.constant 0 : i32
    %c0_i32_0 = arith.constant 0 : i32
    return %arg0, %c0_i32 : i32, i32
  }
}

</mosaic_0001>

<llo_original>
// kernel: conv_autoencoder_forward.8
$region0: #{conv_autoencoder_forward.8}
  #allocation0 [shape = 'u32[]', space=smem, size = 0x4, offset = 0x4, fixed_abs, tag = 'smem constant byte address 0x4 - core index']
  #allocation1 [shape = 'u32[72,128]{1,0:T(1,128)}', space=vmem, size = 0x9000, scoped, tag = 'internal scratch']
  %s0 = inlined_call_operand.vmem [shape: bf16[384,128], index: 0, kind: input, shape index: {}]
  %s1 = inlined_call_operand.vmem [shape: bf16[128,128], index: 1, kind: input, shape index: {}]
  %s2 = inlined_call_operand.vmem [shape: f32[384,128], index: 2, kind: output, shape index: {}]
  %s3 = sld [smem:[#allocation0]]
  $region18: #{conv_autoencoder_forward.8} parent=0
    _
  %s5 = ssub.s32 1, %s3
  %s6 = scalar_select 0, %s5, %s3
  // Predicated region
  $region2: #{conv_autoencoder_forward.8} parent=0 // pred_check
    _
  $region3: #{conv_autoencoder_forward.8} parent=0 // pred_check_branch
    %8 = sbr.rel (0) target = $region5
  $region4: #{conv_autoencoder_forward.8} parent=0 // pred_region
    _
  $region5: #{conv_autoencoder_forward.8} parent=0 // pred_fallthru
    _
  // Predicated region
  $region6: #{conv_autoencoder_forward.8} parent=0 // pred_check
    _
  $region7: #{conv_autoencoder_forward.8} parent=0 // pred_check_branch
    %10 = sbr.rel (0) target = $region9
  $region8: #{conv_autoencoder_forward.8} parent=0 // pred_region
    _
  $region9: #{conv_autoencoder_forward.8} parent=0 // pred_fallthru
    _
  %v11 = vld [vmem:[%s0] sm:$0xf]
  %v12 = vld [vmem:[%s0 + $0x4] sm:$0xf]
  %v13 = vld [vmem:[%s0 + $0x8] sm:$0xf]
  %v14 = vld [vmem:[%s0 + $0xc] sm:$0xf]
  %v15 = vld [vmem:[%s0 + $0x10] sm:$0xf]
  %v16 = vld [vmem:[%s0 + $0x14] sm:$0xf]
  %v17 = vld [vmem:[%s0 + $0x18] sm:$0xf]
  %v18 = vld [vmem:[%s0 + $0x1c] sm:$0xf]
  %v19 = vld [vmem:[%s0 + $0x20] sm:$0xf]
  %v20 = vld [vmem:[%s0 + $0x24] sm:$0xf]
  %v21 = vld [vmem:[%s0 + $0x28] sm:$0xf]
  %v22 = vld [vmem:[%s0 + $0x2c] sm:$0xf]
  %v23 = vld [vmem:[%s0 + $0x30] sm:$0xf]
  %v24 = vld [vmem:[%s0 + $0x34] sm:$0xf]
  %v25 = vld [vmem:[%s0 + $0x38] sm:$0xf]
  %v26 = vld [vmem:[%s0 + $0x3c] sm:$0xf]
  %v27 = vld [vmem:[%s0 + $0x40] sm:$0xf]
  %v28 = vld [vmem:[%s0 + $0x44] sm:$0xf]
  %v29 = vld [vmem:[%s0 + $0x48] sm:$0xf]
  %v30 = vld [vmem:[%s0 + $0x4c] sm:$0xf]
  %v31 = vld [vmem:[%s0 + $0x50] sm:$0xf]
  %v32 = vld [vmem:[%s0 + $0x54] sm:$0xf]
  %v33 = vld [vmem:[%s0 + $0x58] sm:$0xf]
  %v34 = vld [vmem:[%s0 + $0x5c] sm:$0xf]
  %v35 = vld [vmem:[%s0 + $0x60] sm:$0xf]
  %v36 = vld [vmem:[%s0 + $0x64] sm:$0xf]
  %v37 = vld [vmem:[%s0 + $0x68] sm:$0xf]
  %v38 = vld [vmem:[%s0 + $0x6c] sm:$0xf]
  %v39 = vld [vmem:[%s0 + $0x70] sm:$0xf]
  %v40 = vld [vmem:[%s0 + $0x74] sm:$0xf]
  %v41 = vld [vmem:[%s0 + $0x78] sm:$0xf]
  %v42 = vld [vmem:[%s0 + $0x7c] sm:$0xf]
  %v43 = vld [vmem:[%s0 + $0x80] sm:$0xf]
  %v44 = vld [vmem:[%s0 + $0x84] sm:$0xf]
  %v45 = vld [vmem:[%s0 + $0x88] sm:$0xf]
  %v46 = vld [vmem:[%s0 + $0x8c] sm:$0xf]
  %v47 = vld [vmem:[%s0 + $0x90] sm:$0xf]
  %v48 = vld [vmem:[%s0 + $0x94] sm:$0xf]
  %v49 = vld [vmem:[%s0 + $0x98] sm:$0xf]
  %v50 = vld [vmem:[%s0 + $0x9c] sm:$0xf]
  %v51 = vld [vmem:[%s0 + $0xa0] sm:$0xf]
  %v52 = vld [vmem:[%s0 + $0xa4] sm:$0xf]
  %v53 = vld [vmem:[%s0 + $0xa8] sm:$0xf]
  %v54 = vld [vmem:[%s0 + $0xac] sm:$0xf]
  %v55 = vld [vmem:[%s0 + $0xb0] sm:$0xf]
  %v56 = vld [vmem:[%s0 + $0xb4] sm:$0xf]
  %v57 = vld [vmem:[%s0 + $0xb8] sm:$0xf]
  %v58 = vld [vmem:[%s0 + $0xbc] sm:$0xf]
  %v59 = vld [vmem:[%s1] sm:$0xf]
  %v60 = vld [vmem:[%s1 + $0x4] sm:$0xf]
  %v61 = vld [vmem:[%s1 + $0x8] sm:$0xf]
  %v62 = vld [vmem:[%s1 + $0xc] sm:$0xf]
  %v63 = vld [vmem:[%s1 + $0x10] sm:$0xf]
  %v64 = vld [vmem:[%s1 + $0x14] sm:$0xf]
  %v65 = vld [vmem:[%s1 + $0x18] sm:$0xf]
  %v66 = vld [vmem:[%s1 + $0x1c] sm:$0xf]
  %v67 = vld [vmem:[%s1 + $0x20] sm:$0xf]
  %v68 = vld [vmem:[%s1 + $0x24] sm:$0xf]
  %v69 = vld [vmem:[%s1 + $0x28] sm:$0xf]
  %v70 = vld [vmem:[%s1 + $0x2c] sm:$0xf]
  %v71 = vld [vmem:[%s1 + $0x30] sm:$0xf]
  %v72 = vld [vmem:[%s1 + $0x34] sm:$0xf]
  %v73 = vld [vmem:[%s1 + $0x38] sm:$0xf]
  %v74 = vld [vmem:[%s1 + $0x3c] sm:$0xf]
  %v123 = vunpack.c.l.b16 %v11
  %v124 = vunpack.c.l.b16 %v12
  %v125 = vunpack.c.l.b16 %v13
  %v126 = vunpack.c.l.b16 %v14
  %v127 = vunpack.c.l.b16 %v15
  %v128 = vunpack.c.l.b16 %v16
  %v129 = vunpack.c.l.b16 %v17
  %v130 = vunpack.c.l.b16 %v18
  %v131 = vunpack.c.l.b16 %v19
  %v132 = vunpack.c.l.b16 %v20
  %v133 = vunpack.c.l.b16 %v21
  %v134 = vunpack.c.l.b16 %v22
  %v135 = vunpack.c.l.b16 %v23
  %v136 = vunpack.c.l.b16 %v24
  %v137 = vunpack.c.l.b16 %v25
  %v138 = vunpack.c.l.b16 %v26
  %v139 = vunpack.c.l.b16 %v27
  %v140 = vunpack.c.l.b16 %v28
  %v141 = vunpack.c.l.b16 %v29
  %v142 = vunpack.c.l.b16 %v30
  %v143 = vunpack.c.l.b16 %v31
  %v144 = vunpack.c.l.b16 %v32
  %v145 = vunpack.c.l.b16 %v33
  %v146 = vunpack.c.l.b16 %v34
  %v147 = vunpack.c.l.b16 %v35
  %v148 = vunpack.c.l.b16 %v36
  %v149 = vunpack.c.l.b16 %v37
  %v150 = vunpack.c.l.b16 %v38
  %v151 = vunpack.c.l.b16 %v39
  %v152 = vunpack.c.l.b16 %v40
  %v153 = vunpack.c.l.b16 %v41
  %v154 = vunpack.c.l.b16 %v42
  %v155 = vunpack.c.l.b16 %v43
  %v156 = vunpack.c.l.b16 %v44
  %v157 = vunpack.c.l.b16 %v45
  %v158 = vunpack.c.l.b16 %v46
  %v159 = vunpack.c.l.b16 %v47
  %v160 = vunpack.c.l.b16 %v48
  %v161 = vunpack.c.l.b16 %v49
  %v162 = vunpack.c.l.b16 %v50
  %v163 = vunpack.c.l.b16 %v51
  %v164 = vunpack.c.l.b16 %v52
  %v165 = vunpack.c.l.b16 %v53
  %v166 = vunpack.c.l.b16 %v54
  %v167 = vunpack.c.l.b16 %v55
  %v168 = vunpack.c.l.b16 %v56
  %v169 = vunpack.c.l.b16 %v57
  %v170 = vunpack.c.l.b16 %v58
  %v171 = vpack.c.b16 %v124, %v123
  %v172 = vpack.c.b16 %v126, %v125
  %v173 = vpack.c.b16 %v128, %v127
  %v174 = vpack.c.b16 %v130, %v129
  %v175 = vpack.c.b16 %v132, %v131
  %v176 = vpack.c.b16 %v134, %v133
  %v177 = vpack.c.b16 %v136, %v135
  %v178 = vpack.c.b16 %v138, %v137
  %v179 = vpack.c.b16 %v140, %v139
  %v180 = vpack.c.b16 %v142, %v141
  %v181 = vpack.c.b16 %v144, %v143
  %v182 = vpack.c.b16 %v146, %v145
  %v183 = vpack.c.b16 %v148, %v147
  %v184 = vpack.c.b16 %v150, %v149
  %v185 = vpack.c.b16 %v152, %v151
  %v186 = vpack.c.b16 %v154, %v153
  %v187 = vpack.c.b16 %v156, %v155
  %v188 = vpack.c.b16 %v158, %v157
  %v189 = vpack.c.b16 %v160, %v159
  %v190 = vpack.c.b16 %v162, %v161
  %v191 = vpack.c.b16 %v164, %v163
  %v192 = vpack.c.b16 %v166, %v165
  %v193 = vpack.c.b16 %v168, %v167
  %v194 = vpack.c.b16 %v170, %v169
  %v235 = vunpack.c.l.b16 %v59
  %v236 = vunpack.c.l.b16 %v60
  %v237 = vunpack.c.l.b16 %v61
  %v238 = vunpack.c.l.b16 %v62
  %v239 = vunpack.c.l.b16 %v63
  %v240 = vunpack.c.l.b16 %v64
  %v241 = vunpack.c.l.b16 %v65
  %v242 = vunpack.c.l.b16 %v66
  %v243 = vunpack.c.l.b16 %v67
  %v244 = vunpack.c.l.b16 %v68
  %v245 = vunpack.c.l.b16 %v69
  %v246 = vunpack.c.l.b16 %v70
  %v247 = vunpack.c.l.b16 %v71
  %v248 = vunpack.c.l.b16 %v72
  %v249 = vunpack.c.l.b16 %v73
  %v250 = vunpack.c.l.b16 %v74
  %v251 = vpack.c.b16 %v236, %v235
  %v252 = vpack.c.b16 %v238, %v237
  %v253 = vpack.c.b16 %v240, %v239
  %v254 = vpack.c.b16 %v242, %v241
  %v255 = vpack.c.b16 %v244, %v243
  %v256 = vpack.c.b16 %v246, %v245
  %v257 = vpack.c.b16 %v248, %v247
  %v258 = vpack.c.b16 %v250, %v249
  %267 = vmatpush.bf16.msra.mxu0 %v258
  %268 = vmatpush.bf16.msra.mxu0 %v257
  %269 = vmatpush.bf16.msra.mxu0 %v256
  %270 = vmatpush.bf16.msra.mxu0 %v255
  %271 = vmatpush.bf16.msra.mxu0 %v254
  %272 = vmatpush.bf16.msra.mxu0 %v253
  %273 = vmatpush.bf16.msra.mxu0 %v252
  %274 = vmatpush.bf16.msra.mxu0 %v251
  %275 = vmatmul.bf16.gmra.mxu0 %v171
  %v276 = vpop.f32.mrf.mxu0
  %v277 = vadd.f32 0.0, %v276
  %v278 = vpop.f32.mrf.mxu0
  %v279 = vadd.f32 0.0, %v278
  %280 = vmatmul.bf16.gmra.mxu0 %v172
  %v281 = vpop.f32.mrf.mxu0
  %v282 = vadd.f32 0.0, %v281
  %v283 = vpop.f32.mrf.mxu0
  %v284 = vadd.f32 0.0, %v283
  %285 = vmatmul.bf16.gmra.mxu0 %v173
  %v286 = vpop.f32.mrf.mxu0
  %v287 = vadd.f32 0.0, %v286
  %v288 = vpop.f32.mrf.mxu0
  %v289 = vadd.f32 0.0, %v288
  %290 = vmatmul.bf16.gmra.mxu0 %v174
  %v291 = vpop.f32.mrf.mxu0
  %v292 = vadd.f32 0.0, %v291
  %v293 = vpop.f32.mrf.mxu0
  %v294 = vadd.f32 0.0, %v293
  %295 = vmatmul.bf16.gmra.mxu0 %v175
  %v296 = vpop.f32.mrf.mxu0
  %v297 = vadd.f32 0.0, %v296
  %v298 = vpop.f32.mrf.mxu0
  %v299 = vadd.f32 0.0, %v298
  %300 = vmatmul.bf16.gmra.mxu0 %v176
  %v301 = vpop.f32.mrf.mxu0
  %v302 = vadd.f32 0.0, %v301
  %v303 = vpop.f32.mrf.mxu0
  %v304 = vadd.f32 0.0, %v303
  %305 = vmatmul.bf16.gmra.mxu0 %v177
  %v306 = vpop.f32.mrf.mxu0
  %v307 = vadd.f32 0.0, %v306
  %v308 = vpop.f32.mrf.mxu0
  %v309 = vadd.f32 0.0, %v308
  %310 = vmatmul.bf16.gmra.mxu0 %v178
  %v311 = vpop.f32.mrf.mxu0
  %v312 = vadd.f32 0.0, %v311
  %v313 = vpop.f32.mrf.mxu0
  %v314 = vadd.f32 0.0, %v313
  %315 = vmatmul.bf16.gmra.mxu0 %v179
  %v316 = vpop.f32.mrf.mxu0
  %v317 = vadd.f32 0.0, %v316
  %v318 = vpop.f32.mrf.mxu0
  %v319 = vadd.f32 0.0, %v318
  %320 = vmatmul.bf16.gmra.mxu0 %v180
  %v321 = vpop.f32.mrf.mxu0
  %v322 = vadd.f32 0.0, %v321
  %v323 = vpop.f32.mrf.mxu0
  %v324 = vadd.f32 0.0, %v323
  %325 = vmatmul.bf16.gmra.mxu0 %v181
  %v326 = vpop.f32.mrf.mxu0
  %v327 = vadd.f32 0.0, %v326
  %v328 = vpop.f32.mrf.mxu0
  %v329 = vadd.f32 0.0, %v328
  %330 = vmatmul.bf16.gmra.mxu0 %v182
  %v331 = vpop.f32.mrf.mxu0
  %v332 = vadd.f32 0.0, %v331
  %v333 = vpop.f32.mrf.mxu0
  %v334 = vadd.f32 0.0, %v333
  %335 = vmatmul.bf16.gmra.mxu0 %v183
  %v336 = vpop.f32.mrf.mxu0
  %v337 = vadd.f32 0.0, %v336
  %v338 = vpop.f32.mrf.mxu0
  %v339 = vadd.f32 0.0, %v338
  %340 = vmatmul.bf16.gmra.mxu0 %v184
  %v341 = vpop.f32.mrf.mxu0
  %v342 = vadd.f32 0.0, %v341
  %v343 = vpop.f32.mrf.mxu0
  %v344 = vadd.f32 0.0, %v343
  %345 = vmatmul.bf16.gmra.mxu0 %v185
  %v346 = vpop.f32.mrf.mxu0
  %v347 = vadd.f32 0.0, %v346
  %v348 = vpop.f32.mrf.mxu0
  %v349 = vadd.f32 0.0, %v348
  %350 = vmatmul.bf16.gmra.mxu0 %v186
  %v351 = vpop.f32.mrf.mxu0
  %v352 = vadd.f32 0.0, %v351
  %v353 = vpop.f32.mrf.mxu0
  %v354 = vadd.f32 0.0, %v353
  %355 = vmatmul.bf16.gmra.mxu0 %v187
  %v356 = vpop.f32.mrf.mxu0
  %v357 = vadd.f32 0.0, %v356
  %v358 = vpop.f32.mrf.mxu0
  %v359 = vadd.f32 0.0, %v358
  %360 = vmatmul.bf16.gmra.mxu0 %v188
  %v361 = vpop.f32.mrf.mxu0
  %v362 = vadd.f32 0.0, %v361
  %v363 = vpop.f32.mrf.mxu0
  %v364 = vadd.f32 0.0, %v363
  %365 = vmatmul.bf16.gmra.mxu0 %v189
  %v366 = vpop.f32.mrf.mxu0
  %v367 = vadd.f32 0.0, %v366
  %v368 = vpop.f32.mrf.mxu0
  %v369 = vadd.f32 0.0, %v368
  %370 = vmatmul.bf16.gmra.mxu0 %v190
  %v371 = vpop.f32.mrf.mxu0
  %v372 = vadd.f32 0.0, %v371
  %v373 = vpop.f32.mrf.mxu0
  %v374 = vadd.f32 0.0, %v373
  %375 = vmatmul.bf16.gmra.mxu0 %v191
  %v376 = vpop.f32.mrf.mxu0
  %v377 = vadd.f32 0.0, %v376
  %v378 = vpop.f32.mrf.mxu0
  %v379 = vadd.f32 0.0, %v378
  %380 = vmatmul.bf16.gmra.mxu0 %v192
  %v381 = vpop.f32.mrf.mxu0
  %v382 = vadd.f32 0.0, %v381
  %v383 = vpop.f32.mrf.mxu0
  %v384 = vadd.f32 0.0, %v383
  %385 = vmatmul.bf16.gmra.mxu0 %v193
  %v386 = vpop.f32.mrf.mxu0
  %v387 = vadd.f32 0.0, %v386
  %v388 = vpop.f32.mrf.mxu0
  %v389 = vadd.f32 0.0, %v388
  %390 = vmatmul.bf16.gmra.mxu0 %v194
  %v391 = vpop.f32.mrf.mxu0
  %v392 = vadd.f32 0.0, %v391
  %v393 = vpop.f32.mrf.mxu0
  %v394 = vadd.f32 0.0, %v393
  %395 = vdwg.mxu0
  %v396 = vtanh.pop %v277
  %v397 = vtanh.pop %v279
  %v398 = vtanh.pop %v282
  %v399 = vtanh.pop %v284
  %v400 = vtanh.pop %v287
  %v401 = vtanh.pop %v289
  %v402 = vtanh.pop %v292
  %v403 = vtanh.pop %v294
  %v404 = vtanh.pop %v297
  %v405 = vtanh.pop %v299
  %v406 = vtanh.pop %v302
  %v407 = vtanh.pop %v304
  %v408 = vtanh.pop %v307
  %v409 = vtanh.pop %v309
  %v410 = vtanh.pop %v312
  %v411 = vtanh.pop %v314
  %v412 = vtanh.pop %v317
  %v413 = vtanh.pop %v319
  %v414 = vtanh.pop %v322
  %v415 = vtanh.pop %v324
  %v416 = vtanh.pop %v327
  %v417 = vtanh.pop %v329
  %v418 = vtanh.pop %v332
  %v419 = vtanh.pop %v334
  %v420 = vtanh.pop %v337
  %v421 = vtanh.pop %v339
  %v422 = vtanh.pop %v342
  %v423 = vtanh.pop %v344
  %v424 = vtanh.pop %v347
  %v425 = vtanh.pop %v349
  %v426 = vtanh.pop %v352
  %v427 = vtanh.pop %v354
  %v428 = vtanh.pop %v357
  %v429 = vtanh.pop %v359
  %v430 = vtanh.pop %v362
  %v431 = vtanh.pop %v364
  %v432 = vtanh.pop %v367
  %v433 = vtanh.pop %v369
  %v434 = vtanh.pop %v372
  %v435 = vtanh.pop %v374
  %v436 = vtanh.pop %v377
  %v437 = vtanh.pop %v379
  %v438 = vtanh.pop %v382
  %v439 = vtanh.pop %v384
  %v440 = vtanh.pop %v387
  %v441 = vtanh.pop %v389
  %v442 = vtanh.pop %v392
  %v443 = vtanh.pop %v394
  %444 = vst [vmem:[%s2] sm:$0xff] %v396
  %445 = vst [vmem:[%s2 + $0x8] sm:$0xff] %v397
  %446 = vst [vmem:[%s2 + $0x10] sm:$0xff] %v398
  %447 = vst [vmem:[%s2 + $0x18] sm:$0xff] %v399
  %448 = vst [vmem:[%s2 + $0x20] sm:$0xff] %v400
  %449 = vst [vmem:[%s2 + $0x28] sm:$0xff] %v401
  %450 = vst [vmem:[%s2 + $0x30] sm:$0xff] %v402
  %451 = vst [vmem:[%s2 + $0x38] sm:$0xff] %v403
  %452 = vst [vmem:[%s2 + $0x40] sm:$0xff] %v404
  %453 = vst [vmem:[%s2 + $0x48] sm:$0xff] %v405
  %454 = vst [vmem:[%s2 + $0x50] sm:$0xff] %v406
  %455 = vst [vmem:[%s2 + $0x58] sm:$0xff] %v407
  %456 = vst [vmem:[%s2 + $0x60] sm:$0xff] %v408
  %457 = vst [vmem:[%s2 + $0x68] sm:$0xff] %v409
  %458 = vst [vmem:[%s2 + $0x70] sm:$0xff] %v410
  %459 = vst [vmem:[%s2 + $0x78] sm:$0xff] %v411
  %460 = vst [vmem:[%s2 + $0x80] sm:$0xff] %v412
  %461 = vst [vmem:[%s2 + $0x88] sm:$0xff] %v413
  %462 = vst [vmem:[%s2 + $0x90] sm:$0xff] %v414
  %463 = vst [vmem:[%s2 + $0x98] sm:$0xff] %v415
  %464 = vst [vmem:[%s2 + $0xa0] sm:$0xff] %v416
  %465 = vst [vmem:[%s2 + $0xa8] sm:$0xff] %v417
  %466 = vst [vmem:[%s2 + $0xb0] sm:$0xff] %v418
  %467 = vst [vmem:[%s2 + $0xb8] sm:$0xff] %v419
  %468 = vst [vmem:[%s2 + $0xc0] sm:$0xff] %v420
  %469 = vst [vmem:[%s2 + $0xc8] sm:$0xff] %v421
  %470 = vst [vmem:[%s2 + $0xd0] sm:$0xff] %v422
  %471 = vst [vmem:[%s2 + $0xd8] sm:$0xff] %v423
  %472 = vst [vmem:[%s2 + $0xe0] sm:$0xff] %v424
  %473 = vst [vmem:[%s2 + $0xe8] sm:$0xff] %v425
  %474 = vst [vmem:[%s2 + $0xf0] sm:$0xff] %v426
  %475 = vst [vmem:[%s2 + $0xf8] sm:$0xff] %v427
  %476 = vst [vmem:[%s2 + $0x100] sm:$0xff] %v428
  %477 = vst [vmem:[%s2 + $0x108] sm:$0xff] %v429
  %478 = vst [vmem:[%s2 + $0x110] sm:$0xff] %v430
  %479 = vst [vmem:[%s2 + $0x118] sm:$0xff] %v431
  %480 = vst [vmem:[%s2 + $0x120] sm:$0xff] %v432
  %481 = vst [vmem:[%s2 + $0x128] sm:$0xff] %v433
  %482 = vst [vmem:[%s2 + $0x130] sm:$0xff] %v434
  %483 = vst [vmem:[%s2 + $0x138] sm:$0xff] %v435
  %484 = vst [vmem:[%s2 + $0x140] sm:$0xff] %v436
  %485 = vst [vmem:[%s2 + $0x148] sm:$0xff] %v437
  %486 = vst [vmem:[%s2 + $0x150] sm:$0xff] %v438
  %487 = vst [vmem:[%s2 + $0x158] sm:$0xff] %v439
  %488 = vst [vmem:[%s2 + $0x160] sm:$0xff] %v440
  %489 = vst [vmem:[%s2 + $0x168] sm:$0xff] %v441
  %490 = vst [vmem:[%s2 + $0x170] sm:$0xff] %v442
  %491 = vst [vmem:[%s2 + $0x178] sm:$0xff] %v443
  // Predicated region
  $region10: #{conv_autoencoder_forward.8} parent=0 // pred_check
    _
  $region11: #{conv_autoencoder_forward.8} parent=0 // pred_check_branch
    %493 = sbr.rel (0) target = $region13
  $region12: #{conv_autoencoder_forward.8} parent=0 // pred_region
    _
  $region13: #{conv_autoencoder_forward.8} parent=0 // pred_fallthru
    _
  // Predicated region
  $region14: #{conv_autoencoder_forward.8} parent=0 // pred_check
    _
  $region15: #{conv_autoencoder_forward.8} parent=0 // pred_check_branch
    %495 = sbr.rel (0) target = $region17
  $region16: #{conv_autoencoder_forward.8} parent=0 // pred_region
    _
  $region17: #{conv_autoencoder_forward.8} parent=0 // pred_fallthru
    _

// kernel: conv_autoencoder_forward.9
$region0: #{conv_autoencoder_forward.9}
  #allocation0 [shape = 'u32[]', space=smem, size = 0x4, offset = 0x4, fixed_abs, tag = 'smem constant byte address 0x4 - core index']
  #allocation1 [shape = 'u32[72,128]{1,0:T(1,128)}', space=vmem, size = 0x9000, scoped, tag = 'internal scratch']
  %s0 = inlined_call_operand.vmem [shape: bf16[448,256], index: 0, kind: input, shape index: {}]
  %s1 = inlined_call_operand.vmem [shape: bf16[256,128], index: 1, kind: input, shape index: {}]
  %s2 = inlined_call_operand.vmem [shape: f32[448,128], index: 2, kind: output, shape index: {}]
  %s3 = sld [smem:[#allocation0]]
  $region18: #{conv_autoencoder_forward.9} parent=0
    _
  %s5 = ssub.s32 1, %s3
  %s6 = scalar_select 0, %s5, %s3
  // Predicated region
  $region2: #{conv_autoencoder_forward.9} parent=0 // pred_check
    _
  $region3: #{conv_autoencoder_forward.9} parent=0 // pred_check_branch
    %8 = sbr.rel (0) target = $region5
  $region4: #{conv_autoencoder_forward.9} parent=0 // pred_region
    _
  $region5: #{conv_autoencoder_forward.9} parent=0 // pred_fallthru
    _
  // Predicated region
  $region6: #{conv_autoencoder_forward.9} parent=0 // pred_check
    _
  $region7: #{conv_autoencoder_forward.9} parent=0 // pred_check_branch
    %10 = sbr.rel (0) target = $region9
  $region8: #{conv_autoencoder_forward.9} parent=0 // pred_region
    _
  $region9: #{conv_autoencoder_forward.9} parent=0 // pred_fallthru
    _
  %v11 = vld [vmem:[%s0] sm:$0xff]
  %v12 = vld [vmem:[%s0 + $0x8] sm:$0xff]
  %v13 = vld [vmem:[%s0 + $0x10] sm:$0xff]
  %v14 = vld [vmem:[%s0 + $0x18] sm:$0xff]
  %v15 = vld [vmem:[%s0 + $0x20] sm:$0xff]
  %v16 = vld [vmem:[%s0 + $0x28] sm:$0xff]
  %v17 = vld [vmem:[%s0 + $0x30] sm:$0xff]
  %v18 = vld [vmem:[%s0 + $0x38] sm:$0xff]
  %v19 = vld [vmem:[%s0 + $0x40] sm:$0xff]
  %v20 = vld [vmem:[%s0 + $0x48] sm:$0xff]
  %v21 = vld [vmem:[%s0 + $0x50] sm:$0xff]
  %v22 = vld [vmem:[%s0 + $0x58] sm:$0xff]
  %v23 = vld [vmem:[%s0 + $0x60] sm:$0xff]
  %v24 = vld [vmem:[%s0 + $0x68] sm:$0xff]
  %v25 = vld [vmem:[%s0 + $0x70] sm:$0xff]
  %v26 = vld [vmem:[%s0 + $0x78] sm:$0xff]
  %v27 = vld [vmem:[%s0 + $0x80] sm:$0xff]
  %v28 = vld [vmem:[%s0 + $0x88] sm:$0xff]
  %v29 = vld [vmem:[%s0 + $0x90] sm:$0xff]
  %v30 = vld [vmem:[%s0 + $0x98] sm:$0xff]
  %v31 = vld [vmem:[%s0 + $0xa0] sm:$0xff]
  %v32 = vld [vmem:[%s0 + $0xa8] sm:$0xff]
  %v33 = vld [vmem:[%s0 + $0xb0] sm:$0xff]
  %v34 = vld [vmem:[%s0 + $0xb8] sm:$0xff]
  %v35 = vld [vmem:[%s0 + $0xc0] sm:$0xff]
  %v36 = vld [vmem:[%s0 + $0xc8] sm:$0xff]
  %v37 = vld [vmem:[%s0 + $0xd0] sm:$0xff]
  %v38 = vld [vmem:[%s0 + $0xd8] sm:$0xff]
  %v39 = vld [vmem:[%s0 + $0xe0] sm:$0xff]
  %v40 = vld [vmem:[%s0 + $0xe8] sm:$0xff]
  %v41 = vld [vmem:[%s0 + $0xf0] sm:$0xff]
  %v42 = vld [vmem:[%s0 + $0xf8] sm:$0xff]
  %v43 = vld [vmem:[%s0 + $0x100] sm:$0xff]
  %v44 = vld [vmem:[%s0 + $0x108] sm:$0xff]
  %v45 = vld [vmem:[%s0 + $0x110] sm:$0xff]
  %v46 = vld [vmem:[%s0 + $0x118] sm:$0xff]
  %v47 = vld [vmem:[%s0 + $0x120] sm:$0xff]
  %v48 = vld [vmem:[%s0 + $0x128] sm:$0xff]
  %v49 = vld [vmem:[%s0 + $0x130] sm:$0xff]
  %v50 = vld [vmem:[%s0 + $0x138] sm:$0xff]
  %v51 = vld [vmem:[%s0 + $0x140] sm:$0xff]
  %v52 = vld [vmem:[%s0 + $0x148] sm:$0xff]
  %v53 = vld [vmem:[%s0 + $0x150] sm:$0xff]
  %v54 = vld [vmem:[%s0 + $0x158] sm:$0xff]
  %v55 = vld [vmem:[%s0 + $0x160] sm:$0xff]
  %v56 = vld [vmem:[%s0 + $0x168] sm:$0xff]
  %v57 = vld [vmem:[%s0 + $0x170] sm:$0xff]
  %v58 = vld [vmem:[%s0 + $0x178] sm:$0xff]
  %v59 = vld [vmem:[%s0 + $0x180] sm:$0xff]
  %v60 = vld [vmem:[%s0 + $0x188] sm:$0xff]
  %v61 = vld [vmem:[%s0 + $0x190] sm:$0xff]
  %v62 = vld [vmem:[%s0 + $0x198] sm:$0xff]
  %v63 = vld [vmem:[%s0 + $0x1a0] sm:$0xff]
  %v64 = vld [vmem:[%s0 + $0x1a8] sm:$0xff]
  %v65 = vld [vmem:[%s0 + $0x1b0] sm:$0xff]
  %v66 = vld [vmem:[%s0 + $0x1b8] sm:$0xff]
  %v67 = vld [vmem:[%s1] sm:$0xf]
  %v68 = vld [vmem:[%s1 + $0x4] sm:$0xf]
  %v69 = vld [vmem:[%s1 + $0x8] sm:$0xf]
  %v70 = vld [vmem:[%s1 + $0xc] sm:$0xf]
  %v71 = vld [vmem:[%s1 + $0x10] sm:$0xf]
  %v72 = vld [vmem:[%s1 + $0x14] sm:$0xf]
  %v73 = vld [vmem:[%s1 + $0x18] sm:$0xf]
  %v74 = vld [vmem:[%s1 + $0x1c] sm:$0xf]
  %v75 = vld [vmem:[%s1 + $0x20] sm:$0xf]
  %v76 = vld [vmem:[%s1 + $0x24] sm:$0xf]
  %v77 = vld [vmem:[%s1 + $0x28] sm:$0xf]
  %v78 = vld [vmem:[%s1 + $0x2c] sm:$0xf]
  %v79 = vld [vmem:[%s1 + $0x30] sm:$0xf]
  %v80 = vld [vmem:[%s1 + $0x34] sm:$0xf]
  %v81 = vld [vmem:[%s1 + $0x38] sm:$0xf]
  %v82 = vld [vmem:[%s1 + $0x3c] sm:$0xf]
  %v83 = vld [vmem:[%s1 + $0x40] sm:$0xf]
  %v84 = vld [vmem:[%s1 + $0x44] sm:$0xf]
  %v85 = vld [vmem:[%s1 + $0x48] sm:$0xf]
  %v86 = vld [vmem:[%s1 + $0x4c] sm:$0xf]
  %v87 = vld [vmem:[%s1 + $0x50] sm:$0xf]
  %v88 = vld [vmem:[%s1 + $0x54] sm:$0xf]
  %v89 = vld [vmem:[%s1 + $0x58] sm:$0xf]
  %v90 = vld [vmem:[%s1 + $0x5c] sm:$0xf]
  %v91 = vld [vmem:[%s1 + $0x60] sm:$0xf]
  %v92 = vld [vmem:[%s1 + $0x64] sm:$0xf]
  %v93 = vld [vmem:[%s1 + $0x68] sm:$0xf]
  %v94 = vld [vmem:[%s1 + $0x6c] sm:$0xf]
  %v95 = vld [vmem:[%s1 + $0x70] sm:$0xf]
  %v96 = vld [vmem:[%s1 + $0x74] sm:$0xf]
  %v97 = vld [vmem:[%s1 + $0x78] sm:$0xf]
  %v98 = vld [vmem:[%s1 + $0x7c] sm:$0xf]
  %v155 = vunpack.c.l.b16 %v11
  %v156 = vunpack.c.h.b16 %v11
  %v157 = vunpack.c.l.b16 %v12
  %v158 = vunpack.c.h.b16 %v12
  %v159 = vunpack.c.l.b16 %v13
  %v160 = vunpack.c.h.b16 %v13
  %v161 = vunpack.c.l.b16 %v14
  %v162 = vunpack.c.h.b16 %v14
  %v163 = vunpack.c.l.b16 %v15
  %v164 = vunpack.c.h.b16 %v15
  %v165 = vunpack.c.l.b16 %v16
  %v166 = vunpack.c.h.b16 %v16
  %v167 = vunpack.c.l.b16 %v17
  %v168 = vunpack.c.h.b16 %v17
  %v169 = vunpack.c.l.b16 %v18
  %v170 = vunpack.c.h.b16 %v18
  %v171 = vunpack.c.l.b16 %v19
  %v172 = vunpack.c.h.b16 %v19
  %v173 = vunpack.c.l.b16 %v20
  %v174 = vunpack.c.h.b16 %v20
  %v175 = vunpack.c.l.b16 %v21
  %v176 = vunpack.c.h.b16 %v21
  %v177 = vunpack.c.l.b16 %v22
  %v178 = vunpack.c.h.b16 %v22
  %v179 = vunpack.c.l.b16 %v23
  %v180 = vunpack.c.h.b16 %v23
  %v181 = vunpack.c.l.b16 %v24
  %v182 = vunpack.c.h.b16 %v24
  %v183 = vunpack.c.l.b16 %v25
  %v184 = vunpack.c.h.b16 %v25
  %v185 = vunpack.c.l.b16 %v26
  %v186 = vunpack.c.h.b16 %v26
  %v187 = vunpack.c.l.b16 %v27
  %v188 = vunpack.c.h.b16 %v27
  %v189 = vunpack.c.l.b16 %v28
  %v190 = vunpack.c.h.b16 %v28
  %v191 = vunpack.c.l.b16 %v29
  %v192 = vunpack.c.h.b16 %v29
  %v193 = vunpack.c.l.b16 %v30
  %v194 = vunpack.c.h.b16 %v30
  %v195 = vunpack.c.l.b16 %v31
  %v196 = vunpack.c.h.b16 %v31
  %v197 = vunpack.c.l.b16 %v32
  %v198 = vunpack.c.h.b16 %v32
  %v199 = vunpack.c.l.b16 %v33
  %v200 = vunpack.c.h.b16 %v33
  %v201 = vunpack.c.l.b16 %v34
  %v202 = vunpack.c.h.b16 %v34
  %v203 = vunpack.c.l.b16 %v35
  %v204 = vunpack.c.h.b16 %v35
  %v205 = vunpack.c.l.b16 %v36
  %v206 = vunpack.c.h.b16 %v36
  %v207 = vunpack.c.l.b16 %v37
  %v208 = vunpack.c.h.b16 %v37
  %v209 = vunpack.c.l.b16 %v38
  %v210 = vunpack.c.h.b16 %v38
  %v211 = vunpack.c.l.b16 %v39
  %v212 = vunpack.c.h.b16 %v39
  %v213 = vunpack.c.l.b16 %v40
  %v214 = vunpack.c.h.b16 %v40
  %v215 = vunpack.c.l.b16 %v41
  %v216 = vunpack.c.h.b16 %v41
  %v217 = vunpack.c.l.b16 %v42
  %v218 = vunpack.c.h.b16 %v42
  %v219 = vunpack.c.l.b16 %v43
  %v220 = vunpack.c.h.b16 %v43
  %v221 = vunpack.c.l.b16 %v44
  %v222 = vunpack.c.h.b16 %v44
  %v223 = vunpack.c.l.b16 %v45
  %v224 = vunpack.c.h.b16 %v45
  %v225 = vunpack.c.l.b16 %v46
  %v226 = vunpack.c.h.b16 %v46
  %v227 = vunpack.c.l.b16 %v47
  %v228 = vunpack.c.h.b16 %v47
  %v229 = vunpack.c.l.b16 %v48
  %v230 = vunpack.c.h.b16 %v48
  %v231 = vunpack.c.l.b16 %v49
  %v232 = vunpack.c.h.b16 %v49
  %v233 = vunpack.c.l.b16 %v50
  %v234 = vunpack.c.h.b16 %v50
  %v235 = vunpack.c.l.b16 %v51
  %v236 = vunpack.c.h.b16 %v51
  %v237 = vunpack.c.l.b16 %v52
  %v238 = vunpack.c.h.b16 %v52
  %v239 = vunpack.c.l.b16 %v53
  %v240 = vunpack.c.h.b16 %v53
  %v241 = vunpack.c.l.b16 %v54
  %v242 = vunpack.c.h.b16 %v54
  %v243 = vunpack.c.l.b16 %v55
  %v244 = vunpack.c.h.b16 %v55
  %v245 = vunpack.c.l.b16 %v56
  %v246 = vunpack.c.h.b16 %v56
  %v247 = vunpack.c.l.b16 %v57
  %v248 = vunpack.c.h.b16 %v57
  %v249 = vunpack.c.l.b16 %v58
  %v250 = vunpack.c.h.b16 %v58
  %v251 = vunpack.c.l.b16 %v59
  %v252 = vunpack.c.h.b16 %v59
  %v253 = vunpack.c.l.b16 %v60
  %v254 = vunpack.c.h.b16 %v60
  %v255 = vunpack.c.l.b16 %v61
  %v256 = vunpack.c.h.b16 %v61
  %v257 = vunpack.c.l.b16 %v62
  %v258 = vunpack.c.h.b16 %v62
  %v259 = vunpack.c.l.b16 %v63
  %v260 = vunpack.c.h.b16 %v63
  %v261 = vunpack.c.l.b16 %v64
  %v262 = vunpack.c.h.b16 %v64
  %v263 = vunpack.c.l.b16 %v65
  %v264 = vunpack.c.h.b16 %v65
  %v265 = vunpack.c.l.b16 %v66
  %v266 = vunpack.c.h.b16 %v66
  %v267 = vpack.c.b16 %v157, %v155
  %v268 = vpack.c.b16 %v158, %v156
  %v269 = vpack.c.b16 %v161, %v159
  %v270 = vpack.c.b16 %v162, %v160
  %v271 = vpack.c.b16 %v165, %v163
  %v272 = vpack.c.b16 %v166, %v164
  %v273 = vpack.c.b16 %v169, %v167
  %v274 = vpack.c.b16 %v170, %v168
  %v275 = vpack.c.b16 %v173, %v171
  %v276 = vpack.c.b16 %v174, %v172
  %v277 = vpack.c.b16 %v177, %v175
  %v278 = vpack.c.b16 %v178, %v176
  %v279 = vpack.c.b16 %v181, %v179
  %v280 = vpack.c.b16 %v182, %v180
  %v281 = vpack.c.b16 %v185, %v183
  %v282 = vpack.c.b16 %v186, %v184
  %v283 = vpack.c.b16 %v189, %v187
  %v284 = vpack.c.b16 %v190, %v188
  %v285 = vpack.c.b16 %v193, %v191
  %v286 = vpack.c.b16 %v194, %v192
  %v287 = vpack.c.b16 %v197, %v195
  %v288 = vpack.c.b16 %v198, %v196
  %v289 = vpack.c.b16 %v201, %v199
  %v290 = vpack.c.b16 %v202, %v200
  %v291 = vpack.c.b16 %v205, %v203
  %v292 = vpack.c.b16 %v206, %v204
  %v293 = vpack.c.b16 %v209, %v207
  %v294 = vpack.c.b16 %v210, %v208
  %v295 = vpack.c.b16 %v213, %v211
  %v296 = vpack.c.b16 %v214, %v212
  %v297 = vpack.c.b16 %v217, %v215
  %v298 = vpack.c.b16 %v218, %v216
  %v299 = vpack.c.b16 %v221, %v219
  %v300 = vpack.c.b16 %v222, %v220
  %v301 = vpack.c.b16 %v225, %v223
  %v302 = vpack.c.b16 %v226, %v224
  %v303 = vpack.c.b16 %v229, %v227
  %v304 = vpack.c.b16 %v230, %v228
  %v305 = vpack.c.b16 %v233, %v231
  %v306 = vpack.c.b16 %v234, %v232
  %v307 = vpack.c.b16 %v237, %v235
  %v308 = vpack.c.b16 %v238, %v236
  %v309 = vpack.c.b16 %v241, %v239
  %v310 = vpack.c.b16 %v242, %v240
  %v311 = vpack.c.b16 %v245, %v243
  %v312 = vpack.c.b16 %v246, %v244
  %v313 = vpack.c.b16 %v249, %v247
  %v314 = vpack.c.b16 %v250, %v248
  %v315 = vpack.c.b16 %v253, %v251
  %v316 = vpack.c.b16 %v254, %v252
  %v317 = vpack.c.b16 %v257, %v255
  %v318 = vpack.c.b16 %v258, %v256
  %v319 = vpack.c.b16 %v261, %v259
  %v320 = vpack.c.b16 %v262, %v260
  %v321 = vpack.c.b16 %v265, %v263
  %v322 = vpack.c.b16 %v266, %v264
  %v411 = vunpack.c.l.b16 %v67
  %v412 = vunpack.c.l.b16 %v68
  %v413 = vunpack.c.l.b16 %v69
  %v414 = vunpack.c.l.b16 %v70
  %v415 = vunpack.c.l.b16 %v71
  %v416 = vunpack.c.l.b16 %v72
  %v417 = vunpack.c.l.b16 %v73
  %v418 = vunpack.c.l.b16 %v74
  %v419 = vunpack.c.l.b16 %v75
  %v420 = vunpack.c.l.b16 %v76
  %v421 = vunpack.c.l.b16 %v77
  %v422 = vunpack.c.l.b16 %v78
  %v423 = vunpack.c.l.b16 %v79
  %v424 = vunpack.c.l.b16 %v80
  %v425 = vunpack.c.l.b16 %v81
  %v426 = vunpack.c.l.b16 %v82
  %v427 = vunpack.c.l.b16 %v83
  %v428 = vunpack.c.l.b16 %v84
  %v429 = vunpack.c.l.b16 %v85
  %v430 = vunpack.c.l.b16 %v86
  %v431 = vunpack.c.l.b16 %v87
  %v432 = vunpack.c.l.b16 %v88
  %v433 = vunpack.c.l.b16 %v89
  %v434 = vunpack.c.l.b16 %v90
  %v435 = vunpack.c.l.b16 %v91
  %v436 = vunpack.c.l.b16 %v92
  %v437 = vunpack.c.l.b16 %v93
  %v438 = vunpack.c.l.b16 %v94
  %v439 = vunpack.c.l.b16 %v95
  %v440 = vunpack.c.l.b16 %v96
  %v441 = vunpack.c.l.b16 %v97
  %v442 = vunpack.c.l.b16 %v98
  %v443 = vpack.c.b16 %v412, %v411
  %v444 = vpack.c.b16 %v414, %v413
  %v445 = vpack.c.b16 %v416, %v415
  %v446 = vpack.c.b16 %v418, %v417
  %v447 = vpack.c.b16 %v420, %v419
  %v448 = vpack.c.b16 %v422, %v421
  %v449 = vpack.c.b16 %v424, %v423
  %v450 = vpack.c.b16 %v426, %v425
  %v451 = vpack.c.b16 %v428, %v427
  %v452 = vpack.c.b16 %v430, %v429
  %v453 = vpack.c.b16 %v432, %v431
  %v454 = vpack.c.b16 %v434, %v433
  %v455 = vpack.c.b16 %v436, %v435
  %v456 = vpack.c.b16 %v438, %v437
  %v457 = vpack.c.b16 %v440, %v439
  %v458 = vpack.c.b16 %v442, %v441
  %475 = vmatpush.bf16.msra.mxu0 %v450
  %476 = vmatpush.bf16.msra.mxu0 %v449
  %477 = vmatpush.bf16.msra.mxu0 %v448
  %478 = vmatpush.bf16.msra.mxu0 %v447
  %479 = vmatpush.bf16.msra.mxu0 %v446
  %480 = vmatpush.bf16.msra.mxu0 %v445
  %481 = vmatpush.bf16.msra.mxu0 %v444
  %482 = vmatpush.bf16.msra.mxu0 %v443
  %483 = vmatmul.bf16.gmra.mxu0 %v267
  %v484 = vpop.f32.mrf.mxu0
  %v485 = vadd.f32 0.0, %v484
  %v486 = vpop.f32.mrf.mxu0
  %v487 = vadd.f32 0.0, %v486
  %488 = vmatmul.bf16.gmra.mxu0 %v269
  %v489 = vpop.f32.mrf.mxu0
  %v490 = vadd.f32 0.0, %v489
  %v491 = vpop.f32.mrf.mxu0
  %v492 = vadd.f32 0.0, %v491
  %493 = vmatmul.bf16.gmra.mxu0 %v271
  %v494 = vpop.f32.mrf.mxu0
  %v495 = vadd.f32 0.0, %v494
  %v496 = vpop.f32.mrf.mxu0
  %v497 = vadd.f32 0.0, %v496
  %498 = vmatmul.bf16.gmra.mxu0 %v273
  %v499 = vpop.f32.mrf.mxu0
  %v500 = vadd.f32 0.0, %v499
  %v501 = vpop.f32.mrf.mxu0
  %v502 = vadd.f32 0.0, %v501
  %503 = vmatmul.bf16.gmra.mxu0 %v275
  %v504 = vpop.f32.mrf.mxu0
  %v505 = vadd.f32 0.0, %v504
  %v506 = vpop.f32.mrf.mxu0
  %v507 = vadd.f32 0.0, %v506
  %508 = vmatmul.bf16.gmra.mxu0 %v277
  %v509 = vpop.f32.mrf.mxu0
  %v510 = vadd.f32 0.0, %v509
  %v511 = vpop.f32.mrf.mxu0
  %v512 = vadd.f32 0.0, %v511
  %513 = vmatmul.bf16.gmra.mxu0 %v279
  %v514 = vpop.f32.mrf.mxu0
  %v515 = vadd.f32 0.0, %v514
  %v516 = vpop.f32.mrf.mxu0
  %v517 = vadd.f32 0.0, %v516
  %518 = vmatmul.bf16.gmra.mxu0 %v281
  %v519 = vpop.f32.mrf.mxu0
  %v520 = vadd.f32 0.0, %v519
  %v521 = vpop.f32.mrf.mxu0
  %v522 = vadd.f32 0.0, %v521
  %523 = vmatmul.bf16.gmra.mxu0 %v283
  %v524 = vpop.f32.mrf.mxu0
  %v525 = vadd.f32 0.0, %v524
  %v526 = vpop.f32.mrf.mxu0
  %v527 = vadd.f32 0.0, %v526
  %528 = vmatmul.bf16.gmra.mxu0 %v285
  %v529 = vpop.f32.mrf.mxu0
  %v530 = vadd.f32 0.0, %v529
  %v531 = vpop.f32.mrf.mxu0
  %v532 = vadd.f32 0.0, %v531
  %533 = vmatmul.bf16.gmra.mxu0 %v287
  %v534 = vpop.f32.mrf.mxu0
  %v535 = vadd.f32 0.0, %v534
  %v536 = vpop.f32.mrf.mxu0
  %v537 = vadd.f32 0.0, %v536
  %538 = vmatmul.bf16.gmra.mxu0 %v289
  %v539 = vpop.f32.mrf.mxu0
  %v540 = vadd.f32 0.0, %v539
  %v541 = vpop.f32.mrf.mxu0
  %v542 = vadd.f32 0.0, %v541
  %543 = vmatmul.bf16.gmra.mxu0 %v291
  %v544 = vpop.f32.mrf.mxu0
  %v545 = vadd.f32 0.0, %v544
  %v546 = vpop.f32.mrf.mxu0
  %v547 = vadd.f32 0.0, %v546
  %548 = vmatmul.bf16.gmra.mxu0 %v293
  %v549 = vpop.f32.mrf.mxu0
  %v550 = vadd.f32 0.0, %v549
  %v551 = vpop.f32.mrf.mxu0
  %v552 = vadd.f32 0.0, %v551
  %553 = vmatmul.bf16.gmra.mxu0 %v295
  %v554 = vpop.f32.mrf.mxu0
  %v555 = vadd.f32 0.0, %v554
  %v556 = vpop.f32.mrf.mxu0
  %v557 = vadd.f32 0.0, %v556
  %558 = vmatmul.bf16.gmra.mxu0 %v297
  %v559 = vpop.f32.mrf.mxu0
  %v560 = vadd.f32 0.0, %v559
  %v561 = vpop.f32.mrf.mxu0
  %v562 = vadd.f32 0.0, %v561
  %563 = vmatmul.bf16.gmra.mxu0 %v299
  %v564 = vpop.f32.mrf.mxu0
  %v565 = vadd.f32 0.0, %v564
  %v566 = vpop.f32.mrf.mxu0
  %v567 = vadd.f32 0.0, %v566
  %568 = vmatmul.bf16.gmra.mxu0 %v301
  %v569 = vpop.f32.mrf.mxu0
  %v570 = vadd.f32 0.0, %v569
  %v571 = vpop.f32.mrf.mxu0
  %v572 = vadd.f32 0.0, %v571
  %573 = vmatmul.bf16.gmra.mxu0 %v303
  %v574 = vpop.f32.mrf.mxu0
  %v575 = vadd.f32 0.0, %v574
  %v576 = vpop.f32.mrf.mxu0
  %v577 = vadd.f32 0.0, %v576
  %578 = vmatmul.bf16.gmra.mxu0 %v305
  %v579 = vpop.f32.mrf.mxu0
  %v580 = vadd.f32 0.0, %v579
  %v581 = vpop.f32.mrf.mxu0
  %v582 = vadd.f32 0.0, %v581
  %583 = vmatmul.bf16.gmra.mxu0 %v307
  %v584 = vpop.f32.mrf.mxu0
  %v585 = vadd.f32 0.0, %v584
  %v586 = vpop.f32.mrf.mxu0
  %v587 = vadd.f32 0.0, %v586
  %588 = vmatmul.bf16.gmra.mxu0 %v309
  %v589 = vpop.f32.mrf.mxu0
  %v590 = vadd.f32 0.0, %v589
  %v591 = vpop.f32.mrf.mxu0
  %v592 = vadd.f32 0.0, %v591
  %593 = vmatmul.bf16.gmra.mxu0 %v311
  %v594 = vpop.f32.mrf.mxu0
  %v595 = vadd.f32 0.0, %v594
  %v596 = vpop.f32.mrf.mxu0
  %v597 = vadd.f32 0.0, %v596
  %598 = vmatmul.bf16.gmra.mxu0 %v313
  %v599 = vpop.f32.mrf.mxu0
  %v600 = vadd.f32 0.0, %v599
  %v601 = vpop.f32.mrf.mxu0
  %v602 = vadd.f32 0.0, %v601
  %603 = vmatmul.bf16.gmra.mxu0 %v315
  %v604 = vpop.f32.mrf.mxu0
  %v605 = vadd.f32 0.0, %v604
  %v606 = vpop.f32.mrf.mxu0
  %v607 = vadd.f32 0.0, %v606
  %608 = vmatmul.bf16.gmra.mxu0 %v317
  %v609 = vpop.f32.mrf.mxu0
  %v610 = vadd.f32 0.0, %v609
  %v611 = vpop.f32.mrf.mxu0
  %v612 = vadd.f32 0.0, %v611
  %613 = vmatmul.bf16.gmra.mxu0 %v319
  %v614 = vpop.f32.mrf.mxu0
  %v615 = vadd.f32 0.0, %v614
  %v616 = vpop.f32.mrf.mxu0
  %v617 = vadd.f32 0.0, %v616
  %618 = vmatmul.bf16.gmra.mxu0 %v321
  %v619 = vpop.f32.mrf.mxu0
  %v620 = vadd.f32 0.0, %v619
  %v621 = vpop.f32.mrf.mxu0
  %v622 = vadd.f32 0.0, %v621
  %623 = vdwg.mxu0
  %624 = vmatpush.bf16.msra.mxu0 %v458
  %625 = vmatpush.bf16.msra.mxu0 %v457
  %626 = vmatpush.bf16.msra.mxu0 %v456
  %627 = vmatpush.bf16.msra.mxu0 %v455
  %628 = vmatpush.bf16.msra.mxu0 %v454
  %629 = vmatpush.bf16.msra.mxu0 %v453
  %630 = vmatpush.bf16.msra.mxu0 %v452
  %631 = vmatpush.bf16.msra.mxu0 %v451
  %632 = vmatmul.bf16.gmra.mxu0 %v268
  %v633 = vpop.f32.mrf.mxu0
  %v634 = vadd.f32 %v485, %v633
  %v635 = vpop.f32.mrf.mxu0
  %v636 = vadd.f32 %v487, %v635
  %637 = vmatmul.bf16.gmra.mxu0 %v270
  %v638 = vpop.f32.mrf.mxu0
  %v639 = vadd.f32 %v490, %v638
  %v640 = vpop.f32.mrf.mxu0
  %v641 = vadd.f32 %v492, %v640
  %642 = vmatmul.bf16.gmra.mxu0 %v272
  %v643 = vpop.f32.mrf.mxu0
  %v644 = vadd.f32 %v495, %v643
  %v645 = vpop.f32.mrf.mxu0
  %v646 = vadd.f32 %v497, %v645
  %647 = vmatmul.bf16.gmra.mxu0 %v274
  %v648 = vpop.f32.mrf.mxu0
  %v649 = vadd.f32 %v500, %v648
  %v650 = vpop.f32.mrf.mxu0
  %v651 = vadd.f32 %v502, %v650
  %652 = vmatmul.bf16.gmra.mxu0 %v276
  %v653 = vpop.f32.mrf.mxu0
  %v654 = vadd.f32 %v505, %v653
  %v655 = vpop.f32.mrf.mxu0
  %v656 = vadd.f32 %v507, %v655
  %657 = vmatmul.bf16.gmra.mxu0 %v278
  %v658 = vpop.f32.mrf.mxu0
  %v659 = vadd.f32 %v510, %v658
  %v660 = vpop.f32.mrf.mxu0
  %v661 = vadd.f32 %v512, %v660
  %662 = vmatmul.bf16.gmra.mxu0 %v280
  %v663 = vpop.f32.mrf.mxu0
  %v664 = vadd.f32 %v515, %v663
  %v665 = vpop.f32.mrf.mxu0
  %v666 = vadd.f32 %v517, %v665
  %667 = vmatmul.bf16.gmra.mxu0 %v282
  %v668 = vpop.f32.mrf.mxu0
  %v669 = vadd.f32 %v520, %v668
  %v670 = vpop.f32.mrf.mxu0
  %v671 = vadd.f32 %v522, %v670
  %672 = vmatmul.bf16.gmra.mxu0 %v284
  %v673 = vpop.f32.mrf.mxu0
  %v674 = vadd.f32 %v525, %v673
  %v675 = vpop.f32.mrf.mxu0
  %v676 = vadd.f32 %v527, %v675
  %677 = vmatmul.bf16.gmra.mxu0 %v286
  %v678 = vpop.f32.mrf.mxu0
  %v679 = vadd.f32 %v530, %v678
  %v680 = vpop.f32.mrf.mxu0
  %v681 = vadd.f32 %v532, %v680
  %682 = vmatmul.bf16.gmra.mxu0 %v288
  %v683 = vpop.f32.mrf.mxu0
  %v684 = vadd.f32 %v535, %v683
  %v685 = vpop.f32.mrf.mxu0
  %v686 = vadd.f32 %v537, %v685
  %687 = vmatmul.bf16.gmra.mxu0 %v290
  %v688 = vpop.f32.mrf.mxu0
  %v689 = vadd.f32 %v540, %v688
  %v690 = vpop.f32.mrf.mxu0
  %v691 = vadd.f32 %v542, %v690
  %692 = vmatmul.bf16.gmra.mxu0 %v292
  %v693 = vpop.f32.mrf.mxu0
  %v694 = vadd.f32 %v545, %v693
  %v695 = vpop.f32.mrf.mxu0
  %v696 = vadd.f32 %v547, %v695
  %697 = vmatmul.bf16.gmra.mxu0 %v294
  %v698 = vpop.f32.mrf.mxu0
  %v699 = vadd.f32 %v550, %v698
  %v700 = vpop.f32.mrf.mxu0
  %v701 = vadd.f32 %v552, %v700
  %702 = vmatmul.bf16.gmra.mxu0 %v296
  %v703 = vpop.f32.mrf.mxu0
  %v704 = vadd.f32 %v555, %v703
  %v705 = vpop.f32.mrf.mxu0
  %v706 = vadd.f32 %v557, %v705
  %707 = vmatmul.bf16.gmra.mxu0 %v298
  %v708 = vpop.f32.mrf.mxu0
  %v709 = vadd.f32 %v560, %v708
  %v710 = vpop.f32.mrf.mxu0
  %v711 = vadd.f32 %v562, %v710
  %712 = vmatmul.bf16.gmra.mxu0 %v300
  %v713 = vpop.f32.mrf.mxu0
  %v714 = vadd.f32 %v565, %v713
  %v715 = vpop.f32.mrf.mxu0
  %v716 = vadd.f32 %v567, %v715
  %717 = vmatmul.bf16.gmra.mxu0 %v302
  %v718 = vpop.f32.mrf.mxu0
  %v719 = vadd.f32 %v570, %v718
  %v720 = vpop.f32.mrf.mxu0
  %v721 = vadd.f32 %v572, %v720
  %722 = vmatmul.bf16.gmra.mxu0 %v304
  %v723 = vpop.f32.mrf.mxu0
  %v724 = vadd.f32 %v575, %v723
  %v725 = vpop.f32.mrf.mxu0
  %v726 = vadd.f32 %v577, %v725
  %727 = vmatmul.bf16.gmra.mxu0 %v306
  %v728 = vpop.f32.mrf.mxu0
  %v729 = vadd.f32 %v580, %v728
  %v730 = vpop.f32.mrf.mxu0
  %v731 = vadd.f32 %v582, %v730
  %732 = vmatmul.bf16.gmra.mxu0 %v308
  %v733 = vpop.f32.mrf.mxu0
  %v734 = vadd.f32 %v585, %v733
  %v735 = vpop.f32.mrf.mxu0
  %v736 = vadd.f32 %v587, %v735
  %737 = vmatmul.bf16.gmra.mxu0 %v310
  %v738 = vpop.f32.mrf.mxu0
  %v739 = vadd.f32 %v590, %v738
  %v740 = vpop.f32.mrf.mxu0
  %v741 = vadd.f32 %v592, %v740
  %742 = vmatmul.bf16.gmra.mxu0 %v312
  %v743 = vpop.f32.mrf.mxu0
  %v744 = vadd.f32 %v595, %v743
  %v745 = vpop.f32.mrf.mxu0
  %v746 = vadd.f32 %v597, %v745
  %747 = vmatmul.bf16.gmra.mxu0 %v314
  %v748 = vpop.f32.mrf.mxu0
  %v749 = vadd.f32 %v600, %v748
  %v750 = vpop.f32.mrf.mxu0
  %v751 = vadd.f32 %v602, %v750
  %752 = vmatmul.bf16.gmra.mxu0 %v316
  %v753 = vpop.f32.mrf.mxu0
  %v754 = vadd.f32 %v605, %v753
  %v755 = vpop.f32.mrf.mxu0
  %v756 = vadd.f32 %v607, %v755
  %757 = vmatmul.bf16.gmra.mxu0 %v318
  %v758 = vpop.f32.mrf.mxu0
  %v759 = vadd.f32 %v610, %v758
  %v760 = vpop.f32.mrf.mxu0
  %v761 = vadd.f32 %v612, %v760
  %762 = vmatmul.bf16.gmra.mxu0 %v320
  %v763 = vpop.f32.mrf.mxu0
  %v764 = vadd.f32 %v615, %v763
  %v765 = vpop.f32.mrf.mxu0
  %v766 = vadd.f32 %v617, %v765
  %767 = vmatmul.bf16.gmra.mxu0 %v322
  %v768 = vpop.f32.mrf.mxu0
  %v769 = vadd.f32 %v620, %v768
  %v770 = vpop.f32.mrf.mxu0
  %v771 = vadd.f32 %v622, %v770
  %772 = vdwg.mxu0
  %v773 = vtanh.pop %v634
  %v774 = vtanh.pop %v636
  %v775 = vtanh.pop %v639
  %v776 = vtanh.pop %v641
  %v777 = vtanh.pop %v644
  %v778 = vtanh.pop %v646
  %v779 = vtanh.pop %v649
  %v780 = vtanh.pop %v651
  %v781 = vtanh.pop %v654
  %v782 = vtanh.pop %v656
  %v783 = vtanh.pop %v659
  %v784 = vtanh.pop %v661
  %v785 = vtanh.pop %v664
  %v786 = vtanh.pop %v666
  %v787 = vtanh.pop %v669
  %v788 = vtanh.pop %v671
  %v789 = vtanh.pop %v674
  %v790 = vtanh.pop %v676
  %v791 = vtanh.pop %v679
  %v792 = vtanh.pop %v681
  %v793 = vtanh.pop %v684
  %v794 = vtanh.pop %v686
  %v795 = vtanh.pop %v689
  %v796 = vtanh.pop %v691
  %v797 = vtanh.pop %v694
  %v798 = vtanh.pop %v696
  %v799 = vtanh.pop %v699
  %v800 = vtanh.pop %v701
  %v801 = vtanh.pop %v704
  %v802 = vtanh.pop %v706
  %v803 = vtanh.pop %v709
  %v804 = vtanh.pop %v711
  %v805 = vtanh.pop %v714
  %v806 = vtanh.pop %v716
  %v807 = vtanh.pop %v719
  %v808 = vtanh.pop %v721
  %v809 = vtanh.pop %v724
  %v810 = vtanh.pop %v726
  %v811 = vtanh.pop %v729
  %v812 = vtanh.pop %v731
  %v813 = vtanh.pop %v734
  %v814 = vtanh.pop %v736
  %v815 = vtanh.pop %v739
  %v816 = vtanh.pop %v741
  %v817 = vtanh.pop %v744
  %v818 = vtanh.pop %v746
  %v819 = vtanh.pop %v749
  %v820 = vtanh.pop %v751
  %v821 = vtanh.pop %v754
  %v822 = vtanh.pop %v756
  %v823 = vtanh.pop %v759
  %v824 = vtanh.pop %v761
  %v825 = vtanh.pop %v764
  %v826 = vtanh.pop %v766
  %v827 = vtanh.pop %v769
  %v828 = vtanh.pop %v771
  %829 = vst [vmem:[%s2] sm:$0xff] %v773
  %830 = vst [vmem:[%s2 + $0x8] sm:$0xff] %v774
  %831 = vst [vmem:[%s2 + $0x10] sm:$0xff] %v775
  %832 = vst [vmem:[%s2 + $0x18] sm:$0xff] %v776
  %833 = vst [vmem:[%s2 + $0x20] sm:$0xff] %v777
  %834 = vst [vmem:[%s2 + $0x28] sm:$0xff] %v778
  %835 = vst [vmem:[%s2 + $0x30] sm:$0xff] %v779
  %836 = vst [vmem:[%s2 + $0x38] sm:$0xff] %v780
  %837 = vst [vmem:[%s2 + $0x40] sm:$0xff] %v781
  %838 = vst [vmem:[%s2 + $0x48] sm:$0xff] %v782
  %839 = vst [vmem:[%s2 + $0x50] sm:$0xff] %v783
  %840 = vst [vmem:[%s2 + $0x58] sm:$0xff] %v784
  %841 = vst [vmem:[%s2 + $0x60] sm:$0xff] %v785
  %842 = vst [vmem:[%s2 + $0x68] sm:$0xff] %v786
  %843 = vst [vmem:[%s2 + $0x70] sm:$0xff] %v787
  %844 = vst [vmem:[%s2 + $0x78] sm:$0xff] %v788
  %845 = vst [vmem:[%s2 + $0x80] sm:$0xff] %v789
  %846 = vst [vmem:[%s2 + $0x88] sm:$0xff] %v790
  %847 = vst [vmem:[%s2 + $0x90] sm:$0xff] %v791
  %848 = vst [vmem:[%s2 + $0x98] sm:$0xff] %v792
  %849 = vst [vmem:[%s2 + $0xa0] sm:$0xff] %v793
  %850 = vst [vmem:[%s2 + $0xa8] sm:$0xff] %v794
  %851 = vst [vmem:[%s2 + $0xb0] sm:$0xff] %v795
  %852 = vst [vmem:[%s2 + $0xb8] sm:$0xff] %v796
  %853 = vst [vmem:[%s2 + $0xc0] sm:$0xff] %v797
  %854 = vst [vmem:[%s2 + $0xc8] sm:$0xff] %v798
  %855 = vst [vmem:[%s2 + $0xd0] sm:$0xff] %v799
  %856 = vst [vmem:[%s2 + $0xd8] sm:$0xff] %v800
  %857 = vst [vmem:[%s2 + $0xe0] sm:$0xff] %v801
  %858 = vst [vmem:[%s2 + $0xe8] sm:$0xff] %v802
  %859 = vst [vmem:[%s2 + $0xf0] sm:$0xff] %v803
  %860 = vst [vmem:[%s2 + $0xf8] sm:$0xff] %v804
  %861 = vst [vmem:[%s2 + $0x100] sm:$0xff] %v805
  %862 = vst [vmem:[%s2 + $0x108] sm:$0xff] %v806
  %863 = vst [vmem:[%s2 + $0x110] sm:$0xff] %v807
  %864 = vst [vmem:[%s2 + $0x118] sm:$0xff] %v808
  %865 = vst [vmem:[%s2 + $0x120] sm:$0xff] %v809
  %866 = vst [vmem:[%s2 + $0x128] sm:$0xff] %v810
  %867 = vst [vmem:[%s2 + $0x130] sm:$0xff] %v811
  %868 = vst [vmem:[%s2 + $0x138] sm:$0xff] %v812
  %869 = vst [vmem:[%s2 + $0x140] sm:$0xff] %v813
  %870 = vst [vmem:[%s2 + $0x148] sm:$0xff] %v814
  %871 = vst [vmem:[%s2 + $0x150] sm:$0xff] %v815
  %872 = vst [vmem:[%s2 + $0x158] sm:$0xff] %v816
  %873 = vst [vmem:[%s2 + $0x160] sm:$0xff] %v817
  %874 = vst [vmem:[%s2 + $0x168] sm:$0xff] %v818
  %875 = vst [vmem:[%s2 + $0x170] sm:$0xff] %v819
  %876 = vst [vmem:[%s2 + $0x178] sm:$0xff] %v820
  %877 = vst [vmem:[%s2 + $0x180] sm:$0xff] %v821
  %878 = vst [vmem:[%s2 + $0x188] sm:$0xff] %v822
  %879 = vst [vmem:[%s2 + $0x190] sm:$0xff] %v823
  %880 = vst [vmem:[%s2 + $0x198] sm:$0xff] %v824
  %881 = vst [vmem:[%s2 + $0x1a0] sm:$0xff] %v825
  %882 = vst [vmem:[%s2 + $0x1a8] sm:$0xff] %v826
  %883 = vst [vmem:[%s2 + $0x1b0] sm:$0xff] %v827
  %884 = vst [vmem:[%s2 + $0x1b8] sm:$0xff] %v828
  // Predicated region
  $region10: #{conv_autoencoder_forward.9} parent=0 // pred_check
    _
  $region11: #{conv_autoencoder_forward.9} parent=0 // pred_check_branch
    %886 = sbr.rel (0) target = $region13
  $region12: #{conv_autoencoder_forward.9} parent=0 // pred_region
    _
  $region13: #{conv_autoencoder_forward.9} parent=0 // pred_fallthru
    _
  // Predicated region
  $region14: #{conv_autoencoder_forward.9} parent=0 // pred_check
    _
  $region15: #{conv_autoencoder_forward.9} parent=0 // pred_check_branch
    %888 = sbr.rel (0) target = $region17
  $region16: #{conv_autoencoder_forward.9} parent=0 // pred_region
    _
  $region17: #{conv_autoencoder_forward.9} parent=0 // pred_fallthru
    _

// kernel: conv_autoencoder_forward.10
$region0: #{conv_autoencoder_forward.10}
  #allocation0 [shape = 'u32[]', space=smem, size = 0x4, offset = 0x4, fixed_abs, tag = 'smem constant byte address 0x4 - core index']
  #allocation1 [shape = 'u32[72,128]{1,0:T(1,128)}', space=vmem, size = 0x9000, scoped, tag = 'internal scratch']
  %s0 = inlined_call_operand.vmem [shape: bf16[448,384], index: 0, kind: input, shape index: {}]
  %s1 = inlined_call_operand.vmem [shape: bf16[384,128], index: 1, kind: input, shape index: {}]
  %s2 = inlined_call_operand.vmem [shape: f32[448,128], index: 2, kind: output, shape index: {}]
  %s3 = sld [smem:[#allocation0]]
  $region18: #{conv_autoencoder_forward.10} parent=0
    _
  %s5 = ssub.s32 1, %s3
  %s6 = scalar_select 0, %s5, %s3
  // Predicated region
  $region2: #{conv_autoencoder_forward.10} parent=0 // pred_check
    _
  $region3: #{conv_autoencoder_forward.10} parent=0 // pred_check_branch
    %8 = sbr.rel (0) target = $region5
  $region4: #{conv_autoencoder_forward.10} parent=0 // pred_region
    _
  $region5: #{conv_autoencoder_forward.10} parent=0 // pred_fallthru
    _
  // Predicated region
  $region6: #{conv_autoencoder_forward.10} parent=0 // pred_check
    _
  $region7: #{conv_autoencoder_forward.10} parent=0 // pred_check_branch
    %10 = sbr.rel (0) target = $region9
  $region8: #{conv_autoencoder_forward.10} parent=0 // pred_region
    _
  $region9: #{conv_autoencoder_forward.10} parent=0 // pred_fallthru
    _
  %v11 = vld [vmem:[%s0] sm:$0xff]
  %v12 = vld [vmem:[%s0 + $0x8] sm:$0xf]
  %v13 = vld [vmem:[%s0 + $0xc] sm:$0xff]
  %v14 = vld [vmem:[%s0 + $0x14] sm:$0xf]
  %v15 = vld [vmem:[%s0 + $0x18] sm:$0xff]
  %v16 = vld [vmem:[%s0 + $0x20] sm:$0xf]
  %v17 = vld [vmem:[%s0 + $0x24] sm:$0xff]
  %v18 = vld [vmem:[%s0 + $0x2c] sm:$0xf]
  %v19 = vld [vmem:[%s0 + $0x30] sm:$0xff]
  %v20 = vld [vmem:[%s0 + $0x38] sm:$0xf]
  %v21 = vld [vmem:[%s0 + $0x3c] sm:$0xff]
  %v22 = vld [vmem:[%s0 + $0x44] sm:$0xf]
  %v23 = vld [vmem:[%s0 + $0x48] sm:$0xff]
  %v24 = vld [vmem:[%s0 + $0x50] sm:$0xf]
  %v25 = vld [vmem:[%s0 + $0x54] sm:$0xff]
  %v26 = vld [vmem:[%s0 + $0x5c] sm:$0xf]
  %v27 = vld [vmem:[%s0 + $0x60] sm:$0xff]
  %v28 = vld [vmem:[%s0 + $0x68] sm:$0xf]
  %v29 = vld [vmem:[%s0 + $0x6c] sm:$0xff]
  %v30 = vld [vmem:[%s0 + $0x74] sm:$0xf]
  %v31 = vld [vmem:[%s0 + $0x78] sm:$0xff]
  %v32 = vld [vmem:[%s0 + $0x80] sm:$0xf]
  %v33 = vld [vmem:[%s0 + $0x84] sm:$0xff]
  %v34 = vld [vmem:[%s0 + $0x8c] sm:$0xf]
  %v35 = vld [vmem:[%s0 + $0x90] sm:$0xff]
  %v36 = vld [vmem:[%s0 + $0x98] sm:$0xf]
  %v37 = vld [vmem:[%s0 + $0x9c] sm:$0xff]
  %v38 = vld [vmem:[%s0 + $0xa4] sm:$0xf]
  %v39 = vld [vmem:[%s0 + $0xa8] sm:$0xff]
  %v40 = vld [vmem:[%s0 + $0xb0] sm:$0xf]
  %v41 = vld [vmem:[%s0 + $0xb4] sm:$0xff]
  %v42 = vld [vmem:[%s0 + $0xbc] sm:$0xf]
  %v43 = vld [vmem:[%s0 + $0xc0] sm:$0xff]
  %v44 = vld [vmem:[%s0 + $0xc8] sm:$0xf]
  %v45 = vld [vmem:[%s0 + $0xcc] sm:$0xff]
  %v46 = vld [vmem:[%s0 + $0xd4] sm:$0xf]
  %v47 = vld [vmem:[%s0 + $0xd8] sm:$0xff]
  %v48 = vld [vmem:[%s0 + $0xe0] sm:$0xf]
  %v49 = vld [vmem:[%s0 + $0xe4] sm:$0xff]
  %v50 = vld [vmem:[%s0 + $0xec] sm:$0xf]
  %v51 = vld [vmem:[%s0 + $0xf0] sm:$0xff]
  %v52 = vld [vmem:[%s0 + $0xf8] sm:$0xf]
  %v53 = vld [vmem:[%s0 + $0xfc] sm:$0xff]
  %v54 = vld [vmem:[%s0 + $0x104] sm:$0xf]
  %v55 = vld [vmem:[%s0 + $0x108] sm:$0xff]
  %v56 = vld [vmem:[%s0 + $0x110] sm:$0xf]
  %v57 = vld [vmem:[%s0 + $0x114] sm:$0xff]
  %v58 = vld [vmem:[%s0 + $0x11c] sm:$0xf]
  %v59 = vld [vmem:[%s0 + $0x120] sm:$0xff]
  %v60 = vld [vmem:[%s0 + $0x128] sm:$0xf]
  %v61 = vld [vmem:[%s0 + $0x12c] sm:$0xff]
  %v62 = vld [vmem:[%s0 + $0x134] sm:$0xf]
  %v63 = vld [vmem:[%s0 + $0x138] sm:$0xff]
  %v64 = vld [vmem:[%s0 + $0x140] sm:$0xf]
  %v65 = vld [vmem:[%s0 + $0x144] sm:$0xff]
  %v66 = vld [vmem:[%s0 + $0x14c] sm:$0xf]
  %v67 = vld [vmem:[%s0 + $0x150] sm:$0xff]
  %v68 = vld [vmem:[%s0 + $0x158] sm:$0xf]
  %v69 = vld [vmem:[%s0 + $0x15c] sm:$0xff]
  %v70 = vld [vmem:[%s0 + $0x164] sm:$0xf]
  %v71 = vld [vmem:[%s0 + $0x168] sm:$0xff]
  %v72 = vld [vmem:[%s0 + $0x170] sm:$0xf]
  %v73 = vld [vmem:[%s0 + $0x174] sm:$0xff]
  %v74 = vld [vmem:[%s0 + $0x17c] sm:$0xf]
  %v75 = vld [vmem:[%s0 + $0x180] sm:$0xff]
  %v76 = vld [vmem:[%s0 + $0x188] sm:$0xf]
  %v77 = vld [vmem:[%s0 + $0x18c] sm:$0xff]
  %v78 = vld [vmem:[%s0 + $0x194] sm:$0xf]
  %v79 = vld [vmem:[%s0 + $0x198] sm:$0xff]
  %v80 = vld [vmem:[%s0 + $0x1a0] sm:$0xf]
  %v81 = vld [vmem:[%s0 + $0x1a4] sm:$0xff]
  %v82 = vld [vmem:[%s0 + $0x1ac] sm:$0xf]
  %v83 = vld [vmem:[%s0 + $0x1b0] sm:$0xff]
  %v84 = vld [vmem:[%s0 + $0x1b8] sm:$0xf]
  %v85 = vld [vmem:[%s0 + $0x1bc] sm:$0xff]
  %v86 = vld [vmem:[%s0 + $0x1c4] sm:$0xf]
  %v87 = vld [vmem:[%s0 + $0x1c8] sm:$0xff]
  %v88 = vld [vmem:[%s0 + $0x1d0] sm:$0xf]
  %v89 = vld [vmem:[%s0 + $0x1d4] sm:$0xff]
  %v90 = vld [vmem:[%s0 + $0x1dc] sm:$0xf]
  %v91 = vld [vmem:[%s0 + $0x1e0] sm:$0xff]
  %v92 = vld [vmem:[%s0 + $0x1e8] sm:$0xf]
  %v93 = vld [vmem:[%s0 + $0x1ec] sm:$0xff]
  %v94 = vld [vmem:[%s0 + $0x1f4] sm:$0xf]
  %v95 = vld [vmem:[%s0 + $0x1f8] sm:$0xff]
  %v96 = vld [vmem:[%s0 + $0x200] sm:$0xf]
  %v97 = vld [vmem:[%s0 + $0x204] sm:$0xff]
  %v98 = vld [vmem:[%s0 + $0x20c] sm:$0xf]
  %v99 = vld [vmem:[%s0 + $0x210] sm:$0xff]
  %v100 = vld [vmem:[%s0 + $0x218] sm:$0xf]
  %v101 = vld [vmem:[%s0 + $0x21c] sm:$0xff]
  %v102 = vld [vmem:[%s0 + $0x224] sm:$0xf]
  %v103 = vld [vmem:[%s0 + $0x228] sm:$0xff]
  %v104 = vld [vmem:[%s0 + $0x230] sm:$0xf]
  %v105 = vld [vmem:[%s0 + $0x234] sm:$0xff]
  %v106 = vld [vmem:[%s0 + $0x23c] sm:$0xf]
  %v107 = vld [vmem:[%s0 + $0x240] sm:$0xff]
  %v108 = vld [vmem:[%s0 + $0x248] sm:$0xf]
  %v109 = vld [vmem:[%s0 + $0x24c] sm:$0xff]
  %v110 = vld [vmem:[%s0 + $0x254] sm:$0xf]
  %v111 = vld [vmem:[%s0 + $0x258] sm:$0xff]
  %v112 = vld [vmem:[%s0 + $0x260] sm:$0xf]
  %v113 = vld [vmem:[%s0 + $0x264] sm:$0xff]
  %v114 = vld [vmem:[%s0 + $0x26c] sm:$0xf]
  %v115 = vld [vmem:[%s0 + $0x270] sm:$0xff]
  %v116 = vld [vmem:[%s0 + $0x278] sm:$0xf]
  %v117 = vld [vmem:[%s0 + $0x27c] sm:$0xff]
  %v118 = vld [vmem:[%s0 + $0x284] sm:$0xf]
  %v119 = vld [vmem:[%s0 + $0x288] sm:$0xff]
  %v120 = vld [vmem:[%s0 + $0x290] sm:$0xf]
  %v121 = vld [vmem:[%s0 + $0x294] sm:$0xff]
  %v122 = vld [vmem:[%s0 + $0x29c] sm:$0xf]
  %v123 = vld [vmem:[%s1] sm:$0xf]
  %v124 = vld [vmem:[%s1 + $0x4] sm:$0xf]
  %v125 = vld [vmem:[%s1 + $0x8] sm:$0xf]
  %v126 = vld [vmem:[%s1 + $0xc] sm:$0xf]
  %v127 = vld [vmem:[%s1 + $0x10] sm:$0xf]
  %v128 = vld [vmem:[%s1 + $0x14] sm:$0xf]
  %v129 = vld [vmem:[%s1 + $0x18] sm:$0xf]
  %v130 = vld [vmem:[%s1 + $0x1c] sm:$0xf]
  %v131 = vld [vmem:[%s1 + $0x20] sm:$0xf]
  %v132 = vld [vmem:[%s1 + $0x24] sm:$0xf]
  %v133 = vld [vmem:[%s1 + $0x28] sm:$0xf]
  %v134 = vld [vmem:[%s1 + $0x2c] sm:$0xf]
  %v135 = vld [vmem:[%s1 + $0x30] sm:$0xf]
  %v136 = vld [vmem:[%s1 + $0x34] sm:$0xf]
  %v137 = vld [vmem:[%s1 + $0x38] sm:$0xf]
  %v138 = vld [vmem:[%s1 + $0x3c] sm:$0xf]
  %v139 = vld [vmem:[%s1 + $0x40] sm:$0xf]
  %v140 = vld [vmem:[%s1 + $0x44] sm:$0xf]
  %v141 = vld [vmem:[%s1 + $0x48] sm:$0xf]
  %v142 = vld [vmem:[%s1 + $0x4c] sm:$0xf]
  %v143 = vld [vmem:[%s1 + $0x50] sm:$0xf]
  %v144 = vld [vmem:[%s1 + $0x54] sm:$0xf]
  %v145 = vld [vmem:[%s1 + $0x58] sm:$0xf]
  %v146 = vld [vmem:[%s1 + $0x5c] sm:$0xf]
  %v147 = vld [vmem:[%s1 + $0x60] sm:$0xf]
  %v148 = vld [vmem:[%s1 + $0x64] sm:$0xf]
  %v149 = vld [vmem:[%s1 + $0x68] sm:$0xf]
  %v150 = vld [vmem:[%s1 + $0x6c] sm:$0xf]
  %v151 = vld [vmem:[%s1 + $0x70] sm:$0xf]
  %v152 = vld [vmem:[%s1 + $0x74] sm:$0xf]
  %v153 = vld [vmem:[%s1 + $0x78] sm:$0xf]
  %v154 = vld [vmem:[%s1 + $0x7c] sm:$0xf]
  %v155 = vld [vmem:[%s1 + $0x80] sm:$0xf]
  %v156 = vld [vmem:[%s1 + $0x84] sm:$0xf]
  %v157 = vld [vmem:[%s1 + $0x88] sm:$0xf]
  %v158 = vld [vmem:[%s1 + $0x8c] sm:$0xf]
  %v159 = vld [vmem:[%s1 + $0x90] sm:$0xf]
  %v160 = vld [vmem:[%s1 + $0x94] sm:$0xf]
  %v161 = vld [vmem:[%s1 + $0x98] sm:$0xf]
  %v162 = vld [vmem:[%s1 + $0x9c] sm:$0xf]
  %v163 = vld [vmem:[%s1 + $0xa0] sm:$0xf]
  %v164 = vld [vmem:[%s1 + $0xa4] sm:$0xf]
  %v165 = vld [vmem:[%s1 + $0xa8] sm:$0xf]
  %v166 = vld [vmem:[%s1 + $0xac] sm:$0xf]
  %v167 = vld [vmem:[%s1 + $0xb0] sm:$0xf]
  %v168 = vld [vmem:[%s1 + $0xb4] sm:$0xf]
  %v169 = vld [vmem:[%s1 + $0xb8] sm:$0xf]
  %v170 = vld [vmem:[%s1 + $0xbc] sm:$0xf]
  %v283 = vunpack.c.l.b16 %v11
  %v284 = vunpack.c.h.b16 %v11
  %v285 = vunpack.c.l.b16 %v12
  %v286 = vunpack.c.l.b16 %v13
  %v287 = vunpack.c.h.b16 %v13
  %v288 = vunpack.c.l.b16 %v14
  %v289 = vunpack.c.l.b16 %v15
  %v290 = vunpack.c.h.b16 %v15
  %v291 = vunpack.c.l.b16 %v16
  %v292 = vunpack.c.l.b16 %v17
  %v293 = vunpack.c.h.b16 %v17
  %v294 = vunpack.c.l.b16 %v18
  %v295 = vunpack.c.l.b16 %v19
  %v296 = vunpack.c.h.b16 %v19
  %v297 = vunpack.c.l.b16 %v20
  %v298 = vunpack.c.l.b16 %v21
  %v299 = vunpack.c.h.b16 %v21
  %v300 = vunpack.c.l.b16 %v22
  %v301 = vunpack.c.l.b16 %v23
  %v302 = vunpack.c.h.b16 %v23
  %v303 = vunpack.c.l.b16 %v24
  %v304 = vunpack.c.l.b16 %v25
  %v305 = vunpack.c.h.b16 %v25
  %v306 = vunpack.c.l.b16 %v26
  %v307 = vunpack.c.l.b16 %v27
  %v308 = vunpack.c.h.b16 %v27
  %v309 = vunpack.c.l.b16 %v28
  %v310 = vunpack.c.l.b16 %v29
  %v311 = vunpack.c.h.b16 %v29
  %v312 = vunpack.c.l.b16 %v30
  %v313 = vunpack.c.l.b16 %v31
  %v314 = vunpack.c.h.b16 %v31
  %v315 = vunpack.c.l.b16 %v32
  %v316 = vunpack.c.l.b16 %v33
  %v317 = vunpack.c.h.b16 %v33
  %v318 = vunpack.c.l.b16 %v34
  %v319 = vunpack.c.l.b16 %v35
  %v320 = vunpack.c.h.b16 %v35
  %v321 = vunpack.c.l.b16 %v36
  %v322 = vunpack.c.l.b16 %v37
  %v323 = vunpack.c.h.b16 %v37
  %v324 = vunpack.c.l.b16 %v38
  %v325 = vunpack.c.l.b16 %v39
  %v326 = vunpack.c.h.b16 %v39
  %v327 = vunpack.c.l.b16 %v40
  %v328 = vunpack.c.l.b16 %v41
  %v329 = vunpack.c.h.b16 %v41
  %v330 = vunpack.c.l.b16 %v42
  %v331 = vunpack.c.l.b16 %v43
  %v332 = vunpack.c.h.b16 %v43
  %v333 = vunpack.c.l.b16 %v44
  %v334 = vunpack.c.l.b16 %v45
  %v335 = vunpack.c.h.b16 %v45
  %v336 = vunpack.c.l.b16 %v46
  %v337 = vunpack.c.l.b16 %v47
  %v338 = vunpack.c.h.b16 %v47
  %v339 = vunpack.c.l.b16 %v48
  %v340 = vunpack.c.l.b16 %v49
  %v341 = vunpack.c.h.b16 %v49
  %v342 = vunpack.c.l.b16 %v50
  %v343 = vunpack.c.l.b16 %v51
  %v344 = vunpack.c.h.b16 %v51
  %v345 = vunpack.c.l.b16 %v52
  %v346 = vunpack.c.l.b16 %v53
  %v347 = vunpack.c.h.b16 %v53
  %v348 = vunpack.c.l.b16 %v54
  %v349 = vunpack.c.l.b16 %v55
  %v350 = vunpack.c.h.b16 %v55
  %v351 = vunpack.c.l.b16 %v56
  %v352 = vunpack.c.l.b16 %v57
  %v353 = vunpack.c.h.b16 %v57
  %v354 = vunpack.c.l.b16 %v58
  %v355 = vunpack.c.l.b16 %v59
  %v356 = vunpack.c.h.b16 %v59
  %v357 = vunpack.c.l.b16 %v60
  %v358 = vunpack.c.l.b16 %v61
  %v359 = vunpack.c.h.b16 %v61
  %v360 = vunpack.c.l.b16 %v62
  %v361 = vunpack.c.l.b16 %v63
  %v362 = vunpack.c.h.b16 %v63
  %v363 = vunpack.c.l.b16 %v64
  %v364 = vunpack.c.l.b16 %v65
  %v365 = vunpack.c.h.b16 %v65
  %v366 = vunpack.c.l.b16 %v66
  %v367 = vunpack.c.l.b16 %v67
  %v368 = vunpack.c.h.b16 %v67
  %v369 = vunpack.c.l.b16 %v68
  %v370 = vunpack.c.l.b16 %v69
  %v371 = vunpack.c.h.b16 %v69
  %v372 = vunpack.c.l.b16 %v70
  %v373 = vunpack.c.l.b16 %v71
  %v374 = vunpack.c.h.b16 %v71
  %v375 = vunpack.c.l.b16 %v72
  %v376 = vunpack.c.l.b16 %v73
  %v377 = vunpack.c.h.b16 %v73
  %v378 = vunpack.c.l.b16 %v74
  %v379 = vunpack.c.l.b16 %v75
  %v380 = vunpack.c.h.b16 %v75
  %v381 = vunpack.c.l.b16 %v76
  %v382 = vunpack.c.l.b16 %v77
  %v383 = vunpack.c.h.b16 %v77
  %v384 = vunpack.c.l.b16 %v78
  %v385 = vunpack.c.l.b16 %v79
  %v386 = vunpack.c.h.b16 %v79
  %v387 = vunpack.c.l.b16 %v80
  %v388 = vunpack.c.l.b16 %v81
  %v389 = vunpack.c.h.b16 %v81
  %v390 = vunpack.c.l.b16 %v82
  %v391 = vunpack.c.l.b16 %v83
  %v392 = vunpack.c.h.b16 %v83
  %v393 = vunpack.c.l.b16 %v84
  %v394 = vunpack.c.l.b16 %v85
  %v395 = vunpack.c.h.b16 %v85
  %v396 = vunpack.c.l.b16 %v86
  %v397 = vunpack.c.l.b16 %v87
  %v398 = vunpack.c.h.b16 %v87
  %v399 = vunpack.c.l.b16 %v88
  %v400 = vunpack.c.l.b16 %v89
  %v401 = vunpack.c.h.b16 %v89
  %v402 = vunpack.c.l.b16 %v90
  %v403 = vunpack.c.l.b16 %v91
  %v404 = vunpack.c.h.b16 %v91
  %v405 = vunpack.c.l.b16 %v92
  %v406 = vunpack.c.l.b16 %v93
  %v407 = vunpack.c.h.b16 %v93
  %v408 = vunpack.c.l.b16 %v94
  %v409 = vunpack.c.l.b16 %v95
  %v410 = vunpack.c.h.b16 %v95
  %v411 = vunpack.c.l.b16 %v96
  %v412 = vunpack.c.l.b16 %v97
  %v413 = vunpack.c.h.b16 %v97
  %v414 = vunpack.c.l.b16 %v98
  %v415 = vunpack.c.l.b16 %v99
  %v416 = vunpack.c.h.b16 %v99
  %v417 = vunpack.c.l.b16 %v100
  %v418 = vunpack.c.l.b16 %v101
  %v419 = vunpack.c.h.b16 %v101
  %v420 = vunpack.c.l.b16 %v102
  %v421 = vunpack.c.l.b16 %v103
  %v422 = vunpack.c.h.b16 %v103
  %v423 = vunpack.c.l.b16 %v104
  %v424 = vunpack.c.l.b16 %v105
  %v425 = vunpack.c.h.b16 %v105
  %v426 = vunpack.c.l.b16 %v106
  %v427 = vunpack.c.l.b16 %v107
  %v428 = vunpack.c.h.b16 %v107
  %v429 = vunpack.c.l.b16 %v108
  %v430 = vunpack.c.l.b16 %v109
  %v431 = vunpack.c.h.b16 %v109
  %v432 = vunpack.c.l.b16 %v110
  %v433 = vunpack.c.l.b16 %v111
  %v434 = vunpack.c.h.b16 %v111
  %v435 = vunpack.c.l.b16 %v112
  %v436 = vunpack.c.l.b16 %v113
  %v437 = vunpack.c.h.b16 %v113
  %v438 = vunpack.c.l.b16 %v114
  %v439 = vunpack.c.l.b16 %v115
  %v440 = vunpack.c.h.b16 %v115
  %v441 = vunpack.c.l.b16 %v116
  %v442 = vunpack.c.l.b16 %v117
  %v443 = vunpack.c.h.b16 %v117
  %v444 = vunpack.c.l.b16 %v118
  %v445 = vunpack.c.l.b16 %v119
  %v446 = vunpack.c.h.b16 %v119
  %v447 = vunpack.c.l.b16 %v120
  %v448 = vunpack.c.l.b16 %v121
  %v449 = vunpack.c.h.b16 %v121
  %v450 = vunpack.c.l.b16 %v122
  %v451 = vpack.c.b16 %v286, %v283
  %v452 = vpack.c.b16 %v287, %v284
  %v453 = vpack.c.b16 %v288, %v285
  %v454 = vpack.c.b16 %v292, %v289
  %v455 = vpack.c.b16 %v293, %v290
  %v456 = vpack.c.b16 %v294, %v291
  %v457 = vpack.c.b16 %v298, %v295
  %v458 = vpack.c.b16 %v299, %v296
  %v459 = vpack.c.b16 %v300, %v297
  %v460 = vpack.c.b16 %v304, %v301
  %v461 = vpack.c.b16 %v305, %v302
  %v462 = vpack.c.b16 %v306, %v303
  %v463 = vpack.c.b16 %v310, %v307
  %v464 = vpack.c.b16 %v311, %v308
  %v465 = vpack.c.b16 %v312, %v309
  %v466 = vpack.c.b16 %v316, %v313
  %v467 = vpack.c.b16 %v317, %v314
  %v468 = vpack.c.b16 %v318, %v315
  %v469 = vpack.c.b16 %v322, %v319
  %v470 = vpack.c.b16 %v323, %v320
  %v471 = vpack.c.b16 %v324, %v321
  %v472 = vpack.c.b16 %v328, %v325
  %v473 = vpack.c.b16 %v329, %v326
  %v474 = vpack.c.b16 %v330, %v327
  %v475 = vpack.c.b16 %v334, %v331
  %v476 = vpack.c.b16 %v335, %v332
  %v477 = vpack.c.b16 %v336, %v333
  %v478 = vpack.c.b16 %v340, %v337
  %v479 = vpack.c.b16 %v341, %v338
  %v480 = vpack.c.b16 %v342, %v339
  %v481 = vpack.c.b16 %v346, %v343
  %v482 = vpack.c.b16 %v347, %v344
  %v483 = vpack.c.b16 %v348, %v345
  %v484 = vpack.c.b16 %v352, %v349
  %v485 = vpack.c.b16 %v353, %v350
  %v486 = vpack.c.b16 %v354, %v351
  %v487 = vpack.c.b16 %v358, %v355
  %v488 = vpack.c.b16 %v359, %v356
  %v489 = vpack.c.b16 %v360, %v357
  %v490 = vpack.c.b16 %v364, %v361
  %v491 = vpack.c.b16 %v365, %v362
  %v492 = vpack.c.b16 %v366, %v363
  %v493 = vpack.c.b16 %v370, %v367
  %v494 = vpack.c.b16 %v371, %v368
  %v495 = vpack.c.b16 %v372, %v369
  %v496 = vpack.c.b16 %v376, %v373
  %v497 = vpack.c.b16 %v377, %v374
  %v498 = vpack.c.b16 %v378, %v375
  %v499 = vpack.c.b16 %v382, %v379
  %v500 = vpack.c.b16 %v383, %v380
  %v501 = vpack.c.b16 %v384, %v381
  %v502 = vpack.c.b16 %v388, %v385
  %v503 = vpack.c.b16 %v389, %v386
  %v504 = vpack.c.b16 %v390, %v387
  %v505 = vpack.c.b16 %v394, %v391
  %v506 = vpack.c.b16 %v395, %v392
  %v507 = vpack.c.b16 %v396, %v393
  %v508 = vpack.c.b16 %v400, %v397
  %v509 = vpack.c.b16 %v401, %v398
  %v510 = vpack.c.b16 %v402, %v399
  %v511 = vpack.c.b16 %v406, %v403
  %v512 = vpack.c.b16 %v407, %v404
  %v513 = vpack.c.b16 %v408, %v405
  %v514 = vpack.c.b16 %v412, %v409
  %v515 = vpack.c.b16 %v413, %v410
  %v516 = vpack.c.b16 %v414, %v411
  %v517 = vpack.c.b16 %v418, %v415
  %v518 = vpack.c.b16 %v419, %v416
  %v519 = vpack.c.b16 %v420, %v417
  %v520 = vpack.c.b16 %v424, %v421
  %v521 = vpack.c.b16 %v425, %v422
  %v522 = vpack.c.b16 %v426, %v423
  %v523 = vpack.c.b16 %v430, %v427
  %v524 = vpack.c.b16 %v431, %v428
  %v525 = vpack.c.b16 %v432, %v429
  %v526 = vpack.c.b16 %v436, %v433
  %v527 = vpack.c.b16 %v437, %v434
  %v528 = vpack.c.b16 %v438, %v435
  %v529 = vpack.c.b16 %v442, %v439
  %v530 = vpack.c.b16 %v443, %v440
  %v531 = vpack.c.b16 %v444, %v441
  %v532 = vpack.c.b16 %v448, %v445
  %v533 = vpack.c.b16 %v449, %v446
  %v534 = vpack.c.b16 %v450, %v447
  %v667 = vunpack.c.l.b16 %v123
  %v668 = vunpack.c.l.b16 %v124
  %v669 = vunpack.c.l.b16 %v125
  %v670 = vunpack.c.l.b16 %v126
  %v671 = vunpack.c.l.b16 %v127
  %v672 = vunpack.c.l.b16 %v128
  %v673 = vunpack.c.l.b16 %v129
  %v674 = vunpack.c.l.b16 %v130
  %v675 = vunpack.c.l.b16 %v131
  %v676 = vunpack.c.l.b16 %v132
  %v677 = vunpack.c.l.b16 %v133
  %v678 = vunpack.c.l.b16 %v134
  %v679 = vunpack.c.l.b16 %v135
  %v680 = vunpack.c.l.b16 %v136
  %v681 = vunpack.c.l.b16 %v137
  %v682 = vunpack.c.l.b16 %v138
  %v683 = vunpack.c.l.b16 %v139
  %v684 = vunpack.c.l.b16 %v140
  %v685 = vunpack.c.l.b16 %v141
  %v686 = vunpack.c.l.b16 %v142
  %v687 = vunpack.c.l.b16 %v143
  %v688 = vunpack.c.l.b16 %v144
  %v689 = vunpack.c.l.b16 %v145
  %v690 = vunpack.c.l.b16 %v146
  %v691 = vunpack.c.l.b16 %v147
  %v692 = vunpack.c.l.b16 %v148
  %v693 = vunpack.c.l.b16 %v149
  %v694 = vunpack.c.l.b16 %v150
  %v695 = vunpack.c.l.b16 %v151
  %v696 = vunpack.c.l.b16 %v152
  %v697 = vunpack.c.l.b16 %v153
  %v698 = vunpack.c.l.b16 %v154
  %v699 = vunpack.c.l.b16 %v155
  %v700 = vunpack.c.l.b16 %v156
  %v701 = vunpack.c.l.b16 %v157
  %v702 = vunpack.c.l.b16 %v158
  %v703 = vunpack.c.l.b16 %v159
  %v704 = vunpack.c.l.b16 %v160
  %v705 = vunpack.c.l.b16 %v161
  %v706 = vunpack.c.l.b16 %v162
  %v707 = vunpack.c.l.b16 %v163
  %v708 = vunpack.c.l.b16 %v164
  %v709 = vunpack.c.l.b16 %v165
  %v710 = vunpack.c.l.b16 %v166
  %v711 = vunpack.c.l.b16 %v167
  %v712 = vunpack.c.l.b16 %v168
  %v713 = vunpack.c.l.b16 %v169
  %v714 = vunpack.c.l.b16 %v170
  %v715 = vpack.c.b16 %v668, %v667
  %v716 = vpack.c.b16 %v670, %v669
  %v717 = vpack.c.b16 %v672, %v671
  %v718 = vpack.c.b16 %v674, %v673
  %v719 = vpack.c.b16 %v676, %v675
  %v720 = vpack.c.b16 %v678, %v677
  %v721 = vpack.c.b16 %v680, %v679
  %v722 = vpack.c.b16 %v682, %v681
  %v723 = vpack.c.b16 %v684, %v683
  %v724 = vpack.c.b16 %v686, %v685
  %v725 = vpack.c.b16 %v688, %v687
  %v726 = vpack.c.b16 %v690, %v689
  %v727 = vpack.c.b16 %v692, %v691
  %v728 = vpack.c.b16 %v694, %v693
  %v729 = vpack.c.b16 %v696, %v695
  %v730 = vpack.c.b16 %v698, %v697
  %v731 = vpack.c.b16 %v700, %v699
  %v732 = vpack.c.b16 %v702, %v701
  %v733 = vpack.c.b16 %v704, %v703
  %v734 = vpack.c.b16 %v706, %v705
  %v735 = vpack.c.b16 %v708, %v707
  %v736 = vpack.c.b16 %v710, %v709
  %v737 = vpack.c.b16 %v712, %v711
  %v738 = vpack.c.b16 %v714, %v713
  %763 = vmatpush.bf16.msra.mxu0 %v722
  %764 = vmatpush.bf16.msra.mxu0 %v721
  %765 = vmatpush.bf16.msra.mxu0 %v720
  %766 = vmatpush.bf16.msra.mxu0 %v719
  %767 = vmatpush.bf16.msra.mxu0 %v718
  %768 = vmatpush.bf16.msra.mxu0 %v717
  %769 = vmatpush.bf16.msra.mxu0 %v716
  %770 = vmatpush.bf16.msra.mxu0 %v715
  %771 = vmatmul.bf16.gmra.mxu0 %v451
  %v772 = vpop.f32.mrf.mxu0
  %v773 = vadd.f32 0.0, %v772
  %v774 = vpop.f32.mrf.mxu0
  %v775 = vadd.f32 0.0, %v774
  %776 = vmatmul.bf16.gmra.mxu0 %v454
  %v777 = vpop.f32.mrf.mxu0
  %v778 = vadd.f32 0.0, %v777
  %v779 = vpop.f32.mrf.mxu0
  %v780 = vadd.f32 0.0, %v779
  %781 = vmatmul.bf16.gmra.mxu0 %v457
  %v782 = vpop.f32.mrf.mxu0
  %v783 = vadd.f32 0.0, %v782
  %v784 = vpop.f32.mrf.mxu0
  %v785 = vadd.f32 0.0, %v784
  %786 = vmatmul.bf16.gmra.mxu0 %v460
  %v787 = vpop.f32.mrf.mxu0
  %v788 = vadd.f32 0.0, %v787
  %v789 = vpop.f32.mrf.mxu0
  %v790 = vadd.f32 0.0, %v789
  %791 = vmatmul.bf16.gmra.mxu0 %v463
  %v792 = vpop.f32.mrf.mxu0
  %v793 = vadd.f32 0.0, %v792
  %v794 = vpop.f32.mrf.mxu0
  %v795 = vadd.f32 0.0, %v794
  %796 = vmatmul.bf16.gmra.mxu0 %v466
  %v797 = vpop.f32.mrf.mxu0
  %v798 = vadd.f32 0.0, %v797
  %v799 = vpop.f32.mrf.mxu0
  %v800 = vadd.f32 0.0, %v799
  %801 = vmatmul.bf16.gmra.mxu0 %v469
  %v802 = vpop.f32.mrf.mxu0
  %v803 = vadd.f32 0.0, %v802
  %v804 = vpop.f32.mrf.mxu0
  %v805 = vadd.f32 0.0, %v804
  %806 = vmatmul.bf16.gmra.mxu0 %v472
  %v807 = vpop.f32.mrf.mxu0
  %v808 = vadd.f32 0.0, %v807
  %v809 = vpop.f32.mrf.mxu0
  %v810 = vadd.f32 0.0, %v809
  %811 = vmatmul.bf16.gmra.mxu0 %v475
  %v812 = vpop.f32.mrf.mxu0
  %v813 = vadd.f32 0.0, %v812
  %v814 = vpop.f32.mrf.mxu0
  %v815 = vadd.f32 0.0, %v814
  %816 = vmatmul.bf16.gmra.mxu0 %v478
  %v817 = vpop.f32.mrf.mxu0
  %v818 = vadd.f32 0.0, %v817
  %v819 = vpop.f32.mrf.mxu0
  %v820 = vadd.f32 0.0, %v819
  %821 = vmatmul.bf16.gmra.mxu0 %v481
  %v822 = vpop.f32.mrf.mxu0
  %v823 = vadd.f32 0.0, %v822
  %v824 = vpop.f32.mrf.mxu0
  %v825 = vadd.f32 0.0, %v824
  %826 = vmatmul.bf16.gmra.mxu0 %v484
  %v827 = vpop.f32.mrf.mxu0
  %v828 = vadd.f32 0.0, %v827
  %v829 = vpop.f32.mrf.mxu0
  %v830 = vadd.f32 0.0, %v829
  %831 = vmatmul.bf16.gmra.mxu0 %v487
  %v832 = vpop.f32.mrf.mxu0
  %v833 = vadd.f32 0.0, %v832
  %v834 = vpop.f32.mrf.mxu0
  %v835 = vadd.f32 0.0, %v834
  %836 = vmatmul.bf16.gmra.mxu0 %v490
  %v837 = vpop.f32.mrf.mxu0
  %v838 = vadd.f32 0.0, %v837
  %v839 = vpop.f32.mrf.mxu0
  %v840 = vadd.f32 0.0, %v839
  %841 = vmatmul.bf16.gmra.mxu0 %v493
  %v842 = vpop.f32.mrf.mxu0
  %v843 = vadd.f32 0.0, %v842
  %v844 = vpop.f32.mrf.mxu0
  %v845 = vadd.f32 0.0, %v844
  %846 = vmatmul.bf16.gmra.mxu0 %v496
  %v847 = vpop.f32.mrf.mxu0
  %v848 = vadd.f32 0.0, %v847
  %v849 = vpop.f32.mrf.mxu0
  %v850 = vadd.f32 0.0, %v849
  %851 = vmatmul.bf16.gmra.mxu0 %v499
  %v852 = vpop.f32.mrf.mxu0
  %v853 = vadd.f32 0.0, %v852
  %v854 = vpop.f32.mrf.mxu0
  %v855 = vadd.f32 0.0, %v854
  %856 = vmatmul.bf16.gmra.mxu0 %v502
  %v857 = vpop.f32.mrf.mxu0
  %v858 = vadd.f32 0.0, %v857
  %v859 = vpop.f32.mrf.mxu0
  %v860 = vadd.f32 0.0, %v859
  %861 = vmatmul.bf16.gmra.mxu0 %v505
  %v862 = vpop.f32.mrf.mxu0
  %v863 = vadd.f32 0.0, %v862
  %v864 = vpop.f32.mrf.mxu0
  %v865 = vadd.f32 0.0, %v864
  %866 = vmatmul.bf16.gmra.mxu0 %v508
  %v867 = vpop.f32.mrf.mxu0
  %v868 = vadd.f32 0.0, %v867
  %v869 = vpop.f32.mrf.mxu0
  %v870 = vadd.f32 0.0, %v869
  %871 = vmatmul.bf16.gmra.mxu0 %v511
  %v872 = vpop.f32.mrf.mxu0
  %v873 = vadd.f32 0.0, %v872
  %v874 = vpop.f32.mrf.mxu0
  %v875 = vadd.f32 0.0, %v874
  %876 = vmatmul.bf16.gmra.mxu0 %v514
  %v877 = vpop.f32.mrf.mxu0
  %v878 = vadd.f32 0.0, %v877
  %v879 = vpop.f32.mrf.mxu0
  %v880 = vadd.f32 0.0, %v879
  %881 = vmatmul.bf16.gmra.mxu0 %v517
  %v882 = vpop.f32.mrf.mxu0
  %v883 = vadd.f32 0.0, %v882
  %v884 = vpop.f32.mrf.mxu0
  %v885 = vadd.f32 0.0, %v884
  %886 = vmatmul.bf16.gmra.mxu0 %v520
  %v887 = vpop.f32.mrf.mxu0
  %v888 = vadd.f32 0.0, %v887
  %v889 = vpop.f32.mrf.mxu0
  %v890 = vadd.f32 0.0, %v889
  %891 = vmatmul.bf16.gmra.mxu0 %v523
  %v892 = vpop.f32.mrf.mxu0
  %v893 = vadd.f32 0.0, %v892
  %v894 = vpop.f32.mrf.mxu0
  %v895 = vadd.f32 0.0, %v894
  %896 = vmatmul.bf16.gmra.mxu0 %v526
  %v897 = vpop.f32.mrf.mxu0
  %v898 = vadd.f32 0.0, %v897
  %v899 = vpop.f32.mrf.mxu0
  %v900 = vadd.f32 0.0, %v899
  %901 = vmatmul.bf16.gmra.mxu0 %v529
  %v902 = vpop.f32.mrf.mxu0
  %v903 = vadd.f32 0.0, %v902
  %v904 = vpop.f32.mrf.mxu0
  %v905 = vadd.f32 0.0, %v904
  %906 = vmatmul.bf16.gmra.mxu0 %v532
  %v907 = vpop.f32.mrf.mxu0
  %v908 = vadd.f32 0.0, %v907
  %v909 = vpop.f32.mrf.mxu0
  %v910 = vadd.f32 0.0, %v909
  %911 = vdwg.mxu0
  %912 = vmatpush.bf16.msra.mxu0 %v730
  %913 = vmatpush.bf16.msra.mxu0 %v729
  %914 = vmatpush.bf16.msra.mxu0 %v728
  %915 = vmatpush.bf16.msra.mxu0 %v727
  %916 = vmatpush.bf16.msra.mxu0 %v726
  %917 = vmatpush.bf16.msra.mxu0 %v725
  %918 = vmatpush.bf16.msra.mxu0 %v724
  %919 = vmatpush.bf16.msra.mxu0 %v723
  %920 = vmatmul.bf16.gmra.mxu0 %v452
  %v921 = vpop.f32.mrf.mxu0
  %v922 = vadd.f32 %v773, %v921
  %v923 = vpop.f32.mrf.mxu0
  %v924 = vadd.f32 %v775, %v923
  %925 = vmatmul.bf16.gmra.mxu0 %v455
  %v926 = vpop.f32.mrf.mxu0
  %v927 = vadd.f32 %v778, %v926
  %v928 = vpop.f32.mrf.mxu0
  %v929 = vadd.f32 %v780, %v928
  %930 = vmatmul.bf16.gmra.mxu0 %v458
  %v931 = vpop.f32.mrf.mxu0
  %v932 = vadd.f32 %v783, %v931
  %v933 = vpop.f32.mrf.mxu0
  %v934 = vadd.f32 %v785, %v933
  %935 = vmatmul.bf16.gmra.mxu0 %v461
  %v936 = vpop.f32.mrf.mxu0
  %v937 = vadd.f32 %v788, %v936
  %v938 = vpop.f32.mrf.mxu0
  %v939 = vadd.f32 %v790, %v938
  %940 = vmatmul.bf16.gmra.mxu0 %v464
  %v941 = vpop.f32.mrf.mxu0
  %v942 = vadd.f32 %v793, %v941
  %v943 = vpop.f32.mrf.mxu0
  %v944 = vadd.f32 %v795, %v943
  %945 = vmatmul.bf16.gmra.mxu0 %v467
  %v946 = vpop.f32.mrf.mxu0
  %v947 = vadd.f32 %v798, %v946
  %v948 = vpop.f32.mrf.mxu0
  %v949 = vadd.f32 %v800, %v948
  %950 = vmatmul.bf16.gmra.mxu0 %v470
  %v951 = vpop.f32.mrf.mxu0
  %v952 = vadd.f32 %v803, %v951
  %v953 = vpop.f32.mrf.mxu0
  %v954 = vadd.f32 %v805, %v953
  %955 = vmatmul.bf16.gmra.mxu0 %v473
  %v956 = vpop.f32.mrf.mxu0
  %v957 = vadd.f32 %v808, %v956
  %v958 = vpop.f32.mrf.mxu0
  %v959 = vadd.f32 %v810, %v958
  %960 = vmatmul.bf16.gmra.mxu0 %v476
  %v961 = vpop.f32.mrf.mxu0
  %v962 = vadd.f32 %v813, %v961
  %v963 = vpop.f32.mrf.mxu0
  %v964 = vadd.f32 %v815, %v963
  %965 = vmatmul.bf16.gmra.mxu0 %v479
  %v966 = vpop.f32.mrf.mxu0
  %v967 = vadd.f32 %v818, %v966
  %v968 = vpop.f32.mrf.mxu0
  %v969 = vadd.f32 %v820, %v968
  %970 = vmatmul.bf16.gmra.mxu0 %v482
  %v971 = vpop.f32.mrf.mxu0
  %v972 = vadd.f32 %v823, %v971
  %v973 = vpop.f32.mrf.mxu0
  %v974 = vadd.f32 %v825, %v973
  %975 = vmatmul.bf16.gmra.mxu0 %v485
  %v976 = vpop.f32.mrf.mxu0
  %v977 = vadd.f32 %v828, %v976
  %v978 = vpop.f32.mrf.mxu0
  %v979 = vadd.f32 %v830, %v978
  %980 = vmatmul.bf16.gmra.mxu0 %v488
  %v981 = vpop.f32.mrf.mxu0
  %v982 = vadd.f32 %v833, %v981
  %v983 = vpop.f32.mrf.mxu0
  %v984 = vadd.f32 %v835, %v983
  %985 = vmatmul.bf16.gmra.mxu0 %v491
  %v986 = vpop.f32.mrf.mxu0
  %v987 = vadd.f32 %v838, %v986
  %v988 = vpop.f32.mrf.mxu0
  %v989 = vadd.f32 %v840, %v988
  %990 = vmatmul.bf16.gmra.mxu0 %v494
  %v991 = vpop.f32.mrf.mxu0
  %v992 = vadd.f32 %v843, %v991
  %v993 = vpop.f32.mrf.mxu0
  %v994 = vadd.f32 %v845, %v993
  %995 = vmatmul.bf16.gmra.mxu0 %v497
  %v996 = vpop.f32.mrf.mxu0
  %v997 = vadd.f32 %v848, %v996
  %v998 = vpop.f32.mrf.mxu0
  %v999 = vadd.f32 %v850, %v998
  %1000 = vmatmul.bf16.gmra.mxu0 %v500
  %v1001 = vpop.f32.mrf.mxu0
  %v1002 = vadd.f32 %v853, %v1001
  %v1003 = vpop.f32.mrf.mxu0
  %v1004 = vadd.f32 %v855, %v1003
  %1005 = vmatmul.bf16.gmra.mxu0 %v503
  %v1006 = vpop.f32.mrf.mxu0
  %v1007 = vadd.f32 %v858, %v1006
  %v1008 = vpop.f32.mrf.mxu0
  %v1009 = vadd.f32 %v860, %v1008
  %1010 = vmatmul.bf16.gmra.mxu0 %v506
  %v1011 = vpop.f32.mrf.mxu0
  %v1012 = vadd.f32 %v863, %v1011
  %v1013 = vpop.f32.mrf.mxu0
  %v1014 = vadd.f32 %v865, %v1013
  %1015 = vmatmul.bf16.gmra.mxu0 %v509
  %v1016 = vpop.f32.mrf.mxu0
  %v1017 = vadd.f32 %v868, %v1016
  %v1018 = vpop.f32.mrf.mxu0
  %v1019 = vadd.f32 %v870, %v1018
  %1020 = vmatmul.bf16.gmra.mxu0 %v512
  %v1021 = vpop.f32.mrf.mxu0
  %v1022 = vadd.f32 %v873, %v1021
  %v1023 = vpop.f32.mrf.mxu0
  %v1024 = vadd.f32 %v875, %v1023
  %1025 = vmatmul.bf16.gmra.mxu0 %v515
  %v1026 = vpop.f32.mrf.mxu0
  %v1027 = vadd.f32 %v878, %v1026
  %v1028 = vpop.f32.mrf.mxu0
  %v1029 = vadd.f32 %v880, %v1028
  %1030 = vmatmul.bf16.gmra.mxu0 %v518
  %v1031 = vpop.f32.mrf.mxu0
  %v1032 = vadd.f32 %v883, %v1031
  %v1033 = vpop.f32.mrf.mxu0
  %v1034 = vadd.f32 %v885, %v1033
  %1035 = vmatmul.bf16.gmra.mxu0 %v521
  %v1036 = vpop.f32.mrf.mxu0
  %v1037 = vadd.f32 %v888, %v1036
  %v1038 = vpop.f32.mrf.mxu0
  %v1039 = vadd.f32 %v890, %v1038
  %1040 = vmatmul.bf16.gmra.mxu0 %v524
  %v1041 = vpop.f32.mrf.mxu0
  %v1042 = vadd.f32 %v893, %v1041
  %v1043 = vpop.f32.mrf.mxu0
  %v1044 = vadd.f32 %v895, %v1043
  %1045 = vmatmul.bf16.gmra.mxu0 %v527
  %v1046 = vpop.f32.mrf.mxu0
  %v1047 = vadd.f32 %v898, %v1046
  %v1048 = vpop.f32.mrf.mxu0
  %v1049 = vadd.f32 %v900, %v1048
  %1050 = vmatmul.bf16.gmra.mxu0 %v530
  %v1051 = vpop.f32.mrf.mxu0
  %v1052 = vadd.f32 %v903, %v1051
  %v1053 = vpop.f32.mrf.mxu0
  %v1054 = vadd.f32 %v905, %v1053
  %1055 = vmatmul.bf16.gmra.mxu0 %v533
  %v1056 = vpop.f32.mrf.mxu0
  %v1057 = vadd.f32 %v908, %v1056
  %v1058 = vpop.f32.mrf.mxu0
  %v1059 = vadd.f32 %v910, %v1058
  %1060 = vdwg.mxu0
  %1061 = vmatpush.bf16.msra.mxu0 %v738
  %1062 = vmatpush.bf16.msra.mxu0 %v737
  %1063 = vmatpush.bf16.msra.mxu0 %v736
  %1064 = vmatpush.bf16.msra.mxu0 %v735
  %1065 = vmatpush.bf16.msra.mxu0 %v734
  %1066 = vmatpush.bf16.msra.mxu0 %v733
  %1067 = vmatpush.bf16.msra.mxu0 %v732
  %1068 = vmatpush.bf16.msra.mxu0 %v731
  %1069 = vmatmul.bf16.gmra.mxu0 %v453
  %v1070 = vpop.f32.mrf.mxu0
  %v1071 = vadd.f32 %v922, %v1070
  %v1072 = vpop.f32.mrf.mxu0
  %v1073 = vadd.f32 %v924, %v1072
  %1074 = vmatmul.bf16.gmra.mxu0 %v456
  %v1075 = vpop.f32.mrf.mxu0
  %v1076 = vadd.f32 %v927, %v1075
  %v1077 = vpop.f32.mrf.mxu0
  %v1078 = vadd.f32 %v929, %v1077
  %1079 = vmatmul.bf16.gmra.mxu0 %v459
  %v1080 = vpop.f32.mrf.mxu0
  %v1081 = vadd.f32 %v932, %v1080
  %v1082 = vpop.f32.mrf.mxu0
  %v1083 = vadd.f32 %v934, %v1082
  %1084 = vmatmul.bf16.gmra.mxu0 %v462
  %v1085 = vpop.f32.mrf.mxu0
  %v1086 = vadd.f32 %v937, %v1085
  %v1087 = vpop.f32.mrf.mxu0
  %v1088 = vadd.f32 %v939, %v1087
  %1089 = vmatmul.bf16.gmra.mxu0 %v465
  %v1090 = vpop.f32.mrf.mxu0
  %v1091 = vadd.f32 %v942, %v1090
  %v1092 = vpop.f32.mrf.mxu0
  %v1093 = vadd.f32 %v944, %v1092
  %1094 = vmatmul.bf16.gmra.mxu0 %v468
  %v1095 = vpop.f32.mrf.mxu0
  %v1096 = vadd.f32 %v947, %v1095
  %v1097 = vpop.f32.mrf.mxu0
  %v1098 = vadd.f32 %v949, %v1097
  %1099 = vmatmul.bf16.gmra.mxu0 %v471
  %v1100 = vpop.f32.mrf.mxu0
  %v1101 = vadd.f32 %v952, %v1100
  %v1102 = vpop.f32.mrf.mxu0
  %v1103 = vadd.f32 %v954, %v1102
  %1104 = vmatmul.bf16.gmra.mxu0 %v474
  %v1105 = vpop.f32.mrf.mxu0
  %v1106 = vadd.f32 %v957, %v1105
  %v1107 = vpop.f32.mrf.mxu0
  %v1108 = vadd.f32 %v959, %v1107
  %1109 = vmatmul.bf16.gmra.mxu0 %v477
  %v1110 = vpop.f32.mrf.mxu0
  %v1111 = vadd.f32 %v962, %v1110
  %v1112 = vpop.f32.mrf.mxu0
  %v1113 = vadd.f32 %v964, %v1112
  %1114 = vmatmul.bf16.gmra.mxu0 %v480
  %v1115 = vpop.f32.mrf.mxu0
  %v1116 = vadd.f32 %v967, %v1115
  %v1117 = vpop.f32.mrf.mxu0
  %v1118 = vadd.f32 %v969, %v1117
  %1119 = vmatmul.bf16.gmra.mxu0 %v483
  %v1120 = vpop.f32.mrf.mxu0
  %v1121 = vadd.f32 %v972, %v1120
  %v1122 = vpop.f32.mrf.mxu0
  %v1123 = vadd.f32 %v974, %v1122
  %1124 = vmatmul.bf16.gmra.mxu0 %v486
  %v1125 = vpop.f32.mrf.mxu0
  %v1126 = vadd.f32 %v977, %v1125
  %v1127 = vpop.f32.mrf.mxu0
  %v1128 = vadd.f32 %v979, %v1127
  %1129 = vmatmul.bf16.gmra.mxu0 %v489
  %v1130 = vpop.f32.mrf.mxu0
  %v1131 = vadd.f32 %v982, %v1130
  %v1132 = vpop.f32.mrf.mxu0
  %v1133 = vadd.f32 %v984, %v1132
  %1134 = vmatmul.bf16.gmra.mxu0 %v492
  %v1135 = vpop.f32.mrf.mxu0
  %v1136 = vadd.f32 %v987, %v1135
  %v1137 = vpop.f32.mrf.mxu0
  %v1138 = vadd.f32 %v989, %v1137
  %1139 = vmatmul.bf16.gmra.mxu0 %v495
  %v1140 = vpop.f32.mrf.mxu0
  %v1141 = vadd.f32 %v992, %v1140
  %v1142 = vpop.f32.mrf.mxu0
  %v1143 = vadd.f32 %v994, %v1142
  %1144 = vmatmul.bf16.gmra.mxu0 %v498
  %v1145 = vpop.f32.mrf.mxu0
  %v1146 = vadd.f32 %v997, %v1145
  %v1147 = vpop.f32.mrf.mxu0
  %v1148 = vadd.f32 %v999, %v1147
  %1149 = vmatmul.bf16.gmra.mxu0 %v501
  %v1150 = vpop.f32.mrf.mxu0
  %v1151 = vadd.f32 %v1002, %v1150
  %v1152 = vpop.f32.mrf.mxu0
  %v1153 = vadd.f32 %v1004, %v1152
  %1154 = vmatmul.bf16.gmra.mxu0 %v504
  %v1155 = vpop.f32.mrf.mxu0
  %v1156 = vadd.f32 %v1007, %v1155
  %v1157 = vpop.f32.mrf.mxu0
  %v1158 = vadd.f32 %v1009, %v1157
  %1159 = vmatmul.bf16.gmra.mxu0 %v507
  %v1160 = vpop.f32.mrf.mxu0
  %v1161 = vadd.f32 %v1012, %v1160
  %v1162 = vpop.f32.mrf.mxu0
  %v1163 = vadd.f32 %v1014, %v1162
  %1164 = vmatmul.bf16.gmra.mxu0 %v510
  %v1165 = vpop.f32.mrf.mxu0
  %v1166 = vadd.f32 %v1017, %v1165
  %v1167 = vpop.f32.mrf.mxu0
  %v1168 = vadd.f32 %v1019, %v1167
  %1169 = vmatmul.bf16.gmra.mxu0 %v513
  %v1170 = vpop.f32.mrf.mxu0
  %v1171 = vadd.f32 %v1022, %v1170
  %v1172 = vpop.f32.mrf.mxu0
  %v1173 = vadd.f32 %v1024, %v1172
  %1174 = vmatmul.bf16.gmra.mxu0 %v516
  %v1175 = vpop.f32.mrf.mxu0
  %v1176 = vadd.f32 %v1027, %v1175
  %v1177 = vpop.f32.mrf.mxu0
  %v1178 = vadd.f32 %v1029, %v1177
  %1179 = vmatmul.bf16.gmra.mxu0 %v519
  %v1180 = vpop.f32.mrf.mxu0
  %v1181 = vadd.f32 %v1032, %v1180
  %v1182 = vpop.f32.mrf.mxu0
  %v1183 = vadd.f32 %v1034, %v1182
  %1184 = vmatmul.bf16.gmra.mxu0 %v522
  %v1185 = vpop.f32.mrf.mxu0
  %v1186 = vadd.f32 %v1037, %v1185
  %v1187 = vpop.f32.mrf.mxu0
  %v1188 = vadd.f32 %v1039, %v1187
  %1189 = vmatmul.bf16.gmra.mxu0 %v525
  %v1190 = vpop.f32.mrf.mxu0
  %v1191 = vadd.f32 %v1042, %v1190
  %v1192 = vpop.f32.mrf.mxu0
  %v1193 = vadd.f32 %v1044, %v1192
  %1194 = vmatmul.bf16.gmra.mxu0 %v528
  %v1195 = vpop.f32.mrf.mxu0
  %v1196 = vadd.f32 %v1047, %v1195
  %v1197 = vpop.f32.mrf.mxu0
  %v1198 = vadd.f32 %v1049, %v1197
  %1199 = vmatmul.bf16.gmra.mxu0 %v531
  %v1200 = vpop.f32.mrf.mxu0
  %v1201 = vadd.f32 %v1052, %v1200
  %v1202 = vpop.f32.mrf.mxu0
  %v1203 = vadd.f32 %v1054, %v1202
  %1204 = vmatmul.bf16.gmra.mxu0 %v534
  %v1205 = vpop.f32.mrf.mxu0
  %v1206 = vadd.f32 %v1057, %v1205
  %v1207 = vpop.f32.mrf.mxu0
  %v1208 = vadd.f32 %v1059, %v1207
  %1209 = vdwg.mxu0
  %v1210 = vtanh.pop %v1071
  %v1211 = vtanh.pop %v1073
  %v1212 = vtanh.pop %v1076
  %v1213 = vtanh.pop %v1078
  %v1214 = vtanh.pop %v1081
  %v1215 = vtanh.pop %v1083
  %v1216 = vtanh.pop %v1086
  %v1217 = vtanh.pop %v1088
  %v1218 = vtanh.pop %v1091
  %v1219 = vtanh.pop %v1093
  %v1220 = vtanh.pop %v1096
  %v1221 = vtanh.pop %v1098
  %v1222 = vtanh.pop %v1101
  %v1223 = vtanh.pop %v1103
  %v1224 = vtanh.pop %v1106
  %v1225 = vtanh.pop %v1108
  %v1226 = vtanh.pop %v1111
  %v1227 = vtanh.pop %v1113
  %v1228 = vtanh.pop %v1116
  %v1229 = vtanh.pop %v1118
  %v1230 = vtanh.pop %v1121
  %v1231 = vtanh.pop %v1123
  %v1232 = vtanh.pop %v1126
  %v1233 = vtanh.pop %v1128
  %v1234 = vtanh.pop %v1131
  %v1235 = vtanh.pop %v1133
  %v1236 = vtanh.pop %v1136
  %v1237 = vtanh.pop %v1138
  %v1238 = vtanh.pop %v1141
  %v1239 = vtanh.pop %v1143
  %v1240 = vtanh.pop %v1146
  %v1241 = vtanh.pop %v1148
  %v1242 = vtanh.pop %v1151
  %v1243 = vtanh.pop %v1153
  %v1244 = vtanh.pop %v1156
  %v1245 = vtanh.pop %v1158
  %v1246 = vtanh.pop %v1161
  %v1247 = vtanh.pop %v1163
  %v1248 = vtanh.pop %v1166
  %v1249 = vtanh.pop %v1168
  %v1250 = vtanh.pop %v1171
  %v1251 = vtanh.pop %v1173
  %v1252 = vtanh.pop %v1176
  %v1253 = vtanh.pop %v1178
  %v1254 = vtanh.pop %v1181
  %v1255 = vtanh.pop %v1183
  %v1256 = vtanh.pop %v1186
  %v1257 = vtanh.pop %v1188
  %v1258 = vtanh.pop %v1191
  %v1259 = vtanh.pop %v1193
  %v1260 = vtanh.pop %v1196
  %v1261 = vtanh.pop %v1198
  %v1262 = vtanh.pop %v1201
  %v1263 = vtanh.pop %v1203
  %v1264 = vtanh.pop %v1206
  %v1265 = vtanh.pop %v1208
  %1266 = vst [vmem:[%s2] sm:$0xff] %v1210
  %1267 = vst [vmem:[%s2 + $0x8] sm:$0xff] %v1211
  %1268 = vst [vmem:[%s2 + $0x10] sm:$0xff] %v1212
  %1269 = vst [vmem:[%s2 + $0x18] sm:$0xff] %v1213
  %1270 = vst [vmem:[%s2 + $0x20] sm:$0xff] %v1214
  %1271 = vst [vmem:[%s2 + $0x28] sm:$0xff] %v1215
  %1272 = vst [vmem:[%s2 + $0x30] sm:$0xff] %v1216
  %1273 = vst [vmem:[%s2 + $0x38] sm:$0xff] %v1217
  %1274 = vst [vmem:[%s2 + $0x40] sm:$0xff] %v1218
  %1275 = vst [vmem:[%s2 + $0x48] sm:$0xff] %v1219
  %1276 = vst [vmem:[%s2 + $0x50] sm:$0xff] %v1220
  %1277 = vst [vmem:[%s2 + $0x58] sm:$0xff] %v1221
  %1278 = vst [vmem:[%s2 + $0x60] sm:$0xff] %v1222
  %1279 = vst [vmem:[%s2 + $0x68] sm:$0xff] %v1223
  %1280 = vst [vmem:[%s2 + $0x70] sm:$0xff] %v1224
  %1281 = vst [vmem:[%s2 + $0x78] sm:$0xff] %v1225
  %1282 = vst [vmem:[%s2 + $0x80] sm:$0xff] %v1226
  %1283 = vst [vmem:[%s2 + $0x88] sm:$0xff] %v1227
  %1284 = vst [vmem:[%s2 + $0x90] sm:$0xff] %v1228
  %1285 = vst [vmem:[%s2 + $0x98] sm:$0xff] %v1229
  %1286 = vst [vmem:[%s2 + $0xa0] sm:$0xff] %v1230
  %1287 = vst [vmem:[%s2 + $0xa8] sm:$0xff] %v1231
  %1288 = vst [vmem:[%s2 + $0xb0] sm:$0xff] %v1232
  %1289 = vst [vmem:[%s2 + $0xb8] sm:$0xff] %v1233
  %1290 = vst [vmem:[%s2 + $0xc0] sm:$0xff] %v1234
  %1291 = vst [vmem:[%s2 + $0xc8] sm:$0xff] %v1235
  %1292 = vst [vmem:[%s2 + $0xd0] sm:$0xff] %v1236
  %1293 = vst [vmem:[%s2 + $0xd8] sm:$0xff] %v1237
  %1294 = vst [vmem:[%s2 + $0xe0] sm:$0xff] %v1238
  %1295 = vst [vmem:[%s2 + $0xe8] sm:$0xff] %v1239
  %1296 = vst [vmem:[%s2 + $0xf0] sm:$0xff] %v1240
  %1297 = vst [vmem:[%s2 + $0xf8] sm:$0xff] %v1241
  %1298 = vst [vmem:[%s2 + $0x100] sm:$0xff] %v1242
  %1299 = vst [vmem:[%s2 + $0x108] sm:$0xff] %v1243
  %1300 = vst [vmem:[%s2 + $0x110] sm:$0xff] %v1244
  %1301 = vst [vmem:[%s2 + $0x118] sm:$0xff] %v1245
  %1302 = vst [vmem:[%s2 + $0x120] sm:$0xff] %v1246
  %1303 = vst [vmem:[%s2 + $0x128] sm:$0xff] %v1247
  %1304 = vst [vmem:[%s2 + $0x130] sm:$0xff] %v1248
  %1305 = vst [vmem:[%s2 + $0x138] sm:$0xff] %v1249
  %1306 = vst [vmem:[%s2 + $0x140] sm:$0xff] %v1250
  %1307 = vst [vmem:[%s2 + $0x148] sm:$0xff] %v1251
  %1308 = vst [vmem:[%s2 + $0x150] sm:$0xff] %v1252
  %1309 = vst [vmem:[%s2 + $0x158] sm:$0xff] %v1253
  %1310 = vst [vmem:[%s2 + $0x160] sm:$0xff] %v1254
  %1311 = vst [vmem:[%s2 + $0x168] sm:$0xff] %v1255
  %1312 = vst [vmem:[%s2 + $0x170] sm:$0xff] %v1256
  %1313 = vst [vmem:[%s2 + $0x178] sm:$0xff] %v1257
  %1314 = vst [vmem:[%s2 + $0x180] sm:$0xff] %v1258
  %1315 = vst [vmem:[%s2 + $0x188] sm:$0xff] %v1259
  %1316 = vst [vmem:[%s2 + $0x190] sm:$0xff] %v1260
  %1317 = vst [vmem:[%s2 + $0x198] sm:$0xff] %v1261
  %1318 = vst [vmem:[%s2 + $0x1a0] sm:$0xff] %v1262
  %1319 = vst [vmem:[%s2 + $0x1a8] sm:$0xff] %v1263
  %1320 = vst [vmem:[%s2 + $0x1b0] sm:$0xff] %v1264
  %1321 = vst [vmem:[%s2 + $0x1b8] sm:$0xff] %v1265
  // Predicated region
  $region10: #{conv_autoencoder_forward.10} parent=0 // pred_check
    _
  $region11: #{conv_autoencoder_forward.10} parent=0 // pred_check_branch
    %1323 = sbr.rel (0) target = $region13
  $region12: #{conv_autoencoder_forward.10} parent=0 // pred_region
    _
  $region13: #{conv_autoencoder_forward.10} parent=0 // pred_fallthru
    _
  // Predicated region
  $region14: #{conv_autoencoder_forward.10} parent=0 // pred_check
    _
  $region15: #{conv_autoencoder_forward.10} parent=0 // pred_check_branch
    %1325 = sbr.rel (0) target = $region17
  $region16: #{conv_autoencoder_forward.10} parent=0 // pred_region
    _
  $region17: #{conv_autoencoder_forward.10} parent=0 // pred_fallthru
    _

// kernel: conv_autoencoder_forward.11
$region0: #{conv_autoencoder_forward.11}
  #allocation0 [shape = 'u32[]', space=smem, size = 0x4, offset = 0x4, fixed_abs, tag = 'smem constant byte address 0x4 - core index']
  #allocation1 [shape = 'u32[72,128]{1,0:T(1,128)}', space=vmem, size = 0x9000, scoped, tag = 'internal scratch']
  %s0 = inlined_call_operand.vmem [shape: bf16[4096,640], index: 0, kind: input, shape index: {}]
  %s1 = inlined_call_operand.vmem [shape: bf16[640,128], index: 1, kind: input, shape index: {}]
  %s2 = inlined_call_operand.vmem [shape: f32[4096,128], index: 2, kind: output, shape index: {}]
  %s3 = sld [smem:[#allocation0]]
  $region41: #{conv_autoencoder_forward.11} parent=0
    _
  %s5 = ssub.s32 1, %s3
  %s6 = scalar_select 0, %s5, %s3
  loop: start=0, step=1, limit=10
  $region2: #{conv_autoencoder_forward.11} parent=0 // loop_pre_header
    _
  $region3: #{conv_autoencoder_forward.11} parent=0 // loop_header
    %s8 = sphi 0, %s12
    %p9 = scmp.ge.s32.totalorder %s8, 10
    %s18 = sphi 0, %s20
    %s21 = sphi 0, %s18
    %s22 = sphi 0, %s21
    %s38 = sphi 0, %s22
    %s42 = sphi 0, %s42
    %s44 = sphi 0, %s42
    %s45 = sphi 0, %s44
    %s59 = sphi 0, %s45
    %s65 = sphi 0, %s67
    %s68 = sphi 0, %s65
    %s69 = sphi 0, %s68
    %s85 = sphi 0, %s69
  $region4: #{conv_autoencoder_forward.11} parent=0 // loop_header_branch
    %11 = sbr.rel (%p9) target = $region8
  $region5: #{conv_autoencoder_forward.11} parent=0 // loop_body
    %s13 = ssub.s32 %s8, 1
    %s14 = ssub.s32 %s8, 2
    %s15 = sadd.s32 %s8, 1
    %s16 = ssub.s32 %s8, %s15
    %p17 = scmp.eq.s32.totalorder %s16, 0
    %s19 = sadd.s32 %s18, 1
    %s20 = scalar_select %p17, %s18, %s19
    %p23 = pneg %p17
    %p24 = scmp.eq.s32.totalorder %s8, 7
    %p25 = por %p23, %p24
    %p26 = scmp.ne.s32.totalorder %s18, %s21
    %p27 = scmp.eq.s32.totalorder %s8, 0
    %p28 = por %p26, %p27
    %p29 = scmp.ne.s32.totalorder %s18, %s21
    %p30 = scmp.eq.s32.totalorder %s13, 7
    %p31 = por %p29, %p30
    %p32 = scmp.ne.s32.totalorder %s21, %s22
    %p33 = scmp.eq.s32.totalorder %s13, 0
    %p34 = por %p32, %p33
    %p35 = scmp.ne.s32.totalorder %s21, %s22
    %p36 = scmp.eq.s32.totalorder %s14, 7
    %p37 = por %p35, %p36
    %p39 = scmp.ne.s32.totalorder %s22, %s38
    %p40 = scmp.eq.s32.totalorder %s14, 0
    %p41 = por %p39, %p40
    %s43 = sadd.s32 %s42, 1
    %p46 = scmp.eq.s32.totalorder %s8, 7
    %p47 = scmp.ne.s32.totalorder %s42, %s44
    %p48 = scmp.eq.s32.totalorder %s8, 0
    %p49 = por %p47, %p48
    %p50 = scmp.ne.s32.totalorder %s42, %s44
    %p51 = scmp.eq.s32.totalorder %s13, 7
    %p52 = por %p50, %p51
    %p53 = scmp.ne.s32.totalorder %s44, %s45
    %p54 = scmp.eq.s32.totalorder %s13, 0
    %p55 = por %p53, %p54
    %p56 = scmp.ne.s32.totalorder %s44, %s45
    %p57 = scmp.eq.s32.totalorder %s14, 7
    %p58 = por %p56, %p57
    %p60 = scmp.ne.s32.totalorder %s45, %s59
    %p61 = scmp.eq.s32.totalorder %s14, 0
    %p62 = por %p60, %p61
    %s63 = ssub.s32 %s8, %s15
    %p64 = scmp.eq.s32.totalorder %s63, 0
    %s66 = sadd.s32 %s65, 1
    %s67 = scalar_select %p64, %s65, %s66
    %p70 = pneg %p64
    %p71 = scmp.eq.s32.totalorder %s8, 7
    %p72 = por %p70, %p71
    %p73 = scmp.ne.s32.totalorder %s65, %s68
    %p74 = scmp.eq.s32.totalorder %s8, 0
    %p75 = por %p73, %p74
    %p76 = scmp.ne.s32.totalorder %s65, %s68
    %p77 = scmp.eq.s32.totalorder %s13, 7
    %p78 = por %p76, %p77
    %p79 = scmp.ne.s32.totalorder %s68, %s69
    %p80 = scmp.eq.s32.totalorder %s13, 0
    %p81 = por %p79, %p80
    %p82 = scmp.ne.s32.totalorder %s68, %s69
    %p83 = scmp.eq.s32.totalorder %s14, 7
    %p84 = por %p82, %p83
    %p86 = scmp.ne.s32.totalorder %s69, %s85
    %p87 = scmp.eq.s32.totalorder %s14, 0
    %p88 = por %p86, %p87
    %p89 = scmp.le.s32.totalorder 1, %s8
    %p90 = scmp.lt.s32.totalorder %s8, 9
    %p91 = pnand %p89, %p90
    %p92 = pneg %p91
    // Predicated region
    $region9: #{conv_autoencoder_forward.11} parent=5 // pred_check
      _
    $region10: #{conv_autoencoder_forward.11} parent=5 // pred_check_branch
      %94 = sbr.rel (%p91) target = $region12
    $region11: #{conv_autoencoder_forward.11} parent=5 // pred_region
      %s95 = ssub.s32 %s8, 1
      // Predicated region
      $region13: #{conv_autoencoder_forward.11} parent=11 // pred_check
        %p96 = pneg %p55
      $region14: #{conv_autoencoder_forward.11} parent=11 // pred_check_branch
        %98 = sbr.rel (%p96) target = $region16
      $region15: #{conv_autoencoder_forward.11} parent=11 // pred_region
        _
      $region16: #{conv_autoencoder_forward.11} parent=11 // pred_fallthru
        _
    $region12: #{conv_autoencoder_forward.11} parent=5 // pred_fallthru
      _
    %p99 = scmp.lt.s32.totalorder %s8, 8
    // Predicated region
    $region17: #{conv_autoencoder_forward.11} parent=5 // pred_check
      %p100 = pneg %p99
    $region18: #{conv_autoencoder_forward.11} parent=5 // pred_check_branch
      %102 = sbr.rel (%p100) target = $region20
    $region19: #{conv_autoencoder_forward.11} parent=5 // pred_region
      // Predicated region
      $region21: #{conv_autoencoder_forward.11} parent=19 // pred_check
        %p103 = pneg %p28
      $region22: #{conv_autoencoder_forward.11} parent=19 // pred_check_branch
        %105 = sbr.rel (%p103) target = $region24
      $region23: #{conv_autoencoder_forward.11} parent=19 // pred_region
        %s106 = smul.u32 64, %s8
        %p107 = scmp.lt.s32.totalorder %s106, 511
        %s108 = scalar_select %p107, %s106, 511
        %s109 = smul.addr %s108, 5
        %s110 = smul.addr %s109, 4
        %s111 = scalar_lea.vmem %s0, %s110
        %s112 = smul.u32 64, %s8
      $region24: #{conv_autoencoder_forward.11} parent=19 // pred_fallthru
        _
    $region20: #{conv_autoencoder_forward.11} parent=5 // pred_fallthru
      _
    %p113 = scmp.le.s32.totalorder 1, %s8
    %p114 = scmp.lt.s32.totalorder %s8, 9
    %p115 = pnand %p113, %p114
    %p116 = pneg %p115
    // Predicated region
    $region25: #{conv_autoencoder_forward.11} parent=5 // pred_check
      _
    $region26: #{conv_autoencoder_forward.11} parent=5 // pred_check_branch
      %118 = sbr.rel (%p115) target = $region28
    $region27: #{conv_autoencoder_forward.11} parent=5 // pred_region
      %s119 = ssub.s32 %s8, 1
      %s120 = smul.u32 64, %s13
      %p121 = scmp.lt.s32.totalorder %s120, 511
      %s122 = scalar_select %p121, %s120, 511
      %s123 = smul.addr %s122, 5
      %s124 = smul.addr %s123, 4
      %s125 = scalar_lea.vmem %s0, %s124
      %p126 = pneg %p34
      %p127 = pneg %p31
      %p128 = pneg %p55
      %p129 = pneg %p52
      %p130 = pneg %p81
      %p131 = pneg %p78
      %s132 = smul.u32 64, %s13
      %p133 = scmp.lt.s32.totalorder %s132, 511
      %s134 = scalar_select %p133, %s132, 511
      %s135 = smul.addr %s134, 8
      %s136 = scalar_lea.vmem %s2, %s135
      %s137 = smul.u32 64, %s13
      %p138 = scmp.lt.s32.totalorder %s137, 511
      %s139 = scalar_select %p138, %s137, 511
      %s140 = smul.addr %s139, 5
      %s141 = smul.addr %s140, 4
      %s142 = scalar_lea.vmem %s0, %s141
      %s143 = smul.u32 64, %s13
      %s144 = smul.u32 64, %s13
      %p145 = scmp.lt.s32.totalorder %s144, 511
      %s146 = scalar_select %p145, %s144, 511
      %s147 = smul.addr %s146, 8
      %s148 = scalar_lea.vmem %s2, %s147
      %s149 = smul.u32 64, %s13
      %v150 = vld [vmem:[%s142] sm:$0xff]
      %v151 = vld [vmem:[%s142 + $0x8] sm:$0xff]
      %v152 = vld [vmem:[%s142 + $0x10] sm:$0xf]
      %v153 = vld [vmem:[%s142 + $0x14] sm:$0xff]
      %v154 = vld [vmem:[%s142 + $0x1c] sm:$0xff]
      %v155 = vld [vmem:[%s142 + $0x24] sm:$0xf]
      %v156 = vld [vmem:[%s142 + $0x28] sm:$0xff]
      %v157 = vld [vmem:[%s142 + $0x30] sm:$0xff]
      %v158 = vld [vmem:[%s142 + $0x38] sm:$0xf]
      %v159 = vld [vmem:[%s142 + $0x3c] sm:$0xff]
      %v160 = vld [vmem:[%s142 + $0x44] sm:$0xff]
      %v161 = vld [vmem:[%s142 + $0x4c] sm:$0xf]
      %v162 = vld [vmem:[%s142 + $0x50] sm:$0xff]
      %v163 = vld [vmem:[%s142 + $0x58] sm:$0xff]
      %v164 = vld [vmem:[%s142 + $0x60] sm:$0xf]
      %v165 = vld [vmem:[%s142 + $0x64] sm:$0xff]
      %v166 = vld [vmem:[%s142 + $0x6c] sm:$0xff]
      %v167 = vld [vmem:[%s142 + $0x74] sm:$0xf]
      %v168 = vld [vmem:[%s142 + $0x78] sm:$0xff]
      %v169 = vld [vmem:[%s142 + $0x80] sm:$0xff]
      %v170 = vld [vmem:[%s142 + $0x88] sm:$0xf]
      %v171 = vld [vmem:[%s142 + $0x8c] sm:$0xff]
      %v172 = vld [vmem:[%s142 + $0x94] sm:$0xff]
      %v173 = vld [vmem:[%s142 + $0x9c] sm:$0xf]
      %v174 = vld [vmem:[%s142 + $0xa0] sm:$0xff]
      %v175 = vld [vmem:[%s142 + $0xa8] sm:$0xff]
      %v176 = vld [vmem:[%s142 + $0xb0] sm:$0xf]
      %v177 = vld [vmem:[%s142 + $0xb4] sm:$0xff]
      %v178 = vld [vmem:[%s142 + $0xbc] sm:$0xff]
      %v179 = vld [vmem:[%s142 + $0xc4] sm:$0xf]
      %v180 = vld [vmem:[%s142 + $0xc8] sm:$0xff]
      %v181 = vld [vmem:[%s142 + $0xd0] sm:$0xff]
      %v182 = vld [vmem:[%s142 + $0xd8] sm:$0xf]
      %v183 = vld [vmem:[%s142 + $0xdc] sm:$0xff]
      %v184 = vld [vmem:[%s142 + $0xe4] sm:$0xff]
      %v185 = vld [vmem:[%s142 + $0xec] sm:$0xf]
      %v186 = vld [vmem:[%s142 + $0xf0] sm:$0xff]
      %v187 = vld [vmem:[%s142 + $0xf8] sm:$0xff]
      %v188 = vld [vmem:[%s142 + $0x100] sm:$0xf]
      %v189 = vld [vmem:[%s142 + $0x104] sm:$0xff]
      %v190 = vld [vmem:[%s142 + $0x10c] sm:$0xff]
      %v191 = vld [vmem:[%s142 + $0x114] sm:$0xf]
      %v192 = vld [vmem:[%s142 + $0x118] sm:$0xff]
      %v193 = vld [vmem:[%s142 + $0x120] sm:$0xff]
      %v194 = vld [vmem:[%s142 + $0x128] sm:$0xf]
      %v195 = vld [vmem:[%s142 + $0x12c] sm:$0xff]
      %v196 = vld [vmem:[%s142 + $0x134] sm:$0xff]
      %v197 = vld [vmem:[%s142 + $0x13c] sm:$0xf]
      %v198 = vld [vmem:[%s142 + $0x140] sm:$0xff]
      %v199 = vld [vmem:[%s142 + $0x148] sm:$0xff]
      %v200 = vld [vmem:[%s142 + $0x150] sm:$0xf]
      %v201 = vld [vmem:[%s142 + $0x154] sm:$0xff]
      %v202 = vld [vmem:[%s142 + $0x15c] sm:$0xff]
      %v203 = vld [vmem:[%s142 + $0x164] sm:$0xf]
      %v204 = vld [vmem:[%s142 + $0x168] sm:$0xff]
      %v205 = vld [vmem:[%s142 + $0x170] sm:$0xff]
      %v206 = vld [vmem:[%s142 + $0x178] sm:$0xf]
      %v207 = vld [vmem:[%s142 + $0x17c] sm:$0xff]
      %v208 = vld [vmem:[%s142 + $0x184] sm:$0xff]
      %v209 = vld [vmem:[%s142 + $0x18c] sm:$0xf]
      %v210 = vld [vmem:[%s142 + $0x190] sm:$0xff]
      %v211 = vld [vmem:[%s142 + $0x198] sm:$0xff]
      %v212 = vld [vmem:[%s142 + $0x1a0] sm:$0xf]
      %v213 = vld [vmem:[%s142 + $0x1a4] sm:$0xff]
      %v214 = vld [vmem:[%s142 + $0x1ac] sm:$0xff]
      %v215 = vld [vmem:[%s142 + $0x1b4] sm:$0xf]
      %v216 = vld [vmem:[%s142 + $0x1b8] sm:$0xff]
      %v217 = vld [vmem:[%s142 + $0x1c0] sm:$0xff]
      %v218 = vld [vmem:[%s142 + $0x1c8] sm:$0xf]
      %v219 = vld [vmem:[%s142 + $0x1cc] sm:$0xff]
      %v220 = vld [vmem:[%s142 + $0x1d4] sm:$0xff]
      %v221 = vld [vmem:[%s142 + $0x1dc] sm:$0xf]
      %v222 = vld [vmem:[%s142 + $0x1e0] sm:$0xff]
      %v223 = vld [vmem:[%s142 + $0x1e8] sm:$0xff]
      %v224 = vld [vmem:[%s142 + $0x1f0] sm:$0xf]
      %v225 = vld [vmem:[%s142 + $0x1f4] sm:$0xff]
      %v226 = vld [vmem:[%s142 + $0x1fc] sm:$0xff]
      %v227 = vld [vmem:[%s142 + $0x204] sm:$0xf]
      %v228 = vld [vmem:[%s142 + $0x208] sm:$0xff]
      %v229 = vld [vmem:[%s142 + $0x210] sm:$0xff]
      %v230 = vld [vmem:[%s142 + $0x218] sm:$0xf]
      %v231 = vld [vmem:[%s142 + $0x21c] sm:$0xff]
      %v232 = vld [vmem:[%s142 + $0x224] sm:$0xff]
      %v233 = vld [vmem:[%s142 + $0x22c] sm:$0xf]
      %v234 = vld [vmem:[%s142 + $0x230] sm:$0xff]
      %v235 = vld [vmem:[%s142 + $0x238] sm:$0xff]
      %v236 = vld [vmem:[%s142 + $0x240] sm:$0xf]
      %v237 = vld [vmem:[%s142 + $0x244] sm:$0xff]
      %v238 = vld [vmem:[%s142 + $0x24c] sm:$0xff]
      %v239 = vld [vmem:[%s142 + $0x254] sm:$0xf]
      %v240 = vld [vmem:[%s142 + $0x258] sm:$0xff]
      %v241 = vld [vmem:[%s142 + $0x260] sm:$0xff]
      %v242 = vld [vmem:[%s142 + $0x268] sm:$0xf]
      %v243 = vld [vmem:[%s142 + $0x26c] sm:$0xff]
      %v244 = vld [vmem:[%s142 + $0x274] sm:$0xff]
      %v245 = vld [vmem:[%s142 + $0x27c] sm:$0xf]
      %v246 = vld [vmem:[%s142 + $0x280] sm:$0xff]
      %v247 = vld [vmem:[%s142 + $0x288] sm:$0xff]
      %v248 = vld [vmem:[%s142 + $0x290] sm:$0xf]
      %v249 = vld [vmem:[%s142 + $0x294] sm:$0xff]
      %v250 = vld [vmem:[%s142 + $0x29c] sm:$0xff]
      %v251 = vld [vmem:[%s142 + $0x2a4] sm:$0xf]
      %v252 = vld [vmem:[%s142 + $0x2a8] sm:$0xff]
      %v253 = vld [vmem:[%s142 + $0x2b0] sm:$0xff]
      %v254 = vld [vmem:[%s142 + $0x2b8] sm:$0xf]
      %v255 = vld [vmem:[%s142 + $0x2bc] sm:$0xff]
      %v256 = vld [vmem:[%s142 + $0x2c4] sm:$0xff]
      %v257 = vld [vmem:[%s142 + $0x2cc] sm:$0xf]
      %v258 = vld [vmem:[%s142 + $0x2d0] sm:$0xff]
      %v259 = vld [vmem:[%s142 + $0x2d8] sm:$0xff]
      %v260 = vld [vmem:[%s142 + $0x2e0] sm:$0xf]
      %v261 = vld [vmem:[%s142 + $0x2e4] sm:$0xff]
      %v262 = vld [vmem:[%s142 + $0x2ec] sm:$0xff]
      %v263 = vld [vmem:[%s142 + $0x2f4] sm:$0xf]
      %v264 = vld [vmem:[%s142 + $0x2f8] sm:$0xff]
      %v265 = vld [vmem:[%s142 + $0x300] sm:$0xff]
      %v266 = vld [vmem:[%s142 + $0x308] sm:$0xf]
      %v267 = vld [vmem:[%s142 + $0x30c] sm:$0xff]
      %v268 = vld [vmem:[%s142 + $0x314] sm:$0xff]
      %v269 = vld [vmem:[%s142 + $0x31c] sm:$0xf]
      %v270 = vld [vmem:[%s142 + $0x320] sm:$0xff]
      %v271 = vld [vmem:[%s142 + $0x328] sm:$0xff]
      %v272 = vld [vmem:[%s142 + $0x330] sm:$0xf]
      %v273 = vld [vmem:[%s142 + $0x334] sm:$0xff]
      %v274 = vld [vmem:[%s142 + $0x33c] sm:$0xff]
      %v275 = vld [vmem:[%s142 + $0x344] sm:$0xf]
      %v276 = vld [vmem:[%s142 + $0x348] sm:$0xff]
      %v277 = vld [vmem:[%s142 + $0x350] sm:$0xff]
      %v278 = vld [vmem:[%s142 + $0x358] sm:$0xf]
      %v279 = vld [vmem:[%s142 + $0x35c] sm:$0xff]
      %v280 = vld [vmem:[%s142 + $0x364] sm:$0xff]
      %v281 = vld [vmem:[%s142 + $0x36c] sm:$0xf]
      %v282 = vld [vmem:[%s142 + $0x370] sm:$0xff]
      %v283 = vld [vmem:[%s142 + $0x378] sm:$0xff]
      %v284 = vld [vmem:[%s142 + $0x380] sm:$0xf]
      %v285 = vld [vmem:[%s142 + $0x384] sm:$0xff]
      %v286 = vld [vmem:[%s142 + $0x38c] sm:$0xff]
      %v287 = vld [vmem:[%s142 + $0x394] sm:$0xf]
      %v288 = vld [vmem:[%s142 + $0x398] sm:$0xff]
      %v289 = vld [vmem:[%s142 + $0x3a0] sm:$0xff]
      %v290 = vld [vmem:[%s142 + $0x3a8] sm:$0xf]
      %v291 = vld [vmem:[%s142 + $0x3ac] sm:$0xff]
      %v292 = vld [vmem:[%s142 + $0x3b4] sm:$0xff]
      %v293 = vld [vmem:[%s142 + $0x3bc] sm:$0xf]
      %v294 = vld [vmem:[%s142 + $0x3c0] sm:$0xff]
      %v295 = vld [vmem:[%s142 + $0x3c8] sm:$0xff]
      %v296 = vld [vmem:[%s142 + $0x3d0] sm:$0xf]
      %v297 = vld [vmem:[%s142 + $0x3d4] sm:$0xff]
      %v298 = vld [vmem:[%s142 + $0x3dc] sm:$0xff]
      %v299 = vld [vmem:[%s142 + $0x3e4] sm:$0xf]
      %v300 = vld [vmem:[%s142 + $0x3e8] sm:$0xff]
      %v301 = vld [vmem:[%s142 + $0x3f0] sm:$0xff]
      %v302 = vld [vmem:[%s142 + $0x3f8] sm:$0xf]
      %v303 = vld [vmem:[%s142 + $0x3fc] sm:$0xff]
      %v304 = vld [vmem:[%s142 + $0x404] sm:$0xff]
      %v305 = vld [vmem:[%s142 + $0x40c] sm:$0xf]
      %v306 = vld [vmem:[%s142 + $0x410] sm:$0xff]
      %v307 = vld [vmem:[%s142 + $0x418] sm:$0xff]
      %v308 = vld [vmem:[%s142 + $0x420] sm:$0xf]
      %v309 = vld [vmem:[%s142 + $0x424] sm:$0xff]
      %v310 = vld [vmem:[%s142 + $0x42c] sm:$0xff]
      %v311 = vld [vmem:[%s142 + $0x434] sm:$0xf]
      %v312 = vld [vmem:[%s142 + $0x438] sm:$0xff]
      %v313 = vld [vmem:[%s142 + $0x440] sm:$0xff]
      %v314 = vld [vmem:[%s142 + $0x448] sm:$0xf]
      %v315 = vld [vmem:[%s142 + $0x44c] sm:$0xff]
      %v316 = vld [vmem:[%s142 + $0x454] sm:$0xff]
      %v317 = vld [vmem:[%s142 + $0x45c] sm:$0xf]
      %v318 = vld [vmem:[%s142 + $0x460] sm:$0xff]
      %v319 = vld [vmem:[%s142 + $0x468] sm:$0xff]
      %v320 = vld [vmem:[%s142 + $0x470] sm:$0xf]
      %v321 = vld [vmem:[%s142 + $0x474] sm:$0xff]
      %v322 = vld [vmem:[%s142 + $0x47c] sm:$0xff]
      %v323 = vld [vmem:[%s142 + $0x484] sm:$0xf]
      %v324 = vld [vmem:[%s142 + $0x488] sm:$0xff]
      %v325 = vld [vmem:[%s142 + $0x490] sm:$0xff]
      %v326 = vld [vmem:[%s142 + $0x498] sm:$0xf]
      %v327 = vld [vmem:[%s142 + $0x49c] sm:$0xff]
      %v328 = vld [vmem:[%s142 + $0x4a4] sm:$0xff]
      %v329 = vld [vmem:[%s142 + $0x4ac] sm:$0xf]
      %v330 = vld [vmem:[%s142 + $0x4b0] sm:$0xff]
      %v331 = vld [vmem:[%s142 + $0x4b8] sm:$0xff]
      %v332 = vld [vmem:[%s142 + $0x4c0] sm:$0xf]
      %v333 = vld [vmem:[%s142 + $0x4c4] sm:$0xff]
      %v334 = vld [vmem:[%s142 + $0x4cc] sm:$0xff]
      %v335 = vld [vmem:[%s142 + $0x4d4] sm:$0xf]
      %v336 = vld [vmem:[%s142 + $0x4d8] sm:$0xff]
      %v337 = vld [vmem:[%s142 + $0x4e0] sm:$0xff]
      %v338 = vld [vmem:[%s142 + $0x4e8] sm:$0xf]
      %v339 = vld [vmem:[%s142 + $0x4ec] sm:$0xff]
      %v340 = vld [vmem:[%s142 + $0x4f4] sm:$0xff]
      %v341 = vld [vmem:[%s142 + $0x4fc] sm:$0xf]
      %v342 = vld [vmem:[%s1] sm:$0xf]
      %v343 = vld [vmem:[%s1 + $0x4] sm:$0xf]
      %v344 = vld [vmem:[%s1 + $0x8] sm:$0xf]
      %v345 = vld [vmem:[%s1 + $0xc] sm:$0xf]
      %v346 = vld [vmem:[%s1 + $0x10] sm:$0xf]
      %v347 = vld [vmem:[%s1 + $0x14] sm:$0xf]
      %v348 = vld [vmem:[%s1 + $0x18] sm:$0xf]
      %v349 = vld [vmem:[%s1 + $0x1c] sm:$0xf]
      %v350 = vld [vmem:[%s1 + $0x20] sm:$0xf]
      %v351 = vld [vmem:[%s1 + $0x24] sm:$0xf]
      %v352 = vld [vmem:[%s1 + $0x28] sm:$0xf]
      %v353 = vld [vmem:[%s1 + $0x2c] sm:$0xf]
      %v354 = vld [vmem:[%s1 + $0x30] sm:$0xf]
      %v355 = vld [vmem:[%s1 + $0x34] sm:$0xf]
      %v356 = vld [vmem:[%s1 + $0x38] sm:$0xf]
      %v357 = vld [vmem:[%s1 + $0x3c] sm:$0xf]
      %v358 = vld [vmem:[%s1 + $0x40] sm:$0xf]
      %v359 = vld [vmem:[%s1 + $0x44] sm:$0xf]
      %v360 = vld [vmem:[%s1 + $0x48] sm:$0xf]
      %v361 = vld [vmem:[%s1 + $0x4c] sm:$0xf]
      %v362 = vld [vmem:[%s1 + $0x50] sm:$0xf]
      %v363 = vld [vmem:[%s1 + $0x54] sm:$0xf]
      %v364 = vld [vmem:[%s1 + $0x58] sm:$0xf]
      %v365 = vld [vmem:[%s1 + $0x5c] sm:$0xf]
      %v366 = vld [vmem:[%s1 + $0x60] sm:$0xf]
      %v367 = vld [vmem:[%s1 + $0x64] sm:$0xf]
      %v368 = vld [vmem:[%s1 + $0x68] sm:$0xf]
      %v369 = vld [vmem:[%s1 + $0x6c] sm:$0xf]
      %v370 = vld [vmem:[%s1 + $0x70] sm:$0xf]
      %v371 = vld [vmem:[%s1 + $0x74] sm:$0xf]
      %v372 = vld [vmem:[%s1 + $0x78] sm:$0xf]
      %v373 = vld [vmem:[%s1 + $0x7c] sm:$0xf]
      %v374 = vld [vmem:[%s1 + $0x80] sm:$0xf]
      %v375 = vld [vmem:[%s1 + $0x84] sm:$0xf]
      %v376 = vld [vmem:[%s1 + $0x88] sm:$0xf]
      %v377 = vld [vmem:[%s1 + $0x8c] sm:$0xf]
      %v378 = vld [vmem:[%s1 + $0x90] sm:$0xf]
      %v379 = vld [vmem:[%s1 + $0x94] sm:$0xf]
      %v380 = vld [vmem:[%s1 + $0x98] sm:$0xf]
      %v381 = vld [vmem:[%s1 + $0x9c] sm:$0xf]
      %v382 = vld [vmem:[%s1 + $0xa0] sm:$0xf]
      %v383 = vld [vmem:[%s1 + $0xa4] sm:$0xf]
      %v384 = vld [vmem:[%s1 + $0xa8] sm:$0xf]
      %v385 = vld [vmem:[%s1 + $0xac] sm:$0xf]
      %v386 = vld [vmem:[%s1 + $0xb0] sm:$0xf]
      %v387 = vld [vmem:[%s1 + $0xb4] sm:$0xf]
      %v388 = vld [vmem:[%s1 + $0xb8] sm:$0xf]
      %v389 = vld [vmem:[%s1 + $0xbc] sm:$0xf]
      %v390 = vld [vmem:[%s1 + $0xc0] sm:$0xf]
      %v391 = vld [vmem:[%s1 + $0xc4] sm:$0xf]
      %v392 = vld [vmem:[%s1 + $0xc8] sm:$0xf]
      %v393 = vld [vmem:[%s1 + $0xcc] sm:$0xf]
      %v394 = vld [vmem:[%s1 + $0xd0] sm:$0xf]
      %v395 = vld [vmem:[%s1 + $0xd4] sm:$0xf]
      %v396 = vld [vmem:[%s1 + $0xd8] sm:$0xf]
      %v397 = vld [vmem:[%s1 + $0xdc] sm:$0xf]
      %v398 = vld [vmem:[%s1 + $0xe0] sm:$0xf]
      %v399 = vld [vmem:[%s1 + $0xe4] sm:$0xf]
      %v400 = vld [vmem:[%s1 + $0xe8] sm:$0xf]
      %v401 = vld [vmem:[%s1 + $0xec] sm:$0xf]
      %v402 = vld [vmem:[%s1 + $0xf0] sm:$0xf]
      %v403 = vld [vmem:[%s1 + $0xf4] sm:$0xf]
      %v404 = vld [vmem:[%s1 + $0xf8] sm:$0xf]
      %v405 = vld [vmem:[%s1 + $0xfc] sm:$0xf]
      %v406 = vld [vmem:[%s1 + $0x100] sm:$0xf]
      %v407 = vld [vmem:[%s1 + $0x104] sm:$0xf]
      %v408 = vld [vmem:[%s1 + $0x108] sm:$0xf]
      %v409 = vld [vmem:[%s1 + $0x10c] sm:$0xf]
      %v410 = vld [vmem:[%s1 + $0x110] sm:$0xf]
      %v411 = vld [vmem:[%s1 + $0x114] sm:$0xf]
      %v412 = vld [vmem:[%s1 + $0x118] sm:$0xf]
      %v413 = vld [vmem:[%s1 + $0x11c] sm:$0xf]
      %v414 = vld [vmem:[%s1 + $0x120] sm:$0xf]
      %v415 = vld [vmem:[%s1 + $0x124] sm:$0xf]
      %v416 = vld [vmem:[%s1 + $0x128] sm:$0xf]
      %v417 = vld [vmem:[%s1 + $0x12c] sm:$0xf]
      %v418 = vld [vmem:[%s1 + $0x130] sm:$0xf]
      %v419 = vld [vmem:[%s1 + $0x134] sm:$0xf]
      %v420 = vld [vmem:[%s1 + $0x138] sm:$0xf]
      %v421 = vld [vmem:[%s1 + $0x13c] sm:$0xf]
      %v614 = vunpack.c.l.b16 %v150
      %v615 = vunpack.c.h.b16 %v150
      %v616 = vunpack.c.l.b16 %v151
      %v617 = vunpack.c.h.b16 %v151
      %v618 = vunpack.c.l.b16 %v152
      %v619 = vunpack.c.l.b16 %v153
      %v620 = vunpack.c.h.b16 %v153
      %v621 = vunpack.c.l.b16 %v154
      %v622 = vunpack.c.h.b16 %v154
      %v623 = vunpack.c.l.b16 %v155
      %v624 = vunpack.c.l.b16 %v156
      %v625 = vunpack.c.h.b16 %v156
      %v626 = vunpack.c.l.b16 %v157
      %v627 = vunpack.c.h.b16 %v157
      %v628 = vunpack.c.l.b16 %v158
      %v629 = vunpack.c.l.b16 %v159
      %v630 = vunpack.c.h.b16 %v159
      %v631 = vunpack.c.l.b16 %v160
      %v632 = vunpack.c.h.b16 %v160
      %v633 = vunpack.c.l.b16 %v161
      %v634 = vunpack.c.l.b16 %v162
      %v635 = vunpack.c.h.b16 %v162
      %v636 = vunpack.c.l.b16 %v163
      %v637 = vunpack.c.h.b16 %v163
      %v638 = vunpack.c.l.b16 %v164
      %v639 = vunpack.c.l.b16 %v165
      %v640 = vunpack.c.h.b16 %v165
      %v641 = vunpack.c.l.b16 %v166
      %v642 = vunpack.c.h.b16 %v166
      %v643 = vunpack.c.l.b16 %v167
      %v644 = vunpack.c.l.b16 %v168
      %v645 = vunpack.c.h.b16 %v168
      %v646 = vunpack.c.l.b16 %v169
      %v647 = vunpack.c.h.b16 %v169
      %v648 = vunpack.c.l.b16 %v170
      %v649 = vunpack.c.l.b16 %v171
      %v650 = vunpack.c.h.b16 %v171
      %v651 = vunpack.c.l.b16 %v172
      %v652 = vunpack.c.h.b16 %v172
      %v653 = vunpack.c.l.b16 %v173
      %v654 = vunpack.c.l.b16 %v174
      %v655 = vunpack.c.h.b16 %v174
      %v656 = vunpack.c.l.b16 %v175
      %v657 = vunpack.c.h.b16 %v175
      %v658 = vunpack.c.l.b16 %v176
      %v659 = vunpack.c.l.b16 %v177
      %v660 = vunpack.c.h.b16 %v177
      %v661 = vunpack.c.l.b16 %v178
      %v662 = vunpack.c.h.b16 %v178
      %v663 = vunpack.c.l.b16 %v179
      %v664 = vunpack.c.l.b16 %v180
      %v665 = vunpack.c.h.b16 %v180
      %v666 = vunpack.c.l.b16 %v181
      %v667 = vunpack.c.h.b16 %v181
      %v668 = vunpack.c.l.b16 %v182
      %v669 = vunpack.c.l.b16 %v183
      %v670 = vunpack.c.h.b16 %v183
      %v671 = vunpack.c.l.b16 %v184
      %v672 = vunpack.c.h.b16 %v184
      %v673 = vunpack.c.l.b16 %v185
      %v674 = vunpack.c.l.b16 %v186
      %v675 = vunpack.c.h.b16 %v186
      %v676 = vunpack.c.l.b16 %v187
      %v677 = vunpack.c.h.b16 %v187
      %v678 = vunpack.c.l.b16 %v188
      %v679 = vunpack.c.l.b16 %v189
      %v680 = vunpack.c.h.b16 %v189
      %v681 = vunpack.c.l.b16 %v190
      %v682 = vunpack.c.h.b16 %v190
      %v683 = vunpack.c.l.b16 %v191
      %v684 = vunpack.c.l.b16 %v192
      %v685 = vunpack.c.h.b16 %v192
      %v686 = vunpack.c.l.b16 %v193
      %v687 = vunpack.c.h.b16 %v193
      %v688 = vunpack.c.l.b16 %v194
      %v689 = vunpack.c.l.b16 %v195
      %v690 = vunpack.c.h.b16 %v195
      %v691 = vunpack.c.l.b16 %v196
      %v692 = vunpack.c.h.b16 %v196
      %v693 = vunpack.c.l.b16 %v197
      %v694 = vunpack.c.l.b16 %v198
      %v695 = vunpack.c.h.b16 %v198
      %v696 = vunpack.c.l.b16 %v199
      %v697 = vunpack.c.h.b16 %v199
      %v698 = vunpack.c.l.b16 %v200
      %v699 = vunpack.c.l.b16 %v201
      %v700 = vunpack.c.h.b16 %v201
      %v701 = vunpack.c.l.b16 %v202
      %v702 = vunpack.c.h.b16 %v202
      %v703 = vunpack.c.l.b16 %v203
      %v704 = vunpack.c.l.b16 %v204
      %v705 = vunpack.c.h.b16 %v204
      %v706 = vunpack.c.l.b16 %v205
      %v707 = vunpack.c.h.b16 %v205
      %v708 = vunpack.c.l.b16 %v206
      %v709 = vunpack.c.l.b16 %v207
      %v710 = vunpack.c.h.b16 %v207
      %v711 = vunpack.c.l.b16 %v208
      %v712 = vunpack.c.h.b16 %v208
      %v713 = vunpack.c.l.b16 %v209
      %v714 = vunpack.c.l.b16 %v210
      %v715 = vunpack.c.h.b16 %v210
      %v716 = vunpack.c.l.b16 %v211
      %v717 = vunpack.c.h.b16 %v211
      %v718 = vunpack.c.l.b16 %v212
      %v719 = vunpack.c.l.b16 %v213
      %v720 = vunpack.c.h.b16 %v213
      %v721 = vunpack.c.l.b16 %v214
      %v722 = vunpack.c.h.b16 %v214
      %v723 = vunpack.c.l.b16 %v215
      %v724 = vunpack.c.l.b16 %v216
      %v725 = vunpack.c.h.b16 %v216
      %v726 = vunpack.c.l.b16 %v217
      %v727 = vunpack.c.h.b16 %v217
      %v728 = vunpack.c.l.b16 %v218
      %v729 = vunpack.c.l.b16 %v219
      %v730 = vunpack.c.h.b16 %v219
      %v731 = vunpack.c.l.b16 %v220
      %v732 = vunpack.c.h.b16 %v220
      %v733 = vunpack.c.l.b16 %v221
      %v734 = vunpack.c.l.b16 %v222
      %v735 = vunpack.c.h.b16 %v222
      %v736 = vunpack.c.l.b16 %v223
      %v737 = vunpack.c.h.b16 %v223
      %v738 = vunpack.c.l.b16 %v224
      %v739 = vunpack.c.l.b16 %v225
      %v740 = vunpack.c.h.b16 %v225
      %v741 = vunpack.c.l.b16 %v226
      %v742 = vunpack.c.h.b16 %v226
      %v743 = vunpack.c.l.b16 %v227
      %v744 = vunpack.c.l.b16 %v228
      %v745 = vunpack.c.h.b16 %v228
      %v746 = vunpack.c.l.b16 %v229
      %v747 = vunpack.c.h.b16 %v229
      %v748 = vunpack.c.l.b16 %v230
      %v749 = vunpack.c.l.b16 %v231
      %v750 = vunpack.c.h.b16 %v231
      %v751 = vunpack.c.l.b16 %v232
      %v752 = vunpack.c.h.b16 %v232
      %v753 = vunpack.c.l.b16 %v233
      %v754 = vunpack.c.l.b16 %v234
      %v755 = vunpack.c.h.b16 %v234
      %v756 = vunpack.c.l.b16 %v235
      %v757 = vunpack.c.h.b16 %v235
      %v758 = vunpack.c.l.b16 %v236
      %v759 = vunpack.c.l.b16 %v237
      %v760 = vunpack.c.h.b16 %v237
      %v761 = vunpack.c.l.b16 %v238
      %v762 = vunpack.c.h.b16 %v238
      %v763 = vunpack.c.l.b16 %v239
      %v764 = vunpack.c.l.b16 %v240
      %v765 = vunpack.c.h.b16 %v240
      %v766 = vunpack.c.l.b16 %v241
      %v767 = vunpack.c.h.b16 %v241
      %v768 = vunpack.c.l.b16 %v242
      %v769 = vunpack.c.l.b16 %v243
      %v770 = vunpack.c.h.b16 %v243
      %v771 = vunpack.c.l.b16 %v244
      %v772 = vunpack.c.h.b16 %v244
      %v773 = vunpack.c.l.b16 %v245
      %v774 = vunpack.c.l.b16 %v246
      %v775 = vunpack.c.h.b16 %v246
      %v776 = vunpack.c.l.b16 %v247
      %v777 = vunpack.c.h.b16 %v247
      %v778 = vunpack.c.l.b16 %v248
      %v779 = vunpack.c.l.b16 %v249
      %v780 = vunpack.c.h.b16 %v249
      %v781 = vunpack.c.l.b16 %v250
      %v782 = vunpack.c.h.b16 %v250
      %v783 = vunpack.c.l.b16 %v251
      %v784 = vunpack.c.l.b16 %v252
      %v785 = vunpack.c.h.b16 %v252
      %v786 = vunpack.c.l.b16 %v253
      %v787 = vunpack.c.h.b16 %v253
      %v788 = vunpack.c.l.b16 %v254
      %v789 = vunpack.c.l.b16 %v255
      %v790 = vunpack.c.h.b16 %v255
      %v791 = vunpack.c.l.b16 %v256
      %v792 = vunpack.c.h.b16 %v256
      %v793 = vunpack.c.l.b16 %v257
      %v794 = vunpack.c.l.b16 %v258
      %v795 = vunpack.c.h.b16 %v258
      %v796 = vunpack.c.l.b16 %v259
      %v797 = vunpack.c.h.b16 %v259
      %v798 = vunpack.c.l.b16 %v260
      %v799 = vunpack.c.l.b16 %v261
      %v800 = vunpack.c.h.b16 %v261
      %v801 = vunpack.c.l.b16 %v262
      %v802 = vunpack.c.h.b16 %v262
      %v803 = vunpack.c.l.b16 %v263
      %v804 = vunpack.c.l.b16 %v264
      %v805 = vunpack.c.h.b16 %v264
      %v806 = vunpack.c.l.b16 %v265
      %v807 = vunpack.c.h.b16 %v265
      %v808 = vunpack.c.l.b16 %v266
      %v809 = vunpack.c.l.b16 %v267
      %v810 = vunpack.c.h.b16 %v267
      %v811 = vunpack.c.l.b16 %v268
      %v812 = vunpack.c.h.b16 %v268
      %v813 = vunpack.c.l.b16 %v269
      %v814 = vunpack.c.l.b16 %v270
      %v815 = vunpack.c.h.b16 %v270
      %v816 = vunpack.c.l.b16 %v271
      %v817 = vunpack.c.h.b16 %v271
      %v818 = vunpack.c.l.b16 %v272
      %v819 = vunpack.c.l.b16 %v273
      %v820 = vunpack.c.h.b16 %v273
      %v821 = vunpack.c.l.b16 %v274
      %v822 = vunpack.c.h.b16 %v274
      %v823 = vunpack.c.l.b16 %v275
      %v824 = vunpack.c.l.b16 %v276
      %v825 = vunpack.c.h.b16 %v276
      %v826 = vunpack.c.l.b16 %v277
      %v827 = vunpack.c.h.b16 %v277
      %v828 = vunpack.c.l.b16 %v278
      %v829 = vunpack.c.l.b16 %v279
      %v830 = vunpack.c.h.b16 %v279
      %v831 = vunpack.c.l.b16 %v280
      %v832 = vunpack.c.h.b16 %v280
      %v833 = vunpack.c.l.b16 %v281
      %v834 = vunpack.c.l.b16 %v282
      %v835 = vunpack.c.h.b16 %v282
      %v836 = vunpack.c.l.b16 %v283
      %v837 = vunpack.c.h.b16 %v283
      %v838 = vunpack.c.l.b16 %v284
      %v839 = vunpack.c.l.b16 %v285
      %v840 = vunpack.c.h.b16 %v285
      %v841 = vunpack.c.l.b16 %v286
      %v842 = vunpack.c.h.b16 %v286
      %v843 = vunpack.c.l.b16 %v287
      %v844 = vunpack.c.l.b16 %v288
      %v845 = vunpack.c.h.b16 %v288
      %v846 = vunpack.c.l.b16 %v289
      %v847 = vunpack.c.h.b16 %v289
      %v848 = vunpack.c.l.b16 %v290
      %v849 = vunpack.c.l.b16 %v291
      %v850 = vunpack.c.h.b16 %v291
      %v851 = vunpack.c.l.b16 %v292
      %v852 = vunpack.c.h.b16 %v292
      %v853 = vunpack.c.l.b16 %v293
      %v854 = vunpack.c.l.b16 %v294
      %v855 = vunpack.c.h.b16 %v294
      %v856 = vunpack.c.l.b16 %v295
      %v857 = vunpack.c.h.b16 %v295
      %v858 = vunpack.c.l.b16 %v296
      %v859 = vunpack.c.l.b16 %v297
      %v860 = vunpack.c.h.b16 %v297
      %v861 = vunpack.c.l.b16 %v298
      %v862 = vunpack.c.h.b16 %v298
      %v863 = vunpack.c.l.b16 %v299
      %v864 = vunpack.c.l.b16 %v300
      %v865 = vunpack.c.h.b16 %v300
      %v866 = vunpack.c.l.b16 %v301
      %v867 = vunpack.c.h.b16 %v301
      %v868 = vunpack.c.l.b16 %v302
      %v869 = vunpack.c.l.b16 %v303
      %v870 = vunpack.c.h.b16 %v303
      %v871 = vunpack.c.l.b16 %v304
      %v872 = vunpack.c.h.b16 %v304
      %v873 = vunpack.c.l.b16 %v305
      %v874 = vunpack.c.l.b16 %v306
      %v875 = vunpack.c.h.b16 %v306
      %v876 = vunpack.c.l.b16 %v307
      %v877 = vunpack.c.h.b16 %v307
      %v878 = vunpack.c.l.b16 %v308
      %v879 = vunpack.c.l.b16 %v309
      %v880 = vunpack.c.h.b16 %v309
      %v881 = vunpack.c.l.b16 %v310
      %v882 = vunpack.c.h.b16 %v310
      %v883 = vunpack.c.l.b16 %v311
      %v884 = vunpack.c.l.b16 %v312
      %v885 = vunpack.c.h.b16 %v312
      %v886 = vunpack.c.l.b16 %v313
      %v887 = vunpack.c.h.b16 %v313
      %v888 = vunpack.c.l.b16 %v314
      %v889 = vunpack.c.l.b16 %v315
      %v890 = vunpack.c.h.b16 %v315
      %v891 = vunpack.c.l.b16 %v316
      %v892 = vunpack.c.h.b16 %v316
      %v893 = vunpack.c.l.b16 %v317
      %v894 = vunpack.c.l.b16 %v318
      %v895 = vunpack.c.h.b16 %v318
      %v896 = vunpack.c.l.b16 %v319
      %v897 = vunpack.c.h.b16 %v319
      %v898 = vunpack.c.l.b16 %v320
      %v899 = vunpack.c.l.b16 %v321
      %v900 = vunpack.c.h.b16 %v321
      %v901 = vunpack.c.l.b16 %v322
      %v902 = vunpack.c.h.b16 %v322
      %v903 = vunpack.c.l.b16 %v323
      %v904 = vunpack.c.l.b16 %v324
      %v905 = vunpack.c.h.b16 %v324
      %v906 = vunpack.c.l.b16 %v325
      %v907 = vunpack.c.h.b16 %v325
      %v908 = vunpack.c.l.b16 %v326
      %v909 = vunpack.c.l.b16 %v327
      %v910 = vunpack.c.h.b16 %v327
      %v911 = vunpack.c.l.b16 %v328
      %v912 = vunpack.c.h.b16 %v328
      %v913 = vunpack.c.l.b16 %v329
      %v914 = vunpack.c.l.b16 %v330
      %v915 = vunpack.c.h.b16 %v330
      %v916 = vunpack.c.l.b16 %v331
      %v917 = vunpack.c.h.b16 %v331
      %v918 = vunpack.c.l.b16 %v332
      %v919 = vunpack.c.l.b16 %v333
      %v920 = vunpack.c.h.b16 %v333
      %v921 = vunpack.c.l.b16 %v334
      %v922 = vunpack.c.h.b16 %v334
      %v923 = vunpack.c.l.b16 %v335
      %v924 = vunpack.c.l.b16 %v336
      %v925 = vunpack.c.h.b16 %v336
      %v926 = vunpack.c.l.b16 %v337
      %v927 = vunpack.c.h.b16 %v337
      %v928 = vunpack.c.l.b16 %v338
      %v929 = vunpack.c.l.b16 %v339
      %v930 = vunpack.c.h.b16 %v339
      %v931 = vunpack.c.l.b16 %v340
      %v932 = vunpack.c.h.b16 %v340
      %v933 = vunpack.c.l.b16 %v341
      %v934 = vpack.c.b16 %v619, %v614
      %v935 = vpack.c.b16 %v620, %v615
      %v936 = vpack.c.b16 %v621, %v616
      %v937 = vpack.c.b16 %v622, %v617
      %v938 = vpack.c.b16 %v623, %v618
      %v939 = vpack.c.b16 %v629, %v624
      %v940 = vpack.c.b16 %v630, %v625
      %v941 = vpack.c.b16 %v631, %v626
      %v942 = vpack.c.b16 %v632, %v627
      %v943 = vpack.c.b16 %v633, %v628
      %v944 = vpack.c.b16 %v639, %v634
      %v945 = vpack.c.b16 %v640, %v635
      %v946 = vpack.c.b16 %v641, %v636
      %v947 = vpack.c.b16 %v642, %v637
      %v948 = vpack.c.b16 %v643, %v638
      %v949 = vpack.c.b16 %v649, %v644
      %v950 = vpack.c.b16 %v650, %v645
      %v951 = vpack.c.b16 %v651, %v646
      %v952 = vpack.c.b16 %v652, %v647
      %v953 = vpack.c.b16 %v653, %v648
      %v954 = vpack.c.b16 %v659, %v654
      %v955 = vpack.c.b16 %v660, %v655
      %v956 = vpack.c.b16 %v661, %v656
      %v957 = vpack.c.b16 %v662, %v657
      %v958 = vpack.c.b16 %v663, %v658
      %v959 = vpack.c.b16 %v669, %v664
      %v960 = vpack.c.b16 %v670, %v665
      %v961 = vpack.c.b16 %v671, %v666
      %v962 = vpack.c.b16 %v672, %v667
      %v963 = vpack.c.b16 %v673, %v668
      %v964 = vpack.c.b16 %v679, %v674
      %v965 = vpack.c.b16 %v680, %v675
      %v966 = vpack.c.b16 %v681, %v676
      %v967 = vpack.c.b16 %v682, %v677
      %v968 = vpack.c.b16 %v683, %v678
      %v969 = vpack.c.b16 %v689, %v684
      %v970 = vpack.c.b16 %v690, %v685
      %v971 = vpack.c.b16 %v691, %v686
      %v972 = vpack.c.b16 %v692, %v687
      %v973 = vpack.c.b16 %v693, %v688
      %v974 = vpack.c.b16 %v699, %v694
      %v975 = vpack.c.b16 %v700, %v695
      %v976 = vpack.c.b16 %v701, %v696
      %v977 = vpack.c.b16 %v702, %v697
      %v978 = vpack.c.b16 %v703, %v698
      %v979 = vpack.c.b16 %v709, %v704
      %v980 = vpack.c.b16 %v710, %v705
      %v981 = vpack.c.b16 %v711, %v706
      %v982 = vpack.c.b16 %v712, %v707
      %v983 = vpack.c.b16 %v713, %v708
      %v984 = vpack.c.b16 %v719, %v714
      %v985 = vpack.c.b16 %v720, %v715
      %v986 = vpack.c.b16 %v721, %v716
      %v987 = vpack.c.b16 %v722, %v717
      %v988 = vpack.c.b16 %v723, %v718
      %v989 = vpack.c.b16 %v729, %v724
      %v990 = vpack.c.b16 %v730, %v725
      %v991 = vpack.c.b16 %v731, %v726
      %v992 = vpack.c.b16 %v732, %v727
      %v993 = vpack.c.b16 %v733, %v728
      %v994 = vpack.c.b16 %v739, %v734
      %v995 = vpack.c.b16 %v740, %v735
      %v996 = vpack.c.b16 %v741, %v736
      %v997 = vpack.c.b16 %v742, %v737
      %v998 = vpack.c.b16 %v743, %v738
      %v999 = vpack.c.b16 %v749, %v744
      %v1000 = vpack.c.b16 %v750, %v745
      %v1001 = vpack.c.b16 %v751, %v746
      %v1002 = vpack.c.b16 %v752, %v747
      %v1003 = vpack.c.b16 %v753, %v748
      %v1004 = vpack.c.b16 %v759, %v754
      %v1005 = vpack.c.b16 %v760, %v755
      %v1006 = vpack.c.b16 %v761, %v756
      %v1007 = vpack.c.b16 %v762, %v757
      %v1008 = vpack.c.b16 %v763, %v758
      %v1009 = vpack.c.b16 %v769, %v764
      %v1010 = vpack.c.b16 %v770, %v765
      %v1011 = vpack.c.b16 %v771, %v766
      %v1012 = vpack.c.b16 %v772, %v767
      %v1013 = vpack.c.b16 %v773, %v768
      %v1014 = vpack.c.b16 %v779, %v774
      %v1015 = vpack.c.b16 %v780, %v775
      %v1016 = vpack.c.b16 %v781, %v776
      %v1017 = vpack.c.b16 %v782, %v777
      %v1018 = vpack.c.b16 %v783, %v778
      %v1019 = vpack.c.b16 %v789, %v784
      %v1020 = vpack.c.b16 %v790, %v785
      %v1021 = vpack.c.b16 %v791, %v786
      %v1022 = vpack.c.b16 %v792, %v787
      %v1023 = vpack.c.b16 %v793, %v788
      %v1024 = vpack.c.b16 %v799, %v794
      %v1025 = vpack.c.b16 %v800, %v795
      %v1026 = vpack.c.b16 %v801, %v796
      %v1027 = vpack.c.b16 %v802, %v797
      %v1028 = vpack.c.b16 %v803, %v798
      %v1029 = vpack.c.b16 %v809, %v804
      %v1030 = vpack.c.b16 %v810, %v805
      %v1031 = vpack.c.b16 %v811, %v806
      %v1032 = vpack.c.b16 %v812, %v807
      %v1033 = vpack.c.b16 %v813, %v808
      %v1034 = vpack.c.b16 %v819, %v814
      %v1035 = vpack.c.b16 %v820, %v815
      %v1036 = vpack.c.b16 %v821, %v816
      %v1037 = vpack.c.b16 %v822, %v817
      %v1038 = vpack.c.b16 %v823, %v818
      %v1039 = vpack.c.b16 %v829, %v824
      %v1040 = vpack.c.b16 %v830, %v825
      %v1041 = vpack.c.b16 %v831, %v826
      %v1042 = vpack.c.b16 %v832, %v827
      %v1043 = vpack.c.b16 %v833, %v828
      %v1044 = vpack.c.b16 %v839, %v834
      %v1045 = vpack.c.b16 %v840, %v835
      %v1046 = vpack.c.b16 %v841, %v836
      %v1047 = vpack.c.b16 %v842, %v837
      %v1048 = vpack.c.b16 %v843, %v838
      %v1049 = vpack.c.b16 %v849, %v844
      %v1050 = vpack.c.b16 %v850, %v845
      %v1051 = vpack.c.b16 %v851, %v846
      %v1052 = vpack.c.b16 %v852, %v847
      %v1053 = vpack.c.b16 %v853, %v848
      %v1054 = vpack.c.b16 %v859, %v854
      %v1055 = vpack.c.b16 %v860, %v855
      %v1056 = vpack.c.b16 %v861, %v856
      %v1057 = vpack.c.b16 %v862, %v857
      %v1058 = vpack.c.b16 %v863, %v858
      %v1059 = vpack.c.b16 %v869, %v864
      %v1060 = vpack.c.b16 %v870, %v865
      %v1061 = vpack.c.b16 %v871, %v866
      %v1062 = vpack.c.b16 %v872, %v867
      %v1063 = vpack.c.b16 %v873, %v868
      %v1064 = vpack.c.b16 %v879, %v874
      %v1065 = vpack.c.b16 %v880, %v875
      %v1066 = vpack.c.b16 %v881, %v876
      %v1067 = vpack.c.b16 %v882, %v877
      %v1068 = vpack.c.b16 %v883, %v878
      %v1069 = vpack.c.b16 %v889, %v884
      %v1070 = vpack.c.b16 %v890, %v885
      %v1071 = vpack.c.b16 %v891, %v886
      %v1072 = vpack.c.b16 %v892, %v887
      %v1073 = vpack.c.b16 %v893, %v888
      %v1074 = vpack.c.b16 %v899, %v894
      %v1075 = vpack.c.b16 %v900, %v895
      %v1076 = vpack.c.b16 %v901, %v896
      %v1077 = vpack.c.b16 %v902, %v897
      %v1078 = vpack.c.b16 %v903, %v898
      %v1079 = vpack.c.b16 %v909, %v904
      %v1080 = vpack.c.b16 %v910, %v905
      %v1081 = vpack.c.b16 %v911, %v906
      %v1082 = vpack.c.b16 %v912, %v907
      %v1083 = vpack.c.b16 %v913, %v908
      %v1084 = vpack.c.b16 %v919, %v914
      %v1085 = vpack.c.b16 %v920, %v915
      %v1086 = vpack.c.b16 %v921, %v916
      %v1087 = vpack.c.b16 %v922, %v917
      %v1088 = vpack.c.b16 %v923, %v918
      %v1089 = vpack.c.b16 %v929, %v924
      %v1090 = vpack.c.b16 %v930, %v925
      %v1091 = vpack.c.b16 %v931, %v926
      %v1092 = vpack.c.b16 %v932, %v927
      %v1093 = vpack.c.b16 %v933, %v928
      %v1334 = vunpack.c.l.b16 %v342
      %v1335 = vunpack.c.l.b16 %v343
      %v1336 = vunpack.c.l.b16 %v344
      %v1337 = vunpack.c.l.b16 %v345
      %v1338 = vunpack.c.l.b16 %v346
      %v1339 = vunpack.c.l.b16 %v347
      %v1340 = vunpack.c.l.b16 %v348
      %v1341 = vunpack.c.l.b16 %v349
      %v1342 = vunpack.c.l.b16 %v350
      %v1343 = vunpack.c.l.b16 %v351
      %v1344 = vunpack.c.l.b16 %v352
      %v1345 = vunpack.c.l.b16 %v353
      %v1346 = vunpack.c.l.b16 %v354
      %v1347 = vunpack.c.l.b16 %v355
      %v1348 = vunpack.c.l.b16 %v356
      %v1349 = vunpack.c.l.b16 %v357
      %v1350 = vunpack.c.l.b16 %v358
      %v1351 = vunpack.c.l.b16 %v359
      %v1352 = vunpack.c.l.b16 %v360
      %v1353 = vunpack.c.l.b16 %v361
      %v1354 = vunpack.c.l.b16 %v362
      %v1355 = vunpack.c.l.b16 %v363
      %v1356 = vunpack.c.l.b16 %v364
      %v1357 = vunpack.c.l.b16 %v365
      %v1358 = vunpack.c.l.b16 %v366
      %v1359 = vunpack.c.l.b16 %v367
      %v1360 = vunpack.c.l.b16 %v368
      %v1361 = vunpack.c.l.b16 %v369
      %v1362 = vunpack.c.l.b16 %v370
      %v1363 = vunpack.c.l.b16 %v371
      %v1364 = vunpack.c.l.b16 %v372
      %v1365 = vunpack.c.l.b16 %v373
      %v1366 = vunpack.c.l.b16 %v374
      %v1367 = vunpack.c.l.b16 %v375
      %v1368 = vunpack.c.l.b16 %v376
      %v1369 = vunpack.c.l.b16 %v377
      %v1370 = vunpack.c.l.b16 %v378
      %v1371 = vunpack.c.l.b16 %v379
      %v1372 = vunpack.c.l.b16 %v380
      %v1373 = vunpack.c.l.b16 %v381
      %v1374 = vunpack.c.l.b16 %v382
      %v1375 = vunpack.c.l.b16 %v383
      %v1376 = vunpack.c.l.b16 %v384
      %v1377 = vunpack.c.l.b16 %v385
      %v1378 = vunpack.c.l.b16 %v386
      %v1379 = vunpack.c.l.b16 %v387
      %v1380 = vunpack.c.l.b16 %v388
      %v1381 = vunpack.c.l.b16 %v389
      %v1382 = vunpack.c.l.b16 %v390
      %v1383 = vunpack.c.l.b16 %v391
      %v1384 = vunpack.c.l.b16 %v392
      %v1385 = vunpack.c.l.b16 %v393
      %v1386 = vunpack.c.l.b16 %v394
      %v1387 = vunpack.c.l.b16 %v395
      %v1388 = vunpack.c.l.b16 %v396
      %v1389 = vunpack.c.l.b16 %v397
      %v1390 = vunpack.c.l.b16 %v398
      %v1391 = vunpack.c.l.b16 %v399
      %v1392 = vunpack.c.l.b16 %v400
      %v1393 = vunpack.c.l.b16 %v401
      %v1394 = vunpack.c.l.b16 %v402
      %v1395 = vunpack.c.l.b16 %v403
      %v1396 = vunpack.c.l.b16 %v404
      %v1397 = vunpack.c.l.b16 %v405
      %v1398 = vunpack.c.l.b16 %v406
      %v1399 = vunpack.c.l.b16 %v407
      %v1400 = vunpack.c.l.b16 %v408
      %v1401 = vunpack.c.l.b16 %v409
      %v1402 = vunpack.c.l.b16 %v410
      %v1403 = vunpack.c.l.b16 %v411
      %v1404 = vunpack.c.l.b16 %v412
      %v1405 = vunpack.c.l.b16 %v413
      %v1406 = vunpack.c.l.b16 %v414
      %v1407 = vunpack.c.l.b16 %v415
      %v1408 = vunpack.c.l.b16 %v416
      %v1409 = vunpack.c.l.b16 %v417
      %v1410 = vunpack.c.l.b16 %v418
      %v1411 = vunpack.c.l.b16 %v419
      %v1412 = vunpack.c.l.b16 %v420
      %v1413 = vunpack.c.l.b16 %v421
      %v1414 = vpack.c.b16 %v1335, %v1334
      %v1415 = vpack.c.b16 %v1337, %v1336
      %v1416 = vpack.c.b16 %v1339, %v1338
      %v1417 = vpack.c.b16 %v1341, %v1340
      %v1418 = vpack.c.b16 %v1343, %v1342
      %v1419 = vpack.c.b16 %v1345, %v1344
      %v1420 = vpack.c.b16 %v1347, %v1346
      %v1421 = vpack.c.b16 %v1349, %v1348
      %v1422 = vpack.c.b16 %v1351, %v1350
      %v1423 = vpack.c.b16 %v1353, %v1352
      %v1424 = vpack.c.b16 %v1355, %v1354
      %v1425 = vpack.c.b16 %v1357, %v1356
      %v1426 = vpack.c.b16 %v1359, %v1358
      %v1427 = vpack.c.b16 %v1361, %v1360
      %v1428 = vpack.c.b16 %v1363, %v1362
      %v1429 = vpack.c.b16 %v1365, %v1364
      %v1430 = vpack.c.b16 %v1367, %v1366
      %v1431 = vpack.c.b16 %v1369, %v1368
      %v1432 = vpack.c.b16 %v1371, %v1370
      %v1433 = vpack.c.b16 %v1373, %v1372
      %v1434 = vpack.c.b16 %v1375, %v1374
      %v1435 = vpack.c.b16 %v1377, %v1376
      %v1436 = vpack.c.b16 %v1379, %v1378
      %v1437 = vpack.c.b16 %v1381, %v1380
      %v1438 = vpack.c.b16 %v1383, %v1382
      %v1439 = vpack.c.b16 %v1385, %v1384
      %v1440 = vpack.c.b16 %v1387, %v1386
      %v1441 = vpack.c.b16 %v1389, %v1388
      %v1442 = vpack.c.b16 %v1391, %v1390
      %v1443 = vpack.c.b16 %v1393, %v1392
      %v1444 = vpack.c.b16 %v1395, %v1394
      %v1445 = vpack.c.b16 %v1397, %v1396
      %v1446 = vpack.c.b16 %v1399, %v1398
      %v1447 = vpack.c.b16 %v1401, %v1400
      %v1448 = vpack.c.b16 %v1403, %v1402
      %v1449 = vpack.c.b16 %v1405, %v1404
      %v1450 = vpack.c.b16 %v1407, %v1406
      %v1451 = vpack.c.b16 %v1409, %v1408
      %v1452 = vpack.c.b16 %v1411, %v1410
      %v1453 = vpack.c.b16 %v1413, %v1412
      %1494 = vmatpush.bf16.msra.mxu0 %v1421
      %1495 = vmatpush.bf16.msra.mxu0 %v1420
      %1496 = vmatpush.bf16.msra.mxu0 %v1419
      %1497 = vmatpush.bf16.msra.mxu0 %v1418
      %1498 = vmatpush.bf16.msra.mxu0 %v1417
      %1499 = vmatpush.bf16.msra.mxu0 %v1416
      %1500 = vmatpush.bf16.msra.mxu0 %v1415
      %1501 = vmatpush.bf16.msra.mxu0 %v1414
      %1502 = vmatmul.bf16.gmra.mxu0 %v934
      %v1503 = vpop.f32.mrf.mxu0
      %v1504 = vadd.f32 0.0, %v1503
      %v1505 = vpop.f32.mrf.mxu0
      %v1506 = vadd.f32 0.0, %v1505
      %1507 = vmatmul.bf16.gmra.mxu0 %v939
      %v1508 = vpop.f32.mrf.mxu0
      %v1509 = vadd.f32 0.0, %v1508
      %v1510 = vpop.f32.mrf.mxu0
      %v1511 = vadd.f32 0.0, %v1510
      %1512 = vmatmul.bf16.gmra.mxu0 %v944
      %v1513 = vpop.f32.mrf.mxu0
      %v1514 = vadd.f32 0.0, %v1513
      %v1515 = vpop.f32.mrf.mxu0
      %v1516 = vadd.f32 0.0, %v1515
      %1517 = vmatmul.bf16.gmra.mxu0 %v949
      %v1518 = vpop.f32.mrf.mxu0
      %v1519 = vadd.f32 0.0, %v1518
      %v1520 = vpop.f32.mrf.mxu0
      %v1521 = vadd.f32 0.0, %v1520
      %1522 = vmatmul.bf16.gmra.mxu0 %v954
      %v1523 = vpop.f32.mrf.mxu0
      %v1524 = vadd.f32 0.0, %v1523
      %v1525 = vpop.f32.mrf.mxu0
      %v1526 = vadd.f32 0.0, %v1525
      %1527 = vmatmul.bf16.gmra.mxu0 %v959
      %v1528 = vpop.f32.mrf.mxu0
      %v1529 = vadd.f32 0.0, %v1528
      %v1530 = vpop.f32.mrf.mxu0
      %v1531 = vadd.f32 0.0, %v1530
      %1532 = vmatmul.bf16.gmra.mxu0 %v964
      %v1533 = vpop.f32.mrf.mxu0
      %v1534 = vadd.f32 0.0, %v1533
      %v1535 = vpop.f32.mrf.mxu0
      %v1536 = vadd.f32 0.0, %v1535
      %1537 = vmatmul.bf16.gmra.mxu0 %v969
      %v1538 = vpop.f32.mrf.mxu0
      %v1539 = vadd.f32 0.0, %v1538
      %v1540 = vpop.f32.mrf.mxu0
      %v1541 = vadd.f32 0.0, %v1540
      %1542 = vmatmul.bf16.gmra.mxu0 %v974
      %v1543 = vpop.f32.mrf.mxu0
      %v1544 = vadd.f32 0.0, %v1543
      %v1545 = vpop.f32.mrf.mxu0
      %v1546 = vadd.f32 0.0, %v1545
      %1547 = vmatmul.bf16.gmra.mxu0 %v979
      %v1548 = vpop.f32.mrf.mxu0
      %v1549 = vadd.f32 0.0, %v1548
      %v1550 = vpop.f32.mrf.mxu0
      %v1551 = vadd.f32 0.0, %v1550
      %1552 = vmatmul.bf16.gmra.mxu0 %v984
      %v1553 = vpop.f32.mrf.mxu0
      %v1554 = vadd.f32 0.0, %v1553
      %v1555 = vpop.f32.mrf.mxu0
      %v1556 = vadd.f32 0.0, %v1555
      %1557 = vmatmul.bf16.gmra.mxu0 %v989
      %v1558 = vpop.f32.mrf.mxu0
      %v1559 = vadd.f32 0.0, %v1558
      %v1560 = vpop.f32.mrf.mxu0
      %v1561 = vadd.f32 0.0, %v1560
      %1562 = vmatmul.bf16.gmra.mxu0 %v994
      %v1563 = vpop.f32.mrf.mxu0
      %v1564 = vadd.f32 0.0, %v1563
      %v1565 = vpop.f32.mrf.mxu0
      %v1566 = vadd.f32 0.0, %v1565
      %1567 = vmatmul.bf16.gmra.mxu0 %v999
      %v1568 = vpop.f32.mrf.mxu0
      %v1569 = vadd.f32 0.0, %v1568
      %v1570 = vpop.f32.mrf.mxu0
      %v1571 = vadd.f32 0.0, %v1570
      %1572 = vmatmul.bf16.gmra.mxu0 %v1004
      %v1573 = vpop.f32.mrf.mxu0
      %v1574 = vadd.f32 0.0, %v1573
      %v1575 = vpop.f32.mrf.mxu0
      %v1576 = vadd.f32 0.0, %v1575
      %1577 = vmatmul.bf16.gmra.mxu0 %v1009
      %v1578 = vpop.f32.mrf.mxu0
      %v1579 = vadd.f32 0.0, %v1578
      %v1580 = vpop.f32.mrf.mxu0
      %v1581 = vadd.f32 0.0, %v1580
      %1582 = vmatmul.bf16.gmra.mxu0 %v1014
      %v1583 = vpop.f32.mrf.mxu0
      %v1584 = vadd.f32 0.0, %v1583
      %v1585 = vpop.f32.mrf.mxu0
      %v1586 = vadd.f32 0.0, %v1585
      %1587 = vmatmul.bf16.gmra.mxu0 %v1019
      %v1588 = vpop.f32.mrf.mxu0
      %v1589 = vadd.f32 0.0, %v1588
      %v1590 = vpop.f32.mrf.mxu0
      %v1591 = vadd.f32 0.0, %v1590
      %1592 = vmatmul.bf16.gmra.mxu0 %v1024
      %v1593 = vpop.f32.mrf.mxu0
      %v1594 = vadd.f32 0.0, %v1593
      %v1595 = vpop.f32.mrf.mxu0
      %v1596 = vadd.f32 0.0, %v1595
      %1597 = vmatmul.bf16.gmra.mxu0 %v1029
      %v1598 = vpop.f32.mrf.mxu0
      %v1599 = vadd.f32 0.0, %v1598
      %v1600 = vpop.f32.mrf.mxu0
      %v1601 = vadd.f32 0.0, %v1600
      %1602 = vmatmul.bf16.gmra.mxu0 %v1034
      %v1603 = vpop.f32.mrf.mxu0
      %v1604 = vadd.f32 0.0, %v1603
      %v1605 = vpop.f32.mrf.mxu0
      %v1606 = vadd.f32 0.0, %v1605
      %1607 = vmatmul.bf16.gmra.mxu0 %v1039
      %v1608 = vpop.f32.mrf.mxu0
      %v1609 = vadd.f32 0.0, %v1608
      %v1610 = vpop.f32.mrf.mxu0
      %v1611 = vadd.f32 0.0, %v1610
      %1612 = vmatmul.bf16.gmra.mxu0 %v1044
      %v1613 = vpop.f32.mrf.mxu0
      %v1614 = vadd.f32 0.0, %v1613
      %v1615 = vpop.f32.mrf.mxu0
      %v1616 = vadd.f32 0.0, %v1615
      %1617 = vmatmul.bf16.gmra.mxu0 %v1049
      %v1618 = vpop.f32.mrf.mxu0
      %v1619 = vadd.f32 0.0, %v1618
      %v1620 = vpop.f32.mrf.mxu0
      %v1621 = vadd.f32 0.0, %v1620
      %1622 = vmatmul.bf16.gmra.mxu0 %v1054
      %v1623 = vpop.f32.mrf.mxu0
      %v1624 = vadd.f32 0.0, %v1623
      %v1625 = vpop.f32.mrf.mxu0
      %v1626 = vadd.f32 0.0, %v1625
      %1627 = vmatmul.bf16.gmra.mxu0 %v1059
      %v1628 = vpop.f32.mrf.mxu0
      %v1629 = vadd.f32 0.0, %v1628
      %v1630 = vpop.f32.mrf.mxu0
      %v1631 = vadd.f32 0.0, %v1630
      %1632 = vmatmul.bf16.gmra.mxu0 %v1064
      %v1633 = vpop.f32.mrf.mxu0
      %v1634 = vadd.f32 0.0, %v1633
      %v1635 = vpop.f32.mrf.mxu0
      %v1636 = vadd.f32 0.0, %v1635
      %1637 = vmatmul.bf16.gmra.mxu0 %v1069
      %v1638 = vpop.f32.mrf.mxu0
      %v1639 = vadd.f32 0.0, %v1638
      %v1640 = vpop.f32.mrf.mxu0
      %v1641 = vadd.f32 0.0, %v1640
      %1642 = vmatmul.bf16.gmra.mxu0 %v1074
      %v1643 = vpop.f32.mrf.mxu0
      %v1644 = vadd.f32 0.0, %v1643
      %v1645 = vpop.f32.mrf.mxu0
      %v1646 = vadd.f32 0.0, %v1645
      %1647 = vmatmul.bf16.gmra.mxu0 %v1079
      %v1648 = vpop.f32.mrf.mxu0
      %v1649 = vadd.f32 0.0, %v1648
      %v1650 = vpop.f32.mrf.mxu0
      %v1651 = vadd.f32 0.0, %v1650
      %1652 = vmatmul.bf16.gmra.mxu0 %v1084
      %v1653 = vpop.f32.mrf.mxu0
      %v1654 = vadd.f32 0.0, %v1653
      %v1655 = vpop.f32.mrf.mxu0
      %v1656 = vadd.f32 0.0, %v1655
      %1657 = vmatmul.bf16.gmra.mxu0 %v1089
      %v1658 = vpop.f32.mrf.mxu0
      %v1659 = vadd.f32 0.0, %v1658
      %v1660 = vpop.f32.mrf.mxu0
      %v1661 = vadd.f32 0.0, %v1660
      %1662 = vdwg.mxu0
      %1663 = vmatpush.bf16.msra.mxu0 %v1429
      %1664 = vmatpush.bf16.msra.mxu0 %v1428
      %1665 = vmatpush.bf16.msra.mxu0 %v1427
      %1666 = vmatpush.bf16.msra.mxu0 %v1426
      %1667 = vmatpush.bf16.msra.mxu0 %v1425
      %1668 = vmatpush.bf16.msra.mxu0 %v1424
      %1669 = vmatpush.bf16.msra.mxu0 %v1423
      %1670 = vmatpush.bf16.msra.mxu0 %v1422
      %1671 = vmatmul.bf16.gmra.mxu0 %v935
      %v1672 = vpop.f32.mrf.mxu0
      %v1673 = vadd.f32 %v1504, %v1672
      %v1674 = vpop.f32.mrf.mxu0
      %v1675 = vadd.f32 %v1506, %v1674
      %1676 = vmatmul.bf16.gmra.mxu0 %v940
      %v1677 = vpop.f32.mrf.mxu0
      %v1678 = vadd.f32 %v1509, %v1677
      %v1679 = vpop.f32.mrf.mxu0
      %v1680 = vadd.f32 %v1511, %v1679
      %1681 = vmatmul.bf16.gmra.mxu0 %v945
      %v1682 = vpop.f32.mrf.mxu0
      %v1683 = vadd.f32 %v1514, %v1682
      %v1684 = vpop.f32.mrf.mxu0
      %v1685 = vadd.f32 %v1516, %v1684
      %1686 = vmatmul.bf16.gmra.mxu0 %v950
      %v1687 = vpop.f32.mrf.mxu0
      %v1688 = vadd.f32 %v1519, %v1687
      %v1689 = vpop.f32.mrf.mxu0
      %v1690 = vadd.f32 %v1521, %v1689
      %1691 = vmatmul.bf16.gmra.mxu0 %v955
      %v1692 = vpop.f32.mrf.mxu0
      %v1693 = vadd.f32 %v1524, %v1692
      %v1694 = vpop.f32.mrf.mxu0
      %v1695 = vadd.f32 %v1526, %v1694
      %1696 = vmatmul.bf16.gmra.mxu0 %v960
      %v1697 = vpop.f32.mrf.mxu0
      %v1698 = vadd.f32 %v1529, %v1697
      %v1699 = vpop.f32.mrf.mxu0
      %v1700 = vadd.f32 %v1531, %v1699
      %1701 = vmatmul.bf16.gmra.mxu0 %v965
      %v1702 = vpop.f32.mrf.mxu0
      %v1703 = vadd.f32 %v1534, %v1702
      %v1704 = vpop.f32.mrf.mxu0
      %v1705 = vadd.f32 %v1536, %v1704
      %1706 = vmatmul.bf16.gmra.mxu0 %v970
      %v1707 = vpop.f32.mrf.mxu0
      %v1708 = vadd.f32 %v1539, %v1707
      %v1709 = vpop.f32.mrf.mxu0
      %v1710 = vadd.f32 %v1541, %v1709
      %1711 = vmatmul.bf16.gmra.mxu0 %v975
      %v1712 = vpop.f32.mrf.mxu0
      %v1713 = vadd.f32 %v1544, %v1712
      %v1714 = vpop.f32.mrf.mxu0
      %v1715 = vadd.f32 %v1546, %v1714
      %1716 = vmatmul.bf16.gmra.mxu0 %v980
      %v1717 = vpop.f32.mrf.mxu0
      %v1718 = vadd.f32 %v1549, %v1717
      %v1719 = vpop.f32.mrf.mxu0
      %v1720 = vadd.f32 %v1551, %v1719
      %1721 = vmatmul.bf16.gmra.mxu0 %v985
      %v1722 = vpop.f32.mrf.mxu0
      %v1723 = vadd.f32 %v1554, %v1722
      %v1724 = vpop.f32.mrf.mxu0
      %v1725 = vadd.f32 %v1556, %v1724
      %1726 = vmatmul.bf16.gmra.mxu0 %v990
      %v1727 = vpop.f32.mrf.mxu0
      %v1728 = vadd.f32 %v1559, %v1727
      %v1729 = vpop.f32.mrf.mxu0
      %v1730 = vadd.f32 %v1561, %v1729
      %1731 = vmatmul.bf16.gmra.mxu0 %v995
      %v1732 = vpop.f32.mrf.mxu0
      %v1733 = vadd.f32 %v1564, %v1732
      %v1734 = vpop.f32.mrf.mxu0
      %v1735 = vadd.f32 %v1566, %v1734
      %1736 = vmatmul.bf16.gmra.mxu0 %v1000
      %v1737 = vpop.f32.mrf.mxu0
      %v1738 = vadd.f32 %v1569, %v1737
      %v1739 = vpop.f32.mrf.mxu0
      %v1740 = vadd.f32 %v1571, %v1739
      %1741 = vmatmul.bf16.gmra.mxu0 %v1005
      %v1742 = vpop.f32.mrf.mxu0
      %v1743 = vadd.f32 %v1574, %v1742
      %v1744 = vpop.f32.mrf.mxu0
      %v1745 = vadd.f32 %v1576, %v1744
      %1746 = vmatmul.bf16.gmra.mxu0 %v1010
      %v1747 = vpop.f32.mrf.mxu0
      %v1748 = vadd.f32 %v1579, %v1747
      %v1749 = vpop.f32.mrf.mxu0
      %v1750 = vadd.f32 %v1581, %v1749
      %1751 = vmatmul.bf16.gmra.mxu0 %v1015
      %v1752 = vpop.f32.mrf.mxu0
      %v1753 = vadd.f32 %v1584, %v1752
      %v1754 = vpop.f32.mrf.mxu0
      %v1755 = vadd.f32 %v1586, %v1754
      %1756 = vmatmul.bf16.gmra.mxu0 %v1020
      %v1757 = vpop.f32.mrf.mxu0
      %v1758 = vadd.f32 %v1589, %v1757
      %v1759 = vpop.f32.mrf.mxu0
      %v1760 = vadd.f32 %v1591, %v1759
      %1761 = vmatmul.bf16.gmra.mxu0 %v1025
      %v1762 = vpop.f32.mrf.mxu0
      %v1763 = vadd.f32 %v1594, %v1762
      %v1764 = vpop.f32.mrf.mxu0
      %v1765 = vadd.f32 %v1596, %v1764
      %1766 = vmatmul.bf16.gmra.mxu0 %v1030
      %v1767 = vpop.f32.mrf.mxu0
      %v1768 = vadd.f32 %v1599, %v1767
      %v1769 = vpop.f32.mrf.mxu0
      %v1770 = vadd.f32 %v1601, %v1769
      %1771 = vmatmul.bf16.gmra.mxu0 %v1035
      %v1772 = vpop.f32.mrf.mxu0
      %v1773 = vadd.f32 %v1604, %v1772
      %v1774 = vpop.f32.mrf.mxu0
      %v1775 = vadd.f32 %v1606, %v1774
      %1776 = vmatmul.bf16.gmra.mxu0 %v1040
      %v1777 = vpop.f32.mrf.mxu0
      %v1778 = vadd.f32 %v1609, %v1777
      %v1779 = vpop.f32.mrf.mxu0
      %v1780 = vadd.f32 %v1611, %v1779
      %1781 = vmatmul.bf16.gmra.mxu0 %v1045
      %v1782 = vpop.f32.mrf.mxu0
      %v1783 = vadd.f32 %v1614, %v1782
      %v1784 = vpop.f32.mrf.mxu0
      %v1785 = vadd.f32 %v1616, %v1784
      %1786 = vmatmul.bf16.gmra.mxu0 %v1050
      %v1787 = vpop.f32.mrf.mxu0
      %v1788 = vadd.f32 %v1619, %v1787
      %v1789 = vpop.f32.mrf.mxu0
      %v1790 = vadd.f32 %v1621, %v1789
      %1791 = vmatmul.bf16.gmra.mxu0 %v1055
      %v1792 = vpop.f32.mrf.mxu0
      %v1793 = vadd.f32 %v1624, %v1792
      %v1794 = vpop.f32.mrf.mxu0
      %v1795 = vadd.f32 %v1626, %v1794
      %1796 = vmatmul.bf16.gmra.mxu0 %v1060
      %v1797 = vpop.f32.mrf.mxu0
      %v1798 = vadd.f32 %v1629, %v1797
      %v1799 = vpop.f32.mrf.mxu0
      %v1800 = vadd.f32 %v1631, %v1799
      %1801 = vmatmul.bf16.gmra.mxu0 %v1065
      %v1802 = vpop.f32.mrf.mxu0
      %v1803 = vadd.f32 %v1634, %v1802
      %v1804 = vpop.f32.mrf.mxu0
      %v1805 = vadd.f32 %v1636, %v1804
      %1806 = vmatmul.bf16.gmra.mxu0 %v1070
      %v1807 = vpop.f32.mrf.mxu0
      %v1808 = vadd.f32 %v1639, %v1807
      %v1809 = vpop.f32.mrf.mxu0
      %v1810 = vadd.f32 %v1641, %v1809
      %1811 = vmatmul.bf16.gmra.mxu0 %v1075
      %v1812 = vpop.f32.mrf.mxu0
      %v1813 = vadd.f32 %v1644, %v1812
      %v1814 = vpop.f32.mrf.mxu0
      %v1815 = vadd.f32 %v1646, %v1814
      %1816 = vmatmul.bf16.gmra.mxu0 %v1080
      %v1817 = vpop.f32.mrf.mxu0
      %v1818 = vadd.f32 %v1649, %v1817
      %v1819 = vpop.f32.mrf.mxu0
      %v1820 = vadd.f32 %v1651, %v1819
      %1821 = vmatmul.bf16.gmra.mxu0 %v1085
      %v1822 = vpop.f32.mrf.mxu0
      %v1823 = vadd.f32 %v1654, %v1822
      %v1824 = vpop.f32.mrf.mxu0
      %v1825 = vadd.f32 %v1656, %v1824
      %1826 = vmatmul.bf16.gmra.mxu0 %v1090
      %v1827 = vpop.f32.mrf.mxu0
      %v1828 = vadd.f32 %v1659, %v1827
      %v1829 = vpop.f32.mrf.mxu0
      %v1830 = vadd.f32 %v1661, %v1829
      %1831 = vdwg.mxu0
      %1832 = vmatpush.bf16.msra.mxu0 %v1437
      %1833 = vmatpush.bf16.msra.mxu0 %v1436
      %1834 = vmatpush.bf16.msra.mxu0 %v1435
      %1835 = vmatpush.bf16.msra.mxu0 %v1434
      %1836 = vmatpush.bf16.msra.mxu0 %v1433
      %1837 = vmatpush.bf16.msra.mxu0 %v1432
      %1838 = vmatpush.bf16.msra.mxu0 %v1431
      %1839 = vmatpush.bf16.msra.mxu0 %v1430
      %1840 = vmatmul.bf16.gmra.mxu0 %v936
      %v1841 = vpop.f32.mrf.mxu0
      %v1842 = vadd.f32 %v1673, %v1841
      %v1843 = vpop.f32.mrf.mxu0
      %v1844 = vadd.f32 %v1675, %v1843
      %1845 = vmatmul.bf16.gmra.mxu0 %v941
      %v1846 = vpop.f32.mrf.mxu0
      %v1847 = vadd.f32 %v1678, %v1846
      %v1848 = vpop.f32.mrf.mxu0
      %v1849 = vadd.f32 %v1680, %v1848
      %1850 = vmatmul.bf16.gmra.mxu0 %v946
      %v1851 = vpop.f32.mrf.mxu0
      %v1852 = vadd.f32 %v1683, %v1851
      %v1853 = vpop.f32.mrf.mxu0
      %v1854 = vadd.f32 %v1685, %v1853
      %1855 = vmatmul.bf16.gmra.mxu0 %v951
      %v1856 = vpop.f32.mrf.mxu0
      %v1857 = vadd.f32 %v1688, %v1856
      %v1858 = vpop.f32.mrf.mxu0
      %v1859 = vadd.f32 %v1690, %v1858
      %1860 = vmatmul.bf16.gmra.mxu0 %v956
      %v1861 = vpop.f32.mrf.mxu0
      %v1862 = vadd.f32 %v1693, %v1861
      %v1863 = vpop.f32.mrf.mxu0
      %v1864 = vadd.f32 %v1695, %v1863
      %1865 = vmatmul.bf16.gmra.mxu0 %v961
      %v1866 = vpop.f32.mrf.mxu0
      %v1867 = vadd.f32 %v1698, %v1866
      %v1868 = vpop.f32.mrf.mxu0
      %v1869 = vadd.f32 %v1700, %v1868
      %1870 = vmatmul.bf16.gmra.mxu0 %v966
      %v1871 = vpop.f32.mrf.mxu0
      %v1872 = vadd.f32 %v1703, %v1871
      %v1873 = vpop.f32.mrf.mxu0
      %v1874 = vadd.f32 %v1705, %v1873
      %1875 = vmatmul.bf16.gmra.mxu0 %v971
      %v1876 = vpop.f32.mrf.mxu0
      %v1877 = vadd.f32 %v1708, %v1876
      %v1878 = vpop.f32.mrf.mxu0
      %v1879 = vadd.f32 %v1710, %v1878
      %1880 = vmatmul.bf16.gmra.mxu0 %v976
      %v1881 = vpop.f32.mrf.mxu0
      %v1882 = vadd.f32 %v1713, %v1881
      %v1883 = vpop.f32.mrf.mxu0
      %v1884 = vadd.f32 %v1715, %v1883
      %1885 = vmatmul.bf16.gmra.mxu0 %v981
      %v1886 = vpop.f32.mrf.mxu0
      %v1887 = vadd.f32 %v1718, %v1886
      %v1888 = vpop.f32.mrf.mxu0
      %v1889 = vadd.f32 %v1720, %v1888
      %1890 = vmatmul.bf16.gmra.mxu0 %v986
      %v1891 = vpop.f32.mrf.mxu0
      %v1892 = vadd.f32 %v1723, %v1891
      %v1893 = vpop.f32.mrf.mxu0
      %v1894 = vadd.f32 %v1725, %v1893
      %1895 = vmatmul.bf16.gmra.mxu0 %v991
      %v1896 = vpop.f32.mrf.mxu0
      %v1897 = vadd.f32 %v1728, %v1896
      %v1898 = vpop.f32.mrf.mxu0
      %v1899 = vadd.f32 %v1730, %v1898
      %1900 = vmatmul.bf16.gmra.mxu0 %v996
      %v1901 = vpop.f32.mrf.mxu0
      %v1902 = vadd.f32 %v1733, %v1901
      %v1903 = vpop.f32.mrf.mxu0
      %v1904 = vadd.f32 %v1735, %v1903
      %1905 = vmatmul.bf16.gmra.mxu0 %v1001
      %v1906 = vpop.f32.mrf.mxu0
      %v1907 = vadd.f32 %v1738, %v1906
      %v1908 = vpop.f32.mrf.mxu0
      %v1909 = vadd.f32 %v1740, %v1908
      %1910 = vmatmul.bf16.gmra.mxu0 %v1006
      %v1911 = vpop.f32.mrf.mxu0
      %v1912 = vadd.f32 %v1743, %v1911
      %v1913 = vpop.f32.mrf.mxu0
      %v1914 = vadd.f32 %v1745, %v1913
      %1915 = vmatmul.bf16.gmra.mxu0 %v1011
      %v1916 = vpop.f32.mrf.mxu0
      %v1917 = vadd.f32 %v1748, %v1916
      %v1918 = vpop.f32.mrf.mxu0
      %v1919 = vadd.f32 %v1750, %v1918
      %1920 = vmatmul.bf16.gmra.mxu0 %v1016
      %v1921 = vpop.f32.mrf.mxu0
      %v1922 = vadd.f32 %v1753, %v1921
      %v1923 = vpop.f32.mrf.mxu0
      %v1924 = vadd.f32 %v1755, %v1923
      %1925 = vmatmul.bf16.gmra.mxu0 %v1021
      %v1926 = vpop.f32.mrf.mxu0
      %v1927 = vadd.f32 %v1758, %v1926
      %v1928 = vpop.f32.mrf.mxu0
      %v1929 = vadd.f32 %v1760, %v1928
      %1930 = vmatmul.bf16.gmra.mxu0 %v1026
      %v1931 = vpop.f32.mrf.mxu0
      %v1932 = vadd.f32 %v1763, %v1931
      %v1933 = vpop.f32.mrf.mxu0
      %v1934 = vadd.f32 %v1765, %v1933
      %1935 = vmatmul.bf16.gmra.mxu0 %v1031
      %v1936 = vpop.f32.mrf.mxu0
      %v1937 = vadd.f32 %v1768, %v1936
      %v1938 = vpop.f32.mrf.mxu0
      %v1939 = vadd.f32 %v1770, %v1938
      %1940 = vmatmul.bf16.gmra.mxu0 %v1036
      %v1941 = vpop.f32.mrf.mxu0
      %v1942 = vadd.f32 %v1773, %v1941
      %v1943 = vpop.f32.mrf.mxu0
      %v1944 = vadd.f32 %v1775, %v1943
      %1945 = vmatmul.bf16.gmra.mxu0 %v1041
      %v1946 = vpop.f32.mrf.mxu0
      %v1947 = vadd.f32 %v1778, %v1946
      %v1948 = vpop.f32.mrf.mxu0
      %v1949 = vadd.f32 %v1780, %v1948
      %1950 = vmatmul.bf16.gmra.mxu0 %v1046
      %v1951 = vpop.f32.mrf.mxu0
      %v1952 = vadd.f32 %v1783, %v1951
      %v1953 = vpop.f32.mrf.mxu0
      %v1954 = vadd.f32 %v1785, %v1953
      %1955 = vmatmul.bf16.gmra.mxu0 %v1051
      %v1956 = vpop.f32.mrf.mxu0
      %v1957 = vadd.f32 %v1788, %v1956
      %v1958 = vpop.f32.mrf.mxu0
      %v1959 = vadd.f32 %v1790, %v1958
      %1960 = vmatmul.bf16.gmra.mxu0 %v1056
      %v1961 = vpop.f32.mrf.mxu0
      %v1962 = vadd.f32 %v1793, %v1961
      %v1963 = vpop.f32.mrf.mxu0
      %v1964 = vadd.f32 %v1795, %v1963
      %1965 = vmatmul.bf16.gmra.mxu0 %v1061
      %v1966 = vpop.f32.mrf.mxu0
      %v1967 = vadd.f32 %v1798, %v1966
      %v1968 = vpop.f32.mrf.mxu0
      %v1969 = vadd.f32 %v1800, %v1968
      %1970 = vmatmul.bf16.gmra.mxu0 %v1066
      %v1971 = vpop.f32.mrf.mxu0
      %v1972 = vadd.f32 %v1803, %v1971
      %v1973 = vpop.f32.mrf.mxu0
      %v1974 = vadd.f32 %v1805, %v1973
      %1975 = vmatmul.bf16.gmra.mxu0 %v1071
      %v1976 = vpop.f32.mrf.mxu0
      %v1977 = vadd.f32 %v1808, %v1976
      %v1978 = vpop.f32.mrf.mxu0
      %v1979 = vadd.f32 %v1810, %v1978
      %1980 = vmatmul.bf16.gmra.mxu0 %v1076
      %v1981 = vpop.f32.mrf.mxu0
      %v1982 = vadd.f32 %v1813, %v1981
      %v1983 = vpop.f32.mrf.mxu0
      %v1984 = vadd.f32 %v1815, %v1983
      %1985 = vmatmul.bf16.gmra.mxu0 %v1081
      %v1986 = vpop.f32.mrf.mxu0
      %v1987 = vadd.f32 %v1818, %v1986
      %v1988 = vpop.f32.mrf.mxu0
      %v1989 = vadd.f32 %v1820, %v1988
      %1990 = vmatmul.bf16.gmra.mxu0 %v1086
      %v1991 = vpop.f32.mrf.mxu0
      %v1992 = vadd.f32 %v1823, %v1991
      %v1993 = vpop.f32.mrf.mxu0
      %v1994 = vadd.f32 %v1825, %v1993
      %1995 = vmatmul.bf16.gmra.mxu0 %v1091
      %v1996 = vpop.f32.mrf.mxu0
      %v1997 = vadd.f32 %v1828, %v1996
      %v1998 = vpop.f32.mrf.mxu0
      %v1999 = vadd.f32 %v1830, %v1998
      %2000 = vdwg.mxu0
      %2001 = vmatpush.bf16.msra.mxu0 %v1445
      %2002 = vmatpush.bf16.msra.mxu0 %v1444
      %2003 = vmatpush.bf16.msra.mxu0 %v1443
      %2004 = vmatpush.bf16.msra.mxu0 %v1442
      %2005 = vmatpush.bf16.msra.mxu0 %v1441
      %2006 = vmatpush.bf16.msra.mxu0 %v1440
      %2007 = vmatpush.bf16.msra.mxu0 %v1439
      %2008 = vmatpush.bf16.msra.mxu0 %v1438
      %2009 = vmatmul.bf16.gmra.mxu0 %v937
      %v2010 = vpop.f32.mrf.mxu0
      %v2011 = vadd.f32 %v1842, %v2010
      %v2012 = vpop.f32.mrf.mxu0
      %v2013 = vadd.f32 %v1844, %v2012
      %2014 = vmatmul.bf16.gmra.mxu0 %v942
      %v2015 = vpop.f32.mrf.mxu0
      %v2016 = vadd.f32 %v1847, %v2015
      %v2017 = vpop.f32.mrf.mxu0
      %v2018 = vadd.f32 %v1849, %v2017
      %2019 = vmatmul.bf16.gmra.mxu0 %v947
      %v2020 = vpop.f32.mrf.mxu0
      %v2021 = vadd.f32 %v1852, %v2020
      %v2022 = vpop.f32.mrf.mxu0
      %v2023 = vadd.f32 %v1854, %v2022
      %2024 = vmatmul.bf16.gmra.mxu0 %v952
      %v2025 = vpop.f32.mrf.mxu0
      %v2026 = vadd.f32 %v1857, %v2025
      %v2027 = vpop.f32.mrf.mxu0
      %v2028 = vadd.f32 %v1859, %v2027
      %2029 = vmatmul.bf16.gmra.mxu0 %v957
      %v2030 = vpop.f32.mrf.mxu0
      %v2031 = vadd.f32 %v1862, %v2030
      %v2032 = vpop.f32.mrf.mxu0
      %v2033 = vadd.f32 %v1864, %v2032
      %2034 = vmatmul.bf16.gmra.mxu0 %v962
      %v2035 = vpop.f32.mrf.mxu0
      %v2036 = vadd.f32 %v1867, %v2035
      %v2037 = vpop.f32.mrf.mxu0
      %v2038 = vadd.f32 %v1869, %v2037
      %2039 = vmatmul.bf16.gmra.mxu0 %v967
      %v2040 = vpop.f32.mrf.mxu0
      %v2041 = vadd.f32 %v1872, %v2040
      %v2042 = vpop.f32.mrf.mxu0
      %v2043 = vadd.f32 %v1874, %v2042
      %2044 = vmatmul.bf16.gmra.mxu0 %v972
      %v2045 = vpop.f32.mrf.mxu0
      %v2046 = vadd.f32 %v1877, %v2045
      %v2047 = vpop.f32.mrf.mxu0
      %v2048 = vadd.f32 %v1879, %v2047
      %2049 = vmatmul.bf16.gmra.mxu0 %v977
      %v2050 = vpop.f32.mrf.mxu0
      %v2051 = vadd.f32 %v1882, %v2050
      %v2052 = vpop.f32.mrf.mxu0
      %v2053 = vadd.f32 %v1884, %v2052
      %2054 = vmatmul.bf16.gmra.mxu0 %v982
      %v2055 = vpop.f32.mrf.mxu0
      %v2056 = vadd.f32 %v1887, %v2055
      %v2057 = vpop.f32.mrf.mxu0
      %v2058 = vadd.f32 %v1889, %v2057
      %2059 = vmatmul.bf16.gmra.mxu0 %v987
      %v2060 = vpop.f32.mrf.mxu0
      %v2061 = vadd.f32 %v1892, %v2060
      %v2062 = vpop.f32.mrf.mxu0
      %v2063 = vadd.f32 %v1894, %v2062
      %2064 = vmatmul.bf16.gmra.mxu0 %v992
      %v2065 = vpop.f32.mrf.mxu0
      %v2066 = vadd.f32 %v1897, %v2065
      %v2067 = vpop.f32.mrf.mxu0
      %v2068 = vadd.f32 %v1899, %v2067
      %2069 = vmatmul.bf16.gmra.mxu0 %v997
      %v2070 = vpop.f32.mrf.mxu0
      %v2071 = vadd.f32 %v1902, %v2070
      %v2072 = vpop.f32.mrf.mxu0
      %v2073 = vadd.f32 %v1904, %v2072
      %2074 = vmatmul.bf16.gmra.mxu0 %v1002
      %v2075 = vpop.f32.mrf.mxu0
      %v2076 = vadd.f32 %v1907, %v2075
      %v2077 = vpop.f32.mrf.mxu0
      %v2078 = vadd.f32 %v1909, %v2077
      %2079 = vmatmul.bf16.gmra.mxu0 %v1007
      %v2080 = vpop.f32.mrf.mxu0
      %v2081 = vadd.f32 %v1912, %v2080
      %v2082 = vpop.f32.mrf.mxu0
      %v2083 = vadd.f32 %v1914, %v2082
      %2084 = vmatmul.bf16.gmra.mxu0 %v1012
      %v2085 = vpop.f32.mrf.mxu0
      %v2086 = vadd.f32 %v1917, %v2085
      %v2087 = vpop.f32.mrf.mxu0
      %v2088 = vadd.f32 %v1919, %v2087
      %2089 = vmatmul.bf16.gmra.mxu0 %v1017
      %v2090 = vpop.f32.mrf.mxu0
      %v2091 = vadd.f32 %v1922, %v2090
      %v2092 = vpop.f32.mrf.mxu0
      %v2093 = vadd.f32 %v1924, %v2092
      %2094 = vmatmul.bf16.gmra.mxu0 %v1022
      %v2095 = vpop.f32.mrf.mxu0
      %v2096 = vadd.f32 %v1927, %v2095
      %v2097 = vpop.f32.mrf.mxu0
      %v2098 = vadd.f32 %v1929, %v2097
      %2099 = vmatmul.bf16.gmra.mxu0 %v1027
      %v2100 = vpop.f32.mrf.mxu0
      %v2101 = vadd.f32 %v1932, %v2100
      %v2102 = vpop.f32.mrf.mxu0
      %v2103 = vadd.f32 %v1934, %v2102
      %2104 = vmatmul.bf16.gmra.mxu0 %v1032
      %v2105 = vpop.f32.mrf.mxu0
      %v2106 = vadd.f32 %v1937, %v2105
      %v2107 = vpop.f32.mrf.mxu0
      %v2108 = vadd.f32 %v1939, %v2107
      %2109 = vmatmul.bf16.gmra.mxu0 %v1037
      %v2110 = vpop.f32.mrf.mxu0
      %v2111 = vadd.f32 %v1942, %v2110
      %v2112 = vpop.f32.mrf.mxu0
      %v2113 = vadd.f32 %v1944, %v2112
      %2114 = vmatmul.bf16.gmra.mxu0 %v1042
      %v2115 = vpop.f32.mrf.mxu0
      %v2116 = vadd.f32 %v1947, %v2115
      %v2117 = vpop.f32.mrf.mxu0
      %v2118 = vadd.f32 %v1949, %v2117
      %2119 = vmatmul.bf16.gmra.mxu0 %v1047
      %v2120 = vpop.f32.mrf.mxu0
      %v2121 = vadd.f32 %v1952, %v2120
      %v2122 = vpop.f32.mrf.mxu0
      %v2123 = vadd.f32 %v1954, %v2122
      %2124 = vmatmul.bf16.gmra.mxu0 %v1052
      %v2125 = vpop.f32.mrf.mxu0
      %v2126 = vadd.f32 %v1957, %v2125
      %v2127 = vpop.f32.mrf.mxu0
      %v2128 = vadd.f32 %v1959, %v2127
      %2129 = vmatmul.bf16.gmra.mxu0 %v1057
      %v2130 = vpop.f32.mrf.mxu0
      %v2131 = vadd.f32 %v1962, %v2130
      %v2132 = vpop.f32.mrf.mxu0
      %v2133 = vadd.f32 %v1964, %v2132
      %2134 = vmatmul.bf16.gmra.mxu0 %v1062
      %v2135 = vpop.f32.mrf.mxu0
      %v2136 = vadd.f32 %v1967, %v2135
      %v2137 = vpop.f32.mrf.mxu0
      %v2138 = vadd.f32 %v1969, %v2137
      %2139 = vmatmul.bf16.gmra.mxu0 %v1067
      %v2140 = vpop.f32.mrf.mxu0
      %v2141 = vadd.f32 %v1972, %v2140
      %v2142 = vpop.f32.mrf.mxu0
      %v2143 = vadd.f32 %v1974, %v2142
      %2144 = vmatmul.bf16.gmra.mxu0 %v1072
      %v2145 = vpop.f32.mrf.mxu0
      %v2146 = vadd.f32 %v1977, %v2145
      %v2147 = vpop.f32.mrf.mxu0
      %v2148 = vadd.f32 %v1979, %v2147
      %2149 = vmatmul.bf16.gmra.mxu0 %v1077
      %v2150 = vpop.f32.mrf.mxu0
      %v2151 = vadd.f32 %v1982, %v2150
      %v2152 = vpop.f32.mrf.mxu0
      %v2153 = vadd.f32 %v1984, %v2152
      %2154 = vmatmul.bf16.gmra.mxu0 %v1082
      %v2155 = vpop.f32.mrf.mxu0
      %v2156 = vadd.f32 %v1987, %v2155
      %v2157 = vpop.f32.mrf.mxu0
      %v2158 = vadd.f32 %v1989, %v2157
      %2159 = vmatmul.bf16.gmra.mxu0 %v1087
      %v2160 = vpop.f32.mrf.mxu0
      %v2161 = vadd.f32 %v1992, %v2160
      %v2162 = vpop.f32.mrf.mxu0
      %v2163 = vadd.f32 %v1994, %v2162
      %2164 = vmatmul.bf16.gmra.mxu0 %v1092
      %v2165 = vpop.f32.mrf.mxu0
      %v2166 = vadd.f32 %v1997, %v2165
      %v2167 = vpop.f32.mrf.mxu0
      %v2168 = vadd.f32 %v1999, %v2167
      %2169 = vdwg.mxu0
      %2170 = vmatpush.bf16.msra.mxu0 %v1453
      %2171 = vmatpush.bf16.msra.mxu0 %v1452
      %2172 = vmatpush.bf16.msra.mxu0 %v1451
      %2173 = vmatpush.bf16.msra.mxu0 %v1450
      %2174 = vmatpush.bf16.msra.mxu0 %v1449
      %2175 = vmatpush.bf16.msra.mxu0 %v1448
      %2176 = vmatpush.bf16.msra.mxu0 %v1447
      %2177 = vmatpush.bf16.msra.mxu0 %v1446
      %2178 = vmatmul.bf16.gmra.mxu0 %v938
      %v2179 = vpop.f32.mrf.mxu0
      %v2180 = vadd.f32 %v2011, %v2179
      %v2181 = vpop.f32.mrf.mxu0
      %v2182 = vadd.f32 %v2013, %v2181
      %2183 = vmatmul.bf16.gmra.mxu0 %v943
      %v2184 = vpop.f32.mrf.mxu0
      %v2185 = vadd.f32 %v2016, %v2184
      %v2186 = vpop.f32.mrf.mxu0
      %v2187 = vadd.f32 %v2018, %v2186
      %2188 = vmatmul.bf16.gmra.mxu0 %v948
      %v2189 = vpop.f32.mrf.mxu0
      %v2190 = vadd.f32 %v2021, %v2189
      %v2191 = vpop.f32.mrf.mxu0
      %v2192 = vadd.f32 %v2023, %v2191
      %2193 = vmatmul.bf16.gmra.mxu0 %v953
      %v2194 = vpop.f32.mrf.mxu0
      %v2195 = vadd.f32 %v2026, %v2194
      %v2196 = vpop.f32.mrf.mxu0
      %v2197 = vadd.f32 %v2028, %v2196
      %2198 = vmatmul.bf16.gmra.mxu0 %v958
      %v2199 = vpop.f32.mrf.mxu0
      %v2200 = vadd.f32 %v2031, %v2199
      %v2201 = vpop.f32.mrf.mxu0
      %v2202 = vadd.f32 %v2033, %v2201
      %2203 = vmatmul.bf16.gmra.mxu0 %v963
      %v2204 = vpop.f32.mrf.mxu0
      %v2205 = vadd.f32 %v2036, %v2204
      %v2206 = vpop.f32.mrf.mxu0
      %v2207 = vadd.f32 %v2038, %v2206
      %2208 = vmatmul.bf16.gmra.mxu0 %v968
      %v2209 = vpop.f32.mrf.mxu0
      %v2210 = vadd.f32 %v2041, %v2209
      %v2211 = vpop.f32.mrf.mxu0
      %v2212 = vadd.f32 %v2043, %v2211
      %2213 = vmatmul.bf16.gmra.mxu0 %v973
      %v2214 = vpop.f32.mrf.mxu0
      %v2215 = vadd.f32 %v2046, %v2214
      %v2216 = vpop.f32.mrf.mxu0
      %v2217 = vadd.f32 %v2048, %v2216
      %2218 = vmatmul.bf16.gmra.mxu0 %v978
      %v2219 = vpop.f32.mrf.mxu0
      %v2220 = vadd.f32 %v2051, %v2219
      %v2221 = vpop.f32.mrf.mxu0
      %v2222 = vadd.f32 %v2053, %v2221
      %2223 = vmatmul.bf16.gmra.mxu0 %v983
      %v2224 = vpop.f32.mrf.mxu0
      %v2225 = vadd.f32 %v2056, %v2224
      %v2226 = vpop.f32.mrf.mxu0
      %v2227 = vadd.f32 %v2058, %v2226
      %2228 = vmatmul.bf16.gmra.mxu0 %v988
      %v2229 = vpop.f32.mrf.mxu0
      %v2230 = vadd.f32 %v2061, %v2229
      %v2231 = vpop.f32.mrf.mxu0
      %v2232 = vadd.f32 %v2063, %v2231
      %2233 = vmatmul.bf16.gmra.mxu0 %v993
      %v2234 = vpop.f32.mrf.mxu0
      %v2235 = vadd.f32 %v2066, %v2234
      %v2236 = vpop.f32.mrf.mxu0
      %v2237 = vadd.f32 %v2068, %v2236
      %2238 = vmatmul.bf16.gmra.mxu0 %v998
      %v2239 = vpop.f32.mrf.mxu0
      %v2240 = vadd.f32 %v2071, %v2239
      %v2241 = vpop.f32.mrf.mxu0
      %v2242 = vadd.f32 %v2073, %v2241
      %2243 = vmatmul.bf16.gmra.mxu0 %v1003
      %v2244 = vpop.f32.mrf.mxu0
      %v2245 = vadd.f32 %v2076, %v2244
      %v2246 = vpop.f32.mrf.mxu0
      %v2247 = vadd.f32 %v2078, %v2246
      %2248 = vmatmul.bf16.gmra.mxu0 %v1008
      %v2249 = vpop.f32.mrf.mxu0
      %v2250 = vadd.f32 %v2081, %v2249
      %v2251 = vpop.f32.mrf.mxu0
      %v2252 = vadd.f32 %v2083, %v2251
      %2253 = vmatmul.bf16.gmra.mxu0 %v1013
      %v2254 = vpop.f32.mrf.mxu0
      %v2255 = vadd.f32 %v2086, %v2254
      %v2256 = vpop.f32.mrf.mxu0
      %v2257 = vadd.f32 %v2088, %v2256
      %2258 = vmatmul.bf16.gmra.mxu0 %v1018
      %v2259 = vpop.f32.mrf.mxu0
      %v2260 = vadd.f32 %v2091, %v2259
      %v2261 = vpop.f32.mrf.mxu0
      %v2262 = vadd.f32 %v2093, %v2261
      %2263 = vmatmul.bf16.gmra.mxu0 %v1023
      %v2264 = vpop.f32.mrf.mxu0
      %v2265 = vadd.f32 %v2096, %v2264
      %v2266 = vpop.f32.mrf.mxu0
      %v2267 = vadd.f32 %v2098, %v2266
      %2268 = vmatmul.bf16.gmra.mxu0 %v1028
      %v2269 = vpop.f32.mrf.mxu0
      %v2270 = vadd.f32 %v2101, %v2269
      %v2271 = vpop.f32.mrf.mxu0
      %v2272 = vadd.f32 %v2103, %v2271
      %2273 = vmatmul.bf16.gmra.mxu0 %v1033
      %v2274 = vpop.f32.mrf.mxu0
      %v2275 = vadd.f32 %v2106, %v2274
      %v2276 = vpop.f32.mrf.mxu0
      %v2277 = vadd.f32 %v2108, %v2276
      %2278 = vmatmul.bf16.gmra.mxu0 %v1038
      %v2279 = vpop.f32.mrf.mxu0
      %v2280 = vadd.f32 %v2111, %v2279
      %v2281 = vpop.f32.mrf.mxu0
      %v2282 = vadd.f32 %v2113, %v2281
      %2283 = vmatmul.bf16.gmra.mxu0 %v1043
      %v2284 = vpop.f32.mrf.mxu0
      %v2285 = vadd.f32 %v2116, %v2284
      %v2286 = vpop.f32.mrf.mxu0
      %v2287 = vadd.f32 %v2118, %v2286
      %2288 = vmatmul.bf16.gmra.mxu0 %v1048
      %v2289 = vpop.f32.mrf.mxu0
      %v2290 = vadd.f32 %v2121, %v2289
      %v2291 = vpop.f32.mrf.mxu0
      %v2292 = vadd.f32 %v2123, %v2291
      %2293 = vmatmul.bf16.gmra.mxu0 %v1053
      %v2294 = vpop.f32.mrf.mxu0
      %v2295 = vadd.f32 %v2126, %v2294
      %v2296 = vpop.f32.mrf.mxu0
      %v2297 = vadd.f32 %v2128, %v2296
      %2298 = vmatmul.bf16.gmra.mxu0 %v1058
      %v2299 = vpop.f32.mrf.mxu0
      %v2300 = vadd.f32 %v2131, %v2299
      %v2301 = vpop.f32.mrf.mxu0
      %v2302 = vadd.f32 %v2133, %v2301
      %2303 = vmatmul.bf16.gmra.mxu0 %v1063
      %v2304 = vpop.f32.mrf.mxu0
      %v2305 = vadd.f32 %v2136, %v2304
      %v2306 = vpop.f32.mrf.mxu0
      %v2307 = vadd.f32 %v2138, %v2306
      %2308 = vmatmul.bf16.gmra.mxu0 %v1068
      %v2309 = vpop.f32.mrf.mxu0
      %v2310 = vadd.f32 %v2141, %v2309
      %v2311 = vpop.f32.mrf.mxu0
      %v2312 = vadd.f32 %v2143, %v2311
      %2313 = vmatmul.bf16.gmra.mxu0 %v1073
      %v2314 = vpop.f32.mrf.mxu0
      %v2315 = vadd.f32 %v2146, %v2314
      %v2316 = vpop.f32.mrf.mxu0
      %v2317 = vadd.f32 %v2148, %v2316
      %2318 = vmatmul.bf16.gmra.mxu0 %v1078
      %v2319 = vpop.f32.mrf.mxu0
      %v2320 = vadd.f32 %v2151, %v2319
      %v2321 = vpop.f32.mrf.mxu0
      %v2322 = vadd.f32 %v2153, %v2321
      %2323 = vmatmul.bf16.gmra.mxu0 %v1083
      %v2324 = vpop.f32.mrf.mxu0
      %v2325 = vadd.f32 %v2156, %v2324
      %v2326 = vpop.f32.mrf.mxu0
      %v2327 = vadd.f32 %v2158, %v2326
      %2328 = vmatmul.bf16.gmra.mxu0 %v1088
      %v2329 = vpop.f32.mrf.mxu0
      %v2330 = vadd.f32 %v2161, %v2329
      %v2331 = vpop.f32.mrf.mxu0
      %v2332 = vadd.f32 %v2163, %v2331
      %2333 = vmatmul.bf16.gmra.mxu0 %v1093
      %v2334 = vpop.f32.mrf.mxu0
      %v2335 = vadd.f32 %v2166, %v2334
      %v2336 = vpop.f32.mrf.mxu0
      %v2337 = vadd.f32 %v2168, %v2336
      %2338 = vdwg.mxu0
      %v2339 = vsub.f32 0.0, %v2180
      %v2340 = vsub.f32 0.0, %v2182
      %v2341 = vsub.f32 0.0, %v2185
      %v2342 = vsub.f32 0.0, %v2187
      %v2343 = vsub.f32 0.0, %v2190
      %v2344 = vsub.f32 0.0, %v2192
      %v2345 = vsub.f32 0.0, %v2195
      %v2346 = vsub.f32 0.0, %v2197
      %v2347 = vsub.f32 0.0, %v2200
      %v2348 = vsub.f32 0.0, %v2202
      %v2349 = vsub.f32 0.0, %v2205
      %v2350 = vsub.f32 0.0, %v2207
      %v2351 = vsub.f32 0.0, %v2210
      %v2352 = vsub.f32 0.0, %v2212
      %v2353 = vsub.f32 0.0, %v2215
      %v2354 = vsub.f32 0.0, %v2217
      %v2355 = vsub.f32 0.0, %v2220
      %v2356 = vsub.f32 0.0, %v2222
      %v2357 = vsub.f32 0.0, %v2225
      %v2358 = vsub.f32 0.0, %v2227
      %v2359 = vsub.f32 0.0, %v2230
      %v2360 = vsub.f32 0.0, %v2232
      %v2361 = vsub.f32 0.0, %v2235
      %v2362 = vsub.f32 0.0, %v2237
      %v2363 = vsub.f32 0.0, %v2240
      %v2364 = vsub.f32 0.0, %v2242
      %v2365 = vsub.f32 0.0, %v2245
      %v2366 = vsub.f32 0.0, %v2247
      %v2367 = vsub.f32 0.0, %v2250
      %v2368 = vsub.f32 0.0, %v2252
      %v2369 = vsub.f32 0.0, %v2255
      %v2370 = vsub.f32 0.0, %v2257
      %v2371 = vsub.f32 0.0, %v2260
      %v2372 = vsub.f32 0.0, %v2262
      %v2373 = vsub.f32 0.0, %v2265
      %v2374 = vsub.f32 0.0, %v2267
      %v2375 = vsub.f32 0.0, %v2270
      %v2376 = vsub.f32 0.0, %v2272
      %v2377 = vsub.f32 0.0, %v2275
      %v2378 = vsub.f32 0.0, %v2277
      %v2379 = vsub.f32 0.0, %v2280
      %v2380 = vsub.f32 0.0, %v2282
      %v2381 = vsub.f32 0.0, %v2285
      %v2382 = vsub.f32 0.0, %v2287
      %v2383 = vsub.f32 0.0, %v2290
      %v2384 = vsub.f32 0.0, %v2292
      %v2385 = vsub.f32 0.0, %v2295
      %v2386 = vsub.f32 0.0, %v2297
      %v2387 = vsub.f32 0.0, %v2300
      %v2388 = vsub.f32 0.0, %v2302
      %v2389 = vsub.f32 0.0, %v2305
      %v2390 = vsub.f32 0.0, %v2307
      %v2391 = vsub.f32 0.0, %v2310
      %v2392 = vsub.f32 0.0, %v2312
      %v2393 = vsub.f32 0.0, %v2315
      %v2394 = vsub.f32 0.0, %v2317
      %v2395 = vsub.f32 0.0, %v2320
      %v2396 = vsub.f32 0.0, %v2322
      %v2397 = vsub.f32 0.0, %v2325
      %v2398 = vsub.f32 0.0, %v2327
      %v2399 = vsub.f32 0.0, %v2330
      %v2400 = vsub.f32 0.0, %v2332
      %v2401 = vsub.f32 0.0, %v2335
      %v2402 = vsub.f32 0.0, %v2337
      %v2403 = vmul.f32 %v2339, 1.442695
      %v2404 = vpow.pop %v2403
      %v2405 = vmul.f32 %v2340, 1.442695
      %v2406 = vpow.pop %v2405
      %v2407 = vmul.f32 %v2341, 1.442695
      %v2408 = vpow.pop %v2407
      %v2409 = vmul.f32 %v2342, 1.442695
      %v2410 = vpow.pop %v2409
      %v2411 = vmul.f32 %v2343, 1.442695
      %v2412 = vpow.pop %v2411
      %v2413 = vmul.f32 %v2344, 1.442695
      %v2414 = vpow.pop %v2413
      %v2415 = vmul.f32 %v2345, 1.442695
      %v2416 = vpow.pop %v2415
      %v2417 = vmul.f32 %v2346, 1.442695
      %v2418 = vpow.pop %v2417
      %v2419 = vmul.f32 %v2347, 1.442695
      %v2420 = vpow.pop %v2419
      %v2421 = vmul.f32 %v2348, 1.442695
      %v2422 = vpow.pop %v2421
      %v2423 = vmul.f32 %v2349, 1.442695
      %v2424 = vpow.pop %v2423
      %v2425 = vmul.f32 %v2350, 1.442695
      %v2426 = vpow.pop %v2425
      %v2427 = vmul.f32 %v2351, 1.442695
      %v2428 = vpow.pop %v2427
      %v2429 = vmul.f32 %v2352, 1.442695
      %v2430 = vpow.pop %v2429
      %v2431 = vmul.f32 %v2353, 1.442695
      %v2432 = vpow.pop %v2431
      %v2433 = vmul.f32 %v2354, 1.442695
      %v2434 = vpow.pop %v2433
      %v2435 = vmul.f32 %v2355, 1.442695
      %v2436 = vpow.pop %v2435
      %v2437 = vmul.f32 %v2356, 1.442695
      %v2438 = vpow.pop %v2437
      %v2439 = vmul.f32 %v2357, 1.442695
      %v2440 = vpow.pop %v2439
      %v2441 = vmul.f32 %v2358, 1.442695
      %v2442 = vpow.pop %v2441
      %v2443 = vmul.f32 %v2359, 1.442695
      %v2444 = vpow.pop %v2443
      %v2445 = vmul.f32 %v2360, 1.442695
      %v2446 = vpow.pop %v2445
      %v2447 = vmul.f32 %v2361, 1.442695
      %v2448 = vpow.pop %v2447
      %v2449 = vmul.f32 %v2362, 1.442695
      %v2450 = vpow.pop %v2449
      %v2451 = vmul.f32 %v2363, 1.442695
      %v2452 = vpow.pop %v2451
      %v2453 = vmul.f32 %v2364, 1.442695
      %v2454 = vpow.pop %v2453
      %v2455 = vmul.f32 %v2365, 1.442695
      %v2456 = vpow.pop %v2455
      %v2457 = vmul.f32 %v2366, 1.442695
      %v2458 = vpow.pop %v2457
      %v2459 = vmul.f32 %v2367, 1.442695
      %v2460 = vpow.pop %v2459
      %v2461 = vmul.f32 %v2368, 1.442695
      %v2462 = vpow.pop %v2461
      %v2463 = vmul.f32 %v2369, 1.442695
      %v2464 = vpow.pop %v2463
      %v2465 = vmul.f32 %v2370, 1.442695
      %v2466 = vpow.pop %v2465
      %v2467 = vmul.f32 %v2371, 1.442695
      %v2468 = vpow.pop %v2467
      %v2469 = vmul.f32 %v2372, 1.442695
      %v2470 = vpow.pop %v2469
      %v2471 = vmul.f32 %v2373, 1.442695
      %v2472 = vpow.pop %v2471
      %v2473 = vmul.f32 %v2374, 1.442695
      %v2474 = vpow.pop %v2473
      %v2475 = vmul.f32 %v2375, 1.442695
      %v2476 = vpow.pop %v2475
      %v2477 = vmul.f32 %v2376, 1.442695
      %v2478 = vpow.pop %v2477
      %v2479 = vmul.f32 %v2377, 1.442695
      %v2480 = vpow.pop %v2479
      %v2481 = vmul.f32 %v2378, 1.442695
      %v2482 = vpow.pop %v2481
      %v2483 = vmul.f32 %v2379, 1.442695
      %v2484 = vpow.pop %v2483
      %v2485 = vmul.f32 %v2380, 1.442695
      %v2486 = vpow.pop %v2485
      %v2487 = vmul.f32 %v2381, 1.442695
      %v2488 = vpow.pop %v2487
      %v2489 = vmul.f32 %v2382, 1.442695
      %v2490 = vpow.pop %v2489
      %v2491 = vmul.f32 %v2383, 1.442695
      %v2492 = vpow.pop %v2491
      %v2493 = vmul.f32 %v2384, 1.442695
      %v2494 = vpow.pop %v2493
      %v2495 = vmul.f32 %v2385, 1.442695
      %v2496 = vpow.pop %v2495
      %v2497 = vmul.f32 %v2386, 1.442695
      %v2498 = vpow.pop %v2497
      %v2499 = vmul.f32 %v2387, 1.442695
      %v2500 = vpow.pop %v2499
      %v2501 = vmul.f32 %v2388, 1.442695
      %v2502 = vpow.pop %v2501
      %v2503 = vmul.f32 %v2389, 1.442695
      %v2504 = vpow.pop %v2503
      %v2505 = vmul.f32 %v2390, 1.442695
      %v2506 = vpow.pop %v2505
      %v2507 = vmul.f32 %v2391, 1.442695
      %v2508 = vpow.pop %v2507
      %v2509 = vmul.f32 %v2392, 1.442695
      %v2510 = vpow.pop %v2509
      %v2511 = vmul.f32 %v2393, 1.442695
      %v2512 = vpow.pop %v2511
      %v2513 = vmul.f32 %v2394, 1.442695
      %v2514 = vpow.pop %v2513
      %v2515 = vmul.f32 %v2395, 1.442695
      %v2516 = vpow.pop %v2515
      %v2517 = vmul.f32 %v2396, 1.442695
      %v2518 = vpow.pop %v2517
      %v2519 = vmul.f32 %v2397, 1.442695
      %v2520 = vpow.pop %v2519
      %v2521 = vmul.f32 %v2398, 1.442695
      %v2522 = vpow.pop %v2521
      %v2523 = vmul.f32 %v2399, 1.442695
      %v2524 = vpow.pop %v2523
      %v2525 = vmul.f32 %v2400, 1.442695
      %v2526 = vpow.pop %v2525
      %v2527 = vmul.f32 %v2401, 1.442695
      %v2528 = vpow.pop %v2527
      %v2529 = vmul.f32 %v2402, 1.442695
      %v2530 = vpow.pop %v2529
      %v2531 = vadd.f32 %v2404, 1.0
      %v2532 = vadd.f32 %v2406, 1.0
      %v2533 = vadd.f32 %v2408, 1.0
      %v2534 = vadd.f32 %v2410, 1.0
      %v2535 = vadd.f32 %v2412, 1.0
      %v2536 = vadd.f32 %v2414, 1.0
      %v2537 = vadd.f32 %v2416, 1.0
      %v2538 = vadd.f32 %v2418, 1.0
      %v2539 = vadd.f32 %v2420, 1.0
      %v2540 = vadd.f32 %v2422, 1.0
      %v2541 = vadd.f32 %v2424, 1.0
      %v2542 = vadd.f32 %v2426, 1.0
      %v2543 = vadd.f32 %v2428, 1.0
      %v2544 = vadd.f32 %v2430, 1.0
      %v2545 = vadd.f32 %v2432, 1.0
      %v2546 = vadd.f32 %v2434, 1.0
      %v2547 = vadd.f32 %v2436, 1.0
      %v2548 = vadd.f32 %v2438, 1.0
      %v2549 = vadd.f32 %v2440, 1.0
      %v2550 = vadd.f32 %v2442, 1.0
      %v2551 = vadd.f32 %v2444, 1.0
      %v2552 = vadd.f32 %v2446, 1.0
      %v2553 = vadd.f32 %v2448, 1.0
      %v2554 = vadd.f32 %v2450, 1.0
      %v2555 = vadd.f32 %v2452, 1.0
      %v2556 = vadd.f32 %v2454, 1.0
      %v2557 = vadd.f32 %v2456, 1.0
      %v2558 = vadd.f32 %v2458, 1.0
      %v2559 = vadd.f32 %v2460, 1.0
      %v2560 = vadd.f32 %v2462, 1.0
      %v2561 = vadd.f32 %v2464, 1.0
      %v2562 = vadd.f32 %v2466, 1.0
      %v2563 = vadd.f32 %v2468, 1.0
      %v2564 = vadd.f32 %v2470, 1.0
      %v2565 = vadd.f32 %v2472, 1.0
      %v2566 = vadd.f32 %v2474, 1.0
      %v2567 = vadd.f32 %v2476, 1.0
      %v2568 = vadd.f32 %v2478, 1.0
      %v2569 = vadd.f32 %v2480, 1.0
      %v2570 = vadd.f32 %v2482, 1.0
      %v2571 = vadd.f32 %v2484, 1.0
      %v2572 = vadd.f32 %v2486, 1.0
      %v2573 = vadd.f32 %v2488, 1.0
      %v2574 = vadd.f32 %v2490, 1.0
      %v2575 = vadd.f32 %v2492, 1.0
      %v2576 = vadd.f32 %v2494, 1.0
      %v2577 = vadd.f32 %v2496, 1.0
      %v2578 = vadd.f32 %v2498, 1.0
      %v2579 = vadd.f32 %v2500, 1.0
      %v2580 = vadd.f32 %v2502, 1.0
      %v2581 = vadd.f32 %v2504, 1.0
      %v2582 = vadd.f32 %v2506, 1.0
      %v2583 = vadd.f32 %v2508, 1.0
      %v2584 = vadd.f32 %v2510, 1.0
      %v2585 = vadd.f32 %v2512, 1.0
      %v2586 = vadd.f32 %v2514, 1.0
      %v2587 = vadd.f32 %v2516, 1.0
      %v2588 = vadd.f32 %v2518, 1.0
      %v2589 = vadd.f32 %v2520, 1.0
      %v2590 = vadd.f32 %v2522, 1.0
      %v2591 = vadd.f32 %v2524, 1.0
      %v2592 = vadd.f32 %v2526, 1.0
      %v2593 = vadd.f32 %v2528, 1.0
      %v2594 = vadd.f32 %v2530, 1.0
      %v2595 = vrcp.pop %v2531
      %v2596 = vrcp.pop %v2532
      %v2597 = vrcp.pop %v2533
      %v2598 = vrcp.pop %v2534
      %v2599 = vrcp.pop %v2535
      %v2600 = vrcp.pop %v2536
      %v2601 = vrcp.pop %v2537
      %v2602 = vrcp.pop %v2538
      %v2603 = vrcp.pop %v2539
      %v2604 = vrcp.pop %v2540
      %v2605 = vrcp.pop %v2541
      %v2606 = vrcp.pop %v2542
      %v2607 = vrcp.pop %v2543
      %v2608 = vrcp.pop %v2544
      %v2609 = vrcp.pop %v2545
      %v2610 = vrcp.pop %v2546
      %v2611 = vrcp.pop %v2547
      %v2612 = vrcp.pop %v2548
      %v2613 = vrcp.pop %v2549
      %v2614 = vrcp.pop %v2550
      %v2615 = vrcp.pop %v2551
      %v2616 = vrcp.pop %v2552
      %v2617 = vrcp.pop %v2553
      %v2618 = vrcp.pop %v2554
      %v2619 = vrcp.pop %v2555
      %v2620 = vrcp.pop %v2556
      %v2621 = vrcp.pop %v2557
      %v2622 = vrcp.pop %v2558
      %v2623 = vrcp.pop %v2559
      %v2624 = vrcp.pop %v2560
      %v2625 = vrcp.pop %v2561
      %v2626 = vrcp.pop %v2562
      %v2627 = vrcp.pop %v2563
      %v2628 = vrcp.pop %v2564
      %v2629 = vrcp.pop %v2565
      %v2630 = vrcp.pop %v2566
      %v2631 = vrcp.pop %v2567
      %v2632 = vrcp.pop %v2568
      %v2633 = vrcp.pop %v2569
      %v2634 = vrcp.pop %v2570
      %v2635 = vrcp.pop %v2571
      %v2636 = vrcp.pop %v2572
      %v2637 = vrcp.pop %v2573
      %v2638 = vrcp.pop %v2574
      %v2639 = vrcp.pop %v2575
      %v2640 = vrcp.pop %v2576
      %v2641 = vrcp.pop %v2577
      %v2642 = vrcp.pop %v2578
      %v2643 = vrcp.pop %v2579
      %v2644 = vrcp.pop %v2580
      %v2645 = vrcp.pop %v2581
      %v2646 = vrcp.pop %v2582
      %v2647 = vrcp.pop %v2583
      %v2648 = vrcp.pop %v2584
      %v2649 = vrcp.pop %v2585
      %v2650 = vrcp.pop %v2586
      %v2651 = vrcp.pop %v2587
      %v2652 = vrcp.pop %v2588
      %v2653 = vrcp.pop %v2589
      %v2654 = vrcp.pop %v2590
      %v2655 = vrcp.pop %v2591
      %v2656 = vrcp.pop %v2592
      %v2657 = vrcp.pop %v2593
      %v2658 = vrcp.pop %v2594
      %2659 = vst [vmem:[%s148] sm:$0xff] %v2595
      %2660 = vst [vmem:[%s148 + $0x8] sm:$0xff] %v2596
      %2661 = vst [vmem:[%s148 + $0x10] sm:$0xff] %v2597
      %2662 = vst [vmem:[%s148 + $0x18] sm:$0xff] %v2598
      %2663 = vst [vmem:[%s148 + $0x20] sm:$0xff] %v2599
      %2664 = vst [vmem:[%s148 + $0x28] sm:$0xff] %v2600
      %2665 = vst [vmem:[%s148 + $0x30] sm:$0xff] %v2601
      %2666 = vst [vmem:[%s148 + $0x38] sm:$0xff] %v2602
      %2667 = vst [vmem:[%s148 + $0x40] sm:$0xff] %v2603
      %2668 = vst [vmem:[%s148 + $0x48] sm:$0xff] %v2604
      %2669 = vst [vmem:[%s148 + $0x50] sm:$0xff] %v2605
      %2670 = vst [vmem:[%s148 + $0x58] sm:$0xff] %v2606
      %2671 = vst [vmem:[%s148 + $0x60] sm:$0xff] %v2607
      %2672 = vst [vmem:[%s148 + $0x68] sm:$0xff] %v2608
      %2673 = vst [vmem:[%s148 + $0x70] sm:$0xff] %v2609
      %2674 = vst [vmem:[%s148 + $0x78] sm:$0xff] %v2610
      %2675 = vst [vmem:[%s148 + $0x80] sm:$0xff] %v2611
      %2676 = vst [vmem:[%s148 + $0x88] sm:$0xff] %v2612
      %2677 = vst [vmem:[%s148 + $0x90] sm:$0xff] %v2613
      %2678 = vst [vmem:[%s148 + $0x98] sm:$0xff] %v2614
      %2679 = vst [vmem:[%s148 + $0xa0] sm:$0xff] %v2615
      %2680 = vst [vmem:[%s148 + $0xa8] sm:$0xff] %v2616
      %2681 = vst [vmem:[%s148 + $0xb0] sm:$0xff] %v2617
      %2682 = vst [vmem:[%s148 + $0xb8] sm:$0xff] %v2618
      %2683 = vst [vmem:[%s148 + $0xc0] sm:$0xff] %v2619
      %2684 = vst [vmem:[%s148 + $0xc8] sm:$0xff] %v2620
      %2685 = vst [vmem:[%s148 + $0xd0] sm:$0xff] %v2621
      %2686 = vst [vmem:[%s148 + $0xd8] sm:$0xff] %v2622
      %2687 = vst [vmem:[%s148 + $0xe0] sm:$0xff] %v2623
      %2688 = vst [vmem:[%s148 + $0xe8] sm:$0xff] %v2624
      %2689 = vst [vmem:[%s148 + $0xf0] sm:$0xff] %v2625
      %2690 = vst [vmem:[%s148 + $0xf8] sm:$0xff] %v2626
      %2691 = vst [vmem:[%s148 + $0x100] sm:$0xff] %v2627
      %2692 = vst [vmem:[%s148 + $0x108] sm:$0xff] %v2628
      %2693 = vst [vmem:[%s148 + $0x110] sm:$0xff] %v2629
      %2694 = vst [vmem:[%s148 + $0x118] sm:$0xff] %v2630
      %2695 = vst [vmem:[%s148 + $0x120] sm:$0xff] %v2631
      %2696 = vst [vmem:[%s148 + $0x128] sm:$0xff] %v2632
      %2697 = vst [vmem:[%s148 + $0x130] sm:$0xff] %v2633
      %2698 = vst [vmem:[%s148 + $0x138] sm:$0xff] %v2634
      %2699 = vst [vmem:[%s148 + $0x140] sm:$0xff] %v2635
      %2700 = vst [vmem:[%s148 + $0x148] sm:$0xff] %v2636
      %2701 = vst [vmem:[%s148 + $0x150] sm:$0xff] %v2637
      %2702 = vst [vmem:[%s148 + $0x158] sm:$0xff] %v2638
      %2703 = vst [vmem:[%s148 + $0x160] sm:$0xff] %v2639
      %2704 = vst [vmem:[%s148 + $0x168] sm:$0xff] %v2640
      %2705 = vst [vmem:[%s148 + $0x170] sm:$0xff] %v2641
      %2706 = vst [vmem:[%s148 + $0x178] sm:$0xff] %v2642
      %2707 = vst [vmem:[%s148 + $0x180] sm:$0xff] %v2643
      %2708 = vst [vmem:[%s148 + $0x188] sm:$0xff] %v2644
      %2709 = vst [vmem:[%s148 + $0x190] sm:$0xff] %v2645
      %2710 = vst [vmem:[%s148 + $0x198] sm:$0xff] %v2646
      %2711 = vst [vmem:[%s148 + $0x1a0] sm:$0xff] %v2647
      %2712 = vst [vmem:[%s148 + $0x1a8] sm:$0xff] %v2648
      %2713 = vst [vmem:[%s148 + $0x1b0] sm:$0xff] %v2649
      %2714 = vst [vmem:[%s148 + $0x1b8] sm:$0xff] %v2650
      %2715 = vst [vmem:[%s148 + $0x1c0] sm:$0xff] %v2651
      %2716 = vst [vmem:[%s148 + $0x1c8] sm:$0xff] %v2652
      %2717 = vst [vmem:[%s148 + $0x1d0] sm:$0xff] %v2653
      %2718 = vst [vmem:[%s148 + $0x1d8] sm:$0xff] %v2654
      %2719 = vst [vmem:[%s148 + $0x1e0] sm:$0xff] %v2655
      %2720 = vst [vmem:[%s148 + $0x1e8] sm:$0xff] %v2656
      %2721 = vst [vmem:[%s148 + $0x1f0] sm:$0xff] %v2657
      %2722 = vst [vmem:[%s148 + $0x1f8] sm:$0xff] %v2658
      %s2723 = smul.u32 64, %s13
      %p2724 = scmp.lt.s32.totalorder %s2723, 511
      %s2725 = scalar_select %p2724, %s2723, 511
      %s2726 = smul.addr %s2725, 8
      %s2727 = scalar_lea.vmem %s2, %s2726
      // Predicated region
      $region29: #{conv_autoencoder_forward.11} parent=27 // pred_check
        %p2728 = pneg %p78
      $region30: #{conv_autoencoder_forward.11} parent=27 // pred_check_branch
        %2730 = sbr.rel (%p2728) target = $region32
      $region31: #{conv_autoencoder_forward.11} parent=27 // pred_region
        %s2731 = smul.u32 64, %s13
      $region32: #{conv_autoencoder_forward.11} parent=27 // pred_fallthru
        _
    $region28: #{conv_autoencoder_forward.11} parent=5 // pred_fallthru
      _
    %p2732 = scmp.le.s32.totalorder 2, %s8
    // Predicated region
    $region33: #{conv_autoencoder_forward.11} parent=5 // pred_check
      %p2733 = pneg %p2732
    $region34: #{conv_autoencoder_forward.11} parent=5 // pred_check_branch
      %2735 = sbr.rel (%p2733) target = $region36
    $region35: #{conv_autoencoder_forward.11} parent=5 // pred_region
      %s2736 = ssub.s32 %s8, 2
      // Predicated region
      $region37: #{conv_autoencoder_forward.11} parent=35 // pred_check
        %p2737 = pneg %p84
      $region38: #{conv_autoencoder_forward.11} parent=35 // pred_check_branch
        %2739 = sbr.rel (%p2737) target = $region40
      $region39: #{conv_autoencoder_forward.11} parent=35 // pred_region
        %s2740 = smul.u32 64, %s14
        %p2741 = scmp.lt.s32.totalorder %s2740, 511
        %s2742 = scalar_select %p2741, %s2740, 511
        %s2743 = smul.addr %s2742, 8
        %s2744 = scalar_lea.vmem %s2, %s2743
      $region40: #{conv_autoencoder_forward.11} parent=35 // pred_fallthru
        _
    $region36: #{conv_autoencoder_forward.11} parent=5 // pred_fallthru
      _
  $region6: #{conv_autoencoder_forward.11} parent=0 // loop_footer
    %s12 = sadd.s32 1, %s8
  $region7: #{conv_autoencoder_forward.11} parent=0 // loop_footer_branch
    %7 = sbr.rel target = $region3
  $region8: #{conv_autoencoder_forward.11} parent=0 // loop_exit
    _

// kernel: conv_autoencoder_forward.12
$region0: #{conv_autoencoder_forward.12}
  #allocation0 [shape = 'u32[]', space=smem, size = 0x4, offset = 0x4, fixed_abs, tag = 'smem constant byte address 0x4 - core index']
  #allocation1 [shape = 'u32[72,128]{1,0:T(1,128)}', space=vmem, size = 0x9000, scoped, tag = 'internal scratch']
  %s0 = inlined_call_operand.vmem [shape: bf16[448,128], index: 0, kind: input, shape index: {}]
  %s1 = inlined_call_operand.vmem [shape: bf16[128,128], index: 1, kind: input, shape index: {}]
  %s2 = inlined_call_operand.vmem [shape: f32[448,128], index: 2, kind: output, shape index: {}]
  %s3 = sld [smem:[#allocation0]]
  $region18: #{conv_autoencoder_forward.12} parent=0
    _
  %s5 = ssub.s32 1, %s3
  %s6 = scalar_select 0, %s5, %s3
  // Predicated region
  $region2: #{conv_autoencoder_forward.12} parent=0 // pred_check
    _
  $region3: #{conv_autoencoder_forward.12} parent=0 // pred_check_branch
    %8 = sbr.rel (0) target = $region5
  $region4: #{conv_autoencoder_forward.12} parent=0 // pred_region
    _
  $region5: #{conv_autoencoder_forward.12} parent=0 // pred_fallthru
    _
  // Predicated region
  $region6: #{conv_autoencoder_forward.12} parent=0 // pred_check
    _
  $region7: #{conv_autoencoder_forward.12} parent=0 // pred_check_branch
    %10 = sbr.rel (0) target = $region9
  $region8: #{conv_autoencoder_forward.12} parent=0 // pred_region
    _
  $region9: #{conv_autoencoder_forward.12} parent=0 // pred_fallthru
    _
  %v11 = vld [vmem:[%s0] sm:$0xf]
  %v12 = vld [vmem:[%s0 + $0x4] sm:$0xf]
  %v13 = vld [vmem:[%s0 + $0x8] sm:$0xf]
  %v14 = vld [vmem:[%s0 + $0xc] sm:$0xf]
  %v15 = vld [vmem:[%s0 + $0x10] sm:$0xf]
  %v16 = vld [vmem:[%s0 + $0x14] sm:$0xf]
  %v17 = vld [vmem:[%s0 + $0x18] sm:$0xf]
  %v18 = vld [vmem:[%s0 + $0x1c] sm:$0xf]
  %v19 = vld [vmem:[%s0 + $0x20] sm:$0xf]
  %v20 = vld [vmem:[%s0 + $0x24] sm:$0xf]
  %v21 = vld [vmem:[%s0 + $0x28] sm:$0xf]
  %v22 = vld [vmem:[%s0 + $0x2c] sm:$0xf]
  %v23 = vld [vmem:[%s0 + $0x30] sm:$0xf]
  %v24 = vld [vmem:[%s0 + $0x34] sm:$0xf]
  %v25 = vld [vmem:[%s0 + $0x38] sm:$0xf]
  %v26 = vld [vmem:[%s0 + $0x3c] sm:$0xf]
  %v27 = vld [vmem:[%s0 + $0x40] sm:$0xf]
  %v28 = vld [vmem:[%s0 + $0x44] sm:$0xf]
  %v29 = vld [vmem:[%s0 + $0x48] sm:$0xf]
  %v30 = vld [vmem:[%s0 + $0x4c] sm:$0xf]
  %v31 = vld [vmem:[%s0 + $0x50] sm:$0xf]
  %v32 = vld [vmem:[%s0 + $0x54] sm:$0xf]
  %v33 = vld [vmem:[%s0 + $0x58] sm:$0xf]
  %v34 = vld [vmem:[%s0 + $0x5c] sm:$0xf]
  %v35 = vld [vmem:[%s0 + $0x60] sm:$0xf]
  %v36 = vld [vmem:[%s0 + $0x64] sm:$0xf]
  %v37 = vld [vmem:[%s0 + $0x68] sm:$0xf]
  %v38 = vld [vmem:[%s0 + $0x6c] sm:$0xf]
  %v39 = vld [vmem:[%s0 + $0x70] sm:$0xf]
  %v40 = vld [vmem:[%s0 + $0x74] sm:$0xf]
  %v41 = vld [vmem:[%s0 + $0x78] sm:$0xf]
  %v42 = vld [vmem:[%s0 + $0x7c] sm:$0xf]
  %v43 = vld [vmem:[%s0 + $0x80] sm:$0xf]
  %v44 = vld [vmem:[%s0 + $0x84] sm:$0xf]
  %v45 = vld [vmem:[%s0 + $0x88] sm:$0xf]
  %v46 = vld [vmem:[%s0 + $0x8c] sm:$0xf]
  %v47 = vld [vmem:[%s0 + $0x90] sm:$0xf]
  %v48 = vld [vmem:[%s0 + $0x94] sm:$0xf]
  %v49 = vld [vmem:[%s0 + $0x98] sm:$0xf]
  %v50 = vld [vmem:[%s0 + $0x9c] sm:$0xf]
  %v51 = vld [vmem:[%s0 + $0xa0] sm:$0xf]
  %v52 = vld [vmem:[%s0 + $0xa4] sm:$0xf]
  %v53 = vld [vmem:[%s0 + $0xa8] sm:$0xf]
  %v54 = vld [vmem:[%s0 + $0xac] sm:$0xf]
  %v55 = vld [vmem:[%s0 + $0xb0] sm:$0xf]
  %v56 = vld [vmem:[%s0 + $0xb4] sm:$0xf]
  %v57 = vld [vmem:[%s0 + $0xb8] sm:$0xf]
  %v58 = vld [vmem:[%s0 + $0xbc] sm:$0xf]
  %v59 = vld [vmem:[%s0 + $0xc0] sm:$0xf]
  %v60 = vld [vmem:[%s0 + $0xc4] sm:$0xf]
  %v61 = vld [vmem:[%s0 + $0xc8] sm:$0xf]
  %v62 = vld [vmem:[%s0 + $0xcc] sm:$0xf]
  %v63 = vld [vmem:[%s0 + $0xd0] sm:$0xf]
  %v64 = vld [vmem:[%s0 + $0xd4] sm:$0xf]
  %v65 = vld [vmem:[%s0 + $0xd8] sm:$0xf]
  %v66 = vld [vmem:[%s0 + $0xdc] sm:$0xf]
  %v67 = vld [vmem:[%s1] sm:$0xf]
  %v68 = vld [vmem:[%s1 + $0x4] sm:$0xf]
  %v69 = vld [vmem:[%s1 + $0x8] sm:$0xf]
  %v70 = vld [vmem:[%s1 + $0xc] sm:$0xf]
  %v71 = vld [vmem:[%s1 + $0x10] sm:$0xf]
  %v72 = vld [vmem:[%s1 + $0x14] sm:$0xf]
  %v73 = vld [vmem:[%s1 + $0x18] sm:$0xf]
  %v74 = vld [vmem:[%s1 + $0x1c] sm:$0xf]
  %v75 = vld [vmem:[%s1 + $0x20] sm:$0xf]
  %v76 = vld [vmem:[%s1 + $0x24] sm:$0xf]
  %v77 = vld [vmem:[%s1 + $0x28] sm:$0xf]
  %v78 = vld [vmem:[%s1 + $0x2c] sm:$0xf]
  %v79 = vld [vmem:[%s1 + $0x30] sm:$0xf]
  %v80 = vld [vmem:[%s1 + $0x34] sm:$0xf]
  %v81 = vld [vmem:[%s1 + $0x38] sm:$0xf]
  %v82 = vld [vmem:[%s1 + $0x3c] sm:$0xf]
  %v139 = vunpack.c.l.b16 %v11
  %v140 = vunpack.c.l.b16 %v12
  %v141 = vunpack.c.l.b16 %v13
  %v142 = vunpack.c.l.b16 %v14
  %v143 = vunpack.c.l.b16 %v15
  %v144 = vunpack.c.l.b16 %v16
  %v145 = vunpack.c.l.b16 %v17
  %v146 = vunpack.c.l.b16 %v18
  %v147 = vunpack.c.l.b16 %v19
  %v148 = vunpack.c.l.b16 %v20
  %v149 = vunpack.c.l.b16 %v21
  %v150 = vunpack.c.l.b16 %v22
  %v151 = vunpack.c.l.b16 %v23
  %v152 = vunpack.c.l.b16 %v24
  %v153 = vunpack.c.l.b16 %v25
  %v154 = vunpack.c.l.b16 %v26
  %v155 = vunpack.c.l.b16 %v27
  %v156 = vunpack.c.l.b16 %v28
  %v157 = vunpack.c.l.b16 %v29
  %v158 = vunpack.c.l.b16 %v30
  %v159 = vunpack.c.l.b16 %v31
  %v160 = vunpack.c.l.b16 %v32
  %v161 = vunpack.c.l.b16 %v33
  %v162 = vunpack.c.l.b16 %v34
  %v163 = vunpack.c.l.b16 %v35
  %v164 = vunpack.c.l.b16 %v36
  %v165 = vunpack.c.l.b16 %v37
  %v166 = vunpack.c.l.b16 %v38
  %v167 = vunpack.c.l.b16 %v39
  %v168 = vunpack.c.l.b16 %v40
  %v169 = vunpack.c.l.b16 %v41
  %v170 = vunpack.c.l.b16 %v42
  %v171 = vunpack.c.l.b16 %v43
  %v172 = vunpack.c.l.b16 %v44
  %v173 = vunpack.c.l.b16 %v45
  %v174 = vunpack.c.l.b16 %v46
  %v175 = vunpack.c.l.b16 %v47
  %v176 = vunpack.c.l.b16 %v48
  %v177 = vunpack.c.l.b16 %v49
  %v178 = vunpack.c.l.b16 %v50
  %v179 = vunpack.c.l.b16 %v51
  %v180 = vunpack.c.l.b16 %v52
  %v181 = vunpack.c.l.b16 %v53
  %v182 = vunpack.c.l.b16 %v54
  %v183 = vunpack.c.l.b16 %v55
  %v184 = vunpack.c.l.b16 %v56
  %v185 = vunpack.c.l.b16 %v57
  %v186 = vunpack.c.l.b16 %v58
  %v187 = vunpack.c.l.b16 %v59
  %v188 = vunpack.c.l.b16 %v60
  %v189 = vunpack.c.l.b16 %v61
  %v190 = vunpack.c.l.b16 %v62
  %v191 = vunpack.c.l.b16 %v63
  %v192 = vunpack.c.l.b16 %v64
  %v193 = vunpack.c.l.b16 %v65
  %v194 = vunpack.c.l.b16 %v66
  %v195 = vpack.c.b16 %v140, %v139
  %v196 = vpack.c.b16 %v142, %v141
  %v197 = vpack.c.b16 %v144, %v143
  %v198 = vpack.c.b16 %v146, %v145
  %v199 = vpack.c.b16 %v148, %v147
  %v200 = vpack.c.b16 %v150, %v149
  %v201 = vpack.c.b16 %v152, %v151
  %v202 = vpack.c.b16 %v154, %v153
  %v203 = vpack.c.b16 %v156, %v155
  %v204 = vpack.c.b16 %v158, %v157
  %v205 = vpack.c.b16 %v160, %v159
  %v206 = vpack.c.b16 %v162, %v161
  %v207 = vpack.c.b16 %v164, %v163
  %v208 = vpack.c.b16 %v166, %v165
  %v209 = vpack.c.b16 %v168, %v167
  %v210 = vpack.c.b16 %v170, %v169
  %v211 = vpack.c.b16 %v172, %v171
  %v212 = vpack.c.b16 %v174, %v173
  %v213 = vpack.c.b16 %v176, %v175
  %v214 = vpack.c.b16 %v178, %v177
  %v215 = vpack.c.b16 %v180, %v179
  %v216 = vpack.c.b16 %v182, %v181
  %v217 = vpack.c.b16 %v184, %v183
  %v218 = vpack.c.b16 %v186, %v185
  %v219 = vpack.c.b16 %v188, %v187
  %v220 = vpack.c.b16 %v190, %v189
  %v221 = vpack.c.b16 %v192, %v191
  %v222 = vpack.c.b16 %v194, %v193
  %v267 = vunpack.c.l.b16 %v67
  %v268 = vunpack.c.l.b16 %v68
  %v269 = vunpack.c.l.b16 %v69
  %v270 = vunpack.c.l.b16 %v70
  %v271 = vunpack.c.l.b16 %v71
  %v272 = vunpack.c.l.b16 %v72
  %v273 = vunpack.c.l.b16 %v73
  %v274 = vunpack.c.l.b16 %v74
  %v275 = vunpack.c.l.b16 %v75
  %v276 = vunpack.c.l.b16 %v76
  %v277 = vunpack.c.l.b16 %v77
  %v278 = vunpack.c.l.b16 %v78
  %v279 = vunpack.c.l.b16 %v79
  %v280 = vunpack.c.l.b16 %v80
  %v281 = vunpack.c.l.b16 %v81
  %v282 = vunpack.c.l.b16 %v82
  %v283 = vpack.c.b16 %v268, %v267
  %v284 = vpack.c.b16 %v270, %v269
  %v285 = vpack.c.b16 %v272, %v271
  %v286 = vpack.c.b16 %v274, %v273
  %v287 = vpack.c.b16 %v276, %v275
  %v288 = vpack.c.b16 %v278, %v277
  %v289 = vpack.c.b16 %v280, %v279
  %v290 = vpack.c.b16 %v282, %v281
  %299 = vmatpush.bf16.msra.mxu0 %v290
  %300 = vmatpush.bf16.msra.mxu0 %v289
  %301 = vmatpush.bf16.msra.mxu0 %v288
  %302 = vmatpush.bf16.msra.mxu0 %v287
  %303 = vmatpush.bf16.msra.mxu0 %v286
  %304 = vmatpush.bf16.msra.mxu0 %v285
  %305 = vmatpush.bf16.msra.mxu0 %v284
  %306 = vmatpush.bf16.msra.mxu0 %v283
  %307 = vmatmul.bf16.gmra.mxu0 %v195
  %v308 = vpop.f32.mrf.mxu0
  %v309 = vadd.f32 0.0, %v308
  %v310 = vpop.f32.mrf.mxu0
  %v311 = vadd.f32 0.0, %v310
  %312 = vmatmul.bf16.gmra.mxu0 %v196
  %v313 = vpop.f32.mrf.mxu0
  %v314 = vadd.f32 0.0, %v313
  %v315 = vpop.f32.mrf.mxu0
  %v316 = vadd.f32 0.0, %v315
  %317 = vmatmul.bf16.gmra.mxu0 %v197
  %v318 = vpop.f32.mrf.mxu0
  %v319 = vadd.f32 0.0, %v318
  %v320 = vpop.f32.mrf.mxu0
  %v321 = vadd.f32 0.0, %v320
  %322 = vmatmul.bf16.gmra.mxu0 %v198
  %v323 = vpop.f32.mrf.mxu0
  %v324 = vadd.f32 0.0, %v323
  %v325 = vpop.f32.mrf.mxu0
  %v326 = vadd.f32 0.0, %v325
  %327 = vmatmul.bf16.gmra.mxu0 %v199
  %v328 = vpop.f32.mrf.mxu0
  %v329 = vadd.f32 0.0, %v328
  %v330 = vpop.f32.mrf.mxu0
  %v331 = vadd.f32 0.0, %v330
  %332 = vmatmul.bf16.gmra.mxu0 %v200
  %v333 = vpop.f32.mrf.mxu0
  %v334 = vadd.f32 0.0, %v333
  %v335 = vpop.f32.mrf.mxu0
  %v336 = vadd.f32 0.0, %v335
  %337 = vmatmul.bf16.gmra.mxu0 %v201
  %v338 = vpop.f32.mrf.mxu0
  %v339 = vadd.f32 0.0, %v338
  %v340 = vpop.f32.mrf.mxu0
  %v341 = vadd.f32 0.0, %v340
  %342 = vmatmul.bf16.gmra.mxu0 %v202
  %v343 = vpop.f32.mrf.mxu0
  %v344 = vadd.f32 0.0, %v343
  %v345 = vpop.f32.mrf.mxu0
  %v346 = vadd.f32 0.0, %v345
  %347 = vmatmul.bf16.gmra.mxu0 %v203
  %v348 = vpop.f32.mrf.mxu0
  %v349 = vadd.f32 0.0, %v348
  %v350 = vpop.f32.mrf.mxu0
  %v351 = vadd.f32 0.0, %v350
  %352 = vmatmul.bf16.gmra.mxu0 %v204
  %v353 = vpop.f32.mrf.mxu0
  %v354 = vadd.f32 0.0, %v353
  %v355 = vpop.f32.mrf.mxu0
  %v356 = vadd.f32 0.0, %v355
  %357 = vmatmul.bf16.gmra.mxu0 %v205
  %v358 = vpop.f32.mrf.mxu0
  %v359 = vadd.f32 0.0, %v358
  %v360 = vpop.f32.mrf.mxu0
  %v361 = vadd.f32 0.0, %v360
  %362 = vmatmul.bf16.gmra.mxu0 %v206
  %v363 = vpop.f32.mrf.mxu0
  %v364 = vadd.f32 0.0, %v363
  %v365 = vpop.f32.mrf.mxu0
  %v366 = vadd.f32 0.0, %v365
  %367 = vmatmul.bf16.gmra.mxu0 %v207
  %v368 = vpop.f32.mrf.mxu0
  %v369 = vadd.f32 0.0, %v368
  %v370 = vpop.f32.mrf.mxu0
  %v371 = vadd.f32 0.0, %v370
  %372 = vmatmul.bf16.gmra.mxu0 %v208
  %v373 = vpop.f32.mrf.mxu0
  %v374 = vadd.f32 0.0, %v373
  %v375 = vpop.f32.mrf.mxu0
  %v376 = vadd.f32 0.0, %v375
  %377 = vmatmul.bf16.gmra.mxu0 %v209
  %v378 = vpop.f32.mrf.mxu0
  %v379 = vadd.f32 0.0, %v378
  %v380 = vpop.f32.mrf.mxu0
  %v381 = vadd.f32 0.0, %v380
  %382 = vmatmul.bf16.gmra.mxu0 %v210
  %v383 = vpop.f32.mrf.mxu0
  %v384 = vadd.f32 0.0, %v383
  %v385 = vpop.f32.mrf.mxu0
  %v386 = vadd.f32 0.0, %v385
  %387 = vmatmul.bf16.gmra.mxu0 %v211
  %v388 = vpop.f32.mrf.mxu0
  %v389 = vadd.f32 0.0, %v388
  %v390 = vpop.f32.mrf.mxu0
  %v391 = vadd.f32 0.0, %v390
  %392 = vmatmul.bf16.gmra.mxu0 %v212
  %v393 = vpop.f32.mrf.mxu0
  %v394 = vadd.f32 0.0, %v393
  %v395 = vpop.f32.mrf.mxu0
  %v396 = vadd.f32 0.0, %v395
  %397 = vmatmul.bf16.gmra.mxu0 %v213
  %v398 = vpop.f32.mrf.mxu0
  %v399 = vadd.f32 0.0, %v398
  %v400 = vpop.f32.mrf.mxu0
  %v401 = vadd.f32 0.0, %v400
  %402 = vmatmul.bf16.gmra.mxu0 %v214
  %v403 = vpop.f32.mrf.mxu0
  %v404 = vadd.f32 0.0, %v403
  %v405 = vpop.f32.mrf.mxu0
  %v406 = vadd.f32 0.0, %v405
  %407 = vmatmul.bf16.gmra.mxu0 %v215
  %v408 = vpop.f32.mrf.mxu0
  %v409 = vadd.f32 0.0, %v408
  %v410 = vpop.f32.mrf.mxu0
  %v411 = vadd.f32 0.0, %v410
  %412 = vmatmul.bf16.gmra.mxu0 %v216
  %v413 = vpop.f32.mrf.mxu0
  %v414 = vadd.f32 0.0, %v413
  %v415 = vpop.f32.mrf.mxu0
  %v416 = vadd.f32 0.0, %v415
  %417 = vmatmul.bf16.gmra.mxu0 %v217
  %v418 = vpop.f32.mrf.mxu0
  %v419 = vadd.f32 0.0, %v418
  %v420 = vpop.f32.mrf.mxu0
  %v421 = vadd.f32 0.0, %v420
  %422 = vmatmul.bf16.gmra.mxu0 %v218
  %v423 = vpop.f32.mrf.mxu0
  %v424 = vadd.f32 0.0, %v423
  %v425 = vpop.f32.mrf.mxu0
  %v426 = vadd.f32 0.0, %v425
  %427 = vmatmul.bf16.gmra.mxu0 %v219
  %v428 = vpop.f32.mrf.mxu0
  %v429 = vadd.f32 0.0, %v428
  %v430 = vpop.f32.mrf.mxu0
  %v431 = vadd.f32 0.0, %v430
  %432 = vmatmul.bf16.gmra.mxu0 %v220
  %v433 = vpop.f32.mrf.mxu0
  %v434 = vadd.f32 0.0, %v433
  %v435 = vpop.f32.mrf.mxu0
  %v436 = vadd.f32 0.0, %v435
  %437 = vmatmul.bf16.gmra.mxu0 %v221
  %v438 = vpop.f32.mrf.mxu0
  %v439 = vadd.f32 0.0, %v438
  %v440 = vpop.f32.mrf.mxu0
  %v441 = vadd.f32 0.0, %v440
  %442 = vmatmul.bf16.gmra.mxu0 %v222
  %v443 = vpop.f32.mrf.mxu0
  %v444 = vadd.f32 0.0, %v443
  %v445 = vpop.f32.mrf.mxu0
  %v446 = vadd.f32 0.0, %v445
  %447 = vdwg.mxu0
  %v448 = vtanh.pop %v309
  %v449 = vtanh.pop %v311
  %v450 = vtanh.pop %v314
  %v451 = vtanh.pop %v316
  %v452 = vtanh.pop %v319
  %v453 = vtanh.pop %v321
  %v454 = vtanh.pop %v324
  %v455 = vtanh.pop %v326
  %v456 = vtanh.pop %v329
  %v457 = vtanh.pop %v331
  %v458 = vtanh.pop %v334
  %v459 = vtanh.pop %v336
  %v460 = vtanh.pop %v339
  %v461 = vtanh.pop %v341
  %v462 = vtanh.pop %v344
  %v463 = vtanh.pop %v346
  %v464 = vtanh.pop %v349
  %v465 = vtanh.pop %v351
  %v466 = vtanh.pop %v354
  %v467 = vtanh.pop %v356
  %v468 = vtanh.pop %v359
  %v469 = vtanh.pop %v361
  %v470 = vtanh.pop %v364
  %v471 = vtanh.pop %v366
  %v472 = vtanh.pop %v369
  %v473 = vtanh.pop %v371
  %v474 = vtanh.pop %v374
  %v475 = vtanh.pop %v376
  %v476 = vtanh.pop %v379
  %v477 = vtanh.pop %v381
  %v478 = vtanh.pop %v384
  %v479 = vtanh.pop %v386
  %v480 = vtanh.pop %v389
  %v481 = vtanh.pop %v391
  %v482 = vtanh.pop %v394
  %v483 = vtanh.pop %v396
  %v484 = vtanh.pop %v399
  %v485 = vtanh.pop %v401
  %v486 = vtanh.pop %v404
  %v487 = vtanh.pop %v406
  %v488 = vtanh.pop %v409
  %v489 = vtanh.pop %v411
  %v490 = vtanh.pop %v414
  %v491 = vtanh.pop %v416
  %v492 = vtanh.pop %v419
  %v493 = vtanh.pop %v421
  %v494 = vtanh.pop %v424
  %v495 = vtanh.pop %v426
  %v496 = vtanh.pop %v429
  %v497 = vtanh.pop %v431
  %v498 = vtanh.pop %v434
  %v499 = vtanh.pop %v436
  %v500 = vtanh.pop %v439
  %v501 = vtanh.pop %v441
  %v502 = vtanh.pop %v444
  %v503 = vtanh.pop %v446
  %504 = vst [vmem:[%s2] sm:$0xff] %v448
  %505 = vst [vmem:[%s2 + $0x8] sm:$0xff] %v449
  %506 = vst [vmem:[%s2 + $0x10] sm:$0xff] %v450
  %507 = vst [vmem:[%s2 + $0x18] sm:$0xff] %v451
  %508 = vst [vmem:[%s2 + $0x20] sm:$0xff] %v452
  %509 = vst [vmem:[%s2 + $0x28] sm:$0xff] %v453
  %510 = vst [vmem:[%s2 + $0x30] sm:$0xff] %v454
  %511 = vst [vmem:[%s2 + $0x38] sm:$0xff] %v455
  %512 = vst [vmem:[%s2 + $0x40] sm:$0xff] %v456
  %513 = vst [vmem:[%s2 + $0x48] sm:$0xff] %v457
  %514 = vst [vmem:[%s2 + $0x50] sm:$0xff] %v458
  %515 = vst [vmem:[%s2 + $0x58] sm:$0xff] %v459
  %516 = vst [vmem:[%s2 + $0x60] sm:$0xff] %v460
  %517 = vst [vmem:[%s2 + $0x68] sm:$0xff] %v461
  %518 = vst [vmem:[%s2 + $0x70] sm:$0xff] %v462
  %519 = vst [vmem:[%s2 + $0x78] sm:$0xff] %v463
  %520 = vst [vmem:[%s2 + $0x80] sm:$0xff] %v464
  %521 = vst [vmem:[%s2 + $0x88] sm:$0xff] %v465
  %522 = vst [vmem:[%s2 + $0x90] sm:$0xff] %v466
  %523 = vst [vmem:[%s2 + $0x98] sm:$0xff] %v467
  %524 = vst [vmem:[%s2 + $0xa0] sm:$0xff] %v468
  %525 = vst [vmem:[%s2 + $0xa8] sm:$0xff] %v469
  %526 = vst [vmem:[%s2 + $0xb0] sm:$0xff] %v470
  %527 = vst [vmem:[%s2 + $0xb8] sm:$0xff] %v471
  %528 = vst [vmem:[%s2 + $0xc0] sm:$0xff] %v472
  %529 = vst [vmem:[%s2 + $0xc8] sm:$0xff] %v473
  %530 = vst [vmem:[%s2 + $0xd0] sm:$0xff] %v474
  %531 = vst [vmem:[%s2 + $0xd8] sm:$0xff] %v475
  %532 = vst [vmem:[%s2 + $0xe0] sm:$0xff] %v476
  %533 = vst [vmem:[%s2 + $0xe8] sm:$0xff] %v477
  %534 = vst [vmem:[%s2 + $0xf0] sm:$0xff] %v478
  %535 = vst [vmem:[%s2 + $0xf8] sm:$0xff] %v479
  %536 = vst [vmem:[%s2 + $0x100] sm:$0xff] %v480
  %537 = vst [vmem:[%s2 + $0x108] sm:$0xff] %v481
  %538 = vst [vmem:[%s2 + $0x110] sm:$0xff] %v482
  %539 = vst [vmem:[%s2 + $0x118] sm:$0xff] %v483
  %540 = vst [vmem:[%s2 + $0x120] sm:$0xff] %v484
  %541 = vst [vmem:[%s2 + $0x128] sm:$0xff] %v485
  %542 = vst [vmem:[%s2 + $0x130] sm:$0xff] %v486
  %543 = vst [vmem:[%s2 + $0x138] sm:$0xff] %v487
  %544 = vst [vmem:[%s2 + $0x140] sm:$0xff] %v488
  %545 = vst [vmem:[%s2 + $0x148] sm:$0xff] %v489
  %546 = vst [vmem:[%s2 + $0x150] sm:$0xff] %v490
  %547 = vst [vmem:[%s2 + $0x158] sm:$0xff] %v491
  %548 = vst [vmem:[%s2 + $0x160] sm:$0xff] %v492
  %549 = vst [vmem:[%s2 + $0x168] sm:$0xff] %v493
  %550 = vst [vmem:[%s2 + $0x170] sm:$0xff] %v494
  %551 = vst [vmem:[%s2 + $0x178] sm:$0xff] %v495
  %552 = vst [vmem:[%s2 + $0x180] sm:$0xff] %v496
  %553 = vst [vmem:[%s2 + $0x188] sm:$0xff] %v497
  %554 = vst [vmem:[%s2 + $0x190] sm:$0xff] %v498
  %555 = vst [vmem:[%s2 + $0x198] sm:$0xff] %v499
  %556 = vst [vmem:[%s2 + $0x1a0] sm:$0xff] %v500
  %557 = vst [vmem:[%s2 + $0x1a8] sm:$0xff] %v501
  %558 = vst [vmem:[%s2 + $0x1b0] sm:$0xff] %v502
  %559 = vst [vmem:[%s2 + $0x1b8] sm:$0xff] %v503
  // Predicated region
  $region10: #{conv_autoencoder_forward.12} parent=0 // pred_check
    _
  $region11: #{conv_autoencoder_forward.12} parent=0 // pred_check_branch
    %561 = sbr.rel (0) target = $region13
  $region12: #{conv_autoencoder_forward.12} parent=0 // pred_region
    _
  $region13: #{conv_autoencoder_forward.12} parent=0 // pred_fallthru
    _
  // Predicated region
  $region14: #{conv_autoencoder_forward.12} parent=0 // pred_check
    _
  $region15: #{conv_autoencoder_forward.12} parent=0 // pred_check_branch
    %563 = sbr.rel (0) target = $region17
  $region16: #{conv_autoencoder_forward.12} parent=0 // pred_region
    _
  $region17: #{conv_autoencoder_forward.12} parent=0 // pred_fallthru
    _

// kernel: conv_autoencoder_forward.13
$region0: #{conv_autoencoder_forward.13}
  #allocation0 [shape = 'u32[]', space=smem, size = 0x4, offset = 0x4, fixed_abs, tag = 'smem constant byte address 0x4 - core index']
  #allocation1 [shape = 'u32[72,128]{1,0:T(1,128)}', space=vmem, size = 0x9000, scoped, tag = 'internal scratch']
  %s0 = inlined_call_operand.vmem [shape: bf16[432,640], index: 0, kind: input, shape index: {}]
  %s1 = inlined_call_operand.vmem [shape: bf16[640,128], index: 1, kind: input, shape index: {}]
  %s2 = inlined_call_operand.vmem [shape: f32[432,128], index: 2, kind: output, shape index: {}]
  %s3 = sld [smem:[#allocation0]]
  $region18: #{conv_autoencoder_forward.13} parent=0
    _
  %s5 = ssub.s32 1, %s3
  %s6 = scalar_select 0, %s5, %s3
  // Predicated region
  $region2: #{conv_autoencoder_forward.13} parent=0 // pred_check
    _
  $region3: #{conv_autoencoder_forward.13} parent=0 // pred_check_branch
    %8 = sbr.rel (0) target = $region5
  $region4: #{conv_autoencoder_forward.13} parent=0 // pred_region
    _
  $region5: #{conv_autoencoder_forward.13} parent=0 // pred_fallthru
    _
  // Predicated region
  $region6: #{conv_autoencoder_forward.13} parent=0 // pred_check
    _
  $region7: #{conv_autoencoder_forward.13} parent=0 // pred_check_branch
    %10 = sbr.rel (0) target = $region9
  $region8: #{conv_autoencoder_forward.13} parent=0 // pred_region
    _
  $region9: #{conv_autoencoder_forward.13} parent=0 // pred_fallthru
    _
  %v11 = vld [vmem:[%s0] sm:$0xff]
  %v12 = vld [vmem:[%s0 + $0x8] sm:$0xff]
  %v13 = vld [vmem:[%s0 + $0x10] sm:$0xf]
  %v14 = vld [vmem:[%s0 + $0x14] sm:$0xff]
  %v15 = vld [vmem:[%s0 + $0x1c] sm:$0xff]
  %v16 = vld [vmem:[%s0 + $0x24] sm:$0xf]
  %v17 = vld [vmem:[%s0 + $0x28] sm:$0xff]
  %v18 = vld [vmem:[%s0 + $0x30] sm:$0xff]
  %v19 = vld [vmem:[%s0 + $0x38] sm:$0xf]
  %v20 = vld [vmem:[%s0 + $0x3c] sm:$0xff]
  %v21 = vld [vmem:[%s0 + $0x44] sm:$0xff]
  %v22 = vld [vmem:[%s0 + $0x4c] sm:$0xf]
  %v23 = vld [vmem:[%s0 + $0x50] sm:$0xff]
  %v24 = vld [vmem:[%s0 + $0x58] sm:$0xff]
  %v25 = vld [vmem:[%s0 + $0x60] sm:$0xf]
  %v26 = vld [vmem:[%s0 + $0x64] sm:$0xff]
  %v27 = vld [vmem:[%s0 + $0x6c] sm:$0xff]
  %v28 = vld [vmem:[%s0 + $0x74] sm:$0xf]
  %v29 = vld [vmem:[%s0 + $0x78] sm:$0xff]
  %v30 = vld [vmem:[%s0 + $0x80] sm:$0xff]
  %v31 = vld [vmem:[%s0 + $0x88] sm:$0xf]
  %v32 = vld [vmem:[%s0 + $0x8c] sm:$0xff]
  %v33 = vld [vmem:[%s0 + $0x94] sm:$0xff]
  %v34 = vld [vmem:[%s0 + $0x9c] sm:$0xf]
  %v35 = vld [vmem:[%s0 + $0xa0] sm:$0xff]
  %v36 = vld [vmem:[%s0 + $0xa8] sm:$0xff]
  %v37 = vld [vmem:[%s0 + $0xb0] sm:$0xf]
  %v38 = vld [vmem:[%s0 + $0xb4] sm:$0xff]
  %v39 = vld [vmem:[%s0 + $0xbc] sm:$0xff]
  %v40 = vld [vmem:[%s0 + $0xc4] sm:$0xf]
  %v41 = vld [vmem:[%s0 + $0xc8] sm:$0xff]
  %v42 = vld [vmem:[%s0 + $0xd0] sm:$0xff]
  %v43 = vld [vmem:[%s0 + $0xd8] sm:$0xf]
  %v44 = vld [vmem:[%s0 + $0xdc] sm:$0xff]
  %v45 = vld [vmem:[%s0 + $0xe4] sm:$0xff]
  %v46 = vld [vmem:[%s0 + $0xec] sm:$0xf]
  %v47 = vld [vmem:[%s0 + $0xf0] sm:$0xff]
  %v48 = vld [vmem:[%s0 + $0xf8] sm:$0xff]
  %v49 = vld [vmem:[%s0 + $0x100] sm:$0xf]
  %v50 = vld [vmem:[%s0 + $0x104] sm:$0xff]
  %v51 = vld [vmem:[%s0 + $0x10c] sm:$0xff]
  %v52 = vld [vmem:[%s0 + $0x114] sm:$0xf]
  %v53 = vld [vmem:[%s0 + $0x118] sm:$0xff]
  %v54 = vld [vmem:[%s0 + $0x120] sm:$0xff]
  %v55 = vld [vmem:[%s0 + $0x128] sm:$0xf]
  %v56 = vld [vmem:[%s0 + $0x12c] sm:$0xff]
  %v57 = vld [vmem:[%s0 + $0x134] sm:$0xff]
  %v58 = vld [vmem:[%s0 + $0x13c] sm:$0xf]
  %v59 = vld [vmem:[%s0 + $0x140] sm:$0xff]
  %v60 = vld [vmem:[%s0 + $0x148] sm:$0xff]
  %v61 = vld [vmem:[%s0 + $0x150] sm:$0xf]
  %v62 = vld [vmem:[%s0 + $0x154] sm:$0xff]
  %v63 = vld [vmem:[%s0 + $0x15c] sm:$0xff]
  %v64 = vld [vmem:[%s0 + $0x164] sm:$0xf]
  %v65 = vld [vmem:[%s0 + $0x168] sm:$0xff]
  %v66 = vld [vmem:[%s0 + $0x170] sm:$0xff]
  %v67 = vld [vmem:[%s0 + $0x178] sm:$0xf]
  %v68 = vld [vmem:[%s0 + $0x17c] sm:$0xff]
  %v69 = vld [vmem:[%s0 + $0x184] sm:$0xff]
  %v70 = vld [vmem:[%s0 + $0x18c] sm:$0xf]
  %v71 = vld [vmem:[%s0 + $0x190] sm:$0xff]
  %v72 = vld [vmem:[%s0 + $0x198] sm:$0xff]
  %v73 = vld [vmem:[%s0 + $0x1a0] sm:$0xf]
  %v74 = vld [vmem:[%s0 + $0x1a4] sm:$0xff]
  %v75 = vld [vmem:[%s0 + $0x1ac] sm:$0xff]
  %v76 = vld [vmem:[%s0 + $0x1b4] sm:$0xf]
  %v77 = vld [vmem:[%s0 + $0x1b8] sm:$0xff]
  %v78 = vld [vmem:[%s0 + $0x1c0] sm:$0xff]
  %v79 = vld [vmem:[%s0 + $0x1c8] sm:$0xf]
  %v80 = vld [vmem:[%s0 + $0x1cc] sm:$0xff]
  %v81 = vld [vmem:[%s0 + $0x1d4] sm:$0xff]
  %v82 = vld [vmem:[%s0 + $0x1dc] sm:$0xf]
  %v83 = vld [vmem:[%s0 + $0x1e0] sm:$0xff]
  %v84 = vld [vmem:[%s0 + $0x1e8] sm:$0xff]
  %v85 = vld [vmem:[%s0 + $0x1f0] sm:$0xf]
  %v86 = vld [vmem:[%s0 + $0x1f4] sm:$0xff]
  %v87 = vld [vmem:[%s0 + $0x1fc] sm:$0xff]
  %v88 = vld [vmem:[%s0 + $0x204] sm:$0xf]
  %v89 = vld [vmem:[%s0 + $0x208] sm:$0xff]
  %v90 = vld [vmem:[%s0 + $0x210] sm:$0xff]
  %v91 = vld [vmem:[%s0 + $0x218] sm:$0xf]
  %v92 = vld [vmem:[%s0 + $0x21c] sm:$0xff]
  %v93 = vld [vmem:[%s0 + $0x224] sm:$0xff]
  %v94 = vld [vmem:[%s0 + $0x22c] sm:$0xf]
  %v95 = vld [vmem:[%s0 + $0x230] sm:$0xff]
  %v96 = vld [vmem:[%s0 + $0x238] sm:$0xff]
  %v97 = vld [vmem:[%s0 + $0x240] sm:$0xf]
  %v98 = vld [vmem:[%s0 + $0x244] sm:$0xff]
  %v99 = vld [vmem:[%s0 + $0x24c] sm:$0xff]
  %v100 = vld [vmem:[%s0 + $0x254] sm:$0xf]
  %v101 = vld [vmem:[%s0 + $0x258] sm:$0xff]
  %v102 = vld [vmem:[%s0 + $0x260] sm:$0xff]
  %v103 = vld [vmem:[%s0 + $0x268] sm:$0xf]
  %v104 = vld [vmem:[%s0 + $0x26c] sm:$0xff]
  %v105 = vld [vmem:[%s0 + $0x274] sm:$0xff]
  %v106 = vld [vmem:[%s0 + $0x27c] sm:$0xf]
  %v107 = vld [vmem:[%s0 + $0x280] sm:$0xff]
  %v108 = vld [vmem:[%s0 + $0x288] sm:$0xff]
  %v109 = vld [vmem:[%s0 + $0x290] sm:$0xf]
  %v110 = vld [vmem:[%s0 + $0x294] sm:$0xff]
  %v111 = vld [vmem:[%s0 + $0x29c] sm:$0xff]
  %v112 = vld [vmem:[%s0 + $0x2a4] sm:$0xf]
  %v113 = vld [vmem:[%s0 + $0x2a8] sm:$0xff]
  %v114 = vld [vmem:[%s0 + $0x2b0] sm:$0xff]
  %v115 = vld [vmem:[%s0 + $0x2b8] sm:$0xf]
  %v116 = vld [vmem:[%s0 + $0x2bc] sm:$0xff]
  %v117 = vld [vmem:[%s0 + $0x2c4] sm:$0xff]
  %v118 = vld [vmem:[%s0 + $0x2cc] sm:$0xf]
  %v119 = vld [vmem:[%s0 + $0x2d0] sm:$0xff]
  %v120 = vld [vmem:[%s0 + $0x2d8] sm:$0xff]
  %v121 = vld [vmem:[%s0 + $0x2e0] sm:$0xf]
  %v122 = vld [vmem:[%s0 + $0x2e4] sm:$0xff]
  %v123 = vld [vmem:[%s0 + $0x2ec] sm:$0xff]
  %v124 = vld [vmem:[%s0 + $0x2f4] sm:$0xf]
  %v125 = vld [vmem:[%s0 + $0x2f8] sm:$0xff]
  %v126 = vld [vmem:[%s0 + $0x300] sm:$0xff]
  %v127 = vld [vmem:[%s0 + $0x308] sm:$0xf]
  %v128 = vld [vmem:[%s0 + $0x30c] sm:$0xff]
  %v129 = vld [vmem:[%s0 + $0x314] sm:$0xff]
  %v130 = vld [vmem:[%s0 + $0x31c] sm:$0xf]
  %v131 = vld [vmem:[%s0 + $0x320] sm:$0xff]
  %v132 = vld [vmem:[%s0 + $0x328] sm:$0xff]
  %v133 = vld [vmem:[%s0 + $0x330] sm:$0xf]
  %v134 = vld [vmem:[%s0 + $0x334] sm:$0xff]
  %v135 = vld [vmem:[%s0 + $0x33c] sm:$0xff]
  %v136 = vld [vmem:[%s0 + $0x344] sm:$0xf]
  %v137 = vld [vmem:[%s0 + $0x348] sm:$0xff]
  %v138 = vld [vmem:[%s0 + $0x350] sm:$0xff]
  %v139 = vld [vmem:[%s0 + $0x358] sm:$0xf]
  %v140 = vld [vmem:[%s0 + $0x35c] sm:$0xff]
  %v141 = vld [vmem:[%s0 + $0x364] sm:$0xff]
  %v142 = vld [vmem:[%s0 + $0x36c] sm:$0xf]
  %v143 = vld [vmem:[%s0 + $0x370] sm:$0xff]
  %v144 = vld [vmem:[%s0 + $0x378] sm:$0xff]
  %v145 = vld [vmem:[%s0 + $0x380] sm:$0xf]
  %v146 = vld [vmem:[%s0 + $0x384] sm:$0xff]
  %v147 = vld [vmem:[%s0 + $0x38c] sm:$0xff]
  %v148 = vld [vmem:[%s0 + $0x394] sm:$0xf]
  %v149 = vld [vmem:[%s0 + $0x398] sm:$0xff]
  %v150 = vld [vmem:[%s0 + $0x3a0] sm:$0xff]
  %v151 = vld [vmem:[%s0 + $0x3a8] sm:$0xf]
  %v152 = vld [vmem:[%s0 + $0x3ac] sm:$0xff]
  %v153 = vld [vmem:[%s0 + $0x3b4] sm:$0xff]
  %v154 = vld [vmem:[%s0 + $0x3bc] sm:$0xf]
  %v155 = vld [vmem:[%s0 + $0x3c0] sm:$0xff]
  %v156 = vld [vmem:[%s0 + $0x3c8] sm:$0xff]
  %v157 = vld [vmem:[%s0 + $0x3d0] sm:$0xf]
  %v158 = vld [vmem:[%s0 + $0x3d4] sm:$0xff]
  %v159 = vld [vmem:[%s0 + $0x3dc] sm:$0xff]
  %v160 = vld [vmem:[%s0 + $0x3e4] sm:$0xf]
  %v161 = vld [vmem:[%s0 + $0x3e8] sm:$0xff]
  %v162 = vld [vmem:[%s0 + $0x3f0] sm:$0xff]
  %v163 = vld [vmem:[%s0 + $0x3f8] sm:$0xf]
  %v164 = vld [vmem:[%s0 + $0x3fc] sm:$0xff]
  %v165 = vld [vmem:[%s0 + $0x404] sm:$0xff]
  %v166 = vld [vmem:[%s0 + $0x40c] sm:$0xf]
  %v167 = vld [vmem:[%s0 + $0x410] sm:$0xff]
  %v168 = vld [vmem:[%s0 + $0x418] sm:$0xff]
  %v169 = vld [vmem:[%s0 + $0x420] sm:$0xf]
  %v170 = vld [vmem:[%s0 + $0x424] sm:$0xff]
  %v171 = vld [vmem:[%s0 + $0x42c] sm:$0xff]
  %v172 = vld [vmem:[%s0 + $0x434] sm:$0xf]
  %v173 = vld [vmem:[%s1] sm:$0xf]
  %v174 = vld [vmem:[%s1 + $0x4] sm:$0xf]
  %v175 = vld [vmem:[%s1 + $0x8] sm:$0xf]
  %v176 = vld [vmem:[%s1 + $0xc] sm:$0xf]
  %v177 = vld [vmem:[%s1 + $0x10] sm:$0xf]
  %v178 = vld [vmem:[%s1 + $0x14] sm:$0xf]
  %v179 = vld [vmem:[%s1 + $0x18] sm:$0xf]
  %v180 = vld [vmem:[%s1 + $0x1c] sm:$0xf]
  %v181 = vld [vmem:[%s1 + $0x20] sm:$0xf]
  %v182 = vld [vmem:[%s1 + $0x24] sm:$0xf]
  %v183 = vld [vmem:[%s1 + $0x28] sm:$0xf]
  %v184 = vld [vmem:[%s1 + $0x2c] sm:$0xf]
  %v185 = vld [vmem:[%s1 + $0x30] sm:$0xf]
  %v186 = vld [vmem:[%s1 + $0x34] sm:$0xf]
  %v187 = vld [vmem:[%s1 + $0x38] sm:$0xf]
  %v188 = vld [vmem:[%s1 + $0x3c] sm:$0xf]
  %v189 = vld [vmem:[%s1 + $0x40] sm:$0xf]
  %v190 = vld [vmem:[%s1 + $0x44] sm:$0xf]
  %v191 = vld [vmem:[%s1 + $0x48] sm:$0xf]
  %v192 = vld [vmem:[%s1 + $0x4c] sm:$0xf]
  %v193 = vld [vmem:[%s1 + $0x50] sm:$0xf]
  %v194 = vld [vmem:[%s1 + $0x54] sm:$0xf]
  %v195 = vld [vmem:[%s1 + $0x58] sm:$0xf]
  %v196 = vld [vmem:[%s1 + $0x5c] sm:$0xf]
  %v197 = vld [vmem:[%s1 + $0x60] sm:$0xf]
  %v198 = vld [vmem:[%s1 + $0x64] sm:$0xf]
  %v199 = vld [vmem:[%s1 + $0x68] sm:$0xf]
  %v200 = vld [vmem:[%s1 + $0x6c] sm:$0xf]
  %v201 = vld [vmem:[%s1 + $0x70] sm:$0xf]
  %v202 = vld [vmem:[%s1 + $0x74] sm:$0xf]
  %v203 = vld [vmem:[%s1 + $0x78] sm:$0xf]
  %v204 = vld [vmem:[%s1 + $0x7c] sm:$0xf]
  %v205 = vld [vmem:[%s1 + $0x80] sm:$0xf]
  %v206 = vld [vmem:[%s1 + $0x84] sm:$0xf]
  %v207 = vld [vmem:[%s1 + $0x88] sm:$0xf]
  %v208 = vld [vmem:[%s1 + $0x8c] sm:$0xf]
  %v209 = vld [vmem:[%s1 + $0x90] sm:$0xf]
  %v210 = vld [vmem:[%s1 + $0x94] sm:$0xf]
  %v211 = vld [vmem:[%s1 + $0x98] sm:$0xf]
  %v212 = vld [vmem:[%s1 + $0x9c] sm:$0xf]
  %v213 = vld [vmem:[%s1 + $0xa0] sm:$0xf]
  %v214 = vld [vmem:[%s1 + $0xa4] sm:$0xf]
  %v215 = vld [vmem:[%s1 + $0xa8] sm:$0xf]
  %v216 = vld [vmem:[%s1 + $0xac] sm:$0xf]
  %v217 = vld [vmem:[%s1 + $0xb0] sm:$0xf]
  %v218 = vld [vmem:[%s1 + $0xb4] sm:$0xf]
  %v219 = vld [vmem:[%s1 + $0xb8] sm:$0xf]
  %v220 = vld [vmem:[%s1 + $0xbc] sm:$0xf]
  %v221 = vld [vmem:[%s1 + $0xc0] sm:$0xf]
  %v222 = vld [vmem:[%s1 + $0xc4] sm:$0xf]
  %v223 = vld [vmem:[%s1 + $0xc8] sm:$0xf]
  %v224 = vld [vmem:[%s1 + $0xcc] sm:$0xf]
  %v225 = vld [vmem:[%s1 + $0xd0] sm:$0xf]
  %v226 = vld [vmem:[%s1 + $0xd4] sm:$0xf]
  %v227 = vld [vmem:[%s1 + $0xd8] sm:$0xf]
  %v228 = vld [vmem:[%s1 + $0xdc] sm:$0xf]
  %v229 = vld [vmem:[%s1 + $0xe0] sm:$0xf]
  %v230 = vld [vmem:[%s1 + $0xe4] sm:$0xf]
  %v231 = vld [vmem:[%s1 + $0xe8] sm:$0xf]
  %v232 = vld [vmem:[%s1 + $0xec] sm:$0xf]
  %v233 = vld [vmem:[%s1 + $0xf0] sm:$0xf]
  %v234 = vld [vmem:[%s1 + $0xf4] sm:$0xf]
  %v235 = vld [vmem:[%s1 + $0xf8] sm:$0xf]
  %v236 = vld [vmem:[%s1 + $0xfc] sm:$0xf]
  %v237 = vld [vmem:[%s1 + $0x100] sm:$0xf]
  %v238 = vld [vmem:[%s1 + $0x104] sm:$0xf]
  %v239 = vld [vmem:[%s1 + $0x108] sm:$0xf]
  %v240 = vld [vmem:[%s1 + $0x10c] sm:$0xf]
  %v241 = vld [vmem:[%s1 + $0x110] sm:$0xf]
  %v242 = vld [vmem:[%s1 + $0x114] sm:$0xf]
  %v243 = vld [vmem:[%s1 + $0x118] sm:$0xf]
  %v244 = vld [vmem:[%s1 + $0x11c] sm:$0xf]
  %v245 = vld [vmem:[%s1 + $0x120] sm:$0xf]
  %v246 = vld [vmem:[%s1 + $0x124] sm:$0xf]
  %v247 = vld [vmem:[%s1 + $0x128] sm:$0xf]
  %v248 = vld [vmem:[%s1 + $0x12c] sm:$0xf]
  %v249 = vld [vmem:[%s1 + $0x130] sm:$0xf]
  %v250 = vld [vmem:[%s1 + $0x134] sm:$0xf]
  %v251 = vld [vmem:[%s1 + $0x138] sm:$0xf]
  %v252 = vld [vmem:[%s1 + $0x13c] sm:$0xf]
  %v415 = vunpack.c.l.b16 %v11
  %v416 = vunpack.c.h.b16 %v11
  %v417 = vunpack.c.l.b16 %v12
  %v418 = vunpack.c.h.b16 %v12
  %v419 = vunpack.c.l.b16 %v13
  %v420 = vunpack.c.l.b16 %v14
  %v421 = vunpack.c.h.b16 %v14
  %v422 = vunpack.c.l.b16 %v15
  %v423 = vunpack.c.h.b16 %v15
  %v424 = vunpack.c.l.b16 %v16
  %v425 = vunpack.c.l.b16 %v17
  %v426 = vunpack.c.h.b16 %v17
  %v427 = vunpack.c.l.b16 %v18
  %v428 = vunpack.c.h.b16 %v18
  %v429 = vunpack.c.l.b16 %v19
  %v430 = vunpack.c.l.b16 %v20
  %v431 = vunpack.c.h.b16 %v20
  %v432 = vunpack.c.l.b16 %v21
  %v433 = vunpack.c.h.b16 %v21
  %v434 = vunpack.c.l.b16 %v22
  %v435 = vunpack.c.l.b16 %v23
  %v436 = vunpack.c.h.b16 %v23
  %v437 = vunpack.c.l.b16 %v24
  %v438 = vunpack.c.h.b16 %v24
  %v439 = vunpack.c.l.b16 %v25
  %v440 = vunpack.c.l.b16 %v26
  %v441 = vunpack.c.h.b16 %v26
  %v442 = vunpack.c.l.b16 %v27
  %v443 = vunpack.c.h.b16 %v27
  %v444 = vunpack.c.l.b16 %v28
  %v445 = vunpack.c.l.b16 %v29
  %v446 = vunpack.c.h.b16 %v29
  %v447 = vunpack.c.l.b16 %v30
  %v448 = vunpack.c.h.b16 %v30
  %v449 = vunpack.c.l.b16 %v31
  %v450 = vunpack.c.l.b16 %v32
  %v451 = vunpack.c.h.b16 %v32
  %v452 = vunpack.c.l.b16 %v33
  %v453 = vunpack.c.h.b16 %v33
  %v454 = vunpack.c.l.b16 %v34
  %v455 = vunpack.c.l.b16 %v35
  %v456 = vunpack.c.h.b16 %v35
  %v457 = vunpack.c.l.b16 %v36
  %v458 = vunpack.c.h.b16 %v36
  %v459 = vunpack.c.l.b16 %v37
  %v460 = vunpack.c.l.b16 %v38
  %v461 = vunpack.c.h.b16 %v38
  %v462 = vunpack.c.l.b16 %v39
  %v463 = vunpack.c.h.b16 %v39
  %v464 = vunpack.c.l.b16 %v40
  %v465 = vunpack.c.l.b16 %v41
  %v466 = vunpack.c.h.b16 %v41
  %v467 = vunpack.c.l.b16 %v42
  %v468 = vunpack.c.h.b16 %v42
  %v469 = vunpack.c.l.b16 %v43
  %v470 = vunpack.c.l.b16 %v44
  %v471 = vunpack.c.h.b16 %v44
  %v472 = vunpack.c.l.b16 %v45
  %v473 = vunpack.c.h.b16 %v45
  %v474 = vunpack.c.l.b16 %v46
  %v475 = vunpack.c.l.b16 %v47
  %v476 = vunpack.c.h.b16 %v47
  %v477 = vunpack.c.l.b16 %v48
  %v478 = vunpack.c.h.b16 %v48
  %v479 = vunpack.c.l.b16 %v49
  %v480 = vunpack.c.l.b16 %v50
  %v481 = vunpack.c.h.b16 %v50
  %v482 = vunpack.c.l.b16 %v51
  %v483 = vunpack.c.h.b16 %v51
  %v484 = vunpack.c.l.b16 %v52
  %v485 = vunpack.c.l.b16 %v53
  %v486 = vunpack.c.h.b16 %v53
  %v487 = vunpack.c.l.b16 %v54
  %v488 = vunpack.c.h.b16 %v54
  %v489 = vunpack.c.l.b16 %v55
  %v490 = vunpack.c.l.b16 %v56
  %v491 = vunpack.c.h.b16 %v56
  %v492 = vunpack.c.l.b16 %v57
  %v493 = vunpack.c.h.b16 %v57
  %v494 = vunpack.c.l.b16 %v58
  %v495 = vunpack.c.l.b16 %v59
  %v496 = vunpack.c.h.b16 %v59
  %v497 = vunpack.c.l.b16 %v60
  %v498 = vunpack.c.h.b16 %v60
  %v499 = vunpack.c.l.b16 %v61
  %v500 = vunpack.c.l.b16 %v62
  %v501 = vunpack.c.h.b16 %v62
  %v502 = vunpack.c.l.b16 %v63
  %v503 = vunpack.c.h.b16 %v63
  %v504 = vunpack.c.l.b16 %v64
  %v505 = vunpack.c.l.b16 %v65
  %v506 = vunpack.c.h.b16 %v65
  %v507 = vunpack.c.l.b16 %v66
  %v508 = vunpack.c.h.b16 %v66
  %v509 = vunpack.c.l.b16 %v67
  %v510 = vunpack.c.l.b16 %v68
  %v511 = vunpack.c.h.b16 %v68
  %v512 = vunpack.c.l.b16 %v69
  %v513 = vunpack.c.h.b16 %v69
  %v514 = vunpack.c.l.b16 %v70
  %v515 = vunpack.c.l.b16 %v71
  %v516 = vunpack.c.h.b16 %v71
  %v517 = vunpack.c.l.b16 %v72
  %v518 = vunpack.c.h.b16 %v72
  %v519 = vunpack.c.l.b16 %v73
  %v520 = vunpack.c.l.b16 %v74
  %v521 = vunpack.c.h.b16 %v74
  %v522 = vunpack.c.l.b16 %v75
  %v523 = vunpack.c.h.b16 %v75
  %v524 = vunpack.c.l.b16 %v76
  %v525 = vunpack.c.l.b16 %v77
  %v526 = vunpack.c.h.b16 %v77
  %v527 = vunpack.c.l.b16 %v78
  %v528 = vunpack.c.h.b16 %v78
  %v529 = vunpack.c.l.b16 %v79
  %v530 = vunpack.c.l.b16 %v80
  %v531 = vunpack.c.h.b16 %v80
  %v532 = vunpack.c.l.b16 %v81
  %v533 = vunpack.c.h.b16 %v81
  %v534 = vunpack.c.l.b16 %v82
  %v535 = vunpack.c.l.b16 %v83
  %v536 = vunpack.c.h.b16 %v83
  %v537 = vunpack.c.l.b16 %v84
  %v538 = vunpack.c.h.b16 %v84
  %v539 = vunpack.c.l.b16 %v85
  %v540 = vunpack.c.l.b16 %v86
  %v541 = vunpack.c.h.b16 %v86
  %v542 = vunpack.c.l.b16 %v87
  %v543 = vunpack.c.h.b16 %v87
  %v544 = vunpack.c.l.b16 %v88
  %v545 = vunpack.c.l.b16 %v89
  %v546 = vunpack.c.h.b16 %v89
  %v547 = vunpack.c.l.b16 %v90
  %v548 = vunpack.c.h.b16 %v90
  %v549 = vunpack.c.l.b16 %v91
  %v550 = vunpack.c.l.b16 %v92
  %v551 = vunpack.c.h.b16 %v92
  %v552 = vunpack.c.l.b16 %v93
  %v553 = vunpack.c.h.b16 %v93
  %v554 = vunpack.c.l.b16 %v94
  %v555 = vunpack.c.l.b16 %v95
  %v556 = vunpack.c.h.b16 %v95
  %v557 = vunpack.c.l.b16 %v96
  %v558 = vunpack.c.h.b16 %v96
  %v559 = vunpack.c.l.b16 %v97
  %v560 = vunpack.c.l.b16 %v98
  %v561 = vunpack.c.h.b16 %v98
  %v562 = vunpack.c.l.b16 %v99
  %v563 = vunpack.c.h.b16 %v99
  %v564 = vunpack.c.l.b16 %v100
  %v565 = vunpack.c.l.b16 %v101
  %v566 = vunpack.c.h.b16 %v101
  %v567 = vunpack.c.l.b16 %v102
  %v568 = vunpack.c.h.b16 %v102
  %v569 = vunpack.c.l.b16 %v103
  %v570 = vunpack.c.l.b16 %v104
  %v571 = vunpack.c.h.b16 %v104
  %v572 = vunpack.c.l.b16 %v105
  %v573 = vunpack.c.h.b16 %v105
  %v574 = vunpack.c.l.b16 %v106
  %v575 = vunpack.c.l.b16 %v107
  %v576 = vunpack.c.h.b16 %v107
  %v577 = vunpack.c.l.b16 %v108
  %v578 = vunpack.c.h.b16 %v108
  %v579 = vunpack.c.l.b16 %v109
  %v580 = vunpack.c.l.b16 %v110
  %v581 = vunpack.c.h.b16 %v110
  %v582 = vunpack.c.l.b16 %v111
  %v583 = vunpack.c.h.b16 %v111
  %v584 = vunpack.c.l.b16 %v112
  %v585 = vunpack.c.l.b16 %v113
  %v586 = vunpack.c.h.b16 %v113
  %v587 = vunpack.c.l.b16 %v114
  %v588 = vunpack.c.h.b16 %v114
  %v589 = vunpack.c.l.b16 %v115
  %v590 = vunpack.c.l.b16 %v116
  %v591 = vunpack.c.h.b16 %v116
  %v592 = vunpack.c.l.b16 %v117
  %v593 = vunpack.c.h.b16 %v117
  %v594 = vunpack.c.l.b16 %v118
  %v595 = vunpack.c.l.b16 %v119
  %v596 = vunpack.c.h.b16 %v119
  %v597 = vunpack.c.l.b16 %v120
  %v598 = vunpack.c.h.b16 %v120
  %v599 = vunpack.c.l.b16 %v121
  %v600 = vunpack.c.l.b16 %v122
  %v601 = vunpack.c.h.b16 %v122
  %v602 = vunpack.c.l.b16 %v123
  %v603 = vunpack.c.h.b16 %v123
  %v604 = vunpack.c.l.b16 %v124
  %v605 = vunpack.c.l.b16 %v125
  %v606 = vunpack.c.h.b16 %v125
  %v607 = vunpack.c.l.b16 %v126
  %v608 = vunpack.c.h.b16 %v126
  %v609 = vunpack.c.l.b16 %v127
  %v610 = vunpack.c.l.b16 %v128
  %v611 = vunpack.c.h.b16 %v128
  %v612 = vunpack.c.l.b16 %v129
  %v613 = vunpack.c.h.b16 %v129
  %v614 = vunpack.c.l.b16 %v130
  %v615 = vunpack.c.l.b16 %v131
  %v616 = vunpack.c.h.b16 %v131
  %v617 = vunpack.c.l.b16 %v132
  %v618 = vunpack.c.h.b16 %v132
  %v619 = vunpack.c.l.b16 %v133
  %v620 = vunpack.c.l.b16 %v134
  %v621 = vunpack.c.h.b16 %v134
  %v622 = vunpack.c.l.b16 %v135
  %v623 = vunpack.c.h.b16 %v135
  %v624 = vunpack.c.l.b16 %v136
  %v625 = vunpack.c.l.b16 %v137
  %v626 = vunpack.c.h.b16 %v137
  %v627 = vunpack.c.l.b16 %v138
  %v628 = vunpack.c.h.b16 %v138
  %v629 = vunpack.c.l.b16 %v139
  %v630 = vunpack.c.l.b16 %v140
  %v631 = vunpack.c.h.b16 %v140
  %v632 = vunpack.c.l.b16 %v141
  %v633 = vunpack.c.h.b16 %v141
  %v634 = vunpack.c.l.b16 %v142
  %v635 = vunpack.c.l.b16 %v143
  %v636 = vunpack.c.h.b16 %v143
  %v637 = vunpack.c.l.b16 %v144
  %v638 = vunpack.c.h.b16 %v144
  %v639 = vunpack.c.l.b16 %v145
  %v640 = vunpack.c.l.b16 %v146
  %v641 = vunpack.c.h.b16 %v146
  %v642 = vunpack.c.l.b16 %v147
  %v643 = vunpack.c.h.b16 %v147
  %v644 = vunpack.c.l.b16 %v148
  %v645 = vunpack.c.l.b16 %v149
  %v646 = vunpack.c.h.b16 %v149
  %v647 = vunpack.c.l.b16 %v150
  %v648 = vunpack.c.h.b16 %v150
  %v649 = vunpack.c.l.b16 %v151
  %v650 = vunpack.c.l.b16 %v152
  %v651 = vunpack.c.h.b16 %v152
  %v652 = vunpack.c.l.b16 %v153
  %v653 = vunpack.c.h.b16 %v153
  %v654 = vunpack.c.l.b16 %v154
  %v655 = vunpack.c.l.b16 %v155
  %v656 = vunpack.c.h.b16 %v155
  %v657 = vunpack.c.l.b16 %v156
  %v658 = vunpack.c.h.b16 %v156
  %v659 = vunpack.c.l.b16 %v157
  %v660 = vunpack.c.l.b16 %v158
  %v661 = vunpack.c.h.b16 %v158
  %v662 = vunpack.c.l.b16 %v159
  %v663 = vunpack.c.h.b16 %v159
  %v664 = vunpack.c.l.b16 %v160
  %v665 = vunpack.c.l.b16 %v161
  %v666 = vunpack.c.h.b16 %v161
  %v667 = vunpack.c.l.b16 %v162
  %v668 = vunpack.c.h.b16 %v162
  %v669 = vunpack.c.l.b16 %v163
  %v670 = vunpack.c.l.b16 %v164
  %v671 = vunpack.c.h.b16 %v164
  %v672 = vunpack.c.l.b16 %v165
  %v673 = vunpack.c.h.b16 %v165
  %v674 = vunpack.c.l.b16 %v166
  %v675 = vunpack.c.l.b16 %v167
  %v676 = vunpack.c.h.b16 %v167
  %v677 = vunpack.c.l.b16 %v168
  %v678 = vunpack.c.h.b16 %v168
  %v679 = vunpack.c.l.b16 %v169
  %v680 = vunpack.c.l.b16 %v170
  %v681 = vunpack.c.h.b16 %v170
  %v682 = vunpack.c.l.b16 %v171
  %v683 = vunpack.c.h.b16 %v171
  %v684 = vunpack.c.l.b16 %v172
  %v685 = vpack.c.b16 %v420, %v415
  %v686 = vpack.c.b16 %v421, %v416
  %v687 = vpack.c.b16 %v422, %v417
  %v688 = vpack.c.b16 %v423, %v418
  %v689 = vpack.c.b16 %v424, %v419
  %v690 = vpack.c.b16 %v430, %v425
  %v691 = vpack.c.b16 %v431, %v426
  %v692 = vpack.c.b16 %v432, %v427
  %v693 = vpack.c.b16 %v433, %v428
  %v694 = vpack.c.b16 %v434, %v429
  %v695 = vpack.c.b16 %v440, %v435
  %v696 = vpack.c.b16 %v441, %v436
  %v697 = vpack.c.b16 %v442, %v437
  %v698 = vpack.c.b16 %v443, %v438
  %v699 = vpack.c.b16 %v444, %v439
  %v700 = vpack.c.b16 %v450, %v445
  %v701 = vpack.c.b16 %v451, %v446
  %v702 = vpack.c.b16 %v452, %v447
  %v703 = vpack.c.b16 %v453, %v448
  %v704 = vpack.c.b16 %v454, %v449
  %v705 = vpack.c.b16 %v460, %v455
  %v706 = vpack.c.b16 %v461, %v456
  %v707 = vpack.c.b16 %v462, %v457
  %v708 = vpack.c.b16 %v463, %v458
  %v709 = vpack.c.b16 %v464, %v459
  %v710 = vpack.c.b16 %v470, %v465
  %v711 = vpack.c.b16 %v471, %v466
  %v712 = vpack.c.b16 %v472, %v467
  %v713 = vpack.c.b16 %v473, %v468
  %v714 = vpack.c.b16 %v474, %v469
  %v715 = vpack.c.b16 %v480, %v475
  %v716 = vpack.c.b16 %v481, %v476
  %v717 = vpack.c.b16 %v482, %v477
  %v718 = vpack.c.b16 %v483, %v478
  %v719 = vpack.c.b16 %v484, %v479
  %v720 = vpack.c.b16 %v490, %v485
  %v721 = vpack.c.b16 %v491, %v486
  %v722 = vpack.c.b16 %v492, %v487
  %v723 = vpack.c.b16 %v493, %v488
  %v724 = vpack.c.b16 %v494, %v489
  %v725 = vpack.c.b16 %v500, %v495
  %v726 = vpack.c.b16 %v501, %v496
  %v727 = vpack.c.b16 %v502, %v497
  %v728 = vpack.c.b16 %v503, %v498
  %v729 = vpack.c.b16 %v504, %v499
  %v730 = vpack.c.b16 %v510, %v505
  %v731 = vpack.c.b16 %v511, %v506
  %v732 = vpack.c.b16 %v512, %v507
  %v733 = vpack.c.b16 %v513, %v508
  %v734 = vpack.c.b16 %v514, %v509
  %v735 = vpack.c.b16 %v520, %v515
  %v736 = vpack.c.b16 %v521, %v516
  %v737 = vpack.c.b16 %v522, %v517
  %v738 = vpack.c.b16 %v523, %v518
  %v739 = vpack.c.b16 %v524, %v519
  %v740 = vpack.c.b16 %v530, %v525
  %v741 = vpack.c.b16 %v531, %v526
  %v742 = vpack.c.b16 %v532, %v527
  %v743 = vpack.c.b16 %v533, %v528
  %v744 = vpack.c.b16 %v534, %v529
  %v745 = vpack.c.b16 %v540, %v535
  %v746 = vpack.c.b16 %v541, %v536
  %v747 = vpack.c.b16 %v542, %v537
  %v748 = vpack.c.b16 %v543, %v538
  %v749 = vpack.c.b16 %v544, %v539
  %v750 = vpack.c.b16 %v550, %v545
  %v751 = vpack.c.b16 %v551, %v546
  %v752 = vpack.c.b16 %v552, %v547
  %v753 = vpack.c.b16 %v553, %v548
  %v754 = vpack.c.b16 %v554, %v549
  %v755 = vpack.c.b16 %v560, %v555
  %v756 = vpack.c.b16 %v561, %v556
  %v757 = vpack.c.b16 %v562, %v557
  %v758 = vpack.c.b16 %v563, %v558
  %v759 = vpack.c.b16 %v564, %v559
  %v760 = vpack.c.b16 %v570, %v565
  %v761 = vpack.c.b16 %v571, %v566
  %v762 = vpack.c.b16 %v572, %v567
  %v763 = vpack.c.b16 %v573, %v568
  %v764 = vpack.c.b16 %v574, %v569
  %v765 = vpack.c.b16 %v580, %v575
  %v766 = vpack.c.b16 %v581, %v576
  %v767 = vpack.c.b16 %v582, %v577
  %v768 = vpack.c.b16 %v583, %v578
  %v769 = vpack.c.b16 %v584, %v579
  %v770 = vpack.c.b16 %v590, %v585
  %v771 = vpack.c.b16 %v591, %v586
  %v772 = vpack.c.b16 %v592, %v587
  %v773 = vpack.c.b16 %v593, %v588
  %v774 = vpack.c.b16 %v594, %v589
  %v775 = vpack.c.b16 %v600, %v595
  %v776 = vpack.c.b16 %v601, %v596
  %v777 = vpack.c.b16 %v602, %v597
  %v778 = vpack.c.b16 %v603, %v598
  %v779 = vpack.c.b16 %v604, %v599
  %v780 = vpack.c.b16 %v610, %v605
  %v781 = vpack.c.b16 %v611, %v606
  %v782 = vpack.c.b16 %v612, %v607
  %v783 = vpack.c.b16 %v613, %v608
  %v784 = vpack.c.b16 %v614, %v609
  %v785 = vpack.c.b16 %v620, %v615
  %v786 = vpack.c.b16 %v621, %v616
  %v787 = vpack.c.b16 %v622, %v617
  %v788 = vpack.c.b16 %v623, %v618
  %v789 = vpack.c.b16 %v624, %v619
  %v790 = vpack.c.b16 %v630, %v625
  %v791 = vpack.c.b16 %v631, %v626
  %v792 = vpack.c.b16 %v632, %v627
  %v793 = vpack.c.b16 %v633, %v628
  %v794 = vpack.c.b16 %v634, %v629
  %v795 = vpack.c.b16 %v640, %v635
  %v796 = vpack.c.b16 %v641, %v636
  %v797 = vpack.c.b16 %v642, %v637
  %v798 = vpack.c.b16 %v643, %v638
  %v799 = vpack.c.b16 %v644, %v639
  %v800 = vpack.c.b16 %v650, %v645
  %v801 = vpack.c.b16 %v651, %v646
  %v802 = vpack.c.b16 %v652, %v647
  %v803 = vpack.c.b16 %v653, %v648
  %v804 = vpack.c.b16 %v654, %v649
  %v805 = vpack.c.b16 %v660, %v655
  %v806 = vpack.c.b16 %v661, %v656
  %v807 = vpack.c.b16 %v662, %v657
  %v808 = vpack.c.b16 %v663, %v658
  %v809 = vpack.c.b16 %v664, %v659
  %v810 = vpack.c.b16 %v670, %v665
  %v811 = vpack.c.b16 %v671, %v666
  %v812 = vpack.c.b16 %v672, %v667
  %v813 = vpack.c.b16 %v673, %v668
  %v814 = vpack.c.b16 %v674, %v669
  %v815 = vpack.c.b16 %v680, %v675
  %v816 = vpack.c.b16 %v681, %v676
  %v817 = vpack.c.b16 %v682, %v677
  %v818 = vpack.c.b16 %v683, %v678
  %v819 = vpack.c.b16 %v684, %v679
  %v1035 = vunpack.c.l.b16 %v173
  %v1036 = vunpack.c.l.b16 %v174
  %v1037 = vunpack.c.l.b16 %v175
  %v1038 = vunpack.c.l.b16 %v176
  %v1039 = vunpack.c.l.b16 %v177
  %v1040 = vunpack.c.l.b16 %v178
  %v1041 = vunpack.c.l.b16 %v179
  %v1042 = vunpack.c.l.b16 %v180
  %v1043 = vunpack.c.l.b16 %v181
  %v1044 = vunpack.c.l.b16 %v182
  %v1045 = vunpack.c.l.b16 %v183
  %v1046 = vunpack.c.l.b16 %v184
  %v1047 = vunpack.c.l.b16 %v185
  %v1048 = vunpack.c.l.b16 %v186
  %v1049 = vunpack.c.l.b16 %v187
  %v1050 = vunpack.c.l.b16 %v188
  %v1051 = vunpack.c.l.b16 %v189
  %v1052 = vunpack.c.l.b16 %v190
  %v1053 = vunpack.c.l.b16 %v191
  %v1054 = vunpack.c.l.b16 %v192
  %v1055 = vunpack.c.l.b16 %v193
  %v1056 = vunpack.c.l.b16 %v194
  %v1057 = vunpack.c.l.b16 %v195
  %v1058 = vunpack.c.l.b16 %v196
  %v1059 = vunpack.c.l.b16 %v197
  %v1060 = vunpack.c.l.b16 %v198
  %v1061 = vunpack.c.l.b16 %v199
  %v1062 = vunpack.c.l.b16 %v200
  %v1063 = vunpack.c.l.b16 %v201
  %v1064 = vunpack.c.l.b16 %v202
  %v1065 = vunpack.c.l.b16 %v203
  %v1066 = vunpack.c.l.b16 %v204
  %v1067 = vunpack.c.l.b16 %v205
  %v1068 = vunpack.c.l.b16 %v206
  %v1069 = vunpack.c.l.b16 %v207
  %v1070 = vunpack.c.l.b16 %v208
  %v1071 = vunpack.c.l.b16 %v209
  %v1072 = vunpack.c.l.b16 %v210
  %v1073 = vunpack.c.l.b16 %v211
  %v1074 = vunpack.c.l.b16 %v212
  %v1075 = vunpack.c.l.b16 %v213
  %v1076 = vunpack.c.l.b16 %v214
  %v1077 = vunpack.c.l.b16 %v215
  %v1078 = vunpack.c.l.b16 %v216
  %v1079 = vunpack.c.l.b16 %v217
  %v1080 = vunpack.c.l.b16 %v218
  %v1081 = vunpack.c.l.b16 %v219
  %v1082 = vunpack.c.l.b16 %v220
  %v1083 = vunpack.c.l.b16 %v221
  %v1084 = vunpack.c.l.b16 %v222
  %v1085 = vunpack.c.l.b16 %v223
  %v1086 = vunpack.c.l.b16 %v224
  %v1087 = vunpack.c.l.b16 %v225
  %v1088 = vunpack.c.l.b16 %v226
  %v1089 = vunpack.c.l.b16 %v227
  %v1090 = vunpack.c.l.b16 %v228
  %v1091 = vunpack.c.l.b16 %v229
  %v1092 = vunpack.c.l.b16 %v230
  %v1093 = vunpack.c.l.b16 %v231
  %v1094 = vunpack.c.l.b16 %v232
  %v1095 = vunpack.c.l.b16 %v233
  %v1096 = vunpack.c.l.b16 %v234
  %v1097 = vunpack.c.l.b16 %v235
  %v1098 = vunpack.c.l.b16 %v236
  %v1099 = vunpack.c.l.b16 %v237
  %v1100 = vunpack.c.l.b16 %v238
  %v1101 = vunpack.c.l.b16 %v239
  %v1102 = vunpack.c.l.b16 %v240
  %v1103 = vunpack.c.l.b16 %v241
  %v1104 = vunpack.c.l.b16 %v242
  %v1105 = vunpack.c.l.b16 %v243
  %v1106 = vunpack.c.l.b16 %v244
  %v1107 = vunpack.c.l.b16 %v245
  %v1108 = vunpack.c.l.b16 %v246
  %v1109 = vunpack.c.l.b16 %v247
  %v1110 = vunpack.c.l.b16 %v248
  %v1111 = vunpack.c.l.b16 %v249
  %v1112 = vunpack.c.l.b16 %v250
  %v1113 = vunpack.c.l.b16 %v251
  %v1114 = vunpack.c.l.b16 %v252
  %v1115 = vpack.c.b16 %v1036, %v1035
  %v1116 = vpack.c.b16 %v1038, %v1037
  %v1117 = vpack.c.b16 %v1040, %v1039
  %v1118 = vpack.c.b16 %v1042, %v1041
  %v1119 = vpack.c.b16 %v1044, %v1043
  %v1120 = vpack.c.b16 %v1046, %v1045
  %v1121 = vpack.c.b16 %v1048, %v1047
  %v1122 = vpack.c.b16 %v1050, %v1049
  %v1123 = vpack.c.b16 %v1052, %v1051
  %v1124 = vpack.c.b16 %v1054, %v1053
  %v1125 = vpack.c.b16 %v1056, %v1055
  %v1126 = vpack.c.b16 %v1058, %v1057
  %v1127 = vpack.c.b16 %v1060, %v1059
  %v1128 = vpack.c.b16 %v1062, %v1061
  %v1129 = vpack.c.b16 %v1064, %v1063
  %v1130 = vpack.c.b16 %v1066, %v1065
  %v1131 = vpack.c.b16 %v1068, %v1067
  %v1132 = vpack.c.b16 %v1070, %v1069
  %v1133 = vpack.c.b16 %v1072, %v1071
  %v1134 = vpack.c.b16 %v1074, %v1073
  %v1135 = vpack.c.b16 %v1076, %v1075
  %v1136 = vpack.c.b16 %v1078, %v1077
  %v1137 = vpack.c.b16 %v1080, %v1079
  %v1138 = vpack.c.b16 %v1082, %v1081
  %v1139 = vpack.c.b16 %v1084, %v1083
  %v1140 = vpack.c.b16 %v1086, %v1085
  %v1141 = vpack.c.b16 %v1088, %v1087
  %v1142 = vpack.c.b16 %v1090, %v1089
  %v1143 = vpack.c.b16 %v1092, %v1091
  %v1144 = vpack.c.b16 %v1094, %v1093
  %v1145 = vpack.c.b16 %v1096, %v1095
  %v1146 = vpack.c.b16 %v1098, %v1097
  %v1147 = vpack.c.b16 %v1100, %v1099
  %v1148 = vpack.c.b16 %v1102, %v1101
  %v1149 = vpack.c.b16 %v1104, %v1103
  %v1150 = vpack.c.b16 %v1106, %v1105
  %v1151 = vpack.c.b16 %v1108, %v1107
  %v1152 = vpack.c.b16 %v1110, %v1109
  %v1153 = vpack.c.b16 %v1112, %v1111
  %v1154 = vpack.c.b16 %v1114, %v1113
  %1195 = vmatpush.bf16.msra.mxu0 %v1122
  %1196 = vmatpush.bf16.msra.mxu0 %v1121
  %1197 = vmatpush.bf16.msra.mxu0 %v1120
  %1198 = vmatpush.bf16.msra.mxu0 %v1119
  %1199 = vmatpush.bf16.msra.mxu0 %v1118
  %1200 = vmatpush.bf16.msra.mxu0 %v1117
  %1201 = vmatpush.bf16.msra.mxu0 %v1116
  %1202 = vmatpush.bf16.msra.mxu0 %v1115
  %1203 = vmatmul.bf16.gmra.mxu0 %v685
  %v1204 = vpop.f32.mrf.mxu0
  %v1205 = vadd.f32 0.0, %v1204
  %v1206 = vpop.f32.mrf.mxu0
  %v1207 = vadd.f32 0.0, %v1206
  %1208 = vmatmul.bf16.gmra.mxu0 %v690
  %v1209 = vpop.f32.mrf.mxu0
  %v1210 = vadd.f32 0.0, %v1209
  %v1211 = vpop.f32.mrf.mxu0
  %v1212 = vadd.f32 0.0, %v1211
  %1213 = vmatmul.bf16.gmra.mxu0 %v695
  %v1214 = vpop.f32.mrf.mxu0
  %v1215 = vadd.f32 0.0, %v1214
  %v1216 = vpop.f32.mrf.mxu0
  %v1217 = vadd.f32 0.0, %v1216
  %1218 = vmatmul.bf16.gmra.mxu0 %v700
  %v1219 = vpop.f32.mrf.mxu0
  %v1220 = vadd.f32 0.0, %v1219
  %v1221 = vpop.f32.mrf.mxu0
  %v1222 = vadd.f32 0.0, %v1221
  %1223 = vmatmul.bf16.gmra.mxu0 %v705
  %v1224 = vpop.f32.mrf.mxu0
  %v1225 = vadd.f32 0.0, %v1224
  %v1226 = vpop.f32.mrf.mxu0
  %v1227 = vadd.f32 0.0, %v1226
  %1228 = vmatmul.bf16.gmra.mxu0 %v710
  %v1229 = vpop.f32.mrf.mxu0
  %v1230 = vadd.f32 0.0, %v1229
  %v1231 = vpop.f32.mrf.mxu0
  %v1232 = vadd.f32 0.0, %v1231
  %1233 = vmatmul.bf16.gmra.mxu0 %v715
  %v1234 = vpop.f32.mrf.mxu0
  %v1235 = vadd.f32 0.0, %v1234
  %v1236 = vpop.f32.mrf.mxu0
  %v1237 = vadd.f32 0.0, %v1236
  %1238 = vmatmul.bf16.gmra.mxu0 %v720
  %v1239 = vpop.f32.mrf.mxu0
  %v1240 = vadd.f32 0.0, %v1239
  %v1241 = vpop.f32.mrf.mxu0
  %v1242 = vadd.f32 0.0, %v1241
  %1243 = vmatmul.bf16.gmra.mxu0 %v725
  %v1244 = vpop.f32.mrf.mxu0
  %v1245 = vadd.f32 0.0, %v1244
  %v1246 = vpop.f32.mrf.mxu0
  %v1247 = vadd.f32 0.0, %v1246
  %1248 = vmatmul.bf16.gmra.mxu0 %v730
  %v1249 = vpop.f32.mrf.mxu0
  %v1250 = vadd.f32 0.0, %v1249
  %v1251 = vpop.f32.mrf.mxu0
  %v1252 = vadd.f32 0.0, %v1251
  %1253 = vmatmul.bf16.gmra.mxu0 %v735
  %v1254 = vpop.f32.mrf.mxu0
  %v1255 = vadd.f32 0.0, %v1254
  %v1256 = vpop.f32.mrf.mxu0
  %v1257 = vadd.f32 0.0, %v1256
  %1258 = vmatmul.bf16.gmra.mxu0 %v740
  %v1259 = vpop.f32.mrf.mxu0
  %v1260 = vadd.f32 0.0, %v1259
  %v1261 = vpop.f32.mrf.mxu0
  %v1262 = vadd.f32 0.0, %v1261
  %1263 = vmatmul.bf16.gmra.mxu0 %v745
  %v1264 = vpop.f32.mrf.mxu0
  %v1265 = vadd.f32 0.0, %v1264
  %v1266 = vpop.f32.mrf.mxu0
  %v1267 = vadd.f32 0.0, %v1266
  %1268 = vmatmul.bf16.gmra.mxu0 %v750
  %v1269 = vpop.f32.mrf.mxu0
  %v1270 = vadd.f32 0.0, %v1269
  %v1271 = vpop.f32.mrf.mxu0
  %v1272 = vadd.f32 0.0, %v1271
  %1273 = vmatmul.bf16.gmra.mxu0 %v755
  %v1274 = vpop.f32.mrf.mxu0
  %v1275 = vadd.f32 0.0, %v1274
  %v1276 = vpop.f32.mrf.mxu0
  %v1277 = vadd.f32 0.0, %v1276
  %1278 = vmatmul.bf16.gmra.mxu0 %v760
  %v1279 = vpop.f32.mrf.mxu0
  %v1280 = vadd.f32 0.0, %v1279
  %v1281 = vpop.f32.mrf.mxu0
  %v1282 = vadd.f32 0.0, %v1281
  %1283 = vmatmul.bf16.gmra.mxu0 %v765
  %v1284 = vpop.f32.mrf.mxu0
  %v1285 = vadd.f32 0.0, %v1284
  %v1286 = vpop.f32.mrf.mxu0
  %v1287 = vadd.f32 0.0, %v1286
  %1288 = vmatmul.bf16.gmra.mxu0 %v770
  %v1289 = vpop.f32.mrf.mxu0
  %v1290 = vadd.f32 0.0, %v1289
  %v1291 = vpop.f32.mrf.mxu0
  %v1292 = vadd.f32 0.0, %v1291
  %1293 = vmatmul.bf16.gmra.mxu0 %v775
  %v1294 = vpop.f32.mrf.mxu0
  %v1295 = vadd.f32 0.0, %v1294
  %v1296 = vpop.f32.mrf.mxu0
  %v1297 = vadd.f32 0.0, %v1296
  %1298 = vmatmul.bf16.gmra.mxu0 %v780
  %v1299 = vpop.f32.mrf.mxu0
  %v1300 = vadd.f32 0.0, %v1299
  %v1301 = vpop.f32.mrf.mxu0
  %v1302 = vadd.f32 0.0, %v1301
  %1303 = vmatmul.bf16.gmra.mxu0 %v785
  %v1304 = vpop.f32.mrf.mxu0
  %v1305 = vadd.f32 0.0, %v1304
  %v1306 = vpop.f32.mrf.mxu0
  %v1307 = vadd.f32 0.0, %v1306
  %1308 = vmatmul.bf16.gmra.mxu0 %v790
  %v1309 = vpop.f32.mrf.mxu0
  %v1310 = vadd.f32 0.0, %v1309
  %v1311 = vpop.f32.mrf.mxu0
  %v1312 = vadd.f32 0.0, %v1311
  %1313 = vmatmul.bf16.gmra.mxu0 %v795
  %v1314 = vpop.f32.mrf.mxu0
  %v1315 = vadd.f32 0.0, %v1314
  %v1316 = vpop.f32.mrf.mxu0
  %v1317 = vadd.f32 0.0, %v1316
  %1318 = vmatmul.bf16.gmra.mxu0 %v800
  %v1319 = vpop.f32.mrf.mxu0
  %v1320 = vadd.f32 0.0, %v1319
  %v1321 = vpop.f32.mrf.mxu0
  %v1322 = vadd.f32 0.0, %v1321
  %1323 = vmatmul.bf16.gmra.mxu0 %v805
  %v1324 = vpop.f32.mrf.mxu0
  %v1325 = vadd.f32 0.0, %v1324
  %v1326 = vpop.f32.mrf.mxu0
  %v1327 = vadd.f32 0.0, %v1326
  %1328 = vmatmul.bf16.gmra.mxu0 %v810
  %v1329 = vpop.f32.mrf.mxu0
  %v1330 = vadd.f32 0.0, %v1329
  %v1331 = vpop.f32.mrf.mxu0
  %v1332 = vadd.f32 0.0, %v1331
  %1333 = vmatmul.bf16.gmra.mxu0 %v815
  %v1334 = vpop.f32.mrf.mxu0
  %v1335 = vadd.f32 0.0, %v1334
  %v1336 = vpop.f32.mrf.mxu0
  %v1337 = vadd.f32 0.0, %v1336
  %1338 = vdwg.mxu0
  %1339 = vmatpush.bf16.msra.mxu0 %v1130
  %1340 = vmatpush.bf16.msra.mxu0 %v1129
  %1341 = vmatpush.bf16.msra.mxu0 %v1128
  %1342 = vmatpush.bf16.msra.mxu0 %v1127
  %1343 = vmatpush.bf16.msra.mxu0 %v1126
  %1344 = vmatpush.bf16.msra.mxu0 %v1125
  %1345 = vmatpush.bf16.msra.mxu0 %v1124
  %1346 = vmatpush.bf16.msra.mxu0 %v1123
  %1347 = vmatmul.bf16.gmra.mxu0 %v686
  %v1348 = vpop.f32.mrf.mxu0
  %v1349 = vadd.f32 %v1205, %v1348
  %v1350 = vpop.f32.mrf.mxu0
  %v1351 = vadd.f32 %v1207, %v1350
  %1352 = vmatmul.bf16.gmra.mxu0 %v691
  %v1353 = vpop.f32.mrf.mxu0
  %v1354 = vadd.f32 %v1210, %v1353
  %v1355 = vpop.f32.mrf.mxu0
  %v1356 = vadd.f32 %v1212, %v1355
  %1357 = vmatmul.bf16.gmra.mxu0 %v696
  %v1358 = vpop.f32.mrf.mxu0
  %v1359 = vadd.f32 %v1215, %v1358
  %v1360 = vpop.f32.mrf.mxu0
  %v1361 = vadd.f32 %v1217, %v1360
  %1362 = vmatmul.bf16.gmra.mxu0 %v701
  %v1363 = vpop.f32.mrf.mxu0
  %v1364 = vadd.f32 %v1220, %v1363
  %v1365 = vpop.f32.mrf.mxu0
  %v1366 = vadd.f32 %v1222, %v1365
  %1367 = vmatmul.bf16.gmra.mxu0 %v706
  %v1368 = vpop.f32.mrf.mxu0
  %v1369 = vadd.f32 %v1225, %v1368
  %v1370 = vpop.f32.mrf.mxu0
  %v1371 = vadd.f32 %v1227, %v1370
  %1372 = vmatmul.bf16.gmra.mxu0 %v711
  %v1373 = vpop.f32.mrf.mxu0
  %v1374 = vadd.f32 %v1230, %v1373
  %v1375 = vpop.f32.mrf.mxu0
  %v1376 = vadd.f32 %v1232, %v1375
  %1377 = vmatmul.bf16.gmra.mxu0 %v716
  %v1378 = vpop.f32.mrf.mxu0
  %v1379 = vadd.f32 %v1235, %v1378
  %v1380 = vpop.f32.mrf.mxu0
  %v1381 = vadd.f32 %v1237, %v1380
  %1382 = vmatmul.bf16.gmra.mxu0 %v721
  %v1383 = vpop.f32.mrf.mxu0
  %v1384 = vadd.f32 %v1240, %v1383
  %v1385 = vpop.f32.mrf.mxu0
  %v1386 = vadd.f32 %v1242, %v1385
  %1387 = vmatmul.bf16.gmra.mxu0 %v726
  %v1388 = vpop.f32.mrf.mxu0
  %v1389 = vadd.f32 %v1245, %v1388
  %v1390 = vpop.f32.mrf.mxu0
  %v1391 = vadd.f32 %v1247, %v1390
  %1392 = vmatmul.bf16.gmra.mxu0 %v731
  %v1393 = vpop.f32.mrf.mxu0
  %v1394 = vadd.f32 %v1250, %v1393
  %v1395 = vpop.f32.mrf.mxu0
  %v1396 = vadd.f32 %v1252, %v1395
  %1397 = vmatmul.bf16.gmra.mxu0 %v736
  %v1398 = vpop.f32.mrf.mxu0
  %v1399 = vadd.f32 %v1255, %v1398
  %v1400 = vpop.f32.mrf.mxu0
  %v1401 = vadd.f32 %v1257, %v1400
  %1402 = vmatmul.bf16.gmra.mxu0 %v741
  %v1403 = vpop.f32.mrf.mxu0
  %v1404 = vadd.f32 %v1260, %v1403
  %v1405 = vpop.f32.mrf.mxu0
  %v1406 = vadd.f32 %v1262, %v1405
  %1407 = vmatmul.bf16.gmra.mxu0 %v746
  %v1408 = vpop.f32.mrf.mxu0
  %v1409 = vadd.f32 %v1265, %v1408
  %v1410 = vpop.f32.mrf.mxu0
  %v1411 = vadd.f32 %v1267, %v1410
  %1412 = vmatmul.bf16.gmra.mxu0 %v751
  %v1413 = vpop.f32.mrf.mxu0
  %v1414 = vadd.f32 %v1270, %v1413
  %v1415 = vpop.f32.mrf.mxu0
  %v1416 = vadd.f32 %v1272, %v1415
  %1417 = vmatmul.bf16.gmra.mxu0 %v756
  %v1418 = vpop.f32.mrf.mxu0
  %v1419 = vadd.f32 %v1275, %v1418
  %v1420 = vpop.f32.mrf.mxu0
  %v1421 = vadd.f32 %v1277, %v1420
  %1422 = vmatmul.bf16.gmra.mxu0 %v761
  %v1423 = vpop.f32.mrf.mxu0
  %v1424 = vadd.f32 %v1280, %v1423
  %v1425 = vpop.f32.mrf.mxu0
  %v1426 = vadd.f32 %v1282, %v1425
  %1427 = vmatmul.bf16.gmra.mxu0 %v766
  %v1428 = vpop.f32.mrf.mxu0
  %v1429 = vadd.f32 %v1285, %v1428
  %v1430 = vpop.f32.mrf.mxu0
  %v1431 = vadd.f32 %v1287, %v1430
  %1432 = vmatmul.bf16.gmra.mxu0 %v771
  %v1433 = vpop.f32.mrf.mxu0
  %v1434 = vadd.f32 %v1290, %v1433
  %v1435 = vpop.f32.mrf.mxu0
  %v1436 = vadd.f32 %v1292, %v1435
  %1437 = vmatmul.bf16.gmra.mxu0 %v776
  %v1438 = vpop.f32.mrf.mxu0
  %v1439 = vadd.f32 %v1295, %v1438
  %v1440 = vpop.f32.mrf.mxu0
  %v1441 = vadd.f32 %v1297, %v1440
  %1442 = vmatmul.bf16.gmra.mxu0 %v781
  %v1443 = vpop.f32.mrf.mxu0
  %v1444 = vadd.f32 %v1300, %v1443
  %v1445 = vpop.f32.mrf.mxu0
  %v1446 = vadd.f32 %v1302, %v1445
  %1447 = vmatmul.bf16.gmra.mxu0 %v786
  %v1448 = vpop.f32.mrf.mxu0
  %v1449 = vadd.f32 %v1305, %v1448
  %v1450 = vpop.f32.mrf.mxu0
  %v1451 = vadd.f32 %v1307, %v1450
  %1452 = vmatmul.bf16.gmra.mxu0 %v791
  %v1453 = vpop.f32.mrf.mxu0
  %v1454 = vadd.f32 %v1310, %v1453
  %v1455 = vpop.f32.mrf.mxu0
  %v1456 = vadd.f32 %v1312, %v1455
  %1457 = vmatmul.bf16.gmra.mxu0 %v796
  %v1458 = vpop.f32.mrf.mxu0
  %v1459 = vadd.f32 %v1315, %v1458
  %v1460 = vpop.f32.mrf.mxu0
  %v1461 = vadd.f32 %v1317, %v1460
  %1462 = vmatmul.bf16.gmra.mxu0 %v801
  %v1463 = vpop.f32.mrf.mxu0
  %v1464 = vadd.f32 %v1320, %v1463
  %v1465 = vpop.f32.mrf.mxu0
  %v1466 = vadd.f32 %v1322, %v1465
  %1467 = vmatmul.bf16.gmra.mxu0 %v806
  %v1468 = vpop.f32.mrf.mxu0
  %v1469 = vadd.f32 %v1325, %v1468
  %v1470 = vpop.f32.mrf.mxu0
  %v1471 = vadd.f32 %v1327, %v1470
  %1472 = vmatmul.bf16.gmra.mxu0 %v811
  %v1473 = vpop.f32.mrf.mxu0
  %v1474 = vadd.f32 %v1330, %v1473
  %v1475 = vpop.f32.mrf.mxu0
  %v1476 = vadd.f32 %v1332, %v1475
  %1477 = vmatmul.bf16.gmra.mxu0 %v816
  %v1478 = vpop.f32.mrf.mxu0
  %v1479 = vadd.f32 %v1335, %v1478
  %v1480 = vpop.f32.mrf.mxu0
  %v1481 = vadd.f32 %v1337, %v1480
  %1482 = vdwg.mxu0
  %1483 = vmatpush.bf16.msra.mxu0 %v1138
  %1484 = vmatpush.bf16.msra.mxu0 %v1137
  %1485 = vmatpush.bf16.msra.mxu0 %v1136
  %1486 = vmatpush.bf16.msra.mxu0 %v1135
  %1487 = vmatpush.bf16.msra.mxu0 %v1134
  %1488 = vmatpush.bf16.msra.mxu0 %v1133
  %1489 = vmatpush.bf16.msra.mxu0 %v1132
  %1490 = vmatpush.bf16.msra.mxu0 %v1131
  %1491 = vmatmul.bf16.gmra.mxu0 %v687
  %v1492 = vpop.f32.mrf.mxu0
  %v1493 = vadd.f32 %v1349, %v1492
  %v1494 = vpop.f32.mrf.mxu0
  %v1495 = vadd.f32 %v1351, %v1494
  %1496 = vmatmul.bf16.gmra.mxu0 %v692
  %v1497 = vpop.f32.mrf.mxu0
  %v1498 = vadd.f32 %v1354, %v1497
  %v1499 = vpop.f32.mrf.mxu0
  %v1500 = vadd.f32 %v1356, %v1499
  %1501 = vmatmul.bf16.gmra.mxu0 %v697
  %v1502 = vpop.f32.mrf.mxu0
  %v1503 = vadd.f32 %v1359, %v1502
  %v1504 = vpop.f32.mrf.mxu0
  %v1505 = vadd.f32 %v1361, %v1504
  %1506 = vmatmul.bf16.gmra.mxu0 %v702
  %v1507 = vpop.f32.mrf.mxu0
  %v1508 = vadd.f32 %v1364, %v1507
  %v1509 = vpop.f32.mrf.mxu0
  %v1510 = vadd.f32 %v1366, %v1509
  %1511 = vmatmul.bf16.gmra.mxu0 %v707
  %v1512 = vpop.f32.mrf.mxu0
  %v1513 = vadd.f32 %v1369, %v1512
  %v1514 = vpop.f32.mrf.mxu0
  %v1515 = vadd.f32 %v1371, %v1514
  %1516 = vmatmul.bf16.gmra.mxu0 %v712
  %v1517 = vpop.f32.mrf.mxu0
  %v1518 = vadd.f32 %v1374, %v1517
  %v1519 = vpop.f32.mrf.mxu0
  %v1520 = vadd.f32 %v1376, %v1519
  %1521 = vmatmul.bf16.gmra.mxu0 %v717
  %v1522 = vpop.f32.mrf.mxu0
  %v1523 = vadd.f32 %v1379, %v1522
  %v1524 = vpop.f32.mrf.mxu0
  %v1525 = vadd.f32 %v1381, %v1524
  %1526 = vmatmul.bf16.gmra.mxu0 %v722
  %v1527 = vpop.f32.mrf.mxu0
  %v1528 = vadd.f32 %v1384, %v1527
  %v1529 = vpop.f32.mrf.mxu0
  %v1530 = vadd.f32 %v1386, %v1529
  %1531 = vmatmul.bf16.gmra.mxu0 %v727
  %v1532 = vpop.f32.mrf.mxu0
  %v1533 = vadd.f32 %v1389, %v1532
  %v1534 = vpop.f32.mrf.mxu0
  %v1535 = vadd.f32 %v1391, %v1534
  %1536 = vmatmul.bf16.gmra.mxu0 %v732
  %v1537 = vpop.f32.mrf.mxu0
  %v1538 = vadd.f32 %v1394, %v1537
  %v1539 = vpop.f32.mrf.mxu0
  %v1540 = vadd.f32 %v1396, %v1539
  %1541 = vmatmul.bf16.gmra.mxu0 %v737
  %v1542 = vpop.f32.mrf.mxu0
  %v1543 = vadd.f32 %v1399, %v1542
  %v1544 = vpop.f32.mrf.mxu0
  %v1545 = vadd.f32 %v1401, %v1544
  %1546 = vmatmul.bf16.gmra.mxu0 %v742
  %v1547 = vpop.f32.mrf.mxu0
  %v1548 = vadd.f32 %v1404, %v1547
  %v1549 = vpop.f32.mrf.mxu0
  %v1550 = vadd.f32 %v1406, %v1549
  %1551 = vmatmul.bf16.gmra.mxu0 %v747
  %v1552 = vpop.f32.mrf.mxu0
  %v1553 = vadd.f32 %v1409, %v1552
  %v1554 = vpop.f32.mrf.mxu0
  %v1555 = vadd.f32 %v1411, %v1554
  %1556 = vmatmul.bf16.gmra.mxu0 %v752
  %v1557 = vpop.f32.mrf.mxu0
  %v1558 = vadd.f32 %v1414, %v1557
  %v1559 = vpop.f32.mrf.mxu0
  %v1560 = vadd.f32 %v1416, %v1559
  %1561 = vmatmul.bf16.gmra.mxu0 %v757
  %v1562 = vpop.f32.mrf.mxu0
  %v1563 = vadd.f32 %v1419, %v1562
  %v1564 = vpop.f32.mrf.mxu0
  %v1565 = vadd.f32 %v1421, %v1564
  %1566 = vmatmul.bf16.gmra.mxu0 %v762
  %v1567 = vpop.f32.mrf.mxu0
  %v1568 = vadd.f32 %v1424, %v1567
  %v1569 = vpop.f32.mrf.mxu0
  %v1570 = vadd.f32 %v1426, %v1569
  %1571 = vmatmul.bf16.gmra.mxu0 %v767
  %v1572 = vpop.f32.mrf.mxu0
  %v1573 = vadd.f32 %v1429, %v1572
  %v1574 = vpop.f32.mrf.mxu0
  %v1575 = vadd.f32 %v1431, %v1574
  %1576 = vmatmul.bf16.gmra.mxu0 %v772
  %v1577 = vpop.f32.mrf.mxu0
  %v1578 = vadd.f32 %v1434, %v1577
  %v1579 = vpop.f32.mrf.mxu0
  %v1580 = vadd.f32 %v1436, %v1579
  %1581 = vmatmul.bf16.gmra.mxu0 %v777
  %v1582 = vpop.f32.mrf.mxu0
  %v1583 = vadd.f32 %v1439, %v1582
  %v1584 = vpop.f32.mrf.mxu0
  %v1585 = vadd.f32 %v1441, %v1584
  %1586 = vmatmul.bf16.gmra.mxu0 %v782
  %v1587 = vpop.f32.mrf.mxu0
  %v1588 = vadd.f32 %v1444, %v1587
  %v1589 = vpop.f32.mrf.mxu0
  %v1590 = vadd.f32 %v1446, %v1589
  %1591 = vmatmul.bf16.gmra.mxu0 %v787
  %v1592 = vpop.f32.mrf.mxu0
  %v1593 = vadd.f32 %v1449, %v1592
  %v1594 = vpop.f32.mrf.mxu0
  %v1595 = vadd.f32 %v1451, %v1594
  %1596 = vmatmul.bf16.gmra.mxu0 %v792
  %v1597 = vpop.f32.mrf.mxu0
  %v1598 = vadd.f32 %v1454, %v1597
  %v1599 = vpop.f32.mrf.mxu0
  %v1600 = vadd.f32 %v1456, %v1599
  %1601 = vmatmul.bf16.gmra.mxu0 %v797
  %v1602 = vpop.f32.mrf.mxu0
  %v1603 = vadd.f32 %v1459, %v1602
  %v1604 = vpop.f32.mrf.mxu0
  %v1605 = vadd.f32 %v1461, %v1604
  %1606 = vmatmul.bf16.gmra.mxu0 %v802
  %v1607 = vpop.f32.mrf.mxu0
  %v1608 = vadd.f32 %v1464, %v1607
  %v1609 = vpop.f32.mrf.mxu0
  %v1610 = vadd.f32 %v1466, %v1609
  %1611 = vmatmul.bf16.gmra.mxu0 %v807
  %v1612 = vpop.f32.mrf.mxu0
  %v1613 = vadd.f32 %v1469, %v1612
  %v1614 = vpop.f32.mrf.mxu0
  %v1615 = vadd.f32 %v1471, %v1614
  %1616 = vmatmul.bf16.gmra.mxu0 %v812
  %v1617 = vpop.f32.mrf.mxu0
  %v1618 = vadd.f32 %v1474, %v1617
  %v1619 = vpop.f32.mrf.mxu0
  %v1620 = vadd.f32 %v1476, %v1619
  %1621 = vmatmul.bf16.gmra.mxu0 %v817
  %v1622 = vpop.f32.mrf.mxu0
  %v1623 = vadd.f32 %v1479, %v1622
  %v1624 = vpop.f32.mrf.mxu0
  %v1625 = vadd.f32 %v1481, %v1624
  %1626 = vdwg.mxu0
  %1627 = vmatpush.bf16.msra.mxu0 %v1146
  %1628 = vmatpush.bf16.msra.mxu0 %v1145
  %1629 = vmatpush.bf16.msra.mxu0 %v1144
  %1630 = vmatpush.bf16.msra.mxu0 %v1143
  %1631 = vmatpush.bf16.msra.mxu0 %v1142
  %1632 = vmatpush.bf16.msra.mxu0 %v1141
  %1633 = vmatpush.bf16.msra.mxu0 %v1140
  %1634 = vmatpush.bf16.msra.mxu0 %v1139
  %1635 = vmatmul.bf16.gmra.mxu0 %v688
  %v1636 = vpop.f32.mrf.mxu0
  %v1637 = vadd.f32 %v1493, %v1636
  %v1638 = vpop.f32.mrf.mxu0
  %v1639 = vadd.f32 %v1495, %v1638
  %1640 = vmatmul.bf16.gmra.mxu0 %v693
  %v1641 = vpop.f32.mrf.mxu0
  %v1642 = vadd.f32 %v1498, %v1641
  %v1643 = vpop.f32.mrf.mxu0
  %v1644 = vadd.f32 %v1500, %v1643
  %1645 = vmatmul.bf16.gmra.mxu0 %v698
  %v1646 = vpop.f32.mrf.mxu0
  %v1647 = vadd.f32 %v1503, %v1646
  %v1648 = vpop.f32.mrf.mxu0
  %v1649 = vadd.f32 %v1505, %v1648
  %1650 = vmatmul.bf16.gmra.mxu0 %v703
  %v1651 = vpop.f32.mrf.mxu0
  %v1652 = vadd.f32 %v1508, %v1651
  %v1653 = vpop.f32.mrf.mxu0
  %v1654 = vadd.f32 %v1510, %v1653
  %1655 = vmatmul.bf16.gmra.mxu0 %v708
  %v1656 = vpop.f32.mrf.mxu0
  %v1657 = vadd.f32 %v1513, %v1656
  %v1658 = vpop.f32.mrf.mxu0
  %v1659 = vadd.f32 %v1515, %v1658
  %1660 = vmatmul.bf16.gmra.mxu0 %v713
  %v1661 = vpop.f32.mrf.mxu0
  %v1662 = vadd.f32 %v1518, %v1661
  %v1663 = vpop.f32.mrf.mxu0
  %v1664 = vadd.f32 %v1520, %v1663
  %1665 = vmatmul.bf16.gmra.mxu0 %v718
  %v1666 = vpop.f32.mrf.mxu0
  %v1667 = vadd.f32 %v1523, %v1666
  %v1668 = vpop.f32.mrf.mxu0
  %v1669 = vadd.f32 %v1525, %v1668
  %1670 = vmatmul.bf16.gmra.mxu0 %v723
  %v1671 = vpop.f32.mrf.mxu0
  %v1672 = vadd.f32 %v1528, %v1671
  %v1673 = vpop.f32.mrf.mxu0
  %v1674 = vadd.f32 %v1530, %v1673
  %1675 = vmatmul.bf16.gmra.mxu0 %v728
  %v1676 = vpop.f32.mrf.mxu0
  %v1677 = vadd.f32 %v1533, %v1676
  %v1678 = vpop.f32.mrf.mxu0
  %v1679 = vadd.f32 %v1535, %v1678
  %1680 = vmatmul.bf16.gmra.mxu0 %v733
  %v1681 = vpop.f32.mrf.mxu0
  %v1682 = vadd.f32 %v1538, %v1681
  %v1683 = vpop.f32.mrf.mxu0
  %v1684 = vadd.f32 %v1540, %v1683
  %1685 = vmatmul.bf16.gmra.mxu0 %v738
  %v1686 = vpop.f32.mrf.mxu0
  %v1687 = vadd.f32 %v1543, %v1686
  %v1688 = vpop.f32.mrf.mxu0
  %v1689 = vadd.f32 %v1545, %v1688
  %1690 = vmatmul.bf16.gmra.mxu0 %v743
  %v1691 = vpop.f32.mrf.mxu0
  %v1692 = vadd.f32 %v1548, %v1691
  %v1693 = vpop.f32.mrf.mxu0
  %v1694 = vadd.f32 %v1550, %v1693
  %1695 = vmatmul.bf16.gmra.mxu0 %v748
  %v1696 = vpop.f32.mrf.mxu0
  %v1697 = vadd.f32 %v1553, %v1696
  %v1698 = vpop.f32.mrf.mxu0
  %v1699 = vadd.f32 %v1555, %v1698
  %1700 = vmatmul.bf16.gmra.mxu0 %v753
  %v1701 = vpop.f32.mrf.mxu0
  %v1702 = vadd.f32 %v1558, %v1701
  %v1703 = vpop.f32.mrf.mxu0
  %v1704 = vadd.f32 %v1560, %v1703
  %1705 = vmatmul.bf16.gmra.mxu0 %v758
  %v1706 = vpop.f32.mrf.mxu0
  %v1707 = vadd.f32 %v1563, %v1706
  %v1708 = vpop.f32.mrf.mxu0
  %v1709 = vadd.f32 %v1565, %v1708
  %1710 = vmatmul.bf16.gmra.mxu0 %v763
  %v1711 = vpop.f32.mrf.mxu0
  %v1712 = vadd.f32 %v1568, %v1711
  %v1713 = vpop.f32.mrf.mxu0
  %v1714 = vadd.f32 %v1570, %v1713
  %1715 = vmatmul.bf16.gmra.mxu0 %v768
  %v1716 = vpop.f32.mrf.mxu0
  %v1717 = vadd.f32 %v1573, %v1716
  %v1718 = vpop.f32.mrf.mxu0
  %v1719 = vadd.f32 %v1575, %v1718
  %1720 = vmatmul.bf16.gmra.mxu0 %v773
  %v1721 = vpop.f32.mrf.mxu0
  %v1722 = vadd.f32 %v1578, %v1721
  %v1723 = vpop.f32.mrf.mxu0
  %v1724 = vadd.f32 %v1580, %v1723
  %1725 = vmatmul.bf16.gmra.mxu0 %v778
  %v1726 = vpop.f32.mrf.mxu0
  %v1727 = vadd.f32 %v1583, %v1726
  %v1728 = vpop.f32.mrf.mxu0
  %v1729 = vadd.f32 %v1585, %v1728
  %1730 = vmatmul.bf16.gmra.mxu0 %v783
  %v1731 = vpop.f32.mrf.mxu0
  %v1732 = vadd.f32 %v1588, %v1731
  %v1733 = vpop.f32.mrf.mxu0
  %v1734 = vadd.f32 %v1590, %v1733
  %1735 = vmatmul.bf16.gmra.mxu0 %v788
  %v1736 = vpop.f32.mrf.mxu0
  %v1737 = vadd.f32 %v1593, %v1736
  %v1738 = vpop.f32.mrf.mxu0
  %v1739 = vadd.f32 %v1595, %v1738
  %1740 = vmatmul.bf16.gmra.mxu0 %v793
  %v1741 = vpop.f32.mrf.mxu0
  %v1742 = vadd.f32 %v1598, %v1741
  %v1743 = vpop.f32.mrf.mxu0
  %v1744 = vadd.f32 %v1600, %v1743
  %1745 = vmatmul.bf16.gmra.mxu0 %v798
  %v1746 = vpop.f32.mrf.mxu0
  %v1747 = vadd.f32 %v1603, %v1746
  %v1748 = vpop.f32.mrf.mxu0
  %v1749 = vadd.f32 %v1605, %v1748
  %1750 = vmatmul.bf16.gmra.mxu0 %v803
  %v1751 = vpop.f32.mrf.mxu0
  %v1752 = vadd.f32 %v1608, %v1751
  %v1753 = vpop.f32.mrf.mxu0
  %v1754 = vadd.f32 %v1610, %v1753
  %1755 = vmatmul.bf16.gmra.mxu0 %v808
  %v1756 = vpop.f32.mrf.mxu0
  %v1757 = vadd.f32 %v1613, %v1756
  %v1758 = vpop.f32.mrf.mxu0
  %v1759 = vadd.f32 %v1615, %v1758
  %1760 = vmatmul.bf16.gmra.mxu0 %v813
  %v1761 = vpop.f32.mrf.mxu0
  %v1762 = vadd.f32 %v1618, %v1761
  %v1763 = vpop.f32.mrf.mxu0
  %v1764 = vadd.f32 %v1620, %v1763
  %1765 = vmatmul.bf16.gmra.mxu0 %v818
  %v1766 = vpop.f32.mrf.mxu0
  %v1767 = vadd.f32 %v1623, %v1766
  %v1768 = vpop.f32.mrf.mxu0
  %v1769 = vadd.f32 %v1625, %v1768
  %1770 = vdwg.mxu0
  %1771 = vmatpush.bf16.msra.mxu0 %v1154
  %1772 = vmatpush.bf16.msra.mxu0 %v1153
  %1773 = vmatpush.bf16.msra.mxu0 %v1152
  %1774 = vmatpush.bf16.msra.mxu0 %v1151
  %1775 = vmatpush.bf16.msra.mxu0 %v1150
  %1776 = vmatpush.bf16.msra.mxu0 %v1149
  %1777 = vmatpush.bf16.msra.mxu0 %v1148
  %1778 = vmatpush.bf16.msra.mxu0 %v1147
  %1779 = vmatmul.bf16.gmra.mxu0 %v689
  %v1780 = vpop.f32.mrf.mxu0
  %v1781 = vadd.f32 %v1637, %v1780
  %v1782 = vpop.f32.mrf.mxu0
  %v1783 = vadd.f32 %v1639, %v1782
  %1784 = vmatmul.bf16.gmra.mxu0 %v694
  %v1785 = vpop.f32.mrf.mxu0
  %v1786 = vadd.f32 %v1642, %v1785
  %v1787 = vpop.f32.mrf.mxu0
  %v1788 = vadd.f32 %v1644, %v1787
  %1789 = vmatmul.bf16.gmra.mxu0 %v699
  %v1790 = vpop.f32.mrf.mxu0
  %v1791 = vadd.f32 %v1647, %v1790
  %v1792 = vpop.f32.mrf.mxu0
  %v1793 = vadd.f32 %v1649, %v1792
  %1794 = vmatmul.bf16.gmra.mxu0 %v704
  %v1795 = vpop.f32.mrf.mxu0
  %v1796 = vadd.f32 %v1652, %v1795
  %v1797 = vpop.f32.mrf.mxu0
  %v1798 = vadd.f32 %v1654, %v1797
  %1799 = vmatmul.bf16.gmra.mxu0 %v709
  %v1800 = vpop.f32.mrf.mxu0
  %v1801 = vadd.f32 %v1657, %v1800
  %v1802 = vpop.f32.mrf.mxu0
  %v1803 = vadd.f32 %v1659, %v1802
  %1804 = vmatmul.bf16.gmra.mxu0 %v714
  %v1805 = vpop.f32.mrf.mxu0
  %v1806 = vadd.f32 %v1662, %v1805
  %v1807 = vpop.f32.mrf.mxu0
  %v1808 = vadd.f32 %v1664, %v1807
  %1809 = vmatmul.bf16.gmra.mxu0 %v719
  %v1810 = vpop.f32.mrf.mxu0
  %v1811 = vadd.f32 %v1667, %v1810
  %v1812 = vpop.f32.mrf.mxu0
  %v1813 = vadd.f32 %v1669, %v1812
  %1814 = vmatmul.bf16.gmra.mxu0 %v724
  %v1815 = vpop.f32.mrf.mxu0
  %v1816 = vadd.f32 %v1672, %v1815
  %v1817 = vpop.f32.mrf.mxu0
  %v1818 = vadd.f32 %v1674, %v1817
  %1819 = vmatmul.bf16.gmra.mxu0 %v729
  %v1820 = vpop.f32.mrf.mxu0
  %v1821 = vadd.f32 %v1677, %v1820
  %v1822 = vpop.f32.mrf.mxu0
  %v1823 = vadd.f32 %v1679, %v1822
  %1824 = vmatmul.bf16.gmra.mxu0 %v734
  %v1825 = vpop.f32.mrf.mxu0
  %v1826 = vadd.f32 %v1682, %v1825
  %v1827 = vpop.f32.mrf.mxu0
  %v1828 = vadd.f32 %v1684, %v1827
  %1829 = vmatmul.bf16.gmra.mxu0 %v739
  %v1830 = vpop.f32.mrf.mxu0
  %v1831 = vadd.f32 %v1687, %v1830
  %v1832 = vpop.f32.mrf.mxu0
  %v1833 = vadd.f32 %v1689, %v1832
  %1834 = vmatmul.bf16.gmra.mxu0 %v744
  %v1835 = vpop.f32.mrf.mxu0
  %v1836 = vadd.f32 %v1692, %v1835
  %v1837 = vpop.f32.mrf.mxu0
  %v1838 = vadd.f32 %v1694, %v1837
  %1839 = vmatmul.bf16.gmra.mxu0 %v749
  %v1840 = vpop.f32.mrf.mxu0
  %v1841 = vadd.f32 %v1697, %v1840
  %v1842 = vpop.f32.mrf.mxu0
  %v1843 = vadd.f32 %v1699, %v1842
  %1844 = vmatmul.bf16.gmra.mxu0 %v754
  %v1845 = vpop.f32.mrf.mxu0
  %v1846 = vadd.f32 %v1702, %v1845
  %v1847 = vpop.f32.mrf.mxu0
  %v1848 = vadd.f32 %v1704, %v1847
  %1849 = vmatmul.bf16.gmra.mxu0 %v759
  %v1850 = vpop.f32.mrf.mxu0
  %v1851 = vadd.f32 %v1707, %v1850
  %v1852 = vpop.f32.mrf.mxu0
  %v1853 = vadd.f32 %v1709, %v1852
  %1854 = vmatmul.bf16.gmra.mxu0 %v764
  %v1855 = vpop.f32.mrf.mxu0
  %v1856 = vadd.f32 %v1712, %v1855
  %v1857 = vpop.f32.mrf.mxu0
  %v1858 = vadd.f32 %v1714, %v1857
  %1859 = vmatmul.bf16.gmra.mxu0 %v769
  %v1860 = vpop.f32.mrf.mxu0
  %v1861 = vadd.f32 %v1717, %v1860
  %v1862 = vpop.f32.mrf.mxu0
  %v1863 = vadd.f32 %v1719, %v1862
  %1864 = vmatmul.bf16.gmra.mxu0 %v774
  %v1865 = vpop.f32.mrf.mxu0
  %v1866 = vadd.f32 %v1722, %v1865
  %v1867 = vpop.f32.mrf.mxu0
  %v1868 = vadd.f32 %v1724, %v1867
  %1869 = vmatmul.bf16.gmra.mxu0 %v779
  %v1870 = vpop.f32.mrf.mxu0
  %v1871 = vadd.f32 %v1727, %v1870
  %v1872 = vpop.f32.mrf.mxu0
  %v1873 = vadd.f32 %v1729, %v1872
  %1874 = vmatmul.bf16.gmra.mxu0 %v784
  %v1875 = vpop.f32.mrf.mxu0
  %v1876 = vadd.f32 %v1732, %v1875
  %v1877 = vpop.f32.mrf.mxu0
  %v1878 = vadd.f32 %v1734, %v1877
  %1879 = vmatmul.bf16.gmra.mxu0 %v789
  %v1880 = vpop.f32.mrf.mxu0
  %v1881 = vadd.f32 %v1737, %v1880
  %v1882 = vpop.f32.mrf.mxu0
  %v1883 = vadd.f32 %v1739, %v1882
  %1884 = vmatmul.bf16.gmra.mxu0 %v794
  %v1885 = vpop.f32.mrf.mxu0
  %v1886 = vadd.f32 %v1742, %v1885
  %v1887 = vpop.f32.mrf.mxu0
  %v1888 = vadd.f32 %v1744, %v1887
  %1889 = vmatmul.bf16.gmra.mxu0 %v799
  %v1890 = vpop.f32.mrf.mxu0
  %v1891 = vadd.f32 %v1747, %v1890
  %v1892 = vpop.f32.mrf.mxu0
  %v1893 = vadd.f32 %v1749, %v1892
  %1894 = vmatmul.bf16.gmra.mxu0 %v804
  %v1895 = vpop.f32.mrf.mxu0
  %v1896 = vadd.f32 %v1752, %v1895
  %v1897 = vpop.f32.mrf.mxu0
  %v1898 = vadd.f32 %v1754, %v1897
  %1899 = vmatmul.bf16.gmra.mxu0 %v809
  %v1900 = vpop.f32.mrf.mxu0
  %v1901 = vadd.f32 %v1757, %v1900
  %v1902 = vpop.f32.mrf.mxu0
  %v1903 = vadd.f32 %v1759, %v1902
  %1904 = vmatmul.bf16.gmra.mxu0 %v814
  %v1905 = vpop.f32.mrf.mxu0
  %v1906 = vadd.f32 %v1762, %v1905
  %v1907 = vpop.f32.mrf.mxu0
  %v1908 = vadd.f32 %v1764, %v1907
  %1909 = vmatmul.bf16.gmra.mxu0 %v819
  %v1910 = vpop.f32.mrf.mxu0
  %v1911 = vadd.f32 %v1767, %v1910
  %v1912 = vpop.f32.mrf.mxu0
  %v1913 = vadd.f32 %v1769, %v1912
  %1914 = vdwg.mxu0
  %v1915 = vtanh.pop %v1781
  %v1916 = vtanh.pop %v1783
  %v1917 = vtanh.pop %v1786
  %v1918 = vtanh.pop %v1788
  %v1919 = vtanh.pop %v1791
  %v1920 = vtanh.pop %v1793
  %v1921 = vtanh.pop %v1796
  %v1922 = vtanh.pop %v1798
  %v1923 = vtanh.pop %v1801
  %v1924 = vtanh.pop %v1803
  %v1925 = vtanh.pop %v1806
  %v1926 = vtanh.pop %v1808
  %v1927 = vtanh.pop %v1811
  %v1928 = vtanh.pop %v1813
  %v1929 = vtanh.pop %v1816
  %v1930 = vtanh.pop %v1818
  %v1931 = vtanh.pop %v1821
  %v1932 = vtanh.pop %v1823
  %v1933 = vtanh.pop %v1826
  %v1934 = vtanh.pop %v1828
  %v1935 = vtanh.pop %v1831
  %v1936 = vtanh.pop %v1833
  %v1937 = vtanh.pop %v1836
  %v1938 = vtanh.pop %v1838
  %v1939 = vtanh.pop %v1841
  %v1940 = vtanh.pop %v1843
  %v1941 = vtanh.pop %v1846
  %v1942 = vtanh.pop %v1848
  %v1943 = vtanh.pop %v1851
  %v1944 = vtanh.pop %v1853
  %v1945 = vtanh.pop %v1856
  %v1946 = vtanh.pop %v1858
  %v1947 = vtanh.pop %v1861
  %v1948 = vtanh.pop %v1863
  %v1949 = vtanh.pop %v1866
  %v1950 = vtanh.pop %v1868
  %v1951 = vtanh.pop %v1871
  %v1952 = vtanh.pop %v1873
  %v1953 = vtanh.pop %v1876
  %v1954 = vtanh.pop %v1878
  %v1955 = vtanh.pop %v1881
  %v1956 = vtanh.pop %v1883
  %v1957 = vtanh.pop %v1886
  %v1958 = vtanh.pop %v1888
  %v1959 = vtanh.pop %v1891
  %v1960 = vtanh.pop %v1893
  %v1961 = vtanh.pop %v1896
  %v1962 = vtanh.pop %v1898
  %v1963 = vtanh.pop %v1901
  %v1964 = vtanh.pop %v1903
  %v1965 = vtanh.pop %v1906
  %v1966 = vtanh.pop %v1908
  %v1967 = vtanh.pop %v1911
  %v1968 = vtanh.pop %v1913
  %1969 = vst [vmem:[%s2] sm:$0xff] %v1915
  %1970 = vst [vmem:[%s2 + $0x8] sm:$0xff] %v1916
  %1971 = vst [vmem:[%s2 + $0x10] sm:$0xff] %v1917
  %1972 = vst [vmem:[%s2 + $0x18] sm:$0xff] %v1918
  %1973 = vst [vmem:[%s2 + $0x20] sm:$0xff] %v1919
  %1974 = vst [vmem:[%s2 + $0x28] sm:$0xff] %v1920
  %1975 = vst [vmem:[%s2 + $0x30] sm:$0xff] %v1921
  %1976 = vst [vmem:[%s2 + $0x38] sm:$0xff] %v1922
  %1977 = vst [vmem:[%s2 + $0x40] sm:$0xff] %v1923
  %1978 = vst [vmem:[%s2 + $0x48] sm:$0xff] %v1924
  %1979 = vst [vmem:[%s2 + $0x50] sm:$0xff] %v1925
  %1980 = vst [vmem:[%s2 + $0x58] sm:$0xff] %v1926
  %1981 = vst [vmem:[%s2 + $0x60] sm:$0xff] %v1927
  %1982 = vst [vmem:[%s2 + $0x68] sm:$0xff] %v1928
  %1983 = vst [vmem:[%s2 + $0x70] sm:$0xff] %v1929
  %1984 = vst [vmem:[%s2 + $0x78] sm:$0xff] %v1930
  %1985 = vst [vmem:[%s2 + $0x80] sm:$0xff] %v1931
  %1986 = vst [vmem:[%s2 + $0x88] sm:$0xff] %v1932
  %1987 = vst [vmem:[%s2 + $0x90] sm:$0xff] %v1933
  %1988 = vst [vmem:[%s2 + $0x98] sm:$0xff] %v1934
  %1989 = vst [vmem:[%s2 + $0xa0] sm:$0xff] %v1935
  %1990 = vst [vmem:[%s2 + $0xa8] sm:$0xff] %v1936
  %1991 = vst [vmem:[%s2 + $0xb0] sm:$0xff] %v1937
  %1992 = vst [vmem:[%s2 + $0xb8] sm:$0xff] %v1938
  %1993 = vst [vmem:[%s2 + $0xc0] sm:$0xff] %v1939
  %1994 = vst [vmem:[%s2 + $0xc8] sm:$0xff] %v1940
  %1995 = vst [vmem:[%s2 + $0xd0] sm:$0xff] %v1941
  %1996 = vst [vmem:[%s2 + $0xd8] sm:$0xff] %v1942
  %1997 = vst [vmem:[%s2 + $0xe0] sm:$0xff] %v1943
  %1998 = vst [vmem:[%s2 + $0xe8] sm:$0xff] %v1944
  %1999 = vst [vmem:[%s2 + $0xf0] sm:$0xff] %v1945
  %2000 = vst [vmem:[%s2 + $0xf8] sm:$0xff] %v1946
  %2001 = vst [vmem:[%s2 + $0x100] sm:$0xff] %v1947
  %2002 = vst [vmem:[%s2 + $0x108] sm:$0xff] %v1948
  %2003 = vst [vmem:[%s2 + $0x110] sm:$0xff] %v1949
  %2004 = vst [vmem:[%s2 + $0x118] sm:$0xff] %v1950
  %2005 = vst [vmem:[%s2 + $0x120] sm:$0xff] %v1951
  %2006 = vst [vmem:[%s2 + $0x128] sm:$0xff] %v1952
  %2007 = vst [vmem:[%s2 + $0x130] sm:$0xff] %v1953
  %2008 = vst [vmem:[%s2 + $0x138] sm:$0xff] %v1954
  %2009 = vst [vmem:[%s2 + $0x140] sm:$0xff] %v1955
  %2010 = vst [vmem:[%s2 + $0x148] sm:$0xff] %v1956
  %2011 = vst [vmem:[%s2 + $0x150] sm:$0xff] %v1957
  %2012 = vst [vmem:[%s2 + $0x158] sm:$0xff] %v1958
  %2013 = vst [vmem:[%s2 + $0x160] sm:$0xff] %v1959
  %2014 = vst [vmem:[%s2 + $0x168] sm:$0xff] %v1960
  %2015 = vst [vmem:[%s2 + $0x170] sm:$0xff] %v1961
  %2016 = vst [vmem:[%s2 + $0x178] sm:$0xff] %v1962
  %2017 = vst [vmem:[%s2 + $0x180] sm:$0xff] %v1963
  %2018 = vst [vmem:[%s2 + $0x188] sm:$0xff] %v1964
  %2019 = vst [vmem:[%s2 + $0x190] sm:$0xff] %v1965
  %2020 = vst [vmem:[%s2 + $0x198] sm:$0xff] %v1966
  %2021 = vst [vmem:[%s2 + $0x1a0] sm:$0xff] %v1967
  %2022 = vst [vmem:[%s2 + $0x1a8] sm:$0xff] %v1968
  // Predicated region
  $region10: #{conv_autoencoder_forward.13} parent=0 // pred_check
    _
  $region11: #{conv_autoencoder_forward.13} parent=0 // pred_check_branch
    %2024 = sbr.rel (0) target = $region13
  $region12: #{conv_autoencoder_forward.13} parent=0 // pred_region
    _
  $region13: #{conv_autoencoder_forward.13} parent=0 // pred_fallthru
    _
  // Predicated region
  $region14: #{conv_autoencoder_forward.13} parent=0 // pred_check
    _
  $region15: #{conv_autoencoder_forward.13} parent=0 // pred_check_branch
    %2026 = sbr.rel (0) target = $region17
  $region16: #{conv_autoencoder_forward.13} parent=0 // pred_region
    _
  $region17: #{conv_autoencoder_forward.13} parent=0 // pred_fallthru
    _

// kernel: conv_autoencoder_forward.14
$region0: #{conv_autoencoder_forward.14}
  #allocation0 [shape = 'u32[]', space=smem, size = 0x4, offset = 0x4, fixed_abs, tag = 'smem constant byte address 0x4 - core index']
  #allocation1 [shape = 'u32[72,128]{1,0:T(1,128)}', space=vmem, size = 0x9000, scoped, tag = 'internal scratch']
  %s0 = inlined_call_operand.vmem [shape: bf16[352,384], index: 0, kind: input, shape index: {}]
  %s1 = inlined_call_operand.vmem [shape: bf16[384,128], index: 1, kind: input, shape index: {}]
  %s2 = inlined_call_operand.vmem [shape: f32[352,128], index: 2, kind: output, shape index: {}]
  %s3 = sld [smem:[#allocation0]]
  $region18: #{conv_autoencoder_forward.14} parent=0
    _
  %s5 = ssub.s32 1, %s3
  %s6 = scalar_select 0, %s5, %s3
  // Predicated region
  $region2: #{conv_autoencoder_forward.14} parent=0 // pred_check
    _
  $region3: #{conv_autoencoder_forward.14} parent=0 // pred_check_branch
    %8 = sbr.rel (0) target = $region5
  $region4: #{conv_autoencoder_forward.14} parent=0 // pred_region
    _
  $region5: #{conv_autoencoder_forward.14} parent=0 // pred_fallthru
    _
  // Predicated region
  $region6: #{conv_autoencoder_forward.14} parent=0 // pred_check
    _
  $region7: #{conv_autoencoder_forward.14} parent=0 // pred_check_branch
    %10 = sbr.rel (0) target = $region9
  $region8: #{conv_autoencoder_forward.14} parent=0 // pred_region
    _
  $region9: #{conv_autoencoder_forward.14} parent=0 // pred_fallthru
    _
  %v11 = vld [vmem:[%s0] sm:$0xff]
  %v12 = vld [vmem:[%s0 + $0x8] sm:$0xf]
  %v13 = vld [vmem:[%s0 + $0xc] sm:$0xff]
  %v14 = vld [vmem:[%s0 + $0x14] sm:$0xf]
  %v15 = vld [vmem:[%s0 + $0x18] sm:$0xff]
  %v16 = vld [vmem:[%s0 + $0x20] sm:$0xf]
  %v17 = vld [vmem:[%s0 + $0x24] sm:$0xff]
  %v18 = vld [vmem:[%s0 + $0x2c] sm:$0xf]
  %v19 = vld [vmem:[%s0 + $0x30] sm:$0xff]
  %v20 = vld [vmem:[%s0 + $0x38] sm:$0xf]
  %v21 = vld [vmem:[%s0 + $0x3c] sm:$0xff]
  %v22 = vld [vmem:[%s0 + $0x44] sm:$0xf]
  %v23 = vld [vmem:[%s0 + $0x48] sm:$0xff]
  %v24 = vld [vmem:[%s0 + $0x50] sm:$0xf]
  %v25 = vld [vmem:[%s0 + $0x54] sm:$0xff]
  %v26 = vld [vmem:[%s0 + $0x5c] sm:$0xf]
  %v27 = vld [vmem:[%s0 + $0x60] sm:$0xff]
  %v28 = vld [vmem:[%s0 + $0x68] sm:$0xf]
  %v29 = vld [vmem:[%s0 + $0x6c] sm:$0xff]
  %v30 = vld [vmem:[%s0 + $0x74] sm:$0xf]
  %v31 = vld [vmem:[%s0 + $0x78] sm:$0xff]
  %v32 = vld [vmem:[%s0 + $0x80] sm:$0xf]
  %v33 = vld [vmem:[%s0 + $0x84] sm:$0xff]
  %v34 = vld [vmem:[%s0 + $0x8c] sm:$0xf]
  %v35 = vld [vmem:[%s0 + $0x90] sm:$0xff]
  %v36 = vld [vmem:[%s0 + $0x98] sm:$0xf]
  %v37 = vld [vmem:[%s0 + $0x9c] sm:$0xff]
  %v38 = vld [vmem:[%s0 + $0xa4] sm:$0xf]
  %v39 = vld [vmem:[%s0 + $0xa8] sm:$0xff]
  %v40 = vld [vmem:[%s0 + $0xb0] sm:$0xf]
  %v41 = vld [vmem:[%s0 + $0xb4] sm:$0xff]
  %v42 = vld [vmem:[%s0 + $0xbc] sm:$0xf]
  %v43 = vld [vmem:[%s0 + $0xc0] sm:$0xff]
  %v44 = vld [vmem:[%s0 + $0xc8] sm:$0xf]
  %v45 = vld [vmem:[%s0 + $0xcc] sm:$0xff]
  %v46 = vld [vmem:[%s0 + $0xd4] sm:$0xf]
  %v47 = vld [vmem:[%s0 + $0xd8] sm:$0xff]
  %v48 = vld [vmem:[%s0 + $0xe0] sm:$0xf]
  %v49 = vld [vmem:[%s0 + $0xe4] sm:$0xff]
  %v50 = vld [vmem:[%s0 + $0xec] sm:$0xf]
  %v51 = vld [vmem:[%s0 + $0xf0] sm:$0xff]
  %v52 = vld [vmem:[%s0 + $0xf8] sm:$0xf]
  %v53 = vld [vmem:[%s0 + $0xfc] sm:$0xff]
  %v54 = vld [vmem:[%s0 + $0x104] sm:$0xf]
  %v55 = vld [vmem:[%s0 + $0x108] sm:$0xff]
  %v56 = vld [vmem:[%s0 + $0x110] sm:$0xf]
  %v57 = vld [vmem:[%s0 + $0x114] sm:$0xff]
  %v58 = vld [vmem:[%s0 + $0x11c] sm:$0xf]
  %v59 = vld [vmem:[%s0 + $0x120] sm:$0xff]
  %v60 = vld [vmem:[%s0 + $0x128] sm:$0xf]
  %v61 = vld [vmem:[%s0 + $0x12c] sm:$0xff]
  %v62 = vld [vmem:[%s0 + $0x134] sm:$0xf]
  %v63 = vld [vmem:[%s0 + $0x138] sm:$0xff]
  %v64 = vld [vmem:[%s0 + $0x140] sm:$0xf]
  %v65 = vld [vmem:[%s0 + $0x144] sm:$0xff]
  %v66 = vld [vmem:[%s0 + $0x14c] sm:$0xf]
  %v67 = vld [vmem:[%s0 + $0x150] sm:$0xff]
  %v68 = vld [vmem:[%s0 + $0x158] sm:$0xf]
  %v69 = vld [vmem:[%s0 + $0x15c] sm:$0xff]
  %v70 = vld [vmem:[%s0 + $0x164] sm:$0xf]
  %v71 = vld [vmem:[%s0 + $0x168] sm:$0xff]
  %v72 = vld [vmem:[%s0 + $0x170] sm:$0xf]
  %v73 = vld [vmem:[%s0 + $0x174] sm:$0xff]
  %v74 = vld [vmem:[%s0 + $0x17c] sm:$0xf]
  %v75 = vld [vmem:[%s0 + $0x180] sm:$0xff]
  %v76 = vld [vmem:[%s0 + $0x188] sm:$0xf]
  %v77 = vld [vmem:[%s0 + $0x18c] sm:$0xff]
  %v78 = vld [vmem:[%s0 + $0x194] sm:$0xf]
  %v79 = vld [vmem:[%s0 + $0x198] sm:$0xff]
  %v80 = vld [vmem:[%s0 + $0x1a0] sm:$0xf]
  %v81 = vld [vmem:[%s0 + $0x1a4] sm:$0xff]
  %v82 = vld [vmem:[%s0 + $0x1ac] sm:$0xf]
  %v83 = vld [vmem:[%s0 + $0x1b0] sm:$0xff]
  %v84 = vld [vmem:[%s0 + $0x1b8] sm:$0xf]
  %v85 = vld [vmem:[%s0 + $0x1bc] sm:$0xff]
  %v86 = vld [vmem:[%s0 + $0x1c4] sm:$0xf]
  %v87 = vld [vmem:[%s0 + $0x1c8] sm:$0xff]
  %v88 = vld [vmem:[%s0 + $0x1d0] sm:$0xf]
  %v89 = vld [vmem:[%s0 + $0x1d4] sm:$0xff]
  %v90 = vld [vmem:[%s0 + $0x1dc] sm:$0xf]
  %v91 = vld [vmem:[%s0 + $0x1e0] sm:$0xff]
  %v92 = vld [vmem:[%s0 + $0x1e8] sm:$0xf]
  %v93 = vld [vmem:[%s0 + $0x1ec] sm:$0xff]
  %v94 = vld [vmem:[%s0 + $0x1f4] sm:$0xf]
  %v95 = vld [vmem:[%s0 + $0x1f8] sm:$0xff]
  %v96 = vld [vmem:[%s0 + $0x200] sm:$0xf]
  %v97 = vld [vmem:[%s0 + $0x204] sm:$0xff]
  %v98 = vld [vmem:[%s0 + $0x20c] sm:$0xf]
  %v99 = vld [vmem:[%s1] sm:$0xf]
  %v100 = vld [vmem:[%s1 + $0x4] sm:$0xf]
  %v101 = vld [vmem:[%s1 + $0x8] sm:$0xf]
  %v102 = vld [vmem:[%s1 + $0xc] sm:$0xf]
  %v103 = vld [vmem:[%s1 + $0x10] sm:$0xf]
  %v104 = vld [vmem:[%s1 + $0x14] sm:$0xf]
  %v105 = vld [vmem:[%s1 + $0x18] sm:$0xf]
  %v106 = vld [vmem:[%s1 + $0x1c] sm:$0xf]
  %v107 = vld [vmem:[%s1 + $0x20] sm:$0xf]
  %v108 = vld [vmem:[%s1 + $0x24] sm:$0xf]
  %v109 = vld [vmem:[%s1 + $0x28] sm:$0xf]
  %v110 = vld [vmem:[%s1 + $0x2c] sm:$0xf]
  %v111 = vld [vmem:[%s1 + $0x30] sm:$0xf]
  %v112 = vld [vmem:[%s1 + $0x34] sm:$0xf]
  %v113 = vld [vmem:[%s1 + $0x38] sm:$0xf]
  %v114 = vld [vmem:[%s1 + $0x3c] sm:$0xf]
  %v115 = vld [vmem:[%s1 + $0x40] sm:$0xf]
  %v116 = vld [vmem:[%s1 + $0x44] sm:$0xf]
  %v117 = vld [vmem:[%s1 + $0x48] sm:$0xf]
  %v118 = vld [vmem:[%s1 + $0x4c] sm:$0xf]
  %v119 = vld [vmem:[%s1 + $0x50] sm:$0xf]
  %v120 = vld [vmem:[%s1 + $0x54] sm:$0xf]
  %v121 = vld [vmem:[%s1 + $0x58] sm:$0xf]
  %v122 = vld [vmem:[%s1 + $0x5c] sm:$0xf]
  %v123 = vld [vmem:[%s1 + $0x60] sm:$0xf]
  %v124 = vld [vmem:[%s1 + $0x64] sm:$0xf]
  %v125 = vld [vmem:[%s1 + $0x68] sm:$0xf]
  %v126 = vld [vmem:[%s1 + $0x6c] sm:$0xf]
  %v127 = vld [vmem:[%s1 + $0x70] sm:$0xf]
  %v128 = vld [vmem:[%s1 + $0x74] sm:$0xf]
  %v129 = vld [vmem:[%s1 + $0x78] sm:$0xf]
  %v130 = vld [vmem:[%s1 + $0x7c] sm:$0xf]
  %v131 = vld [vmem:[%s1 + $0x80] sm:$0xf]
  %v132 = vld [vmem:[%s1 + $0x84] sm:$0xf]
  %v133 = vld [vmem:[%s1 + $0x88] sm:$0xf]
  %v134 = vld [vmem:[%s1 + $0x8c] sm:$0xf]
  %v135 = vld [vmem:[%s1 + $0x90] sm:$0xf]
  %v136 = vld [vmem:[%s1 + $0x94] sm:$0xf]
  %v137 = vld [vmem:[%s1 + $0x98] sm:$0xf]
  %v138 = vld [vmem:[%s1 + $0x9c] sm:$0xf]
  %v139 = vld [vmem:[%s1 + $0xa0] sm:$0xf]
  %v140 = vld [vmem:[%s1 + $0xa4] sm:$0xf]
  %v141 = vld [vmem:[%s1 + $0xa8] sm:$0xf]
  %v142 = vld [vmem:[%s1 + $0xac] sm:$0xf]
  %v143 = vld [vmem:[%s1 + $0xb0] sm:$0xf]
  %v144 = vld [vmem:[%s1 + $0xb4] sm:$0xf]
  %v145 = vld [vmem:[%s1 + $0xb8] sm:$0xf]
  %v146 = vld [vmem:[%s1 + $0xbc] sm:$0xf]
  %v235 = vunpack.c.l.b16 %v11
  %v236 = vunpack.c.h.b16 %v11
  %v237 = vunpack.c.l.b16 %v12
  %v238 = vunpack.c.l.b16 %v13
  %v239 = vunpack.c.h.b16 %v13
  %v240 = vunpack.c.l.b16 %v14
  %v241 = vunpack.c.l.b16 %v15
  %v242 = vunpack.c.h.b16 %v15
  %v243 = vunpack.c.l.b16 %v16
  %v244 = vunpack.c.l.b16 %v17
  %v245 = vunpack.c.h.b16 %v17
  %v246 = vunpack.c.l.b16 %v18
  %v247 = vunpack.c.l.b16 %v19
  %v248 = vunpack.c.h.b16 %v19
  %v249 = vunpack.c.l.b16 %v20
  %v250 = vunpack.c.l.b16 %v21
  %v251 = vunpack.c.h.b16 %v21
  %v252 = vunpack.c.l.b16 %v22
  %v253 = vunpack.c.l.b16 %v23
  %v254 = vunpack.c.h.b16 %v23
  %v255 = vunpack.c.l.b16 %v24
  %v256 = vunpack.c.l.b16 %v25
  %v257 = vunpack.c.h.b16 %v25
  %v258 = vunpack.c.l.b16 %v26
  %v259 = vunpack.c.l.b16 %v27
  %v260 = vunpack.c.h.b16 %v27
  %v261 = vunpack.c.l.b16 %v28
  %v262 = vunpack.c.l.b16 %v29
  %v263 = vunpack.c.h.b16 %v29
  %v264 = vunpack.c.l.b16 %v30
  %v265 = vunpack.c.l.b16 %v31
  %v266 = vunpack.c.h.b16 %v31
  %v267 = vunpack.c.l.b16 %v32
  %v268 = vunpack.c.l.b16 %v33
  %v269 = vunpack.c.h.b16 %v33
  %v270 = vunpack.c.l.b16 %v34
  %v271 = vunpack.c.l.b16 %v35
  %v272 = vunpack.c.h.b16 %v35
  %v273 = vunpack.c.l.b16 %v36
  %v274 = vunpack.c.l.b16 %v37
  %v275 = vunpack.c.h.b16 %v37
  %v276 = vunpack.c.l.b16 %v38
  %v277 = vunpack.c.l.b16 %v39
  %v278 = vunpack.c.h.b16 %v39
  %v279 = vunpack.c.l.b16 %v40
  %v280 = vunpack.c.l.b16 %v41
  %v281 = vunpack.c.h.b16 %v41
  %v282 = vunpack.c.l.b16 %v42
  %v283 = vunpack.c.l.b16 %v43
  %v284 = vunpack.c.h.b16 %v43
  %v285 = vunpack.c.l.b16 %v44
  %v286 = vunpack.c.l.b16 %v45
  %v287 = vunpack.c.h.b16 %v45
  %v288 = vunpack.c.l.b16 %v46
  %v289 = vunpack.c.l.b16 %v47
  %v290 = vunpack.c.h.b16 %v47
  %v291 = vunpack.c.l.b16 %v48
  %v292 = vunpack.c.l.b16 %v49
  %v293 = vunpack.c.h.b16 %v49
  %v294 = vunpack.c.l.b16 %v50
  %v295 = vunpack.c.l.b16 %v51
  %v296 = vunpack.c.h.b16 %v51
  %v297 = vunpack.c.l.b16 %v52
  %v298 = vunpack.c.l.b16 %v53
  %v299 = vunpack.c.h.b16 %v53
  %v300 = vunpack.c.l.b16 %v54
  %v301 = vunpack.c.l.b16 %v55
  %v302 = vunpack.c.h.b16 %v55
  %v303 = vunpack.c.l.b16 %v56
  %v304 = vunpack.c.l.b16 %v57
  %v305 = vunpack.c.h.b16 %v57
  %v306 = vunpack.c.l.b16 %v58
  %v307 = vunpack.c.l.b16 %v59
  %v308 = vunpack.c.h.b16 %v59
  %v309 = vunpack.c.l.b16 %v60
  %v310 = vunpack.c.l.b16 %v61
  %v311 = vunpack.c.h.b16 %v61
  %v312 = vunpack.c.l.b16 %v62
  %v313 = vunpack.c.l.b16 %v63
  %v314 = vunpack.c.h.b16 %v63
  %v315 = vunpack.c.l.b16 %v64
  %v316 = vunpack.c.l.b16 %v65
  %v317 = vunpack.c.h.b16 %v65
  %v318 = vunpack.c.l.b16 %v66
  %v319 = vunpack.c.l.b16 %v67
  %v320 = vunpack.c.h.b16 %v67
  %v321 = vunpack.c.l.b16 %v68
  %v322 = vunpack.c.l.b16 %v69
  %v323 = vunpack.c.h.b16 %v69
  %v324 = vunpack.c.l.b16 %v70
  %v325 = vunpack.c.l.b16 %v71
  %v326 = vunpack.c.h.b16 %v71
  %v327 = vunpack.c.l.b16 %v72
  %v328 = vunpack.c.l.b16 %v73
  %v329 = vunpack.c.h.b16 %v73
  %v330 = vunpack.c.l.b16 %v74
  %v331 = vunpack.c.l.b16 %v75
  %v332 = vunpack.c.h.b16 %v75
  %v333 = vunpack.c.l.b16 %v76
  %v334 = vunpack.c.l.b16 %v77
  %v335 = vunpack.c.h.b16 %v77
  %v336 = vunpack.c.l.b16 %v78
  %v337 = vunpack.c.l.b16 %v79
  %v338 = vunpack.c.h.b16 %v79
  %v339 = vunpack.c.l.b16 %v80
  %v340 = vunpack.c.l.b16 %v81
  %v341 = vunpack.c.h.b16 %v81
  %v342 = vunpack.c.l.b16 %v82
  %v343 = vunpack.c.l.b16 %v83
  %v344 = vunpack.c.h.b16 %v83
  %v345 = vunpack.c.l.b16 %v84
  %v346 = vunpack.c.l.b16 %v85
  %v347 = vunpack.c.h.b16 %v85
  %v348 = vunpack.c.l.b16 %v86
  %v349 = vunpack.c.l.b16 %v87
  %v350 = vunpack.c.h.b16 %v87
  %v351 = vunpack.c.l.b16 %v88
  %v352 = vunpack.c.l.b16 %v89
  %v353 = vunpack.c.h.b16 %v89
  %v354 = vunpack.c.l.b16 %v90
  %v355 = vunpack.c.l.b16 %v91
  %v356 = vunpack.c.h.b16 %v91
  %v357 = vunpack.c.l.b16 %v92
  %v358 = vunpack.c.l.b16 %v93
  %v359 = vunpack.c.h.b16 %v93
  %v360 = vunpack.c.l.b16 %v94
  %v361 = vunpack.c.l.b16 %v95
  %v362 = vunpack.c.h.b16 %v95
  %v363 = vunpack.c.l.b16 %v96
  %v364 = vunpack.c.l.b16 %v97
  %v365 = vunpack.c.h.b16 %v97
  %v366 = vunpack.c.l.b16 %v98
  %v367 = vpack.c.b16 %v238, %v235
  %v368 = vpack.c.b16 %v239, %v236
  %v369 = vpack.c.b16 %v240, %v237
  %v370 = vpack.c.b16 %v244, %v241
  %v371 = vpack.c.b16 %v245, %v242
  %v372 = vpack.c.b16 %v246, %v243
  %v373 = vpack.c.b16 %v250, %v247
  %v374 = vpack.c.b16 %v251, %v248
  %v375 = vpack.c.b16 %v252, %v249
  %v376 = vpack.c.b16 %v256, %v253
  %v377 = vpack.c.b16 %v257, %v254
  %v378 = vpack.c.b16 %v258, %v255
  %v379 = vpack.c.b16 %v262, %v259
  %v380 = vpack.c.b16 %v263, %v260
  %v381 = vpack.c.b16 %v264, %v261
  %v382 = vpack.c.b16 %v268, %v265
  %v383 = vpack.c.b16 %v269, %v266
  %v384 = vpack.c.b16 %v270, %v267
  %v385 = vpack.c.b16 %v274, %v271
  %v386 = vpack.c.b16 %v275, %v272
  %v387 = vpack.c.b16 %v276, %v273
  %v388 = vpack.c.b16 %v280, %v277
  %v389 = vpack.c.b16 %v281, %v278
  %v390 = vpack.c.b16 %v282, %v279
  %v391 = vpack.c.b16 %v286, %v283
  %v392 = vpack.c.b16 %v287, %v284
  %v393 = vpack.c.b16 %v288, %v285
  %v394 = vpack.c.b16 %v292, %v289
  %v395 = vpack.c.b16 %v293, %v290
  %v396 = vpack.c.b16 %v294, %v291
  %v397 = vpack.c.b16 %v298, %v295
  %v398 = vpack.c.b16 %v299, %v296
  %v399 = vpack.c.b16 %v300, %v297
  %v400 = vpack.c.b16 %v304, %v301
  %v401 = vpack.c.b16 %v305, %v302
  %v402 = vpack.c.b16 %v306, %v303
  %v403 = vpack.c.b16 %v310, %v307
  %v404 = vpack.c.b16 %v311, %v308
  %v405 = vpack.c.b16 %v312, %v309
  %v406 = vpack.c.b16 %v316, %v313
  %v407 = vpack.c.b16 %v317, %v314
  %v408 = vpack.c.b16 %v318, %v315
  %v409 = vpack.c.b16 %v322, %v319
  %v410 = vpack.c.b16 %v323, %v320
  %v411 = vpack.c.b16 %v324, %v321
  %v412 = vpack.c.b16 %v328, %v325
  %v413 = vpack.c.b16 %v329, %v326
  %v414 = vpack.c.b16 %v330, %v327
  %v415 = vpack.c.b16 %v334, %v331
  %v416 = vpack.c.b16 %v335, %v332
  %v417 = vpack.c.b16 %v336, %v333
  %v418 = vpack.c.b16 %v340, %v337
  %v419 = vpack.c.b16 %v341, %v338
  %v420 = vpack.c.b16 %v342, %v339
  %v421 = vpack.c.b16 %v346, %v343
  %v422 = vpack.c.b16 %v347, %v344
  %v423 = vpack.c.b16 %v348, %v345
  %v424 = vpack.c.b16 %v352, %v349
  %v425 = vpack.c.b16 %v353, %v350
  %v426 = vpack.c.b16 %v354, %v351
  %v427 = vpack.c.b16 %v358, %v355
  %v428 = vpack.c.b16 %v359, %v356
  %v429 = vpack.c.b16 %v360, %v357
  %v430 = vpack.c.b16 %v364, %v361
  %v431 = vpack.c.b16 %v365, %v362
  %v432 = vpack.c.b16 %v366, %v363
  %v547 = vunpack.c.l.b16 %v99
  %v548 = vunpack.c.l.b16 %v100
  %v549 = vunpack.c.l.b16 %v101
  %v550 = vunpack.c.l.b16 %v102
  %v551 = vunpack.c.l.b16 %v103
  %v552 = vunpack.c.l.b16 %v104
  %v553 = vunpack.c.l.b16 %v105
  %v554 = vunpack.c.l.b16 %v106
  %v555 = vunpack.c.l.b16 %v107
  %v556 = vunpack.c.l.b16 %v108
  %v557 = vunpack.c.l.b16 %v109
  %v558 = vunpack.c.l.b16 %v110
  %v559 = vunpack.c.l.b16 %v111
  %v560 = vunpack.c.l.b16 %v112
  %v561 = vunpack.c.l.b16 %v113
  %v562 = vunpack.c.l.b16 %v114
  %v563 = vunpack.c.l.b16 %v115
  %v564 = vunpack.c.l.b16 %v116
  %v565 = vunpack.c.l.b16 %v117
  %v566 = vunpack.c.l.b16 %v118
  %v567 = vunpack.c.l.b16 %v119
  %v568 = vunpack.c.l.b16 %v120
  %v569 = vunpack.c.l.b16 %v121
  %v570 = vunpack.c.l.b16 %v122
  %v571 = vunpack.c.l.b16 %v123
  %v572 = vunpack.c.l.b16 %v124
  %v573 = vunpack.c.l.b16 %v125
  %v574 = vunpack.c.l.b16 %v126
  %v575 = vunpack.c.l.b16 %v127
  %v576 = vunpack.c.l.b16 %v128
  %v577 = vunpack.c.l.b16 %v129
  %v578 = vunpack.c.l.b16 %v130
  %v579 = vunpack.c.l.b16 %v131
  %v580 = vunpack.c.l.b16 %v132
  %v581 = vunpack.c.l.b16 %v133
  %v582 = vunpack.c.l.b16 %v134
  %v583 = vunpack.c.l.b16 %v135
  %v584 = vunpack.c.l.b16 %v136
  %v585 = vunpack.c.l.b16 %v137
  %v586 = vunpack.c.l.b16 %v138
  %v587 = vunpack.c.l.b16 %v139
  %v588 = vunpack.c.l.b16 %v140
  %v589 = vunpack.c.l.b16 %v141
  %v590 = vunpack.c.l.b16 %v142
  %v591 = vunpack.c.l.b16 %v143
  %v592 = vunpack.c.l.b16 %v144
  %v593 = vunpack.c.l.b16 %v145
  %v594 = vunpack.c.l.b16 %v146
  %v595 = vpack.c.b16 %v548, %v547
  %v596 = vpack.c.b16 %v550, %v549
  %v597 = vpack.c.b16 %v552, %v551
  %v598 = vpack.c.b16 %v554, %v553
  %v599 = vpack.c.b16 %v556, %v555
  %v600 = vpack.c.b16 %v558, %v557
  %v601 = vpack.c.b16 %v560, %v559
  %v602 = vpack.c.b16 %v562, %v561
  %v603 = vpack.c.b16 %v564, %v563
  %v604 = vpack.c.b16 %v566, %v565
  %v605 = vpack.c.b16 %v568, %v567
  %v606 = vpack.c.b16 %v570, %v569
  %v607 = vpack.c.b16 %v572, %v571
  %v608 = vpack.c.b16 %v574, %v573
  %v609 = vpack.c.b16 %v576, %v575
  %v610 = vpack.c.b16 %v578, %v577
  %v611 = vpack.c.b16 %v580, %v579
  %v612 = vpack.c.b16 %v582, %v581
  %v613 = vpack.c.b16 %v584, %v583
  %v614 = vpack.c.b16 %v586, %v585
  %v615 = vpack.c.b16 %v588, %v587
  %v616 = vpack.c.b16 %v590, %v589
  %v617 = vpack.c.b16 %v592, %v591
  %v618 = vpack.c.b16 %v594, %v593
  %643 = vmatpush.bf16.msra.mxu0 %v602
  %644 = vmatpush.bf16.msra.mxu0 %v601
  %645 = vmatpush.bf16.msra.mxu0 %v600
  %646 = vmatpush.bf16.msra.mxu0 %v599
  %647 = vmatpush.bf16.msra.mxu0 %v598
  %648 = vmatpush.bf16.msra.mxu0 %v597
  %649 = vmatpush.bf16.msra.mxu0 %v596
  %650 = vmatpush.bf16.msra.mxu0 %v595
  %651 = vmatmul.bf16.gmra.mxu0 %v367
  %v652 = vpop.f32.mrf.mxu0
  %v653 = vadd.f32 0.0, %v652
  %v654 = vpop.f32.mrf.mxu0
  %v655 = vadd.f32 0.0, %v654
  %656 = vmatmul.bf16.gmra.mxu0 %v370
  %v657 = vpop.f32.mrf.mxu0
  %v658 = vadd.f32 0.0, %v657
  %v659 = vpop.f32.mrf.mxu0
  %v660 = vadd.f32 0.0, %v659
  %661 = vmatmul.bf16.gmra.mxu0 %v373
  %v662 = vpop.f32.mrf.mxu0
  %v663 = vadd.f32 0.0, %v662
  %v664 = vpop.f32.mrf.mxu0
  %v665 = vadd.f32 0.0, %v664
  %666 = vmatmul.bf16.gmra.mxu0 %v376
  %v667 = vpop.f32.mrf.mxu0
  %v668 = vadd.f32 0.0, %v667
  %v669 = vpop.f32.mrf.mxu0
  %v670 = vadd.f32 0.0, %v669
  %671 = vmatmul.bf16.gmra.mxu0 %v379
  %v672 = vpop.f32.mrf.mxu0
  %v673 = vadd.f32 0.0, %v672
  %v674 = vpop.f32.mrf.mxu0
  %v675 = vadd.f32 0.0, %v674
  %676 = vmatmul.bf16.gmra.mxu0 %v382
  %v677 = vpop.f32.mrf.mxu0
  %v678 = vadd.f32 0.0, %v677
  %v679 = vpop.f32.mrf.mxu0
  %v680 = vadd.f32 0.0, %v679
  %681 = vmatmul.bf16.gmra.mxu0 %v385
  %v682 = vpop.f32.mrf.mxu0
  %v683 = vadd.f32 0.0, %v682
  %v684 = vpop.f32.mrf.mxu0
  %v685 = vadd.f32 0.0, %v684
  %686 = vmatmul.bf16.gmra.mxu0 %v388
  %v687 = vpop.f32.mrf.mxu0
  %v688 = vadd.f32 0.0, %v687
  %v689 = vpop.f32.mrf.mxu0
  %v690 = vadd.f32 0.0, %v689
  %691 = vmatmul.bf16.gmra.mxu0 %v391
  %v692 = vpop.f32.mrf.mxu0
  %v693 = vadd.f32 0.0, %v692
  %v694 = vpop.f32.mrf.mxu0
  %v695 = vadd.f32 0.0, %v694
  %696 = vmatmul.bf16.gmra.mxu0 %v394
  %v697 = vpop.f32.mrf.mxu0
  %v698 = vadd.f32 0.0, %v697
  %v699 = vpop.f32.mrf.mxu0
  %v700 = vadd.f32 0.0, %v699
  %701 = vmatmul.bf16.gmra.mxu0 %v397
  %v702 = vpop.f32.mrf.mxu0
  %v703 = vadd.f32 0.0, %v702
  %v704 = vpop.f32.mrf.mxu0
  %v705 = vadd.f32 0.0, %v704
  %706 = vmatmul.bf16.gmra.mxu0 %v400
  %v707 = vpop.f32.mrf.mxu0
  %v708 = vadd.f32 0.0, %v707
  %v709 = vpop.f32.mrf.mxu0
  %v710 = vadd.f32 0.0, %v709
  %711 = vmatmul.bf16.gmra.mxu0 %v403
  %v712 = vpop.f32.mrf.mxu0
  %v713 = vadd.f32 0.0, %v712
  %v714 = vpop.f32.mrf.mxu0
  %v715 = vadd.f32 0.0, %v714
  %716 = vmatmul.bf16.gmra.mxu0 %v406
  %v717 = vpop.f32.mrf.mxu0
  %v718 = vadd.f32 0.0, %v717
  %v719 = vpop.f32.mrf.mxu0
  %v720 = vadd.f32 0.0, %v719
  %721 = vmatmul.bf16.gmra.mxu0 %v409
  %v722 = vpop.f32.mrf.mxu0
  %v723 = vadd.f32 0.0, %v722
  %v724 = vpop.f32.mrf.mxu0
  %v725 = vadd.f32 0.0, %v724
  %726 = vmatmul.bf16.gmra.mxu0 %v412
  %v727 = vpop.f32.mrf.mxu0
  %v728 = vadd.f32 0.0, %v727
  %v729 = vpop.f32.mrf.mxu0
  %v730 = vadd.f32 0.0, %v729
  %731 = vmatmul.bf16.gmra.mxu0 %v415
  %v732 = vpop.f32.mrf.mxu0
  %v733 = vadd.f32 0.0, %v732
  %v734 = vpop.f32.mrf.mxu0
  %v735 = vadd.f32 0.0, %v734
  %736 = vmatmul.bf16.gmra.mxu0 %v418
  %v737 = vpop.f32.mrf.mxu0
  %v738 = vadd.f32 0.0, %v737
  %v739 = vpop.f32.mrf.mxu0
  %v740 = vadd.f32 0.0, %v739
  %741 = vmatmul.bf16.gmra.mxu0 %v421
  %v742 = vpop.f32.mrf.mxu0
  %v743 = vadd.f32 0.0, %v742
  %v744 = vpop.f32.mrf.mxu0
  %v745 = vadd.f32 0.0, %v744
  %746 = vmatmul.bf16.gmra.mxu0 %v424
  %v747 = vpop.f32.mrf.mxu0
  %v748 = vadd.f32 0.0, %v747
  %v749 = vpop.f32.mrf.mxu0
  %v750 = vadd.f32 0.0, %v749
  %751 = vmatmul.bf16.gmra.mxu0 %v427
  %v752 = vpop.f32.mrf.mxu0
  %v753 = vadd.f32 0.0, %v752
  %v754 = vpop.f32.mrf.mxu0
  %v755 = vadd.f32 0.0, %v754
  %756 = vmatmul.bf16.gmra.mxu0 %v430
  %v757 = vpop.f32.mrf.mxu0
  %v758 = vadd.f32 0.0, %v757
  %v759 = vpop.f32.mrf.mxu0
  %v760 = vadd.f32 0.0, %v759
  %761 = vdwg.mxu0
  %762 = vmatpush.bf16.msra.mxu0 %v610
  %763 = vmatpush.bf16.msra.mxu0 %v609
  %764 = vmatpush.bf16.msra.mxu0 %v608
  %765 = vmatpush.bf16.msra.mxu0 %v607
  %766 = vmatpush.bf16.msra.mxu0 %v606
  %767 = vmatpush.bf16.msra.mxu0 %v605
  %768 = vmatpush.bf16.msra.mxu0 %v604
  %769 = vmatpush.bf16.msra.mxu0 %v603
  %770 = vmatmul.bf16.gmra.mxu0 %v368
  %v771 = vpop.f32.mrf.mxu0
  %v772 = vadd.f32 %v653, %v771
  %v773 = vpop.f32.mrf.mxu0
  %v774 = vadd.f32 %v655, %v773
  %775 = vmatmul.bf16.gmra.mxu0 %v371
  %v776 = vpop.f32.mrf.mxu0
  %v777 = vadd.f32 %v658, %v776
  %v778 = vpop.f32.mrf.mxu0
  %v779 = vadd.f32 %v660, %v778
  %780 = vmatmul.bf16.gmra.mxu0 %v374
  %v781 = vpop.f32.mrf.mxu0
  %v782 = vadd.f32 %v663, %v781
  %v783 = vpop.f32.mrf.mxu0
  %v784 = vadd.f32 %v665, %v783
  %785 = vmatmul.bf16.gmra.mxu0 %v377
  %v786 = vpop.f32.mrf.mxu0
  %v787 = vadd.f32 %v668, %v786
  %v788 = vpop.f32.mrf.mxu0
  %v789 = vadd.f32 %v670, %v788
  %790 = vmatmul.bf16.gmra.mxu0 %v380
  %v791 = vpop.f32.mrf.mxu0
  %v792 = vadd.f32 %v673, %v791
  %v793 = vpop.f32.mrf.mxu0
  %v794 = vadd.f32 %v675, %v793
  %795 = vmatmul.bf16.gmra.mxu0 %v383
  %v796 = vpop.f32.mrf.mxu0
  %v797 = vadd.f32 %v678, %v796
  %v798 = vpop.f32.mrf.mxu0
  %v799 = vadd.f32 %v680, %v798
  %800 = vmatmul.bf16.gmra.mxu0 %v386
  %v801 = vpop.f32.mrf.mxu0
  %v802 = vadd.f32 %v683, %v801
  %v803 = vpop.f32.mrf.mxu0
  %v804 = vadd.f32 %v685, %v803
  %805 = vmatmul.bf16.gmra.mxu0 %v389
  %v806 = vpop.f32.mrf.mxu0
  %v807 = vadd.f32 %v688, %v806
  %v808 = vpop.f32.mrf.mxu0
  %v809 = vadd.f32 %v690, %v808
  %810 = vmatmul.bf16.gmra.mxu0 %v392
  %v811 = vpop.f32.mrf.mxu0
  %v812 = vadd.f32 %v693, %v811
  %v813 = vpop.f32.mrf.mxu0
  %v814 = vadd.f32 %v695, %v813
  %815 = vmatmul.bf16.gmra.mxu0 %v395
  %v816 = vpop.f32.mrf.mxu0
  %v817 = vadd.f32 %v698, %v816
  %v818 = vpop.f32.mrf.mxu0
  %v819 = vadd.f32 %v700, %v818
  %820 = vmatmul.bf16.gmra.mxu0 %v398
  %v821 = vpop.f32.mrf.mxu0
  %v822 = vadd.f32 %v703, %v821
  %v823 = vpop.f32.mrf.mxu0
  %v824 = vadd.f32 %v705, %v823
  %825 = vmatmul.bf16.gmra.mxu0 %v401
  %v826 = vpop.f32.mrf.mxu0
  %v827 = vadd.f32 %v708, %v826
  %v828 = vpop.f32.mrf.mxu0
  %v829 = vadd.f32 %v710, %v828
  %830 = vmatmul.bf16.gmra.mxu0 %v404
  %v831 = vpop.f32.mrf.mxu0
  %v832 = vadd.f32 %v713, %v831
  %v833 = vpop.f32.mrf.mxu0
  %v834 = vadd.f32 %v715, %v833
  %835 = vmatmul.bf16.gmra.mxu0 %v407
  %v836 = vpop.f32.mrf.mxu0
  %v837 = vadd.f32 %v718, %v836
  %v838 = vpop.f32.mrf.mxu0
  %v839 = vadd.f32 %v720, %v838
  %840 = vmatmul.bf16.gmra.mxu0 %v410
  %v841 = vpop.f32.mrf.mxu0
  %v842 = vadd.f32 %v723, %v841
  %v843 = vpop.f32.mrf.mxu0
  %v844 = vadd.f32 %v725, %v843
  %845 = vmatmul.bf16.gmra.mxu0 %v413
  %v846 = vpop.f32.mrf.mxu0
  %v847 = vadd.f32 %v728, %v846
  %v848 = vpop.f32.mrf.mxu0
  %v849 = vadd.f32 %v730, %v848
  %850 = vmatmul.bf16.gmra.mxu0 %v416
  %v851 = vpop.f32.mrf.mxu0
  %v852 = vadd.f32 %v733, %v851
  %v853 = vpop.f32.mrf.mxu0
  %v854 = vadd.f32 %v735, %v853
  %855 = vmatmul.bf16.gmra.mxu0 %v419
  %v856 = vpop.f32.mrf.mxu0
  %v857 = vadd.f32 %v738, %v856
  %v858 = vpop.f32.mrf.mxu0
  %v859 = vadd.f32 %v740, %v858
  %860 = vmatmul.bf16.gmra.mxu0 %v422
  %v861 = vpop.f32.mrf.mxu0
  %v862 = vadd.f32 %v743, %v861
  %v863 = vpop.f32.mrf.mxu0
  %v864 = vadd.f32 %v745, %v863
  %865 = vmatmul.bf16.gmra.mxu0 %v425
  %v866 = vpop.f32.mrf.mxu0
  %v867 = vadd.f32 %v748, %v866
  %v868 = vpop.f32.mrf.mxu0
  %v869 = vadd.f32 %v750, %v868
  %870 = vmatmul.bf16.gmra.mxu0 %v428
  %v871 = vpop.f32.mrf.mxu0
  %v872 = vadd.f32 %v753, %v871
  %v873 = vpop.f32.mrf.mxu0
  %v874 = vadd.f32 %v755, %v873
  %875 = vmatmul.bf16.gmra.mxu0 %v431
  %v876 = vpop.f32.mrf.mxu0
  %v877 = vadd.f32 %v758, %v876
  %v878 = vpop.f32.mrf.mxu0
  %v879 = vadd.f32 %v760, %v878
  %880 = vdwg.mxu0
  %881 = vmatpush.bf16.msra.mxu0 %v618
  %882 = vmatpush.bf16.msra.mxu0 %v617
  %883 = vmatpush.bf16.msra.mxu0 %v616
  %884 = vmatpush.bf16.msra.mxu0 %v615
  %885 = vmatpush.bf16.msra.mxu0 %v614
  %886 = vmatpush.bf16.msra.mxu0 %v613
  %887 = vmatpush.bf16.msra.mxu0 %v612
  %888 = vmatpush.bf16.msra.mxu0 %v611
  %889 = vmatmul.bf16.gmra.mxu0 %v369
  %v890 = vpop.f32.mrf.mxu0
  %v891 = vadd.f32 %v772, %v890
  %v892 = vpop.f32.mrf.mxu0
  %v893 = vadd.f32 %v774, %v892
  %894 = vmatmul.bf16.gmra.mxu0 %v372
  %v895 = vpop.f32.mrf.mxu0
  %v896 = vadd.f32 %v777, %v895
  %v897 = vpop.f32.mrf.mxu0
  %v898 = vadd.f32 %v779, %v897
  %899 = vmatmul.bf16.gmra.mxu0 %v375
  %v900 = vpop.f32.mrf.mxu0
  %v901 = vadd.f32 %v782, %v900
  %v902 = vpop.f32.mrf.mxu0
  %v903 = vadd.f32 %v784, %v902
  %904 = vmatmul.bf16.gmra.mxu0 %v378
  %v905 = vpop.f32.mrf.mxu0
  %v906 = vadd.f32 %v787, %v905
  %v907 = vpop.f32.mrf.mxu0
  %v908 = vadd.f32 %v789, %v907
  %909 = vmatmul.bf16.gmra.mxu0 %v381
  %v910 = vpop.f32.mrf.mxu0
  %v911 = vadd.f32 %v792, %v910
  %v912 = vpop.f32.mrf.mxu0
  %v913 = vadd.f32 %v794, %v912
  %914 = vmatmul.bf16.gmra.mxu0 %v384
  %v915 = vpop.f32.mrf.mxu0
  %v916 = vadd.f32 %v797, %v915
  %v917 = vpop.f32.mrf.mxu0
  %v918 = vadd.f32 %v799, %v917
  %919 = vmatmul.bf16.gmra.mxu0 %v387
  %v920 = vpop.f32.mrf.mxu0
  %v921 = vadd.f32 %v802, %v920
  %v922 = vpop.f32.mrf.mxu0
  %v923 = vadd.f32 %v804, %v922
  %924 = vmatmul.bf16.gmra.mxu0 %v390
  %v925 = vpop.f32.mrf.mxu0
  %v926 = vadd.f32 %v807, %v925
  %v927 = vpop.f32.mrf.mxu0
  %v928 = vadd.f32 %v809, %v927
  %929 = vmatmul.bf16.gmra.mxu0 %v393
  %v930 = vpop.f32.mrf.mxu0
  %v931 = vadd.f32 %v812, %v930
  %v932 = vpop.f32.mrf.mxu0
  %v933 = vadd.f32 %v814, %v932
  %934 = vmatmul.bf16.gmra.mxu0 %v396
  %v935 = vpop.f32.mrf.mxu0
  %v936 = vadd.f32 %v817, %v935
  %v937 = vpop.f32.mrf.mxu0
  %v938 = vadd.f32 %v819, %v937
  %939 = vmatmul.bf16.gmra.mxu0 %v399
  %v940 = vpop.f32.mrf.mxu0
  %v941 = vadd.f32 %v822, %v940
  %v942 = vpop.f32.mrf.mxu0
  %v943 = vadd.f32 %v824, %v942
  %944 = vmatmul.bf16.gmra.mxu0 %v402
  %v945 = vpop.f32.mrf.mxu0
  %v946 = vadd.f32 %v827, %v945
  %v947 = vpop.f32.mrf.mxu0
  %v948 = vadd.f32 %v829, %v947
  %949 = vmatmul.bf16.gmra.mxu0 %v405
  %v950 = vpop.f32.mrf.mxu0
  %v951 = vadd.f32 %v832, %v950
  %v952 = vpop.f32.mrf.mxu0
  %v953 = vadd.f32 %v834, %v952
  %954 = vmatmul.bf16.gmra.mxu0 %v408
  %v955 = vpop.f32.mrf.mxu0
  %v956 = vadd.f32 %v837, %v955
  %v957 = vpop.f32.mrf.mxu0
  %v958 = vadd.f32 %v839, %v957
  %959 = vmatmul.bf16.gmra.mxu0 %v411
  %v960 = vpop.f32.mrf.mxu0
  %v961 = vadd.f32 %v842, %v960
  %v962 = vpop.f32.mrf.mxu0
  %v963 = vadd.f32 %v844, %v962
  %964 = vmatmul.bf16.gmra.mxu0 %v414
  %v965 = vpop.f32.mrf.mxu0
  %v966 = vadd.f32 %v847, %v965
  %v967 = vpop.f32.mrf.mxu0
  %v968 = vadd.f32 %v849, %v967
  %969 = vmatmul.bf16.gmra.mxu0 %v417
  %v970 = vpop.f32.mrf.mxu0
  %v971 = vadd.f32 %v852, %v970
  %v972 = vpop.f32.mrf.mxu0
  %v973 = vadd.f32 %v854, %v972
  %974 = vmatmul.bf16.gmra.mxu0 %v420
  %v975 = vpop.f32.mrf.mxu0
  %v976 = vadd.f32 %v857, %v975
  %v977 = vpop.f32.mrf.mxu0
  %v978 = vadd.f32 %v859, %v977
  %979 = vmatmul.bf16.gmra.mxu0 %v423
  %v980 = vpop.f32.mrf.mxu0
  %v981 = vadd.f32 %v862, %v980
  %v982 = vpop.f32.mrf.mxu0
  %v983 = vadd.f32 %v864, %v982
  %984 = vmatmul.bf16.gmra.mxu0 %v426
  %v985 = vpop.f32.mrf.mxu0
  %v986 = vadd.f32 %v867, %v985
  %v987 = vpop.f32.mrf.mxu0
  %v988 = vadd.f32 %v869, %v987
  %989 = vmatmul.bf16.gmra.mxu0 %v429
  %v990 = vpop.f32.mrf.mxu0
  %v991 = vadd.f32 %v872, %v990
  %v992 = vpop.f32.mrf.mxu0
  %v993 = vadd.f32 %v874, %v992
  %994 = vmatmul.bf16.gmra.mxu0 %v432
  %v995 = vpop.f32.mrf.mxu0
  %v996 = vadd.f32 %v877, %v995
  %v997 = vpop.f32.mrf.mxu0
  %v998 = vadd.f32 %v879, %v997
  %999 = vdwg.mxu0
  %v1000 = vtanh.pop %v891
  %v1001 = vtanh.pop %v893
  %v1002 = vtanh.pop %v896
  %v1003 = vtanh.pop %v898
  %v1004 = vtanh.pop %v901
  %v1005 = vtanh.pop %v903
  %v1006 = vtanh.pop %v906
  %v1007 = vtanh.pop %v908
  %v1008 = vtanh.pop %v911
  %v1009 = vtanh.pop %v913
  %v1010 = vtanh.pop %v916
  %v1011 = vtanh.pop %v918
  %v1012 = vtanh.pop %v921
  %v1013 = vtanh.pop %v923
  %v1014 = vtanh.pop %v926
  %v1015 = vtanh.pop %v928
  %v1016 = vtanh.pop %v931
  %v1017 = vtanh.pop %v933
  %v1018 = vtanh.pop %v936
  %v1019 = vtanh.pop %v938
  %v1020 = vtanh.pop %v941
  %v1021 = vtanh.pop %v943
  %v1022 = vtanh.pop %v946
  %v1023 = vtanh.pop %v948
  %v1024 = vtanh.pop %v951
  %v1025 = vtanh.pop %v953
  %v1026 = vtanh.pop %v956
  %v1027 = vtanh.pop %v958
  %v1028 = vtanh.pop %v961
  %v1029 = vtanh.pop %v963
  %v1030 = vtanh.pop %v966
  %v1031 = vtanh.pop %v968
  %v1032 = vtanh.pop %v971
  %v1033 = vtanh.pop %v973
  %v1034 = vtanh.pop %v976
  %v1035 = vtanh.pop %v978
  %v1036 = vtanh.pop %v981
  %v1037 = vtanh.pop %v983
  %v1038 = vtanh.pop %v986
  %v1039 = vtanh.pop %v988
  %v1040 = vtanh.pop %v991
  %v1041 = vtanh.pop %v993
  %v1042 = vtanh.pop %v996
  %v1043 = vtanh.pop %v998
  %1044 = vst [vmem:[%s2] sm:$0xff] %v1000
  %1045 = vst [vmem:[%s2 + $0x8] sm:$0xff] %v1001
  %1046 = vst [vmem:[%s2 + $0x10] sm:$0xff] %v1002
  %1047 = vst [vmem:[%s2 + $0x18] sm:$0xff] %v1003
  %1048 = vst [vmem:[%s2 + $0x20] sm:$0xff] %v1004
  %1049 = vst [vmem:[%s2 + $0x28] sm:$0xff] %v1005
  %1050 = vst [vmem:[%s2 + $0x30] sm:$0xff] %v1006
  %1051 = vst [vmem:[%s2 + $0x38] sm:$0xff] %v1007
  %1052 = vst [vmem:[%s2 + $0x40] sm:$0xff] %v1008
  %1053 = vst [vmem:[%s2 + $0x48] sm:$0xff] %v1009
  %1054 = vst [vmem:[%s2 + $0x50] sm:$0xff] %v1010
  %1055 = vst [vmem:[%s2 + $0x58] sm:$0xff] %v1011
  %1056 = vst [vmem:[%s2 + $0x60] sm:$0xff] %v1012
  %1057 = vst [vmem:[%s2 + $0x68] sm:$0xff] %v1013
  %1058 = vst [vmem:[%s2 + $0x70] sm:$0xff] %v1014
  %1059 = vst [vmem:[%s2 + $0x78] sm:$0xff] %v1015
  %1060 = vst [vmem:[%s2 + $0x80] sm:$0xff] %v1016
  %1061 = vst [vmem:[%s2 + $0x88] sm:$0xff] %v1017
  %1062 = vst [vmem:[%s2 + $0x90] sm:$0xff] %v1018
  %1063 = vst [vmem:[%s2 + $0x98] sm:$0xff] %v1019
  %1064 = vst [vmem:[%s2 + $0xa0] sm:$0xff] %v1020
  %1065 = vst [vmem:[%s2 + $0xa8] sm:$0xff] %v1021
  %1066 = vst [vmem:[%s2 + $0xb0] sm:$0xff] %v1022
  %1067 = vst [vmem:[%s2 + $0xb8] sm:$0xff] %v1023
  %1068 = vst [vmem:[%s2 + $0xc0] sm:$0xff] %v1024
  %1069 = vst [vmem:[%s2 + $0xc8] sm:$0xff] %v1025
  %1070 = vst [vmem:[%s2 + $0xd0] sm:$0xff] %v1026
  %1071 = vst [vmem:[%s2 + $0xd8] sm:$0xff] %v1027
  %1072 = vst [vmem:[%s2 + $0xe0] sm:$0xff] %v1028
  %1073 = vst [vmem:[%s2 + $0xe8] sm:$0xff] %v1029
  %1074 = vst [vmem:[%s2 + $0xf0] sm:$0xff] %v1030
  %1075 = vst [vmem:[%s2 + $0xf8] sm:$0xff] %v1031
  %1076 = vst [vmem:[%s2 + $0x100] sm:$0xff] %v1032
  %1077 = vst [vmem:[%s2 + $0x108] sm:$0xff] %v1033
  %1078 = vst [vmem:[%s2 + $0x110] sm:$0xff] %v1034
  %1079 = vst [vmem:[%s2 + $0x118] sm:$0xff] %v1035
  %1080 = vst [vmem:[%s2 + $0x120] sm:$0xff] %v1036
  %1081 = vst [vmem:[%s2 + $0x128] sm:$0xff] %v1037
  %1082 = vst [vmem:[%s2 + $0x130] sm:$0xff] %v1038
  %1083 = vst [vmem:[%s2 + $0x138] sm:$0xff] %v1039
  %1084 = vst [vmem:[%s2 + $0x140] sm:$0xff] %v1040
  %1085 = vst [vmem:[%s2 + $0x148] sm:$0xff] %v1041
  %1086 = vst [vmem:[%s2 + $0x150] sm:$0xff] %v1042
  %1087 = vst [vmem:[%s2 + $0x158] sm:$0xff] %v1043
  // Predicated region
  $region10: #{conv_autoencoder_forward.14} parent=0 // pred_check
    _
  $region11: #{conv_autoencoder_forward.14} parent=0 // pred_check_branch
    %1089 = sbr.rel (0) target = $region13
  $region12: #{conv_autoencoder_forward.14} parent=0 // pred_region
    _
  $region13: #{conv_autoencoder_forward.14} parent=0 // pred_fallthru
    _
  // Predicated region
  $region14: #{conv_autoencoder_forward.14} parent=0 // pred_check
    _
  $region15: #{conv_autoencoder_forward.14} parent=0 // pred_check_branch
    %1091 = sbr.rel (0) target = $region17
  $region16: #{conv_autoencoder_forward.14} parent=0 // pred_region
    _
  $region17: #{conv_autoencoder_forward.14} parent=0 // pred_fallthru
    _

// kernel: conv_autoencoder_forward.15
$region0: #{conv_autoencoder_forward.15}
  #allocation0 [shape = 'u32[]', space=smem, size = 0x4, offset = 0x4, fixed_abs, tag = 'smem constant byte address 0x4 - core index']
  #allocation1 [shape = 'u32[72,128]{1,0:T(1,128)}', space=vmem, size = 0x9000, scoped, tag = 'internal scratch']
  %s0 = inlined_call_operand.vmem [shape: bf16[192,256], index: 0, kind: input, shape index: {}]
  %s1 = inlined_call_operand.vmem [shape: bf16[256,128], index: 1, kind: input, shape index: {}]
  %s2 = inlined_call_operand.vmem [shape: f32[192,128], index: 2, kind: output, shape index: {}]
  %s3 = sld [smem:[#allocation0]]
  $region18: #{conv_autoencoder_forward.15} parent=0
    _
  %s5 = ssub.s32 1, %s3
  %s6 = scalar_select 0, %s5, %s3
  // Predicated region
  $region2: #{conv_autoencoder_forward.15} parent=0 // pred_check
    _
  $region3: #{conv_autoencoder_forward.15} parent=0 // pred_check_branch
    %8 = sbr.rel (0) target = $region5
  $region4: #{conv_autoencoder_forward.15} parent=0 // pred_region
    _
  $region5: #{conv_autoencoder_forward.15} parent=0 // pred_fallthru
    _
  // Predicated region
  $region6: #{conv_autoencoder_forward.15} parent=0 // pred_check
    _
  $region7: #{conv_autoencoder_forward.15} parent=0 // pred_check_branch
    %10 = sbr.rel (0) target = $region9
  $region8: #{conv_autoencoder_forward.15} parent=0 // pred_region
    _
  $region9: #{conv_autoencoder_forward.15} parent=0 // pred_fallthru
    _
  %v11 = vld [vmem:[%s0] sm:$0xff]
  %v12 = vld [vmem:[%s0 + $0x8] sm:$0xff]
  %v13 = vld [vmem:[%s0 + $0x10] sm:$0xff]
  %v14 = vld [vmem:[%s0 + $0x18] sm:$0xff]
  %v15 = vld [vmem:[%s0 + $0x20] sm:$0xff]
  %v16 = vld [vmem:[%s0 + $0x28] sm:$0xff]
  %v17 = vld [vmem:[%s0 + $0x30] sm:$0xff]
  %v18 = vld [vmem:[%s0 + $0x38] sm:$0xff]
  %v19 = vld [vmem:[%s0 + $0x40] sm:$0xff]
  %v20 = vld [vmem:[%s0 + $0x48] sm:$0xff]
  %v21 = vld [vmem:[%s0 + $0x50] sm:$0xff]
  %v22 = vld [vmem:[%s0 + $0x58] sm:$0xff]
  %v23 = vld [vmem:[%s0 + $0x60] sm:$0xff]
  %v24 = vld [vmem:[%s0 + $0x68] sm:$0xff]
  %v25 = vld [vmem:[%s0 + $0x70] sm:$0xff]
  %v26 = vld [vmem:[%s0 + $0x78] sm:$0xff]
  %v27 = vld [vmem:[%s0 + $0x80] sm:$0xff]
  %v28 = vld [vmem:[%s0 + $0x88] sm:$0xff]
  %v29 = vld [vmem:[%s0 + $0x90] sm:$0xff]
  %v30 = vld [vmem:[%s0 + $0x98] sm:$0xff]
  %v31 = vld [vmem:[%s0 + $0xa0] sm:$0xff]
  %v32 = vld [vmem:[%s0 + $0xa8] sm:$0xff]
  %v33 = vld [vmem:[%s0 + $0xb0] sm:$0xff]
  %v34 = vld [vmem:[%s0 + $0xb8] sm:$0xff]
  %v35 = vld [vmem:[%s1] sm:$0xf]
  %v36 = vld [vmem:[%s1 + $0x4] sm:$0xf]
  %v37 = vld [vmem:[%s1 + $0x8] sm:$0xf]
  %v38 = vld [vmem:[%s1 + $0xc] sm:$0xf]
  %v39 = vld [vmem:[%s1 + $0x10] sm:$0xf]
  %v40 = vld [vmem:[%s1 + $0x14] sm:$0xf]
  %v41 = vld [vmem:[%s1 + $0x18] sm:$0xf]
  %v42 = vld [vmem:[%s1 + $0x1c] sm:$0xf]
  %v43 = vld [vmem:[%s1 + $0x20] sm:$0xf]
  %v44 = vld [vmem:[%s1 + $0x24] sm:$0xf]
  %v45 = vld [vmem:[%s1 + $0x28] sm:$0xf]
  %v46 = vld [vmem:[%s1 + $0x2c] sm:$0xf]
  %v47 = vld [vmem:[%s1 + $0x30] sm:$0xf]
  %v48 = vld [vmem:[%s1 + $0x34] sm:$0xf]
  %v49 = vld [vmem:[%s1 + $0x38] sm:$0xf]
  %v50 = vld [vmem:[%s1 + $0x3c] sm:$0xf]
  %v51 = vld [vmem:[%s1 + $0x40] sm:$0xf]
  %v52 = vld [vmem:[%s1 + $0x44] sm:$0xf]
  %v53 = vld [vmem:[%s1 + $0x48] sm:$0xf]
  %v54 = vld [vmem:[%s1 + $0x4c] sm:$0xf]
  %v55 = vld [vmem:[%s1 + $0x50] sm:$0xf]
  %v56 = vld [vmem:[%s1 + $0x54] sm:$0xf]
  %v57 = vld [vmem:[%s1 + $0x58] sm:$0xf]
  %v58 = vld [vmem:[%s1 + $0x5c] sm:$0xf]
  %v59 = vld [vmem:[%s1 + $0x60] sm:$0xf]
  %v60 = vld [vmem:[%s1 + $0x64] sm:$0xf]
  %v61 = vld [vmem:[%s1 + $0x68] sm:$0xf]
  %v62 = vld [vmem:[%s1 + $0x6c] sm:$0xf]
  %v63 = vld [vmem:[%s1 + $0x70] sm:$0xf]
  %v64 = vld [vmem:[%s1 + $0x74] sm:$0xf]
  %v65 = vld [vmem:[%s1 + $0x78] sm:$0xf]
  %v66 = vld [vmem:[%s1 + $0x7c] sm:$0xf]
  %v91 = vunpack.c.l.b16 %v11
  %v92 = vunpack.c.h.b16 %v11
  %v93 = vunpack.c.l.b16 %v12
  %v94 = vunpack.c.h.b16 %v12
  %v95 = vunpack.c.l.b16 %v13
  %v96 = vunpack.c.h.b16 %v13
  %v97 = vunpack.c.l.b16 %v14
  %v98 = vunpack.c.h.b16 %v14
  %v99 = vunpack.c.l.b16 %v15
  %v100 = vunpack.c.h.b16 %v15
  %v101 = vunpack.c.l.b16 %v16
  %v102 = vunpack.c.h.b16 %v16
  %v103 = vunpack.c.l.b16 %v17
  %v104 = vunpack.c.h.b16 %v17
  %v105 = vunpack.c.l.b16 %v18
  %v106 = vunpack.c.h.b16 %v18
  %v107 = vunpack.c.l.b16 %v19
  %v108 = vunpack.c.h.b16 %v19
  %v109 = vunpack.c.l.b16 %v20
  %v110 = vunpack.c.h.b16 %v20
  %v111 = vunpack.c.l.b16 %v21
  %v112 = vunpack.c.h.b16 %v21
  %v113 = vunpack.c.l.b16 %v22
  %v114 = vunpack.c.h.b16 %v22
  %v115 = vunpack.c.l.b16 %v23
  %v116 = vunpack.c.h.b16 %v23
  %v117 = vunpack.c.l.b16 %v24
  %v118 = vunpack.c.h.b16 %v24
  %v119 = vunpack.c.l.b16 %v25
  %v120 = vunpack.c.h.b16 %v25
  %v121 = vunpack.c.l.b16 %v26
  %v122 = vunpack.c.h.b16 %v26
  %v123 = vunpack.c.l.b16 %v27
  %v124 = vunpack.c.h.b16 %v27
  %v125 = vunpack.c.l.b16 %v28
  %v126 = vunpack.c.h.b16 %v28
  %v127 = vunpack.c.l.b16 %v29
  %v128 = vunpack.c.h.b16 %v29
  %v129 = vunpack.c.l.b16 %v30
  %v130 = vunpack.c.h.b16 %v30
  %v131 = vunpack.c.l.b16 %v31
  %v132 = vunpack.c.h.b16 %v31
  %v133 = vunpack.c.l.b16 %v32
  %v134 = vunpack.c.h.b16 %v32
  %v135 = vunpack.c.l.b16 %v33
  %v136 = vunpack.c.h.b16 %v33
  %v137 = vunpack.c.l.b16 %v34
  %v138 = vunpack.c.h.b16 %v34
  %v139 = vpack.c.b16 %v93, %v91
  %v140 = vpack.c.b16 %v94, %v92
  %v141 = vpack.c.b16 %v97, %v95
  %v142 = vpack.c.b16 %v98, %v96
  %v143 = vpack.c.b16 %v101, %v99
  %v144 = vpack.c.b16 %v102, %v100
  %v145 = vpack.c.b16 %v105, %v103
  %v146 = vpack.c.b16 %v106, %v104
  %v147 = vpack.c.b16 %v109, %v107
  %v148 = vpack.c.b16 %v110, %v108
  %v149 = vpack.c.b16 %v113, %v111
  %v150 = vpack.c.b16 %v114, %v112
  %v151 = vpack.c.b16 %v117, %v115
  %v152 = vpack.c.b16 %v118, %v116
  %v153 = vpack.c.b16 %v121, %v119
  %v154 = vpack.c.b16 %v122, %v120
  %v155 = vpack.c.b16 %v125, %v123
  %v156 = vpack.c.b16 %v126, %v124
  %v157 = vpack.c.b16 %v129, %v127
  %v158 = vpack.c.b16 %v130, %v128
  %v159 = vpack.c.b16 %v133, %v131
  %v160 = vpack.c.b16 %v134, %v132
  %v161 = vpack.c.b16 %v137, %v135
  %v162 = vpack.c.b16 %v138, %v136
  %v219 = vunpack.c.l.b16 %v35
  %v220 = vunpack.c.l.b16 %v36
  %v221 = vunpack.c.l.b16 %v37
  %v222 = vunpack.c.l.b16 %v38
  %v223 = vunpack.c.l.b16 %v39
  %v224 = vunpack.c.l.b16 %v40
  %v225 = vunpack.c.l.b16 %v41
  %v226 = vunpack.c.l.b16 %v42
  %v227 = vunpack.c.l.b16 %v43
  %v228 = vunpack.c.l.b16 %v44
  %v229 = vunpack.c.l.b16 %v45
  %v230 = vunpack.c.l.b16 %v46
  %v231 = vunpack.c.l.b16 %v47
  %v232 = vunpack.c.l.b16 %v48
  %v233 = vunpack.c.l.b16 %v49
  %v234 = vunpack.c.l.b16 %v50
  %v235 = vunpack.c.l.b16 %v51
  %v236 = vunpack.c.l.b16 %v52
  %v237 = vunpack.c.l.b16 %v53
  %v238 = vunpack.c.l.b16 %v54
  %v239 = vunpack.c.l.b16 %v55
  %v240 = vunpack.c.l.b16 %v56
  %v241 = vunpack.c.l.b16 %v57
  %v242 = vunpack.c.l.b16 %v58
  %v243 = vunpack.c.l.b16 %v59
  %v244 = vunpack.c.l.b16 %v60
  %v245 = vunpack.c.l.b16 %v61
  %v246 = vunpack.c.l.b16 %v62
  %v247 = vunpack.c.l.b16 %v63
  %v248 = vunpack.c.l.b16 %v64
  %v249 = vunpack.c.l.b16 %v65
  %v250 = vunpack.c.l.b16 %v66
  %v251 = vpack.c.b16 %v220, %v219
  %v252 = vpack.c.b16 %v222, %v221
  %v253 = vpack.c.b16 %v224, %v223
  %v254 = vpack.c.b16 %v226, %v225
  %v255 = vpack.c.b16 %v228, %v227
  %v256 = vpack.c.b16 %v230, %v229
  %v257 = vpack.c.b16 %v232, %v231
  %v258 = vpack.c.b16 %v234, %v233
  %v259 = vpack.c.b16 %v236, %v235
  %v260 = vpack.c.b16 %v238, %v237
  %v261 = vpack.c.b16 %v240, %v239
  %v262 = vpack.c.b16 %v242, %v241
  %v263 = vpack.c.b16 %v244, %v243
  %v264 = vpack.c.b16 %v246, %v245
  %v265 = vpack.c.b16 %v248, %v247
  %v266 = vpack.c.b16 %v250, %v249
  %283 = vmatpush.bf16.msra.mxu0 %v258
  %284 = vmatpush.bf16.msra.mxu0 %v257
  %285 = vmatpush.bf16.msra.mxu0 %v256
  %286 = vmatpush.bf16.msra.mxu0 %v255
  %287 = vmatpush.bf16.msra.mxu0 %v254
  %288 = vmatpush.bf16.msra.mxu0 %v253
  %289 = vmatpush.bf16.msra.mxu0 %v252
  %290 = vmatpush.bf16.msra.mxu0 %v251
  %291 = vmatmul.bf16.gmra.mxu0 %v139
  %v292 = vpop.f32.mrf.mxu0
  %v293 = vadd.f32 0.0, %v292
  %v294 = vpop.f32.mrf.mxu0
  %v295 = vadd.f32 0.0, %v294
  %296 = vmatmul.bf16.gmra.mxu0 %v141
  %v297 = vpop.f32.mrf.mxu0
  %v298 = vadd.f32 0.0, %v297
  %v299 = vpop.f32.mrf.mxu0
  %v300 = vadd.f32 0.0, %v299
  %301 = vmatmul.bf16.gmra.mxu0 %v143
  %v302 = vpop.f32.mrf.mxu0
  %v303 = vadd.f32 0.0, %v302
  %v304 = vpop.f32.mrf.mxu0
  %v305 = vadd.f32 0.0, %v304
  %306 = vmatmul.bf16.gmra.mxu0 %v145
  %v307 = vpop.f32.mrf.mxu0
  %v308 = vadd.f32 0.0, %v307
  %v309 = vpop.f32.mrf.mxu0
  %v310 = vadd.f32 0.0, %v309
  %311 = vmatmul.bf16.gmra.mxu0 %v147
  %v312 = vpop.f32.mrf.mxu0
  %v313 = vadd.f32 0.0, %v312
  %v314 = vpop.f32.mrf.mxu0
  %v315 = vadd.f32 0.0, %v314
  %316 = vmatmul.bf16.gmra.mxu0 %v149
  %v317 = vpop.f32.mrf.mxu0
  %v318 = vadd.f32 0.0, %v317
  %v319 = vpop.f32.mrf.mxu0
  %v320 = vadd.f32 0.0, %v319
  %321 = vmatmul.bf16.gmra.mxu0 %v151
  %v322 = vpop.f32.mrf.mxu0
  %v323 = vadd.f32 0.0, %v322
  %v324 = vpop.f32.mrf.mxu0
  %v325 = vadd.f32 0.0, %v324
  %326 = vmatmul.bf16.gmra.mxu0 %v153
  %v327 = vpop.f32.mrf.mxu0
  %v328 = vadd.f32 0.0, %v327
  %v329 = vpop.f32.mrf.mxu0
  %v330 = vadd.f32 0.0, %v329
  %331 = vmatmul.bf16.gmra.mxu0 %v155
  %v332 = vpop.f32.mrf.mxu0
  %v333 = vadd.f32 0.0, %v332
  %v334 = vpop.f32.mrf.mxu0
  %v335 = vadd.f32 0.0, %v334
  %336 = vmatmul.bf16.gmra.mxu0 %v157
  %v337 = vpop.f32.mrf.mxu0
  %v338 = vadd.f32 0.0, %v337
  %v339 = vpop.f32.mrf.mxu0
  %v340 = vadd.f32 0.0, %v339
  %341 = vmatmul.bf16.gmra.mxu0 %v159
  %v342 = vpop.f32.mrf.mxu0
  %v343 = vadd.f32 0.0, %v342
  %v344 = vpop.f32.mrf.mxu0
  %v345 = vadd.f32 0.0, %v344
  %346 = vmatmul.bf16.gmra.mxu0 %v161
  %v347 = vpop.f32.mrf.mxu0
  %v348 = vadd.f32 0.0, %v347
  %v349 = vpop.f32.mrf.mxu0
  %v350 = vadd.f32 0.0, %v349
  %351 = vdwg.mxu0
  %352 = vmatpush.bf16.msra.mxu0 %v266
  %353 = vmatpush.bf16.msra.mxu0 %v265
  %354 = vmatpush.bf16.msra.mxu0 %v264
  %355 = vmatpush.bf16.msra.mxu0 %v263
  %356 = vmatpush.bf16.msra.mxu0 %v262
  %357 = vmatpush.bf16.msra.mxu0 %v261
  %358 = vmatpush.bf16.msra.mxu0 %v260
  %359 = vmatpush.bf16.msra.mxu0 %v259
  %360 = vmatmul.bf16.gmra.mxu0 %v140
  %v361 = vpop.f32.mrf.mxu0
  %v362 = vadd.f32 %v293, %v361
  %v363 = vpop.f32.mrf.mxu0
  %v364 = vadd.f32 %v295, %v363
  %365 = vmatmul.bf16.gmra.mxu0 %v142
  %v366 = vpop.f32.mrf.mxu0
  %v367 = vadd.f32 %v298, %v366
  %v368 = vpop.f32.mrf.mxu0
  %v369 = vadd.f32 %v300, %v368
  %370 = vmatmul.bf16.gmra.mxu0 %v144
  %v371 = vpop.f32.mrf.mxu0
  %v372 = vadd.f32 %v303, %v371
  %v373 = vpop.f32.mrf.mxu0
  %v374 = vadd.f32 %v305, %v373
  %375 = vmatmul.bf16.gmra.mxu0 %v146
  %v376 = vpop.f32.mrf.mxu0
  %v377 = vadd.f32 %v308, %v376
  %v378 = vpop.f32.mrf.mxu0
  %v379 = vadd.f32 %v310, %v378
  %380 = vmatmul.bf16.gmra.mxu0 %v148
  %v381 = vpop.f32.mrf.mxu0
  %v382 = vadd.f32 %v313, %v381
  %v383 = vpop.f32.mrf.mxu0
  %v384 = vadd.f32 %v315, %v383
  %385 = vmatmul.bf16.gmra.mxu0 %v150
  %v386 = vpop.f32.mrf.mxu0
  %v387 = vadd.f32 %v318, %v386
  %v388 = vpop.f32.mrf.mxu0
  %v389 = vadd.f32 %v320, %v388
  %390 = vmatmul.bf16.gmra.mxu0 %v152
  %v391 = vpop.f32.mrf.mxu0
  %v392 = vadd.f32 %v323, %v391
  %v393 = vpop.f32.mrf.mxu0
  %v394 = vadd.f32 %v325, %v393
  %395 = vmatmul.bf16.gmra.mxu0 %v154
  %v396 = vpop.f32.mrf.mxu0
  %v397 = vadd.f32 %v328, %v396
  %v398 = vpop.f32.mrf.mxu0
  %v399 = vadd.f32 %v330, %v398
  %400 = vmatmul.bf16.gmra.mxu0 %v156
  %v401 = vpop.f32.mrf.mxu0
  %v402 = vadd.f32 %v333, %v401
  %v403 = vpop.f32.mrf.mxu0
  %v404 = vadd.f32 %v335, %v403
  %405 = vmatmul.bf16.gmra.mxu0 %v158
  %v406 = vpop.f32.mrf.mxu0
  %v407 = vadd.f32 %v338, %v406
  %v408 = vpop.f32.mrf.mxu0
  %v409 = vadd.f32 %v340, %v408
  %410 = vmatmul.bf16.gmra.mxu0 %v160
  %v411 = vpop.f32.mrf.mxu0
  %v412 = vadd.f32 %v343, %v411
  %v413 = vpop.f32.mrf.mxu0
  %v414 = vadd.f32 %v345, %v413
  %415 = vmatmul.bf16.gmra.mxu0 %v162
  %v416 = vpop.f32.mrf.mxu0
  %v417 = vadd.f32 %v348, %v416
  %v418 = vpop.f32.mrf.mxu0
  %v419 = vadd.f32 %v350, %v418
  %420 = vdwg.mxu0
  %v421 = vtanh.pop %v362
  %v422 = vtanh.pop %v364
  %v423 = vtanh.pop %v367
  %v424 = vtanh.pop %v369
  %v425 = vtanh.pop %v372
  %v426 = vtanh.pop %v374
  %v427 = vtanh.pop %v377
  %v428 = vtanh.pop %v379
  %v429 = vtanh.pop %v382
  %v430 = vtanh.pop %v384
  %v431 = vtanh.pop %v387
  %v432 = vtanh.pop %v389
  %v433 = vtanh.pop %v392
  %v434 = vtanh.pop %v394
  %v435 = vtanh.pop %v397
  %v436 = vtanh.pop %v399
  %v437 = vtanh.pop %v402
  %v438 = vtanh.pop %v404
  %v439 = vtanh.pop %v407
  %v440 = vtanh.pop %v409
  %v441 = vtanh.pop %v412
  %v442 = vtanh.pop %v414
  %v443 = vtanh.pop %v417
  %v444 = vtanh.pop %v419
  %445 = vst [vmem:[%s2] sm:$0xff] %v421
  %446 = vst [vmem:[%s2 + $0x8] sm:$0xff] %v422
  %447 = vst [vmem:[%s2 + $0x10] sm:$0xff] %v423
  %448 = vst [vmem:[%s2 + $0x18] sm:$0xff] %v424
  %449 = vst [vmem:[%s2 + $0x20] sm:$0xff] %v425
  %450 = vst [vmem:[%s2 + $0x28] sm:$0xff] %v426
  %451 = vst [vmem:[%s2 + $0x30] sm:$0xff] %v427
  %452 = vst [vmem:[%s2 + $0x38] sm:$0xff] %v428
  %453 = vst [vmem:[%s2 + $0x40] sm:$0xff] %v429
  %454 = vst [vmem:[%s2 + $0x48] sm:$0xff] %v430
  %455 = vst [vmem:[%s2 + $0x50] sm:$0xff] %v431
  %456 = vst [vmem:[%s2 + $0x58] sm:$0xff] %v432
  %457 = vst [vmem:[%s2 + $0x60] sm:$0xff] %v433
  %458 = vst [vmem:[%s2 + $0x68] sm:$0xff] %v434
  %459 = vst [vmem:[%s2 + $0x70] sm:$0xff] %v435
  %460 = vst [vmem:[%s2 + $0x78] sm:$0xff] %v436
  %461 = vst [vmem:[%s2 + $0x80] sm:$0xff] %v437
  %462 = vst [vmem:[%s2 + $0x88] sm:$0xff] %v438
  %463 = vst [vmem:[%s2 + $0x90] sm:$0xff] %v439
  %464 = vst [vmem:[%s2 + $0x98] sm:$0xff] %v440
  %465 = vst [vmem:[%s2 + $0xa0] sm:$0xff] %v441
  %466 = vst [vmem:[%s2 + $0xa8] sm:$0xff] %v442
  %467 = vst [vmem:[%s2 + $0xb0] sm:$0xff] %v443
  %468 = vst [vmem:[%s2 + $0xb8] sm:$0xff] %v444
  // Predicated region
  $region10: #{conv_autoencoder_forward.15} parent=0 // pred_check
    _
  $region11: #{conv_autoencoder_forward.15} parent=0 // pred_check_branch
    %470 = sbr.rel (0) target = $region13
  $region12: #{conv_autoencoder_forward.15} parent=0 // pred_region
    _
  $region13: #{conv_autoencoder_forward.15} parent=0 // pred_fallthru
    _
  // Predicated region
  $region14: #{conv_autoencoder_forward.15} parent=0 // pred_check
    _
  $region15: #{conv_autoencoder_forward.15} parent=0 // pred_check_branch
    %472 = sbr.rel (0) target = $region17
  $region16: #{conv_autoencoder_forward.15} parent=0 // pred_region
    _
  $region17: #{conv_autoencoder_forward.15} parent=0 // pred_fallthru
    _

</llo_original>
